<compile_context>
chip_gen: v7x
topology: tpu7x:2x2x1
jax: 0.10.0
libtpu: 0.0.40
codegen_flags: <defaults>
</compile_context>

<pallas_src>
import functools

import jax
import jax.numpy as jnp
from jax.experimental import pallas as pl
from jax.experimental.pallas import tpu as pltpu


def _audionet_kernel(x_ref,
                     w1_ref, b1_ref,
                     w2_ref, b2_ref,
                     w3_ref, b3_ref,
                     w4_ref, b4_ref,
                     w5_ref, b5_ref,
                     o_ref,
                     *, use_log_softmax: bool, approx_recip: bool):
    cdt = w1_ref.dtype  # compute dtype (bf16 perf path or f32 validation path)

    def layer(h, w_ref, b_ref):
        y = jnp.dot(h, w_ref[...], preferred_element_type=jnp.float32)
        y = jnp.maximum(y + b_ref[...], 0.0)
        return y.astype(cdt)          # back to compute dtype for the next MXU pass

    # x arrives as f32; cast on the VPU (free) instead of a host-side cast.
    h = x_ref[...].astype(cdt)
    h = layer(h, w1_ref, b1_ref)
    h = layer(h, w2_ref, b2_ref)
    h = layer(h, w3_ref, b3_ref)
    h = layer(h, w4_ref, b4_ref)

    # fc5 (no activation), logits kept in f32 for the softmax epilogue.
    logits = jnp.dot(h, w5_ref[...], preferred_element_type=jnp.float32) + b5_ref[...]

    # softmax / log-softmax over the last axis (for 2-D input, Softmax(dim=-1)
    # and LogSoftmax(dim=1) reduce over the same axis).
    m = jnp.max(logits, axis=-1, keepdims=True)
    shifted = logits - m
    e = jnp.exp(shifted)
    denom = jnp.sum(e, axis=-1, keepdims=True)
    if use_log_softmax:
        o_ref[...] = (shifted - jnp.log(denom)).astype(o_ref.dtype)
    else:
        # approx reciprocal -> EUP slot (idle in the epilogue); exact for f32 path.
        o_ref[...] = (e * pl.reciprocal(denom, approx=approx_recip)).astype(o_ref.dtype)


def _round_up(n, m):
    return ((n + m - 1) // m) * m


def _tile_policy():
    """Per-generation (default_batch_tile, min_grid_steps)."""
    kind = jax.devices()[0].device_kind.lower()
    if "v5" in kind:                      # v5e: 4x128 MXU already full at 256 rows
        return 256, 1
    if "v7" in kind or "7x" in kind:      # v7x: 2 TCs/chip -> want >= 2 grid steps
        return 512, 2
    return 512, 1                         # v6e and default


def prepare_params(params, compute_dtype=jnp.bfloat16):
    """Cast weights to the compute dtype ONCE (cache the result across calls).

    params: list of (w, b) with w shaped [in, out] (already transposed vs nn.Linear).
    Biases stay f32 as [1, N] row tiles that broadcast along the batch axis.
    Use compute_dtype=jnp.float32 only for numerical validation, not as the
    perf path on v6e/v7x.
    """
    return tuple(
        (jnp.asarray(w, compute_dtype), jnp.asarray(b, jnp.float32).reshape(1, -1))
        for (w, b) in params)


def audionet_forward(x, prepared_params, *, only_logsoftmax=False, training=False,
                     batch_tile=None):
    """Fused AudioNet forward.

    x: [B, inputsize] float32 (cast to the compute dtype happens in-kernel).
    prepared_params: output of prepare_params() -- weights already in the
        compute dtype, cached by the caller (no per-call cast).
    """
    ws = [w for (w, _) in prepared_params]
    bs = [b for (_, b) in prepared_params]
    cdt = ws[0].dtype
    B, in_size = x.shape
    out_size = ws[4].shape[1]
    use_log_softmax = bool(training or only_logsoftmax)
    approx_recip = (cdt == jnp.bfloat16)

    # --- batch tiling ---------------------------------------------------------
    default_tile, min_steps = _tile_policy()
    tile_req = int(batch_tile) if batch_tile is not None else default_tile

    sub = 16 if cdt == jnp.bfloat16 else 8
    if B <= 128:
        # Small batch: only pad to the dtype sublane multiple (no 16x-wasted MXU rows).
        tile = _round_up(B, sub)
    else:
        Bp128 = _round_up(B, 128)
        tile = min(_round_up(tile_req, 128), Bp128)
        if min_steps > 1:
            # v7x: guarantee >= min_steps grid steps so both TensorCores get work.
            tile = min(tile, max(128, (Bp128 // min_steps) // 128 * 128))

    Bp = _round_up(B, tile)
    if Bp != B:
        x = jnp.pad(x, ((0, Bp - B), (0, 0)))

    kernel = functools.partial(_audionet_kernel,
                               use_log_softmax=use_log_softmax,
                               approx_recip=approx_recip)

    itemsize = jnp.dtype(cdt).itemsize
    w_bytes = sum(int(w.size) * itemsize for w in ws)
    b_bytes = sum(int(b.size) * 4 for b in bs)
    flops = 2 * Bp * (in_size * 1024 + 1024 * 1024 + 1024 * 1024
                      + 1024 * 512 + 512 * out_size)
    cost = pl.CostEstimate(
        flops=int(flops),
        transcendentals=int(Bp * out_size),
        bytes_accessed=int(w_bytes + b_bytes + Bp * in_size * 4
                           + Bp * out_size * 4),
    )

    grid = (Bp // tile,)

    # Constant-index weight/bias blocks stay resident in VMEM across grid steps;
    # default buffering is fine (even double-buffered f32 fits the 48 MiB cap).
    in_specs = [pl.BlockSpec((tile, in_size), lambda i: (i, 0))]  # x
    for w, b in zip(ws, bs):
        in_specs.append(pl.BlockSpec(w.shape, lambda i: (0, 0)))
        in_specs.append(pl.BlockSpec(b.shape, lambda i: (0, 0)))

    out = pl.pallas_call(
        kernel,
        out_shape=jax.ShapeDtypeStruct((Bp, out_size), jnp.float32),
        grid=grid,
        in_specs=in_specs,
        out_specs=pl.BlockSpec((tile, out_size), lambda i: (i, 0)),
        compiler_params=pltpu.CompilerParams(
            dimension_semantics=("parallel",),
            vmem_limit_bytes=48 << 20,   # <= v7x's 64 MiB per-TC physical VMEM
        ),
        cost_estimate=cost,
    )(x, *[a for wb in zip(ws, bs) for a in wb])

    return out[:B]


# jit at the call site so pad/slice around the kernel fuse into one dispatch.
audionet_forward_jit = jax.jit(
    audionet_forward,
    static_argnames=("only_logsoftmax", "training", "batch_tile"))


def init_audionet_params(key, inputsize, outputsize):
    """Deterministic synthetic parameters (PyTorch-Linear-like uniform init).

    Weights are stored [in, out] (transposed vs nn.Linear) so the kernel runs h @ W.
    """
    sizes = [(inputsize, 1024), (1024, 1024), (1024, 1024), (1024, 512),
             (512, outputsize)]
    params = []
    for (fan_in, fan_out) in sizes:
        key, kw, kb = jax.random.split(key, 3)
        bound = 1.0 / jnp.sqrt(fan_in)
        w = jax.random.uniform(kw, (fan_in, fan_out), jnp.float32, -bound, bound)
        b = jax.random.uniform(kb, (fan_out,), jnp.float32, -bound, bound)
        params.append((w, b))
    return params


def audionet_reference(x, params, *, only_logsoftmax=False, training=False,
                       compute_dtype=jnp.float32):
    """Pure-JAX reference mirroring the kernel numerics (compute dtype + f32 acc)."""
    (w1, b1), (w2, b2), (w3, b3), (w4, b4), (w5, b5) = params

    def layer(h, w, b):
        y = jnp.dot(h.astype(compute_dtype), w.astype(compute_dtype),
                    preferred_element_type=jnp.float32) + b
        return jnp.maximum(y, 0.0)

    h = layer(x, w1, b1)
    h = layer(h, w2, b2)
    h = layer(h, w3, b3)
    h = layer(h, w4, b4)
    logits = jnp.dot(h.astype(compute_dtype), w5.astype(compute_dtype),
                     preferred_element_type=jnp.float32) + b5
    if training or only_logsoftmax:
        return jax.nn.log_softmax(logits, axis=1)
    return jax.nn.softmax(logits, axis=-1)


if __name__ == "__main__":
    inputsize = 256    # flattened audio feature vector
    outputsize = 128   # number of classes (lane-dense)
    batch = 8

    key = jax.random.PRNGKey(0)
    key, kx = jax.random.split(key)
    x = jax.random.normal(kx, (batch, inputsize), jnp.float32)
    params = init_audionet_params(key, inputsize, outputsize)

    # Pre-cast weight copies are built ONCE and reused across all forward calls.
    params_f32 = prepare_params(params, jnp.float32)      # validation-only path
    params_bf16 = prepare_params(params, jnp.bfloat16)    # perf path (v6e/v7x)

    # --- f32 compute path, softmax head (eval mode; exact reciprocal) ---
    out = jax.block_until_ready(audionet_forward_jit(x, params_f32))
    ref = audionet_reference(x, params)
    assert out.shape == (batch, outputsize)
    assert jnp.allclose(out, ref, atol=1e-3, rtol=1e-3), "f32 softmax mismatch"

    # --- f32 compute path, log-softmax head (training / only_logsoftmax) ---
    out_ls = jax.block_until_ready(
        audionet_forward_jit(x, params_f32, only_logsoftmax=True))
    ref_ls = audionet_reference(x, params, only_logsoftmax=True)
    assert jnp.allclose(out_ls, ref_ls, atol=1e-3, rtol=1e-3), \
        "f32 log_softmax mismatch"

    # --- bf16 compute path (perf default on v6e/v7x), checked vs bf16 reference ---
    out_bf = jax.block_until_ready(audionet_forward_jit(x, params_bf16))
    ref_bf = audionet_reference(x, params, compute_dtype=jnp.bfloat16)
    assert jnp.allclose(out_bf, ref_bf, atol=5e-3, rtol=5e-3), \
        "bf16 softmax mismatch"

    # --- bf16 log-softmax (training mode) ---
    out_bf_ls = jax.block_until_ready(
        audionet_forward_jit(x, params_bf16, training=True))
    ref_bf_ls = audionet_reference(x, params, training=True,
                                   compute_dtype=jnp.bfloat16)
    assert jnp.allclose(out_bf_ls, ref_bf_ls, atol=5e-3, rtol=5e-3), \
        "bf16 log_softmax mismatch"

    print("KERNEL_OK")
</pallas_src>

<mosaic_0001>
module attributes {stable_mosaic.version = 11 : i64} {
  func.func @_audionet_kernel(%arg0: i32, %arg1: memref<8x256xf32, #tpu.memory_space<vmem>>, %arg2: memref<256x1024xf32, #tpu.memory_space<vmem>>, %arg3: memref<1x1024xf32, #tpu.memory_space<vmem>>, %arg4: memref<1024x1024xf32, #tpu.memory_space<vmem>>, %arg5: memref<1x1024xf32, #tpu.memory_space<vmem>>, %arg6: memref<1024x1024xf32, #tpu.memory_space<vmem>>, %arg7: memref<1x1024xf32, #tpu.memory_space<vmem>>, %arg8: memref<1024x512xf32, #tpu.memory_space<vmem>>, %arg9: memref<1x512xf32, #tpu.memory_space<vmem>>, %arg10: memref<512x128xf32, #tpu.memory_space<vmem>>, %arg11: memref<1x128xf32, #tpu.memory_space<vmem>>, %arg12: memref<8x128xf32, #tpu.memory_space<vmem>>) attributes {dimension_semantics = [#tpu.dimension_semantics<parallel>], iteration_bounds = array<i64: 1>, scalar_prefetch = 0 : i64, scratch_operands = 0 : i64, tpu.core_type = #tpu.core_type<tc>, window_params = [{transform_indices = @transform_0, window_bounds = array<i64: 8, 256>}, {pipeline_mode = #tpu.pipeline_mode<synchronous>, transform_indices = @transform_1, window_bounds = array<i64: 256, 1024>}, {pipeline_mode = #tpu.pipeline_mode<synchronous>, transform_indices = @transform_2, window_bounds = array<i64: 1, 1024>}, {pipeline_mode = #tpu.pipeline_mode<synchronous>, transform_indices = @transform_3, window_bounds = array<i64: 1024, 1024>}, {pipeline_mode = #tpu.pipeline_mode<synchronous>, transform_indices = @transform_4, window_bounds = array<i64: 1, 1024>}, {pipeline_mode = #tpu.pipeline_mode<synchronous>, transform_indices = @transform_5, window_bounds = array<i64: 1024, 1024>}, {pipeline_mode = #tpu.pipeline_mode<synchronous>, transform_indices = @transform_6, window_bounds = array<i64: 1, 1024>}, {pipeline_mode = #tpu.pipeline_mode<synchronous>, transform_indices = @transform_7, window_bounds = array<i64: 1024, 512>}, {pipeline_mode = #tpu.pipeline_mode<synchronous>, transform_indices = @transform_8, window_bounds = array<i64: 1, 512>}, {pipeline_mode = #tpu.pipeline_mode<synchronous>, transform_indices = @transform_9, window_bounds = array<i64: 512, 128>}, {pipeline_mode = #tpu.pipeline_mode<synchronous>, transform_indices = @transform_10, window_bounds = array<i64: 1, 128>}, {transform_indices = @transform_11, window_bounds = array<i64: 8, 128>}]} {
    %c0 = arith.constant 0 : index
    %c0_0 = arith.constant 0 : index
    %0 = vector.load %arg1[%c0, %c0_0] : memref<8x256xf32, #tpu.memory_space<vmem>>, vector<8x256xf32>
    %c0_1 = arith.constant 0 : index
    %c0_2 = arith.constant 0 : index
    %1 = vector.load %arg2[%c0_1, %c0_2] : memref<256x1024xf32, #tpu.memory_space<vmem>>, vector<256x1024xf32>
    %cst = arith.constant dense<0.000000e+00> : vector<8x1024xf32>
    %2 = tpu.matmul %0, %1, %cst {dimension_numbers = #tpu.dot_dimension_numbers<[1], [0], [0], [1], [0, 0, 1, 1], [], []>} : vector<8x256xf32>, vector<256x1024xf32>, vector<8x1024xf32> -> vector<8x1024xf32>
    %c0_3 = arith.constant 0 : index
    %c0_4 = arith.constant 0 : index
    %3 = vector.load %arg3[%c0_3, %c0_4] : memref<1x1024xf32, #tpu.memory_space<vmem>>, vector<1x1024xf32>
    %4 = vector.broadcast %3 : vector<1x1024xf32> to vector<8x1024xf32>
    %5 = arith.addf %2, %4 : vector<8x1024xf32>
    %cst_5 = arith.constant 0.000000e+00 : f32
    %6 = vector.broadcast %cst_5 : f32 to vector<8x1024xf32>
    %7 = arith.maximumf %5, %6 : vector<8x1024xf32>
    %c0_6 = arith.constant 0 : index
    %c0_7 = arith.constant 0 : index
    %8 = vector.load %arg4[%c0_6, %c0_7] : memref<1024x1024xf32, #tpu.memory_space<vmem>>, vector<1024x1024xf32>
    %cst_8 = arith.constant dense<0.000000e+00> : vector<8x1024xf32>
    %9 = tpu.matmul %7, %8, %cst_8 {dimension_numbers = #tpu.dot_dimension_numbers<[1], [0], [0], [1], [0, 0, 1, 1], [], []>} : vector<8x1024xf32>, vector<1024x1024xf32>, vector<8x1024xf32> -> vector<8x1024xf32>
    %c0_9 = arith.constant 0 : index
    %c0_10 = arith.constant 0 : index
    %10 = vector.load %arg5[%c0_9, %c0_10] : memref<1x1024xf32, #tpu.memory_space<vmem>>, vector<1x1024xf32>
    %11 = vector.broadcast %10 : vector<1x1024xf32> to vector<8x1024xf32>
    %12 = arith.addf %9, %11 : vector<8x1024xf32>
    %cst_11 = arith.constant 0.000000e+00 : f32
    %13 = vector.broadcast %cst_11 : f32 to vector<8x1024xf32>
    %14 = arith.maximumf %12, %13 : vector<8x1024xf32>
    %c0_12 = arith.constant 0 : index
    %c0_13 = arith.constant 0 : index
    %15 = vector.load %arg6[%c0_12, %c0_13] : memref<1024x1024xf32, #tpu.memory_space<vmem>>, vector<1024x1024xf32>
    %cst_14 = arith.constant dense<0.000000e+00> : vector<8x1024xf32>
    %16 = tpu.matmul %14, %15, %cst_14 {dimension_numbers = #tpu.dot_dimension_numbers<[1], [0], [0], [1], [0, 0, 1, 1], [], []>} : vector<8x1024xf32>, vector<1024x1024xf32>, vector<8x1024xf32> -> vector<8x1024xf32>
    %c0_15 = arith.constant 0 : index
    %c0_16 = arith.constant 0 : index
    %17 = vector.load %arg7[%c0_15, %c0_16] : memref<1x1024xf32, #tpu.memory_space<vmem>>, vector<1x1024xf32>
    %18 = vector.broadcast %17 : vector<1x1024xf32> to vector<8x1024xf32>
    %19 = arith.addf %16, %18 : vector<8x1024xf32>
    %cst_17 = arith.constant 0.000000e+00 : f32
    %20 = vector.broadcast %cst_17 : f32 to vector<8x1024xf32>
    %21 = arith.maximumf %19, %20 : vector<8x1024xf32>
    %c0_18 = arith.constant 0 : index
    %c0_19 = arith.constant 0 : index
    %22 = vector.load %arg8[%c0_18, %c0_19] : memref<1024x512xf32, #tpu.memory_space<vmem>>, vector<1024x512xf32>
    %cst_20 = arith.constant dense<0.000000e+00> : vector<8x512xf32>
    %23 = tpu.matmul %21, %22, %cst_20 {dimension_numbers = #tpu.dot_dimension_numbers<[1], [0], [0], [1], [0, 0, 1, 1], [], []>} : vector<8x1024xf32>, vector<1024x512xf32>, vector<8x512xf32> -> vector<8x512xf32>
    %c0_21 = arith.constant 0 : index
    %c0_22 = arith.constant 0 : index
    %24 = vector.load %arg9[%c0_21, %c0_22] : memref<1x512xf32, #tpu.memory_space<vmem>>, vector<1x512xf32>
    %25 = vector.broadcast %24 : vector<1x512xf32> to vector<8x512xf32>
    %26 = arith.addf %23, %25 : vector<8x512xf32>
    %cst_23 = arith.constant 0.000000e+00 : f32
    %27 = vector.broadcast %cst_23 : f32 to vector<8x512xf32>
    %28 = arith.maximumf %26, %27 : vector<8x512xf32>
    %c0_24 = arith.constant 0 : index
    %c0_25 = arith.constant 0 : index
    %29 = vector.load %arg10[%c0_24, %c0_25] : memref<512x128xf32, #tpu.memory_space<vmem>>, vector<512x128xf32>
    %cst_26 = arith.constant dense<0.000000e+00> : vector<8x128xf32>
    %30 = tpu.matmul %28, %29, %cst_26 {dimension_numbers = #tpu.dot_dimension_numbers<[1], [0], [0], [1], [0, 0, 1, 1], [], []>} : vector<8x512xf32>, vector<512x128xf32>, vector<8x128xf32> -> vector<8x128xf32>
    %c0_27 = arith.constant 0 : index
    %c0_28 = arith.constant 0 : index
    %31 = vector.load %arg11[%c0_27, %c0_28] : memref<1x128xf32, #tpu.memory_space<vmem>>, vector<1x128xf32>
    %32 = vector.broadcast %31 : vector<1x128xf32> to vector<8x128xf32>
    %33 = arith.addf %30, %32 : vector<8x128xf32>
    %cst_29 = arith.constant dense<0xFF800000> : vector<8xf32>
    %34 = vector.multi_reduction <maximumf>, %33, %cst_29 [1] : vector<8x128xf32> to vector<8xf32>
    %35 = vector.shape_cast %34 : vector<8xf32> to vector<8x1xf32>
    %36 = vector.broadcast %35 : vector<8x1xf32> to vector<8x128xf32>
    %37 = arith.subf %33, %36 : vector<8x128xf32>
    %38 = math.exp %37 : vector<8x128xf32>
    %cst_30 = arith.constant dense<0.000000e+00> : vector<8xf32>
    %39 = vector.multi_reduction <add>, %38, %cst_30 [1] : vector<8x128xf32> to vector<8xf32>
    %40 = vector.shape_cast %39 : vector<8xf32> to vector<8x1xf32>
    %41 = tpu.reciprocal %40 : vector<8x1xf32> -> vector<8x1xf32>
    %42 = vector.broadcast %41 : vector<8x1xf32> to vector<8x128xf32>
    %43 = arith.mulf %38, %42 : vector<8x128xf32>
    %c0_31 = arith.constant 0 : index
    %c0_32 = arith.constant 0 : index
    %44 = vector.load %arg12[%c0_31, %c0_32] : memref<8x128xf32, #tpu.memory_space<vmem>>, vector<8x128xf32>
    tpu.vector_store %arg12[%c0_31, %c0_32], %43 {strides = array<i32>} : memref<8x128xf32, #tpu.memory_space<vmem>>, vector<8x128xf32>,
    return
  }
  func.func @transform_0(%arg0: i32) -> (i32, i32) {
    %c0_i32 = arith.constant 0 : i32
    %c0_i32_0 = arith.constant 0 : i32
    return %arg0, %c0_i32 : i32, i32
  }
  func.func @transform_1(%arg0: i32) -> (i32, i32) {
    %c0_i32 = arith.constant 0 : i32
    %c0_i32_0 = arith.constant 0 : i32
    %c0_i32_1 = arith.constant 0 : i32
    return %c0_i32, %c0_i32_0 : i32, i32
  }
  func.func @transform_2(%arg0: i32) -> (i32, i32) {
    %c0_i32 = arith.constant 0 : i32
    %c0_i32_0 = arith.constant 0 : i32
    %c0_i32_1 = arith.constant 0 : i32
    return %c0_i32, %c0_i32_0 : i32, i32
  }
  func.func @transform_3(%arg0: i32) -> (i32, i32) {
    %c0_i32 = arith.constant 0 : i32
    %c0_i32_0 = arith.constant 0 : i32
    %c0_i32_1 = arith.constant 0 : i32
    return %c0_i32, %c0_i32_0 : i32, i32
  }
  func.func @transform_4(%arg0: i32) -> (i32, i32) {
    %c0_i32 = arith.constant 0 : i32
    %c0_i32_0 = arith.constant 0 : i32
    %c0_i32_1 = arith.constant 0 : i32
    return %c0_i32, %c0_i32_0 : i32, i32
  }
  func.func @transform_5(%arg0: i32) -> (i32, i32) {
    %c0_i32 = arith.constant 0 : i32
    %c0_i32_0 = arith.constant 0 : i32
    %c0_i32_1 = arith.constant 0 : i32
    return %c0_i32, %c0_i32_0 : i32, i32
  }
  func.func @transform_6(%arg0: i32) -> (i32, i32) {
    %c0_i32 = arith.constant 0 : i32
    %c0_i32_0 = arith.constant 0 : i32
    %c0_i32_1 = arith.constant 0 : i32
    return %c0_i32, %c0_i32_0 : i32, i32
  }
  func.func @transform_7(%arg0: i32) -> (i32, i32) {
    %c0_i32 = arith.constant 0 : i32
    %c0_i32_0 = arith.constant 0 : i32
    %c0_i32_1 = arith.constant 0 : i32
    return %c0_i32, %c0_i32_0 : i32, i32
  }
  func.func @transform_8(%arg0: i32) -> (i32, i32) {
    %c0_i32 = arith.constant 0 : i32
    %c0_i32_0 = arith.constant 0 : i32
    %c0_i32_1 = arith.constant 0 : i32
    return %c0_i32, %c0_i32_0 : i32, i32
  }
  func.func @transform_9(%arg0: i32) -> (i32, i32) {
    %c0_i32 = arith.constant 0 : i32
    %c0_i32_0 = arith.constant 0 : i32
    %c0_i32_1 = arith.constant 0 : i32
    return %c0_i32, %c0_i32_0 : i32, i32
  }
  func.func @transform_10(%arg0: i32) -> (i32, i32) {
    %c0_i32 = arith.constant 0 : i32
    %c0_i32_0 = arith.constant 0 : i32
    %c0_i32_1 = arith.constant 0 : i32
    return %c0_i32, %c0_i32_0 : i32, i32
  }
  func.func @transform_11(%arg0: i32) -> (i32, i32) {
    %c0_i32 = arith.constant 0 : i32
    %c0_i32_0 = arith.constant 0 : i32
    return %arg0, %c0_i32 : i32, i32
  }
}

</mosaic_0001>

<llo_original>
// kernel: audionet_forward.1
$region0: #{audionet_forward.1}
  #allocation0 [shape = 'u32[]', space=smem, size = 0x4, offset = 0x4, fixed_abs, tag = 'smem constant byte address 0x4 - core index']
  #allocation1 [shape = 'u32[144,128]{1,0:T(1,128)}', space=vmem, size = 0x12000, scoped, tag = 'internal scratch']
  %s0 = inlined_call_operand.hbm [shape: f32[8,256], index: 0, kind: input, shape index: {}]
  %s1 = inlined_call_operand.hbm [shape: f32[256,1024], index: 1, kind: input, shape index: {}]
  %s2 = inlined_call_operand.hbm [shape: f32[1,1024], index: 2, kind: input, shape index: {}]
  %s3 = inlined_call_operand.hbm [shape: f32[1024,1024], index: 3, kind: input, shape index: {}]
  %s4 = inlined_call_operand.hbm [shape: f32[1,1024], index: 4, kind: input, shape index: {}]
  %s5 = inlined_call_operand.hbm [shape: f32[1024,1024], index: 5, kind: input, shape index: {}]
  %s6 = inlined_call_operand.hbm [shape: f32[1,1024], index: 6, kind: input, shape index: {}]
  %s7 = inlined_call_operand.hbm [shape: f32[1024,512], index: 7, kind: input, shape index: {}]
  %s8 = inlined_call_operand.hbm [shape: f32[1,512], index: 8, kind: input, shape index: {}]
  %s9 = inlined_call_operand.hbm [shape: f32[512,128], index: 9, kind: input, shape index: {}]
  %s10 = inlined_call_operand.hbm [shape: f32[1,128], index: 10, kind: input, shape index: {}]
  %s11 = inlined_call_operand.hbm [shape: f32[8,128], index: 11, kind: output, shape index: {}]
  %s12 = sld [smem:[#allocation0]]
  $region98: #{audionet_forward.1} parent=0
    _
  %s14 = ssub.s32 1, %s12
  %s15 = scalar_select 0, %s14, %s12
  $region1: #{audionet_forward.1} parent=0
    #allocation2 [shape = 'u8[8192]{0}', space=vmem, size = 0x2000, scoped, tag = 'input window, operand 0, single buffered']
    #allocation3 [shape = 's32[1]{0}', space=sflag, size = 0x4, scoped, tag = 'scoped memory for audionet_forward.1']
    #allocation4 [shape = 's32[1]{0}', space=sflag, size = 0x4, scoped, tag = 'scoped memory for audionet_forward.1']
    #allocation5 [shape = 'u8[1048576]{0}', space=vmem, size = 0x100000, scoped, tag = 'input window, operand 1, single buffered']
    #allocation6 [shape = 's32[1]{0}', space=sflag, size = 0x4, scoped, tag = 'scoped memory for audionet_forward.1']
    #allocation7 [shape = 'u8[4096]{0}', space=vmem, size = 0x1000, scoped, tag = 'input window, operand 2, single buffered']
    #allocation8 [shape = 'u8[4194304]{0}', space=vmem, size = 0x400000, scoped, tag = 'input window, operand 3, single buffered']
    #allocation9 [shape = 's32[1]{0}', space=sflag, size = 0x4, scoped, tag = 'scoped memory for audionet_forward.1']
    #allocation10 [shape = 'u8[4096]{0}', space=vmem, size = 0x1000, scoped, tag = 'input window, operand 4, single buffered']
    #allocation11 [shape = 'u8[4194304]{0}', space=vmem, size = 0x400000, scoped, tag = 'input window, operand 5, single buffered']
    #allocation12 [shape = 's32[1]{0}', space=sflag, size = 0x4, scoped, tag = 'scoped memory for audionet_forward.1']
    #allocation13 [shape = 'u8[4096]{0}', space=vmem, size = 0x1000, scoped, tag = 'input window, operand 6, single buffered']
    #allocation14 [shape = 'u8[2097152]{0}', space=vmem, size = 0x200000, scoped, tag = 'input window, operand 7, single buffered']
    #allocation15 [shape = 's32[1]{0}', space=sflag, size = 0x4, scoped, tag = 'scoped memory for audionet_forward.1']
    #allocation16 [shape = 'u8[2048]{0}', space=vmem, size = 0x800, scoped, tag = 'input window, operand 8, single buffered']
    #allocation17 [shape = 'u8[262144]{0}', space=vmem, size = 0x40000, scoped, tag = 'input window, operand 9, single buffered']
    #allocation18 [shape = 's32[1]{0}', space=sflag, size = 0x4, scoped, tag = 'scoped memory for audionet_forward.1']
    #allocation19 [shape = 'u8[512]{0}', space=vmem, size = 0x400, scoped, tag = 'input window, operand 10, single buffered']
    #allocation20 [shape = 'u8[4096]{0}', space=vmem, size = 0x1000, scoped, tag = 'output window, operand 0, single buffered']
    %16 = vsyncpa [#allocation3], 0
    %17 = vsyncpa [#allocation6], 0
    %18 = vsyncpa [#allocation9], 0
    %19 = vsyncpa [#allocation12], 0
    %20 = vsyncpa [#allocation15], 0
    %21 = vsyncpa [#allocation18], 0
    %22 = vsyncpa [#allocation4], 0
    // Predicated region
    $region2: #{audionet_forward.1} parent=1 // pred_check
      _
    $region3: #{audionet_forward.1} parent=1 // pred_check_branch
      %24 = sbr.rel (0) target = $region5
    $region4: #{audionet_forward.1} parent=1 // pred_region
      %s26 = ssub.s32 256, 256
      %27 = vsyncadd [#allocation3], %s26
      %s29 = sshll.u32 [#allocation2], 4
      %s30 = int_to_ptr.vmem [resolvable:$true] %s29
      %32 = dma.hbm_to_vmem [thread:$0]  %s0, 256, %s30, [#allocation3]
    $region5: #{audionet_forward.1} parent=1 // pred_fallthru
      _
    // Predicated region
    $region6: #{audionet_forward.1} parent=1 // pred_check
      _
    $region7: #{audionet_forward.1} parent=1 // pred_check_branch
      %34 = sbr.rel (0) target = $region9
    $region8: #{audionet_forward.1} parent=1 // pred_region
      %s36 = ssub.s32 32768, 32768
      %37 = vsyncadd [#allocation6], %s36
      %s38 = sshll.u32 [#allocation5], 4
      %s39 = int_to_ptr.vmem [resolvable:$true] %s38
      %44 = dma.hbm_to_vmem [thread:$0]  %s1, 32768, %s39, [#allocation6], 1024, 1024, 64
    $region9: #{audionet_forward.1} parent=1 // pred_fallthru
      _
    // Predicated region
    $region10: #{audionet_forward.1} parent=1 // pred_check
      _
    $region11: #{audionet_forward.1} parent=1 // pred_check_branch
      %46 = sbr.rel (0) target = $region13
    $region12: #{audionet_forward.1} parent=1 // pred_region
      %s48 = ssub.s32 128, 128
      %49 = vsyncadd [#allocation6], %s48
      %s51 = sshll.u32 [#allocation7], 4
      %s52 = int_to_ptr.vmem [resolvable:$true] %s51
      %54 = dma.hbm_to_vmem [thread:$0]  %s2, 128, %s52, [#allocation6]
    $region13: #{audionet_forward.1} parent=1 // pred_fallthru
      _
    // Predicated region
    $region14: #{audionet_forward.1} parent=1 // pred_check
      _
    $region15: #{audionet_forward.1} parent=1 // pred_check_branch
      %56 = sbr.rel (0) target = $region17
    $region16: #{audionet_forward.1} parent=1 // pred_region
      %s58 = ssub.s32 131072, 131072
      %59 = vsyncadd [#allocation9], %s58
      %s60 = sshll.u32 [#allocation8], 4
      %s61 = int_to_ptr.vmem [resolvable:$true] %s60
      %66 = dma.hbm_to_vmem [thread:$0]  %s3, 131072, %s61, [#allocation9], 1024, 1024, 64
    $region17: #{audionet_forward.1} parent=1 // pred_fallthru
      _
    // Predicated region
    $region18: #{audionet_forward.1} parent=1 // pred_check
      _
    $region19: #{audionet_forward.1} parent=1 // pred_check_branch
      %68 = sbr.rel (0) target = $region21
    $region20: #{audionet_forward.1} parent=1 // pred_region
      %s70 = ssub.s32 128, 128
      %71 = vsyncadd [#allocation9], %s70
      %s73 = sshll.u32 [#allocation10], 4
      %s74 = int_to_ptr.vmem [resolvable:$true] %s73
      %76 = dma.hbm_to_vmem [thread:$0]  %s4, 128, %s74, [#allocation9]
    $region21: #{audionet_forward.1} parent=1 // pred_fallthru
      _
    // Predicated region
    $region22: #{audionet_forward.1} parent=1 // pred_check
      _
    $region23: #{audionet_forward.1} parent=1 // pred_check_branch
      %78 = sbr.rel (0) target = $region25
    $region24: #{audionet_forward.1} parent=1 // pred_region
      %s80 = ssub.s32 131072, 131072
      %81 = vsyncadd [#allocation12], %s80
      %s82 = sshll.u32 [#allocation11], 4
      %s83 = int_to_ptr.vmem [resolvable:$true] %s82
      %88 = dma.hbm_to_vmem [thread:$0]  %s5, 131072, %s83, [#allocation12], 1024, 1024, 64
    $region25: #{audionet_forward.1} parent=1 // pred_fallthru
      _
    // Predicated region
    $region26: #{audionet_forward.1} parent=1 // pred_check
      _
    $region27: #{audionet_forward.1} parent=1 // pred_check_branch
      %90 = sbr.rel (0) target = $region29
    $region28: #{audionet_forward.1} parent=1 // pred_region
      %s92 = ssub.s32 128, 128
      %93 = vsyncadd [#allocation12], %s92
      %s95 = sshll.u32 [#allocation13], 4
      %s96 = int_to_ptr.vmem [resolvable:$true] %s95
      %98 = dma.hbm_to_vmem [thread:$0]  %s6, 128, %s96, [#allocation12]
    $region29: #{audionet_forward.1} parent=1 // pred_fallthru
      _
    // Predicated region
    $region30: #{audionet_forward.1} parent=1 // pred_check
      _
    $region31: #{audionet_forward.1} parent=1 // pred_check_branch
      %100 = sbr.rel (0) target = $region33
    $region32: #{audionet_forward.1} parent=1 // pred_region
      %s102 = ssub.s32 65536, 65536
      %103 = vsyncadd [#allocation15], %s102
      %s104 = sshll.u32 [#allocation14], 4
      %s105 = int_to_ptr.vmem [resolvable:$true] %s104
      %110 = dma.hbm_to_vmem [thread:$0]  %s7, 65536, %s105, [#allocation15], 512, 512, 32
    $region33: #{audionet_forward.1} parent=1 // pred_fallthru
      _
    // Predicated region
    $region34: #{audionet_forward.1} parent=1 // pred_check
      _
    $region35: #{audionet_forward.1} parent=1 // pred_check_branch
      %112 = sbr.rel (0) target = $region37
    $region36: #{audionet_forward.1} parent=1 // pred_region
      %s114 = ssub.s32 64, 64
      %115 = vsyncadd [#allocation15], %s114
      %s117 = sshll.u32 [#allocation16], 4
      %s118 = int_to_ptr.vmem [resolvable:$true] %s117
      %120 = dma.hbm_to_vmem [thread:$0]  %s8, 64, %s118, [#allocation15]
    $region37: #{audionet_forward.1} parent=1 // pred_fallthru
      _
    // Predicated region
    $region38: #{audionet_forward.1} parent=1 // pred_check
      _
    $region39: #{audionet_forward.1} parent=1 // pred_check_branch
      %122 = sbr.rel (0) target = $region41
    $region40: #{audionet_forward.1} parent=1 // pred_region
      %s124 = ssub.s32 8192, 8192
      %125 = vsyncadd [#allocation18], %s124
      %s126 = sshll.u32 [#allocation17], 4
      %s127 = int_to_ptr.vmem [resolvable:$true] %s126
      %132 = dma.hbm_to_vmem [thread:$0]  %s9, 8192, %s127, [#allocation18], 128, 128, 8
    $region41: #{audionet_forward.1} parent=1 // pred_fallthru
      _
    // Predicated region
    $region42: #{audionet_forward.1} parent=1 // pred_check
      _
    $region43: #{audionet_forward.1} parent=1 // pred_check_branch
      %134 = sbr.rel (0) target = $region45
    $region44: #{audionet_forward.1} parent=1 // pred_region
      %s136 = ssub.s32 16, 16
      %137 = vsyncadd [#allocation18], %s136
      %s139 = sshll.u32 [#allocation19], 4
      %s140 = int_to_ptr.vmem [resolvable:$true] %s139
      %142 = dma.hbm_to_vmem [thread:$0]  %s10, 16, %s140, [#allocation18]
    $region45: #{audionet_forward.1} parent=1 // pred_fallthru
      _
    // Predicated region
    $region46: #{audionet_forward.1} parent=1 // pred_check
      _
    $region47: #{audionet_forward.1} parent=1 // pred_check_branch
      %144 = sbr.rel (0) target = $region49
    $region48: #{audionet_forward.1} parent=1 // pred_region
      %145 = dma.done [#allocation3], 256
    $region49: #{audionet_forward.1} parent=1 // pred_fallthru
      _
    // Predicated region
    $region50: #{audionet_forward.1} parent=1 // pred_check
      _
    $region51: #{audionet_forward.1} parent=1 // pred_check_branch
      %147 = sbr.rel (0) target = $region53
    $region52: #{audionet_forward.1} parent=1 // pred_region
      %148 = dma.done [#allocation6], 32768
    $region53: #{audionet_forward.1} parent=1 // pred_fallthru
      _
    // Predicated region
    $region54: #{audionet_forward.1} parent=1 // pred_check
      _
    $region55: #{audionet_forward.1} parent=1 // pred_check_branch
      %150 = sbr.rel (0) target = $region57
    $region56: #{audionet_forward.1} parent=1 // pred_region
      %151 = dma.done [#allocation6], 128
    $region57: #{audionet_forward.1} parent=1 // pred_fallthru
      _
    // Predicated region
    $region58: #{audionet_forward.1} parent=1 // pred_check
      _
    $region59: #{audionet_forward.1} parent=1 // pred_check_branch
      %153 = sbr.rel (0) target = $region61
    $region60: #{audionet_forward.1} parent=1 // pred_region
      %154 = dma.done [#allocation9], 131072
    $region61: #{audionet_forward.1} parent=1 // pred_fallthru
      _
    // Predicated region
    $region62: #{audionet_forward.1} parent=1 // pred_check
      _
    $region63: #{audionet_forward.1} parent=1 // pred_check_branch
      %156 = sbr.rel (0) target = $region65
    $region64: #{audionet_forward.1} parent=1 // pred_region
      %157 = dma.done [#allocation9], 128
    $region65: #{audionet_forward.1} parent=1 // pred_fallthru
      _
    // Predicated region
    $region66: #{audionet_forward.1} parent=1 // pred_check
      _
    $region67: #{audionet_forward.1} parent=1 // pred_check_branch
      %159 = sbr.rel (0) target = $region69
    $region68: #{audionet_forward.1} parent=1 // pred_region
      %160 = dma.done [#allocation12], 131072
    $region69: #{audionet_forward.1} parent=1 // pred_fallthru
      _
    // Predicated region
    $region70: #{audionet_forward.1} parent=1 // pred_check
      _
    $region71: #{audionet_forward.1} parent=1 // pred_check_branch
      %162 = sbr.rel (0) target = $region73
    $region72: #{audionet_forward.1} parent=1 // pred_region
      %163 = dma.done [#allocation12], 128
    $region73: #{audionet_forward.1} parent=1 // pred_fallthru
      _
    // Predicated region
    $region74: #{audionet_forward.1} parent=1 // pred_check
      _
    $region75: #{audionet_forward.1} parent=1 // pred_check_branch
      %165 = sbr.rel (0) target = $region77
    $region76: #{audionet_forward.1} parent=1 // pred_region
      %166 = dma.done [#allocation15], 65536
    $region77: #{audionet_forward.1} parent=1 // pred_fallthru
      _
    // Predicated region
    $region78: #{audionet_forward.1} parent=1 // pred_check
      _
    $region79: #{audionet_forward.1} parent=1 // pred_check_branch
      %168 = sbr.rel (0) target = $region81
    $region80: #{audionet_forward.1} parent=1 // pred_region
      %169 = dma.done [#allocation15], 64
    $region81: #{audionet_forward.1} parent=1 // pred_fallthru
      _
    // Predicated region
    $region82: #{audionet_forward.1} parent=1 // pred_check
      _
    $region83: #{audionet_forward.1} parent=1 // pred_check_branch
      %171 = sbr.rel (0) target = $region85
    $region84: #{audionet_forward.1} parent=1 // pred_region
      %172 = dma.done [#allocation18], 8192
    $region85: #{audionet_forward.1} parent=1 // pred_fallthru
      _
    // Predicated region
    $region86: #{audionet_forward.1} parent=1 // pred_check
      _
    $region87: #{audionet_forward.1} parent=1 // pred_check_branch
      %174 = sbr.rel (0) target = $region89
    $region88: #{audionet_forward.1} parent=1 // pred_region
      %175 = dma.done [#allocation18], 16
    $region89: #{audionet_forward.1} parent=1 // pred_fallthru
      _
    %v176 = vld [vmem:[#allocation2] sm:$0xff]
    %v177 = vld [vmem:[#allocation2 + $0x8] sm:$0xff]
    %v178 = vld [vmem:[#allocation5] sm:$0xff]
    %v179 = vld [vmem:[#allocation5 + $0x8] sm:$0xff]
    %v180 = vld [vmem:[#allocation5 + $0x10] sm:$0xff]
    %v181 = vld [vmem:[#allocation5 + $0x18] sm:$0xff]
    %v182 = vld [vmem:[#allocation5 + $0x20] sm:$0xff]
    %v183 = vld [vmem:[#allocation5 + $0x28] sm:$0xff]
    %v184 = vld [vmem:[#allocation5 + $0x30] sm:$0xff]
    %v185 = vld [vmem:[#allocation5 + $0x38] sm:$0xff]
    %v186 = vld [vmem:[#allocation5 + $0x40] sm:$0xff]
    %v187 = vld [vmem:[#allocation5 + $0x48] sm:$0xff]
    %v188 = vld [vmem:[#allocation5 + $0x50] sm:$0xff]
    %v189 = vld [vmem:[#allocation5 + $0x58] sm:$0xff]
    %v190 = vld [vmem:[#allocation5 + $0x60] sm:$0xff]
    %v191 = vld [vmem:[#allocation5 + $0x68] sm:$0xff]
    %v192 = vld [vmem:[#allocation5 + $0x70] sm:$0xff]
    %v193 = vld [vmem:[#allocation5 + $0x78] sm:$0xff]
    %v194 = vld [vmem:[#allocation5 + $0x80] sm:$0xff]
    %v195 = vld [vmem:[#allocation5 + $0x88] sm:$0xff]
    %v196 = vld [vmem:[#allocation5 + $0x90] sm:$0xff]
    %v197 = vld [vmem:[#allocation5 + $0x98] sm:$0xff]
    %v198 = vld [vmem:[#allocation5 + $0xa0] sm:$0xff]
    %v199 = vld [vmem:[#allocation5 + $0xa8] sm:$0xff]
    %v200 = vld [vmem:[#allocation5 + $0xb0] sm:$0xff]
    %v201 = vld [vmem:[#allocation5 + $0xb8] sm:$0xff]
    %v202 = vld [vmem:[#allocation5 + $0xc0] sm:$0xff]
    %v203 = vld [vmem:[#allocation5 + $0xc8] sm:$0xff]
    %v204 = vld [vmem:[#allocation5 + $0xd0] sm:$0xff]
    %v205 = vld [vmem:[#allocation5 + $0xd8] sm:$0xff]
    %v206 = vld [vmem:[#allocation5 + $0xe0] sm:$0xff]
    %v207 = vld [vmem:[#allocation5 + $0xe8] sm:$0xff]
    %v208 = vld [vmem:[#allocation5 + $0xf0] sm:$0xff]
    %v209 = vld [vmem:[#allocation5 + $0xf8] sm:$0xff]
    %v210 = vld [vmem:[#allocation5 + $0x100] sm:$0xff]
    %v211 = vld [vmem:[#allocation5 + $0x108] sm:$0xff]
    %v212 = vld [vmem:[#allocation5 + $0x110] sm:$0xff]
    %v213 = vld [vmem:[#allocation5 + $0x118] sm:$0xff]
    %v214 = vld [vmem:[#allocation5 + $0x120] sm:$0xff]
    %v215 = vld [vmem:[#allocation5 + $0x128] sm:$0xff]
    %v216 = vld [vmem:[#allocation5 + $0x130] sm:$0xff]
    %v217 = vld [vmem:[#allocation5 + $0x138] sm:$0xff]
    %v218 = vld [vmem:[#allocation5 + $0x140] sm:$0xff]
    %v219 = vld [vmem:[#allocation5 + $0x148] sm:$0xff]
    %v220 = vld [vmem:[#allocation5 + $0x150] sm:$0xff]
    %v221 = vld [vmem:[#allocation5 + $0x158] sm:$0xff]
    %v222 = vld [vmem:[#allocation5 + $0x160] sm:$0xff]
    %v223 = vld [vmem:[#allocation5 + $0x168] sm:$0xff]
    %v224 = vld [vmem:[#allocation5 + $0x170] sm:$0xff]
    %v225 = vld [vmem:[#allocation5 + $0x178] sm:$0xff]
    %v226 = vld [vmem:[#allocation5 + $0x180] sm:$0xff]
    %v227 = vld [vmem:[#allocation5 + $0x188] sm:$0xff]
    %v228 = vld [vmem:[#allocation5 + $0x190] sm:$0xff]
    %v229 = vld [vmem:[#allocation5 + $0x198] sm:$0xff]
    %v230 = vld [vmem:[#allocation5 + $0x1a0] sm:$0xff]
    %v231 = vld [vmem:[#allocation5 + $0x1a8] sm:$0xff]
    %v232 = vld [vmem:[#allocation5 + $0x1b0] sm:$0xff]
    %v233 = vld [vmem:[#allocation5 + $0x1b8] sm:$0xff]
    %v234 = vld [vmem:[#allocation5 + $0x1c0] sm:$0xff]
    %v235 = vld [vmem:[#allocation5 + $0x1c8] sm:$0xff]
    %v236 = vld [vmem:[#allocation5 + $0x1d0] sm:$0xff]
    %v237 = vld [vmem:[#allocation5 + $0x1d8] sm:$0xff]
    %v238 = vld [vmem:[#allocation5 + $0x1e0] sm:$0xff]
    %v239 = vld [vmem:[#allocation5 + $0x1e8] sm:$0xff]
    %v240 = vld [vmem:[#allocation5 + $0x1f0] sm:$0xff]
    %v241 = vld [vmem:[#allocation5 + $0x1f8] sm:$0xff]
    %v242 = vld [vmem:[#allocation5 + $0x200] sm:$0xff]
    %v243 = vld [vmem:[#allocation5 + $0x208] sm:$0xff]
    %v244 = vld [vmem:[#allocation5 + $0x210] sm:$0xff]
    %v245 = vld [vmem:[#allocation5 + $0x218] sm:$0xff]
    %v246 = vld [vmem:[#allocation5 + $0x220] sm:$0xff]
    %v247 = vld [vmem:[#allocation5 + $0x228] sm:$0xff]
    %v248 = vld [vmem:[#allocation5 + $0x230] sm:$0xff]
    %v249 = vld [vmem:[#allocation5 + $0x238] sm:$0xff]
    %v250 = vld [vmem:[#allocation5 + $0x240] sm:$0xff]
    %v251 = vld [vmem:[#allocation5 + $0x248] sm:$0xff]
    %v252 = vld [vmem:[#allocation5 + $0x250] sm:$0xff]
    %v253 = vld [vmem:[#allocation5 + $0x258] sm:$0xff]
    %v254 = vld [vmem:[#allocation5 + $0x260] sm:$0xff]
    %v255 = vld [vmem:[#allocation5 + $0x268] sm:$0xff]
    %v256 = vld [vmem:[#allocation5 + $0x270] sm:$0xff]
    %v257 = vld [vmem:[#allocation5 + $0x278] sm:$0xff]
    %v258 = vld [vmem:[#allocation5 + $0x280] sm:$0xff]
    %v259 = vld [vmem:[#allocation5 + $0x288] sm:$0xff]
    %v260 = vld [vmem:[#allocation5 + $0x290] sm:$0xff]
    %v261 = vld [vmem:[#allocation5 + $0x298] sm:$0xff]
    %v262 = vld [vmem:[#allocation5 + $0x2a0] sm:$0xff]
    %v263 = vld [vmem:[#allocation5 + $0x2a8] sm:$0xff]
    %v264 = vld [vmem:[#allocation5 + $0x2b0] sm:$0xff]
    %v265 = vld [vmem:[#allocation5 + $0x2b8] sm:$0xff]
    %v266 = vld [vmem:[#allocation5 + $0x2c0] sm:$0xff]
    %v267 = vld [vmem:[#allocation5 + $0x2c8] sm:$0xff]
    %v268 = vld [vmem:[#allocation5 + $0x2d0] sm:$0xff]
    %v269 = vld [vmem:[#allocation5 + $0x2d8] sm:$0xff]
    %v270 = vld [vmem:[#allocation5 + $0x2e0] sm:$0xff]
    %v271 = vld [vmem:[#allocation5 + $0x2e8] sm:$0xff]
    %v272 = vld [vmem:[#allocation5 + $0x2f0] sm:$0xff]
    %v273 = vld [vmem:[#allocation5 + $0x2f8] sm:$0xff]
    %v274 = vld [vmem:[#allocation5 + $0x300] sm:$0xff]
    %v275 = vld [vmem:[#allocation5 + $0x308] sm:$0xff]
    %v276 = vld [vmem:[#allocation5 + $0x310] sm:$0xff]
    %v277 = vld [vmem:[#allocation5 + $0x318] sm:$0xff]
    %v278 = vld [vmem:[#allocation5 + $0x320] sm:$0xff]
    %v279 = vld [vmem:[#allocation5 + $0x328] sm:$0xff]
    %v280 = vld [vmem:[#allocation5 + $0x330] sm:$0xff]
    %v281 = vld [vmem:[#allocation5 + $0x338] sm:$0xff]
    %v282 = vld [vmem:[#allocation5 + $0x340] sm:$0xff]
    %v283 = vld [vmem:[#allocation5 + $0x348] sm:$0xff]
    %v284 = vld [vmem:[#allocation5 + $0x350] sm:$0xff]
    %v285 = vld [vmem:[#allocation5 + $0x358] sm:$0xff]
    %v286 = vld [vmem:[#allocation5 + $0x360] sm:$0xff]
    %v287 = vld [vmem:[#allocation5 + $0x368] sm:$0xff]
    %v288 = vld [vmem:[#allocation5 + $0x370] sm:$0xff]
    %v289 = vld [vmem:[#allocation5 + $0x378] sm:$0xff]
    %v290 = vld [vmem:[#allocation5 + $0x380] sm:$0xff]
    %v291 = vld [vmem:[#allocation5 + $0x388] sm:$0xff]
    %v292 = vld [vmem:[#allocation5 + $0x390] sm:$0xff]
    %v293 = vld [vmem:[#allocation5 + $0x398] sm:$0xff]
    %v294 = vld [vmem:[#allocation5 + $0x3a0] sm:$0xff]
    %v295 = vld [vmem:[#allocation5 + $0x3a8] sm:$0xff]
    %v296 = vld [vmem:[#allocation5 + $0x3b0] sm:$0xff]
    %v297 = vld [vmem:[#allocation5 + $0x3b8] sm:$0xff]
    %v298 = vld [vmem:[#allocation5 + $0x3c0] sm:$0xff]
    %v299 = vld [vmem:[#allocation5 + $0x3c8] sm:$0xff]
    %v300 = vld [vmem:[#allocation5 + $0x3d0] sm:$0xff]
    %v301 = vld [vmem:[#allocation5 + $0x3d8] sm:$0xff]
    %v302 = vld [vmem:[#allocation5 + $0x3e0] sm:$0xff]
    %v303 = vld [vmem:[#allocation5 + $0x3e8] sm:$0xff]
    %v304 = vld [vmem:[#allocation5 + $0x3f0] sm:$0xff]
    %v305 = vld [vmem:[#allocation5 + $0x3f8] sm:$0xff]
    %v306 = vld [vmem:[#allocation5 + $0x400] sm:$0xff]
    %v307 = vld [vmem:[#allocation5 + $0x408] sm:$0xff]
    %v308 = vld [vmem:[#allocation5 + $0x410] sm:$0xff]
    %v309 = vld [vmem:[#allocation5 + $0x418] sm:$0xff]
    %v310 = vld [vmem:[#allocation5 + $0x420] sm:$0xff]
    %v311 = vld [vmem:[#allocation5 + $0x428] sm:$0xff]
    %v312 = vld [vmem:[#allocation5 + $0x430] sm:$0xff]
    %v313 = vld [vmem:[#allocation5 + $0x438] sm:$0xff]
    %v314 = vld [vmem:[#allocation5 + $0x440] sm:$0xff]
    %v315 = vld [vmem:[#allocation5 + $0x448] sm:$0xff]
    %v316 = vld [vmem:[#allocation5 + $0x450] sm:$0xff]
    %v317 = vld [vmem:[#allocation5 + $0x458] sm:$0xff]
    %v318 = vld [vmem:[#allocation5 + $0x460] sm:$0xff]
    %v319 = vld [vmem:[#allocation5 + $0x468] sm:$0xff]
    %v320 = vld [vmem:[#allocation5 + $0x470] sm:$0xff]
    %v321 = vld [vmem:[#allocation5 + $0x478] sm:$0xff]
    %v322 = vld [vmem:[#allocation5 + $0x480] sm:$0xff]
    %v323 = vld [vmem:[#allocation5 + $0x488] sm:$0xff]
    %v324 = vld [vmem:[#allocation5 + $0x490] sm:$0xff]
    %v325 = vld [vmem:[#allocation5 + $0x498] sm:$0xff]
    %v326 = vld [vmem:[#allocation5 + $0x4a0] sm:$0xff]
    %v327 = vld [vmem:[#allocation5 + $0x4a8] sm:$0xff]
    %v328 = vld [vmem:[#allocation5 + $0x4b0] sm:$0xff]
    %v329 = vld [vmem:[#allocation5 + $0x4b8] sm:$0xff]
    %v330 = vld [vmem:[#allocation5 + $0x4c0] sm:$0xff]
    %v331 = vld [vmem:[#allocation5 + $0x4c8] sm:$0xff]
    %v332 = vld [vmem:[#allocation5 + $0x4d0] sm:$0xff]
    %v333 = vld [vmem:[#allocation5 + $0x4d8] sm:$0xff]
    %v334 = vld [vmem:[#allocation5 + $0x4e0] sm:$0xff]
    %v335 = vld [vmem:[#allocation5 + $0x4e8] sm:$0xff]
    %v336 = vld [vmem:[#allocation5 + $0x4f0] sm:$0xff]
    %v337 = vld [vmem:[#allocation5 + $0x4f8] sm:$0xff]
    %v338 = vld [vmem:[#allocation5 + $0x500] sm:$0xff]
    %v339 = vld [vmem:[#allocation5 + $0x508] sm:$0xff]
    %v340 = vld [vmem:[#allocation5 + $0x510] sm:$0xff]
    %v341 = vld [vmem:[#allocation5 + $0x518] sm:$0xff]
    %v342 = vld [vmem:[#allocation5 + $0x520] sm:$0xff]
    %v343 = vld [vmem:[#allocation5 + $0x528] sm:$0xff]
    %v344 = vld [vmem:[#allocation5 + $0x530] sm:$0xff]
    %v345 = vld [vmem:[#allocation5 + $0x538] sm:$0xff]
    %v346 = vld [vmem:[#allocation5 + $0x540] sm:$0xff]
    %v347 = vld [vmem:[#allocation5 + $0x548] sm:$0xff]
    %v348 = vld [vmem:[#allocation5 + $0x550] sm:$0xff]
    %v349 = vld [vmem:[#allocation5 + $0x558] sm:$0xff]
    %v350 = vld [vmem:[#allocation5 + $0x560] sm:$0xff]
    %v351 = vld [vmem:[#allocation5 + $0x568] sm:$0xff]
    %v352 = vld [vmem:[#allocation5 + $0x570] sm:$0xff]
    %v353 = vld [vmem:[#allocation5 + $0x578] sm:$0xff]
    %v354 = vld [vmem:[#allocation5 + $0x580] sm:$0xff]
    %v355 = vld [vmem:[#allocation5 + $0x588] sm:$0xff]
    %v356 = vld [vmem:[#allocation5 + $0x590] sm:$0xff]
    %v357 = vld [vmem:[#allocation5 + $0x598] sm:$0xff]
    %v358 = vld [vmem:[#allocation5 + $0x5a0] sm:$0xff]
    %v359 = vld [vmem:[#allocation5 + $0x5a8] sm:$0xff]
    %v360 = vld [vmem:[#allocation5 + $0x5b0] sm:$0xff]
    %v361 = vld [vmem:[#allocation5 + $0x5b8] sm:$0xff]
    %v362 = vld [vmem:[#allocation5 + $0x5c0] sm:$0xff]
    %v363 = vld [vmem:[#allocation5 + $0x5c8] sm:$0xff]
    %v364 = vld [vmem:[#allocation5 + $0x5d0] sm:$0xff]
    %v365 = vld [vmem:[#allocation5 + $0x5d8] sm:$0xff]
    %v366 = vld [vmem:[#allocation5 + $0x5e0] sm:$0xff]
    %v367 = vld [vmem:[#allocation5 + $0x5e8] sm:$0xff]
    %v368 = vld [vmem:[#allocation5 + $0x5f0] sm:$0xff]
    %v369 = vld [vmem:[#allocation5 + $0x5f8] sm:$0xff]
    %v370 = vld [vmem:[#allocation5 + $0x600] sm:$0xff]
    %v371 = vld [vmem:[#allocation5 + $0x608] sm:$0xff]
    %v372 = vld [vmem:[#allocation5 + $0x610] sm:$0xff]
    %v373 = vld [vmem:[#allocation5 + $0x618] sm:$0xff]
    %v374 = vld [vmem:[#allocation5 + $0x620] sm:$0xff]
    %v375 = vld [vmem:[#allocation5 + $0x628] sm:$0xff]
    %v376 = vld [vmem:[#allocation5 + $0x630] sm:$0xff]
    %v377 = vld [vmem:[#allocation5 + $0x638] sm:$0xff]
    %v378 = vld [vmem:[#allocation5 + $0x640] sm:$0xff]
    %v379 = vld [vmem:[#allocation5 + $0x648] sm:$0xff]
    %v380 = vld [vmem:[#allocation5 + $0x650] sm:$0xff]
    %v381 = vld [vmem:[#allocation5 + $0x658] sm:$0xff]
    %v382 = vld [vmem:[#allocation5 + $0x660] sm:$0xff]
    %v383 = vld [vmem:[#allocation5 + $0x668] sm:$0xff]
    %v384 = vld [vmem:[#allocation5 + $0x670] sm:$0xff]
    %v385 = vld [vmem:[#allocation5 + $0x678] sm:$0xff]
    %v386 = vld [vmem:[#allocation5 + $0x680] sm:$0xff]
    %v387 = vld [vmem:[#allocation5 + $0x688] sm:$0xff]
    %v388 = vld [vmem:[#allocation5 + $0x690] sm:$0xff]
    %v389 = vld [vmem:[#allocation5 + $0x698] sm:$0xff]
    %v390 = vld [vmem:[#allocation5 + $0x6a0] sm:$0xff]
    %v391 = vld [vmem:[#allocation5 + $0x6a8] sm:$0xff]
    %v392 = vld [vmem:[#allocation5 + $0x6b0] sm:$0xff]
    %v393 = vld [vmem:[#allocation5 + $0x6b8] sm:$0xff]
    %v394 = vld [vmem:[#allocation5 + $0x6c0] sm:$0xff]
    %v395 = vld [vmem:[#allocation5 + $0x6c8] sm:$0xff]
    %v396 = vld [vmem:[#allocation5 + $0x6d0] sm:$0xff]
    %v397 = vld [vmem:[#allocation5 + $0x6d8] sm:$0xff]
    %v398 = vld [vmem:[#allocation5 + $0x6e0] sm:$0xff]
    %v399 = vld [vmem:[#allocation5 + $0x6e8] sm:$0xff]
    %v400 = vld [vmem:[#allocation5 + $0x6f0] sm:$0xff]
    %v401 = vld [vmem:[#allocation5 + $0x6f8] sm:$0xff]
    %v402 = vld [vmem:[#allocation5 + $0x700] sm:$0xff]
    %v403 = vld [vmem:[#allocation5 + $0x708] sm:$0xff]
    %v404 = vld [vmem:[#allocation5 + $0x710] sm:$0xff]
    %v405 = vld [vmem:[#allocation5 + $0x718] sm:$0xff]
    %v406 = vld [vmem:[#allocation5 + $0x720] sm:$0xff]
    %v407 = vld [vmem:[#allocation5 + $0x728] sm:$0xff]
    %v408 = vld [vmem:[#allocation5 + $0x730] sm:$0xff]
    %v409 = vld [vmem:[#allocation5 + $0x738] sm:$0xff]
    %v410 = vld [vmem:[#allocation5 + $0x740] sm:$0xff]
    %v411 = vld [vmem:[#allocation5 + $0x748] sm:$0xff]
    %v412 = vld [vmem:[#allocation5 + $0x750] sm:$0xff]
    %v413 = vld [vmem:[#allocation5 + $0x758] sm:$0xff]
    %v414 = vld [vmem:[#allocation5 + $0x760] sm:$0xff]
    %v415 = vld [vmem:[#allocation5 + $0x768] sm:$0xff]
    %v416 = vld [vmem:[#allocation5 + $0x770] sm:$0xff]
    %v417 = vld [vmem:[#allocation5 + $0x778] sm:$0xff]
    %v418 = vld [vmem:[#allocation5 + $0x780] sm:$0xff]
    %v419 = vld [vmem:[#allocation5 + $0x788] sm:$0xff]
    %v420 = vld [vmem:[#allocation5 + $0x790] sm:$0xff]
    %v421 = vld [vmem:[#allocation5 + $0x798] sm:$0xff]
    %v422 = vld [vmem:[#allocation5 + $0x7a0] sm:$0xff]
    %v423 = vld [vmem:[#allocation5 + $0x7a8] sm:$0xff]
    %v424 = vld [vmem:[#allocation5 + $0x7b0] sm:$0xff]
    %v425 = vld [vmem:[#allocation5 + $0x7b8] sm:$0xff]
    %v426 = vld [vmem:[#allocation5 + $0x7c0] sm:$0xff]
    %v427 = vld [vmem:[#allocation5 + $0x7c8] sm:$0xff]
    %v428 = vld [vmem:[#allocation5 + $0x7d0] sm:$0xff]
    %v429 = vld [vmem:[#allocation5 + $0x7d8] sm:$0xff]
    %v430 = vld [vmem:[#allocation5 + $0x7e0] sm:$0xff]
    %v431 = vld [vmem:[#allocation5 + $0x7e8] sm:$0xff]
    %v432 = vld [vmem:[#allocation5 + $0x7f0] sm:$0xff]
    %v433 = vld [vmem:[#allocation5 + $0x7f8] sm:$0xff]
    %v434 = vld [vmem:[#allocation7] sm:$0xff]
    %v436 = vlaneseq
    %v437 = vshrl.u32 %v436, 7
    %v438 = vsub.s32 0, %v437
    %v439 = vrot.slane %v434, %v438
    %v440 = vlaneseq
    %v441 = vshrl.u32 %v440, 7
    %v442 = vsub.s32 1, %v441
    %v443 = vrot.slane %v434, %v442
    %v444 = vlaneseq
    %v445 = vshrl.u32 %v444, 7
    %v446 = vsub.s32 2, %v445
    %v447 = vrot.slane %v434, %v446
    %v448 = vlaneseq
    %v449 = vshrl.u32 %v448, 7
    %v450 = vsub.s32 3, %v449
    %v451 = vrot.slane %v434, %v450
    %v452 = vlaneseq
    %v453 = vshrl.u32 %v452, 7
    %v454 = vsub.s32 4, %v453
    %v455 = vrot.slane %v434, %v454
    %v456 = vlaneseq
    %v457 = vshrl.u32 %v456, 7
    %v458 = vsub.s32 5, %v457
    %v459 = vrot.slane %v434, %v458
    %v460 = vlaneseq
    %v461 = vshrl.u32 %v460, 7
    %v462 = vsub.s32 6, %v461
    %v463 = vrot.slane %v434, %v462
    %v464 = vlaneseq
    %v465 = vshrl.u32 %v464, 7
    %v466 = vsub.s32 7, %v465
    %v467 = vrot.slane %v434, %v466
    %476 = vmatprep.subr.mxu0 %v179
    %477 = vmatpush1.msra.mxu0 %v178
    %478 = vmatprep.subr.mxu0 %v187
    %479 = vmatpush1.msra.mxu0 %v186
    %480 = vmatprep.subr.mxu0 %v195
    %481 = vmatpush1.msra.mxu0 %v194
    %482 = vmatprep.subr.mxu0 %v203
    %483 = vmatpush1.msra.mxu0 %v202
    %484 = vmatprep.subr.mxu0 %v211
    %485 = vmatpush1.msra.mxu0 %v210
    %486 = vmatprep.subr.mxu0 %v219
    %487 = vmatpush1.msra.mxu0 %v218
    %488 = vmatprep.subr.mxu0 %v227
    %489 = vmatpush1.msra.mxu0 %v226
    %490 = vmatprep.subr.mxu0 %v235
    %491 = vmatpush1.msra.mxu0 %v234
    %492 = vmatprep.subr.mxu0 %v243
    %493 = vmatpush1.msra.mxu0 %v242
    %494 = vmatprep.subr.mxu0 %v251
    %495 = vmatpush1.msra.mxu0 %v250
    %496 = vmatprep.subr.mxu0 %v259
    %497 = vmatpush1.msra.mxu0 %v258
    %498 = vmatprep.subr.mxu0 %v267
    %499 = vmatpush1.msra.mxu0 %v266
    %500 = vmatprep.subr.mxu0 %v275
    %501 = vmatpush1.msra.mxu0 %v274
    %502 = vmatprep.subr.mxu0 %v283
    %503 = vmatpush1.msra.mxu0 %v282
    %504 = vmatprep.subr.mxu0 %v291
    %505 = vmatpush1.msra.mxu0 %v290
    %506 = vmatprep.subr.mxu0 %v299
    %507 = vmatpush1.msra.mxu0 %v298
    %508 = vmatprep.subr.mxu0 %v307
    %509 = vmatpush1.msra.mxu0 %v306
    %510 = vmatprep.subr.mxu0 %v315
    %511 = vmatpush1.msra.mxu0 %v314
    %512 = vmatprep.subr.mxu0 %v323
    %513 = vmatpush1.msra.mxu0 %v322
    %514 = vmatprep.subr.mxu0 %v331
    %515 = vmatpush1.msra.mxu0 %v330
    %516 = vmatprep.subr.mxu0 %v339
    %517 = vmatpush1.msra.mxu0 %v338
    %518 = vmatprep.subr.mxu0 %v347
    %519 = vmatpush1.msra.mxu0 %v346
    %520 = vmatprep.subr.mxu0 %v355
    %521 = vmatpush1.msra.mxu0 %v354
    %522 = vmatprep.subr.mxu0 %v363
    %523 = vmatpush1.msra.mxu0 %v362
    %524 = vmatprep.subr.mxu0 %v371
    %525 = vmatpush1.msra.mxu0 %v370
    %526 = vmatprep.subr.mxu0 %v379
    %527 = vmatpush1.msra.mxu0 %v378
    %528 = vmatprep.subr.mxu0 %v387
    %529 = vmatpush1.msra.mxu0 %v386
    %530 = vmatprep.subr.mxu0 %v395
    %531 = vmatpush1.msra.mxu0 %v394
    %532 = vmatprep.subr.mxu0 %v403
    %533 = vmatpush1.msra.mxu0 %v402
    %534 = vmatprep.subr.mxu0 %v411
    %535 = vmatpush1.msra.mxu0 %v410
    %536 = vmatprep.subr.mxu0 %v419
    %537 = vmatpush1.msra.mxu0 %v418
    %538 = vmatprep.subr.mxu0 %v427
    %539 = vmatpush1.msra.mxu0 %v426
    %540 = vmatprep.mubr.f32.mxu0 %v177
    %541 = vmatmul.mubr.f32.gmra.mrb[0].mxu0 %v176
    %v542 = vpop.f32.mrb[0].mxu0
    %v543 = vadd.f32 %v439, %v542
    %v544 = vpop.f32.mrb[0].mxu0
    %v545 = vadd.f32 %v443, %v544
    %546 = vdwg.mxu0
    %547 = vmatprep.subr.mxu0 %v181
    %548 = vmatpush1.msra.mxu0 %v180
    %549 = vmatprep.subr.mxu0 %v189
    %550 = vmatpush1.msra.mxu0 %v188
    %551 = vmatprep.subr.mxu0 %v197
    %552 = vmatpush1.msra.mxu0 %v196
    %553 = vmatprep.subr.mxu0 %v205
    %554 = vmatpush1.msra.mxu0 %v204
    %555 = vmatprep.subr.mxu0 %v213
    %556 = vmatpush1.msra.mxu0 %v212
    %557 = vmatprep.subr.mxu0 %v221
    %558 = vmatpush1.msra.mxu0 %v220
    %559 = vmatprep.subr.mxu0 %v229
    %560 = vmatpush1.msra.mxu0 %v228
    %561 = vmatprep.subr.mxu0 %v237
    %562 = vmatpush1.msra.mxu0 %v236
    %563 = vmatprep.subr.mxu0 %v245
    %564 = vmatpush1.msra.mxu0 %v244
    %565 = vmatprep.subr.mxu0 %v253
    %566 = vmatpush1.msra.mxu0 %v252
    %567 = vmatprep.subr.mxu0 %v261
    %568 = vmatpush1.msra.mxu0 %v260
    %569 = vmatprep.subr.mxu0 %v269
    %570 = vmatpush1.msra.mxu0 %v268
    %571 = vmatprep.subr.mxu0 %v277
    %572 = vmatpush1.msra.mxu0 %v276
    %573 = vmatprep.subr.mxu0 %v285
    %574 = vmatpush1.msra.mxu0 %v284
    %575 = vmatprep.subr.mxu0 %v293
    %576 = vmatpush1.msra.mxu0 %v292
    %577 = vmatprep.subr.mxu0 %v301
    %578 = vmatpush1.msra.mxu0 %v300
    %579 = vmatprep.subr.mxu0 %v309
    %580 = vmatpush1.msra.mxu0 %v308
    %581 = vmatprep.subr.mxu0 %v317
    %582 = vmatpush1.msra.mxu0 %v316
    %583 = vmatprep.subr.mxu0 %v325
    %584 = vmatpush1.msra.mxu0 %v324
    %585 = vmatprep.subr.mxu0 %v333
    %586 = vmatpush1.msra.mxu0 %v332
    %587 = vmatprep.subr.mxu0 %v341
    %588 = vmatpush1.msra.mxu0 %v340
    %589 = vmatprep.subr.mxu0 %v349
    %590 = vmatpush1.msra.mxu0 %v348
    %591 = vmatprep.subr.mxu0 %v357
    %592 = vmatpush1.msra.mxu0 %v356
    %593 = vmatprep.subr.mxu0 %v365
    %594 = vmatpush1.msra.mxu0 %v364
    %595 = vmatprep.subr.mxu0 %v373
    %596 = vmatpush1.msra.mxu0 %v372
    %597 = vmatprep.subr.mxu0 %v381
    %598 = vmatpush1.msra.mxu0 %v380
    %599 = vmatprep.subr.mxu0 %v389
    %600 = vmatpush1.msra.mxu0 %v388
    %601 = vmatprep.subr.mxu0 %v397
    %602 = vmatpush1.msra.mxu0 %v396
    %603 = vmatprep.subr.mxu0 %v405
    %604 = vmatpush1.msra.mxu0 %v404
    %605 = vmatprep.subr.mxu0 %v413
    %606 = vmatpush1.msra.mxu0 %v412
    %607 = vmatprep.subr.mxu0 %v421
    %608 = vmatpush1.msra.mxu0 %v420
    %609 = vmatprep.subr.mxu0 %v429
    %610 = vmatpush1.msra.mxu0 %v428
    %611 = vmatprep.mubr.f32.mxu0 %v177
    %612 = vmatmul.mubr.f32.gmra.mrb[0].mxu0 %v176
    %v613 = vpop.f32.mrb[0].mxu0
    %v614 = vadd.f32 %v447, %v613
    %v615 = vpop.f32.mrb[0].mxu0
    %v616 = vadd.f32 %v451, %v615
    %617 = vdwg.mxu0
    %618 = vmatprep.subr.mxu0 %v183
    %619 = vmatpush1.msra.mxu0 %v182
    %620 = vmatprep.subr.mxu0 %v191
    %621 = vmatpush1.msra.mxu0 %v190
    %622 = vmatprep.subr.mxu0 %v199
    %623 = vmatpush1.msra.mxu0 %v198
    %624 = vmatprep.subr.mxu0 %v207
    %625 = vmatpush1.msra.mxu0 %v206
    %626 = vmatprep.subr.mxu0 %v215
    %627 = vmatpush1.msra.mxu0 %v214
    %628 = vmatprep.subr.mxu0 %v223
    %629 = vmatpush1.msra.mxu0 %v222
    %630 = vmatprep.subr.mxu0 %v231
    %631 = vmatpush1.msra.mxu0 %v230
    %632 = vmatprep.subr.mxu0 %v239
    %633 = vmatpush1.msra.mxu0 %v238
    %634 = vmatprep.subr.mxu0 %v247
    %635 = vmatpush1.msra.mxu0 %v246
    %636 = vmatprep.subr.mxu0 %v255
    %637 = vmatpush1.msra.mxu0 %v254
    %638 = vmatprep.subr.mxu0 %v263
    %639 = vmatpush1.msra.mxu0 %v262
    %640 = vmatprep.subr.mxu0 %v271
    %641 = vmatpush1.msra.mxu0 %v270
    %642 = vmatprep.subr.mxu0 %v279
    %643 = vmatpush1.msra.mxu0 %v278
    %644 = vmatprep.subr.mxu0 %v287
    %645 = vmatpush1.msra.mxu0 %v286
    %646 = vmatprep.subr.mxu0 %v295
    %647 = vmatpush1.msra.mxu0 %v294
    %648 = vmatprep.subr.mxu0 %v303
    %649 = vmatpush1.msra.mxu0 %v302
    %650 = vmatprep.subr.mxu0 %v311
    %651 = vmatpush1.msra.mxu0 %v310
    %652 = vmatprep.subr.mxu0 %v319
    %653 = vmatpush1.msra.mxu0 %v318
    %654 = vmatprep.subr.mxu0 %v327
    %655 = vmatpush1.msra.mxu0 %v326
    %656 = vmatprep.subr.mxu0 %v335
    %657 = vmatpush1.msra.mxu0 %v334
    %658 = vmatprep.subr.mxu0 %v343
    %659 = vmatpush1.msra.mxu0 %v342
    %660 = vmatprep.subr.mxu0 %v351
    %661 = vmatpush1.msra.mxu0 %v350
    %662 = vmatprep.subr.mxu0 %v359
    %663 = vmatpush1.msra.mxu0 %v358
    %664 = vmatprep.subr.mxu0 %v367
    %665 = vmatpush1.msra.mxu0 %v366
    %666 = vmatprep.subr.mxu0 %v375
    %667 = vmatpush1.msra.mxu0 %v374
    %668 = vmatprep.subr.mxu0 %v383
    %669 = vmatpush1.msra.mxu0 %v382
    %670 = vmatprep.subr.mxu0 %v391
    %671 = vmatpush1.msra.mxu0 %v390
    %672 = vmatprep.subr.mxu0 %v399
    %673 = vmatpush1.msra.mxu0 %v398
    %674 = vmatprep.subr.mxu0 %v407
    %675 = vmatpush1.msra.mxu0 %v406
    %676 = vmatprep.subr.mxu0 %v415
    %677 = vmatpush1.msra.mxu0 %v414
    %678 = vmatprep.subr.mxu0 %v423
    %679 = vmatpush1.msra.mxu0 %v422
    %680 = vmatprep.subr.mxu0 %v431
    %681 = vmatpush1.msra.mxu0 %v430
    %682 = vmatprep.mubr.f32.mxu0 %v177
    %683 = vmatmul.mubr.f32.gmra.mrb[0].mxu0 %v176
    %v684 = vpop.f32.mrb[0].mxu0
    %v685 = vadd.f32 %v455, %v684
    %v686 = vpop.f32.mrb[0].mxu0
    %v687 = vadd.f32 %v459, %v686
    %688 = vdwg.mxu0
    %689 = vmatprep.subr.mxu0 %v185
    %690 = vmatpush1.msra.mxu0 %v184
    %691 = vmatprep.subr.mxu0 %v193
    %692 = vmatpush1.msra.mxu0 %v192
    %693 = vmatprep.subr.mxu0 %v201
    %694 = vmatpush1.msra.mxu0 %v200
    %695 = vmatprep.subr.mxu0 %v209
    %696 = vmatpush1.msra.mxu0 %v208
    %697 = vmatprep.subr.mxu0 %v217
    %698 = vmatpush1.msra.mxu0 %v216
    %699 = vmatprep.subr.mxu0 %v225
    %700 = vmatpush1.msra.mxu0 %v224
    %701 = vmatprep.subr.mxu0 %v233
    %702 = vmatpush1.msra.mxu0 %v232
    %703 = vmatprep.subr.mxu0 %v241
    %704 = vmatpush1.msra.mxu0 %v240
    %705 = vmatprep.subr.mxu0 %v249
    %706 = vmatpush1.msra.mxu0 %v248
    %707 = vmatprep.subr.mxu0 %v257
    %708 = vmatpush1.msra.mxu0 %v256
    %709 = vmatprep.subr.mxu0 %v265
    %710 = vmatpush1.msra.mxu0 %v264
    %711 = vmatprep.subr.mxu0 %v273
    %712 = vmatpush1.msra.mxu0 %v272
    %713 = vmatprep.subr.mxu0 %v281
    %714 = vmatpush1.msra.mxu0 %v280
    %715 = vmatprep.subr.mxu0 %v289
    %716 = vmatpush1.msra.mxu0 %v288
    %717 = vmatprep.subr.mxu0 %v297
    %718 = vmatpush1.msra.mxu0 %v296
    %719 = vmatprep.subr.mxu0 %v305
    %720 = vmatpush1.msra.mxu0 %v304
    %721 = vmatprep.subr.mxu0 %v313
    %722 = vmatpush1.msra.mxu0 %v312
    %723 = vmatprep.subr.mxu0 %v321
    %724 = vmatpush1.msra.mxu0 %v320
    %725 = vmatprep.subr.mxu0 %v329
    %726 = vmatpush1.msra.mxu0 %v328
    %727 = vmatprep.subr.mxu0 %v337
    %728 = vmatpush1.msra.mxu0 %v336
    %729 = vmatprep.subr.mxu0 %v345
    %730 = vmatpush1.msra.mxu0 %v344
    %731 = vmatprep.subr.mxu0 %v353
    %732 = vmatpush1.msra.mxu0 %v352
    %733 = vmatprep.subr.mxu0 %v361
    %734 = vmatpush1.msra.mxu0 %v360
    %735 = vmatprep.subr.mxu0 %v369
    %736 = vmatpush1.msra.mxu0 %v368
    %737 = vmatprep.subr.mxu0 %v377
    %738 = vmatpush1.msra.mxu0 %v376
    %739 = vmatprep.subr.mxu0 %v385
    %740 = vmatpush1.msra.mxu0 %v384
    %741 = vmatprep.subr.mxu0 %v393
    %742 = vmatpush1.msra.mxu0 %v392
    %743 = vmatprep.subr.mxu0 %v401
    %744 = vmatpush1.msra.mxu0 %v400
    %745 = vmatprep.subr.mxu0 %v409
    %746 = vmatpush1.msra.mxu0 %v408
    %747 = vmatprep.subr.mxu0 %v417
    %748 = vmatpush1.msra.mxu0 %v416
    %749 = vmatprep.subr.mxu0 %v425
    %750 = vmatpush1.msra.mxu0 %v424
    %751 = vmatprep.subr.mxu0 %v433
    %752 = vmatpush1.msra.mxu0 %v432
    %753 = vmatprep.mubr.f32.mxu0 %v177
    %754 = vmatmul.mubr.f32.gmra.mrb[0].mxu0 %v176
    %v755 = vpop.f32.mrb[0].mxu0
    %v756 = vadd.f32 %v463, %v755
    %v757 = vpop.f32.mrb[0].mxu0
    %v758 = vadd.f32 %v467, %v757
    %759 = vdwg.mxu0
    %v760 = vmax.f32 %v543, 0.0
    %v761 = vmax.f32 %v545, 0.0
    %v762 = vmax.f32 %v614, 0.0
    %v763 = vmax.f32 %v616, 0.0
    %v764 = vmax.f32 %v685, 0.0
    %v765 = vmax.f32 %v687, 0.0
    %v766 = vmax.f32 %v756, 0.0
    %v767 = vmax.f32 %v758, 0.0
    %v768 = vld [vmem:[#allocation8] sm:$0xff]
    %v769 = vld [vmem:[#allocation8 + $0x8] sm:$0xff]
    %v770 = vld [vmem:[#allocation8 + $0x10] sm:$0xff]
    %v771 = vld [vmem:[#allocation8 + $0x18] sm:$0xff]
    %v772 = vld [vmem:[#allocation8 + $0x20] sm:$0xff]
    %v773 = vld [vmem:[#allocation8 + $0x28] sm:$0xff]
    %v774 = vld [vmem:[#allocation8 + $0x30] sm:$0xff]
    %v775 = vld [vmem:[#allocation8 + $0x38] sm:$0xff]
    %v776 = vld [vmem:[#allocation8 + $0x40] sm:$0xff]
    %v777 = vld [vmem:[#allocation8 + $0x48] sm:$0xff]
    %v778 = vld [vmem:[#allocation8 + $0x50] sm:$0xff]
    %v779 = vld [vmem:[#allocation8 + $0x58] sm:$0xff]
    %v780 = vld [vmem:[#allocation8 + $0x60] sm:$0xff]
    %v781 = vld [vmem:[#allocation8 + $0x68] sm:$0xff]
    %v782 = vld [vmem:[#allocation8 + $0x70] sm:$0xff]
    %v783 = vld [vmem:[#allocation8 + $0x78] sm:$0xff]
    %v784 = vld [vmem:[#allocation8 + $0x80] sm:$0xff]
    %v785 = vld [vmem:[#allocation8 + $0x88] sm:$0xff]
    %v786 = vld [vmem:[#allocation8 + $0x90] sm:$0xff]
    %v787 = vld [vmem:[#allocation8 + $0x98] sm:$0xff]
    %v788 = vld [vmem:[#allocation8 + $0xa0] sm:$0xff]
    %v789 = vld [vmem:[#allocation8 + $0xa8] sm:$0xff]
    %v790 = vld [vmem:[#allocation8 + $0xb0] sm:$0xff]
    %v791 = vld [vmem:[#allocation8 + $0xb8] sm:$0xff]
    %v792 = vld [vmem:[#allocation8 + $0xc0] sm:$0xff]
    %v793 = vld [vmem:[#allocation8 + $0xc8] sm:$0xff]
    %v794 = vld [vmem:[#allocation8 + $0xd0] sm:$0xff]
    %v795 = vld [vmem:[#allocation8 + $0xd8] sm:$0xff]
    %v796 = vld [vmem:[#allocation8 + $0xe0] sm:$0xff]
    %v797 = vld [vmem:[#allocation8 + $0xe8] sm:$0xff]
    %v798 = vld [vmem:[#allocation8 + $0xf0] sm:$0xff]
    %v799 = vld [vmem:[#allocation8 + $0xf8] sm:$0xff]
    %v800 = vld [vmem:[#allocation8 + $0x100] sm:$0xff]
    %v801 = vld [vmem:[#allocation8 + $0x108] sm:$0xff]
    %v802 = vld [vmem:[#allocation8 + $0x110] sm:$0xff]
    %v803 = vld [vmem:[#allocation8 + $0x118] sm:$0xff]
    %v804 = vld [vmem:[#allocation8 + $0x120] sm:$0xff]
    %v805 = vld [vmem:[#allocation8 + $0x128] sm:$0xff]
    %v806 = vld [vmem:[#allocation8 + $0x130] sm:$0xff]
    %v807 = vld [vmem:[#allocation8 + $0x138] sm:$0xff]
    %v808 = vld [vmem:[#allocation8 + $0x140] sm:$0xff]
    %v809 = vld [vmem:[#allocation8 + $0x148] sm:$0xff]
    %v810 = vld [vmem:[#allocation8 + $0x150] sm:$0xff]
    %v811 = vld [vmem:[#allocation8 + $0x158] sm:$0xff]
    %v812 = vld [vmem:[#allocation8 + $0x160] sm:$0xff]
    %v813 = vld [vmem:[#allocation8 + $0x168] sm:$0xff]
    %v814 = vld [vmem:[#allocation8 + $0x170] sm:$0xff]
    %v815 = vld [vmem:[#allocation8 + $0x178] sm:$0xff]
    %v816 = vld [vmem:[#allocation8 + $0x180] sm:$0xff]
    %v817 = vld [vmem:[#allocation8 + $0x188] sm:$0xff]
    %v818 = vld [vmem:[#allocation8 + $0x190] sm:$0xff]
    %v819 = vld [vmem:[#allocation8 + $0x198] sm:$0xff]
    %v820 = vld [vmem:[#allocation8 + $0x1a0] sm:$0xff]
    %v821 = vld [vmem:[#allocation8 + $0x1a8] sm:$0xff]
    %v822 = vld [vmem:[#allocation8 + $0x1b0] sm:$0xff]
    %v823 = vld [vmem:[#allocation8 + $0x1b8] sm:$0xff]
    %v824 = vld [vmem:[#allocation8 + $0x1c0] sm:$0xff]
    %v825 = vld [vmem:[#allocation8 + $0x1c8] sm:$0xff]
    %v826 = vld [vmem:[#allocation8 + $0x1d0] sm:$0xff]
    %v827 = vld [vmem:[#allocation8 + $0x1d8] sm:$0xff]
    %v828 = vld [vmem:[#allocation8 + $0x1e0] sm:$0xff]
    %v829 = vld [vmem:[#allocation8 + $0x1e8] sm:$0xff]
    %v830 = vld [vmem:[#allocation8 + $0x1f0] sm:$0xff]
    %v831 = vld [vmem:[#allocation8 + $0x1f8] sm:$0xff]
    %v832 = vld [vmem:[#allocation8 + $0x200] sm:$0xff]
    %v833 = vld [vmem:[#allocation8 + $0x208] sm:$0xff]
    %v834 = vld [vmem:[#allocation8 + $0x210] sm:$0xff]
    %v835 = vld [vmem:[#allocation8 + $0x218] sm:$0xff]
    %v836 = vld [vmem:[#allocation8 + $0x220] sm:$0xff]
    %v837 = vld [vmem:[#allocation8 + $0x228] sm:$0xff]
    %v838 = vld [vmem:[#allocation8 + $0x230] sm:$0xff]
    %v839 = vld [vmem:[#allocation8 + $0x238] sm:$0xff]
    %v840 = vld [vmem:[#allocation8 + $0x240] sm:$0xff]
    %v841 = vld [vmem:[#allocation8 + $0x248] sm:$0xff]
    %v842 = vld [vmem:[#allocation8 + $0x250] sm:$0xff]
    %v843 = vld [vmem:[#allocation8 + $0x258] sm:$0xff]
    %v844 = vld [vmem:[#allocation8 + $0x260] sm:$0xff]
    %v845 = vld [vmem:[#allocation8 + $0x268] sm:$0xff]
    %v846 = vld [vmem:[#allocation8 + $0x270] sm:$0xff]
    %v847 = vld [vmem:[#allocation8 + $0x278] sm:$0xff]
    %v848 = vld [vmem:[#allocation8 + $0x280] sm:$0xff]
    %v849 = vld [vmem:[#allocation8 + $0x288] sm:$0xff]
    %v850 = vld [vmem:[#allocation8 + $0x290] sm:$0xff]
    %v851 = vld [vmem:[#allocation8 + $0x298] sm:$0xff]
    %v852 = vld [vmem:[#allocation8 + $0x2a0] sm:$0xff]
    %v853 = vld [vmem:[#allocation8 + $0x2a8] sm:$0xff]
    %v854 = vld [vmem:[#allocation8 + $0x2b0] sm:$0xff]
    %v855 = vld [vmem:[#allocation8 + $0x2b8] sm:$0xff]
    %v856 = vld [vmem:[#allocation8 + $0x2c0] sm:$0xff]
    %v857 = vld [vmem:[#allocation8 + $0x2c8] sm:$0xff]
    %v858 = vld [vmem:[#allocation8 + $0x2d0] sm:$0xff]
    %v859 = vld [vmem:[#allocation8 + $0x2d8] sm:$0xff]
    %v860 = vld [vmem:[#allocation8 + $0x2e0] sm:$0xff]
    %v861 = vld [vmem:[#allocation8 + $0x2e8] sm:$0xff]
    %v862 = vld [vmem:[#allocation8 + $0x2f0] sm:$0xff]
    %v863 = vld [vmem:[#allocation8 + $0x2f8] sm:$0xff]
    %v864 = vld [vmem:[#allocation8 + $0x300] sm:$0xff]
    %v865 = vld [vmem:[#allocation8 + $0x308] sm:$0xff]
    %v866 = vld [vmem:[#allocation8 + $0x310] sm:$0xff]
    %v867 = vld [vmem:[#allocation8 + $0x318] sm:$0xff]
    %v868 = vld [vmem:[#allocation8 + $0x320] sm:$0xff]
    %v869 = vld [vmem:[#allocation8 + $0x328] sm:$0xff]
    %v870 = vld [vmem:[#allocation8 + $0x330] sm:$0xff]
    %v871 = vld [vmem:[#allocation8 + $0x338] sm:$0xff]
    %v872 = vld [vmem:[#allocation8 + $0x340] sm:$0xff]
    %v873 = vld [vmem:[#allocation8 + $0x348] sm:$0xff]
    %v874 = vld [vmem:[#allocation8 + $0x350] sm:$0xff]
    %v875 = vld [vmem:[#allocation8 + $0x358] sm:$0xff]
    %v876 = vld [vmem:[#allocation8 + $0x360] sm:$0xff]
    %v877 = vld [vmem:[#allocation8 + $0x368] sm:$0xff]
    %v878 = vld [vmem:[#allocation8 + $0x370] sm:$0xff]
    %v879 = vld [vmem:[#allocation8 + $0x378] sm:$0xff]
    %v880 = vld [vmem:[#allocation8 + $0x380] sm:$0xff]
    %v881 = vld [vmem:[#allocation8 + $0x388] sm:$0xff]
    %v882 = vld [vmem:[#allocation8 + $0x390] sm:$0xff]
    %v883 = vld [vmem:[#allocation8 + $0x398] sm:$0xff]
    %v884 = vld [vmem:[#allocation8 + $0x3a0] sm:$0xff]
    %v885 = vld [vmem:[#allocation8 + $0x3a8] sm:$0xff]
    %v886 = vld [vmem:[#allocation8 + $0x3b0] sm:$0xff]
    %v887 = vld [vmem:[#allocation8 + $0x3b8] sm:$0xff]
    %v888 = vld [vmem:[#allocation8 + $0x3c0] sm:$0xff]
    %v889 = vld [vmem:[#allocation8 + $0x3c8] sm:$0xff]
    %v890 = vld [vmem:[#allocation8 + $0x3d0] sm:$0xff]
    %v891 = vld [vmem:[#allocation8 + $0x3d8] sm:$0xff]
    %v892 = vld [vmem:[#allocation8 + $0x3e0] sm:$0xff]
    %v893 = vld [vmem:[#allocation8 + $0x3e8] sm:$0xff]
    %v894 = vld [vmem:[#allocation8 + $0x3f0] sm:$0xff]
    %v895 = vld [vmem:[#allocation8 + $0x3f8] sm:$0xff]
    %v896 = vld [vmem:[#allocation8 + $0x400] sm:$0xff]
    %v897 = vld [vmem:[#allocation8 + $0x408] sm:$0xff]
    %v898 = vld [vmem:[#allocation8 + $0x410] sm:$0xff]
    %v899 = vld [vmem:[#allocation8 + $0x418] sm:$0xff]
    %v900 = vld [vmem:[#allocation8 + $0x420] sm:$0xff]
    %v901 = vld [vmem:[#allocation8 + $0x428] sm:$0xff]
    %v902 = vld [vmem:[#allocation8 + $0x430] sm:$0xff]
    %v903 = vld [vmem:[#allocation8 + $0x438] sm:$0xff]
    %v904 = vld [vmem:[#allocation8 + $0x440] sm:$0xff]
    %v905 = vld [vmem:[#allocation8 + $0x448] sm:$0xff]
    %v906 = vld [vmem:[#allocation8 + $0x450] sm:$0xff]
    %v907 = vld [vmem:[#allocation8 + $0x458] sm:$0xff]
    %v908 = vld [vmem:[#allocation8 + $0x460] sm:$0xff]
    %v909 = vld [vmem:[#allocation8 + $0x468] sm:$0xff]
    %v910 = vld [vmem:[#allocation8 + $0x470] sm:$0xff]
    %v911 = vld [vmem:[#allocation8 + $0x478] sm:$0xff]
    %v912 = vld [vmem:[#allocation8 + $0x480] sm:$0xff]
    %v913 = vld [vmem:[#allocation8 + $0x488] sm:$0xff]
    %v914 = vld [vmem:[#allocation8 + $0x490] sm:$0xff]
    %v915 = vld [vmem:[#allocation8 + $0x498] sm:$0xff]
    %v916 = vld [vmem:[#allocation8 + $0x4a0] sm:$0xff]
    %v917 = vld [vmem:[#allocation8 + $0x4a8] sm:$0xff]
    %v918 = vld [vmem:[#allocation8 + $0x4b0] sm:$0xff]
    %v919 = vld [vmem:[#allocation8 + $0x4b8] sm:$0xff]
    %v920 = vld [vmem:[#allocation8 + $0x4c0] sm:$0xff]
    %v921 = vld [vmem:[#allocation8 + $0x4c8] sm:$0xff]
    %v922 = vld [vmem:[#allocation8 + $0x4d0] sm:$0xff]
    %v923 = vld [vmem:[#allocation8 + $0x4d8] sm:$0xff]
    %v924 = vld [vmem:[#allocation8 + $0x4e0] sm:$0xff]
    %v925 = vld [vmem:[#allocation8 + $0x4e8] sm:$0xff]
    %v926 = vld [vmem:[#allocation8 + $0x4f0] sm:$0xff]
    %v927 = vld [vmem:[#allocation8 + $0x4f8] sm:$0xff]
    %v928 = vld [vmem:[#allocation8 + $0x500] sm:$0xff]
    %v929 = vld [vmem:[#allocation8 + $0x508] sm:$0xff]
    %v930 = vld [vmem:[#allocation8 + $0x510] sm:$0xff]
    %v931 = vld [vmem:[#allocation8 + $0x518] sm:$0xff]
    %v932 = vld [vmem:[#allocation8 + $0x520] sm:$0xff]
    %v933 = vld [vmem:[#allocation8 + $0x528] sm:$0xff]
    %v934 = vld [vmem:[#allocation8 + $0x530] sm:$0xff]
    %v935 = vld [vmem:[#allocation8 + $0x538] sm:$0xff]
    %v936 = vld [vmem:[#allocation8 + $0x540] sm:$0xff]
    %v937 = vld [vmem:[#allocation8 + $0x548] sm:$0xff]
    %v938 = vld [vmem:[#allocation8 + $0x550] sm:$0xff]
    %v939 = vld [vmem:[#allocation8 + $0x558] sm:$0xff]
    %v940 = vld [vmem:[#allocation8 + $0x560] sm:$0xff]
    %v941 = vld [vmem:[#allocation8 + $0x568] sm:$0xff]
    %v942 = vld [vmem:[#allocation8 + $0x570] sm:$0xff]
    %v943 = vld [vmem:[#allocation8 + $0x578] sm:$0xff]
    %v944 = vld [vmem:[#allocation8 + $0x580] sm:$0xff]
    %v945 = vld [vmem:[#allocation8 + $0x588] sm:$0xff]
    %v946 = vld [vmem:[#allocation8 + $0x590] sm:$0xff]
    %v947 = vld [vmem:[#allocation8 + $0x598] sm:$0xff]
    %v948 = vld [vmem:[#allocation8 + $0x5a0] sm:$0xff]
    %v949 = vld [vmem:[#allocation8 + $0x5a8] sm:$0xff]
    %v950 = vld [vmem:[#allocation8 + $0x5b0] sm:$0xff]
    %v951 = vld [vmem:[#allocation8 + $0x5b8] sm:$0xff]
    %v952 = vld [vmem:[#allocation8 + $0x5c0] sm:$0xff]
    %v953 = vld [vmem:[#allocation8 + $0x5c8] sm:$0xff]
    %v954 = vld [vmem:[#allocation8 + $0x5d0] sm:$0xff]
    %v955 = vld [vmem:[#allocation8 + $0x5d8] sm:$0xff]
    %v956 = vld [vmem:[#allocation8 + $0x5e0] sm:$0xff]
    %v957 = vld [vmem:[#allocation8 + $0x5e8] sm:$0xff]
    %v958 = vld [vmem:[#allocation8 + $0x5f0] sm:$0xff]
    %v959 = vld [vmem:[#allocation8 + $0x5f8] sm:$0xff]
    %v960 = vld [vmem:[#allocation8 + $0x600] sm:$0xff]
    %v961 = vld [vmem:[#allocation8 + $0x608] sm:$0xff]
    %v962 = vld [vmem:[#allocation8 + $0x610] sm:$0xff]
    %v963 = vld [vmem:[#allocation8 + $0x618] sm:$0xff]
    %v964 = vld [vmem:[#allocation8 + $0x620] sm:$0xff]
    %v965 = vld [vmem:[#allocation8 + $0x628] sm:$0xff]
    %v966 = vld [vmem:[#allocation8 + $0x630] sm:$0xff]
    %v967 = vld [vmem:[#allocation8 + $0x638] sm:$0xff]
    %v968 = vld [vmem:[#allocation8 + $0x640] sm:$0xff]
    %v969 = vld [vmem:[#allocation8 + $0x648] sm:$0xff]
    %v970 = vld [vmem:[#allocation8 + $0x650] sm:$0xff]
    %v971 = vld [vmem:[#allocation8 + $0x658] sm:$0xff]
    %v972 = vld [vmem:[#allocation8 + $0x660] sm:$0xff]
    %v973 = vld [vmem:[#allocation8 + $0x668] sm:$0xff]
    %v974 = vld [vmem:[#allocation8 + $0x670] sm:$0xff]
    %v975 = vld [vmem:[#allocation8 + $0x678] sm:$0xff]
    %v976 = vld [vmem:[#allocation8 + $0x680] sm:$0xff]
    %v977 = vld [vmem:[#allocation8 + $0x688] sm:$0xff]
    %v978 = vld [vmem:[#allocation8 + $0x690] sm:$0xff]
    %v979 = vld [vmem:[#allocation8 + $0x698] sm:$0xff]
    %v980 = vld [vmem:[#allocation8 + $0x6a0] sm:$0xff]
    %v981 = vld [vmem:[#allocation8 + $0x6a8] sm:$0xff]
    %v982 = vld [vmem:[#allocation8 + $0x6b0] sm:$0xff]
    %v983 = vld [vmem:[#allocation8 + $0x6b8] sm:$0xff]
    %v984 = vld [vmem:[#allocation8 + $0x6c0] sm:$0xff]
    %v985 = vld [vmem:[#allocation8 + $0x6c8] sm:$0xff]
    %v986 = vld [vmem:[#allocation8 + $0x6d0] sm:$0xff]
    %v987 = vld [vmem:[#allocation8 + $0x6d8] sm:$0xff]
    %v988 = vld [vmem:[#allocation8 + $0x6e0] sm:$0xff]
    %v989 = vld [vmem:[#allocation8 + $0x6e8] sm:$0xff]
    %v990 = vld [vmem:[#allocation8 + $0x6f0] sm:$0xff]
    %v991 = vld [vmem:[#allocation8 + $0x6f8] sm:$0xff]
    %v992 = vld [vmem:[#allocation8 + $0x700] sm:$0xff]
    %v993 = vld [vmem:[#allocation8 + $0x708] sm:$0xff]
    %v994 = vld [vmem:[#allocation8 + $0x710] sm:$0xff]
    %v995 = vld [vmem:[#allocation8 + $0x718] sm:$0xff]
    %v996 = vld [vmem:[#allocation8 + $0x720] sm:$0xff]
    %v997 = vld [vmem:[#allocation8 + $0x728] sm:$0xff]
    %v998 = vld [vmem:[#allocation8 + $0x730] sm:$0xff]
    %v999 = vld [vmem:[#allocation8 + $0x738] sm:$0xff]
    %v1000 = vld [vmem:[#allocation8 + $0x740] sm:$0xff]
    %v1001 = vld [vmem:[#allocation8 + $0x748] sm:$0xff]
    %v1002 = vld [vmem:[#allocation8 + $0x750] sm:$0xff]
    %v1003 = vld [vmem:[#allocation8 + $0x758] sm:$0xff]
    %v1004 = vld [vmem:[#allocation8 + $0x760] sm:$0xff]
    %v1005 = vld [vmem:[#allocation8 + $0x768] sm:$0xff]
    %v1006 = vld [vmem:[#allocation8 + $0x770] sm:$0xff]
    %v1007 = vld [vmem:[#allocation8 + $0x778] sm:$0xff]
    %v1008 = vld [vmem:[#allocation8 + $0x780] sm:$0xff]
    %v1009 = vld [vmem:[#allocation8 + $0x788] sm:$0xff]
    %v1010 = vld [vmem:[#allocation8 + $0x790] sm:$0xff]
    %v1011 = vld [vmem:[#allocation8 + $0x798] sm:$0xff]
    %v1012 = vld [vmem:[#allocation8 + $0x7a0] sm:$0xff]
    %v1013 = vld [vmem:[#allocation8 + $0x7a8] sm:$0xff]
    %v1014 = vld [vmem:[#allocation8 + $0x7b0] sm:$0xff]
    %v1015 = vld [vmem:[#allocation8 + $0x7b8] sm:$0xff]
    %v1016 = vld [vmem:[#allocation8 + $0x7c0] sm:$0xff]
    %v1017 = vld [vmem:[#allocation8 + $0x7c8] sm:$0xff]
    %v1018 = vld [vmem:[#allocation8 + $0x7d0] sm:$0xff]
    %v1019 = vld [vmem:[#allocation8 + $0x7d8] sm:$0xff]
    %v1020 = vld [vmem:[#allocation8 + $0x7e0] sm:$0xff]
    %v1021 = vld [vmem:[#allocation8 + $0x7e8] sm:$0xff]
    %v1022 = vld [vmem:[#allocation8 + $0x7f0] sm:$0xff]
    %v1023 = vld [vmem:[#allocation8 + $0x7f8] sm:$0xff]
    %v1024 = vld [vmem:[#allocation8 + $0x800] sm:$0xff]
    %v1025 = vld [vmem:[#allocation8 + $0x808] sm:$0xff]
    %v1026 = vld [vmem:[#allocation8 + $0x810] sm:$0xff]
    %v1027 = vld [vmem:[#allocation8 + $0x818] sm:$0xff]
    %v1028 = vld [vmem:[#allocation8 + $0x820] sm:$0xff]
    %v1029 = vld [vmem:[#allocation8 + $0x828] sm:$0xff]
    %v1030 = vld [vmem:[#allocation8 + $0x830] sm:$0xff]
    %v1031 = vld [vmem:[#allocation8 + $0x838] sm:$0xff]
    %v1032 = vld [vmem:[#allocation8 + $0x840] sm:$0xff]
    %v1033 = vld [vmem:[#allocation8 + $0x848] sm:$0xff]
    %v1034 = vld [vmem:[#allocation8 + $0x850] sm:$0xff]
    %v1035 = vld [vmem:[#allocation8 + $0x858] sm:$0xff]
    %v1036 = vld [vmem:[#allocation8 + $0x860] sm:$0xff]
    %v1037 = vld [vmem:[#allocation8 + $0x868] sm:$0xff]
    %v1038 = vld [vmem:[#allocation8 + $0x870] sm:$0xff]
    %v1039 = vld [vmem:[#allocation8 + $0x878] sm:$0xff]
    %v1040 = vld [vmem:[#allocation8 + $0x880] sm:$0xff]
    %v1041 = vld [vmem:[#allocation8 + $0x888] sm:$0xff]
    %v1042 = vld [vmem:[#allocation8 + $0x890] sm:$0xff]
    %v1043 = vld [vmem:[#allocation8 + $0x898] sm:$0xff]
    %v1044 = vld [vmem:[#allocation8 + $0x8a0] sm:$0xff]
    %v1045 = vld [vmem:[#allocation8 + $0x8a8] sm:$0xff]
    %v1046 = vld [vmem:[#allocation8 + $0x8b0] sm:$0xff]
    %v1047 = vld [vmem:[#allocation8 + $0x8b8] sm:$0xff]
    %v1048 = vld [vmem:[#allocation8 + $0x8c0] sm:$0xff]
    %v1049 = vld [vmem:[#allocation8 + $0x8c8] sm:$0xff]
    %v1050 = vld [vmem:[#allocation8 + $0x8d0] sm:$0xff]
    %v1051 = vld [vmem:[#allocation8 + $0x8d8] sm:$0xff]
    %v1052 = vld [vmem:[#allocation8 + $0x8e0] sm:$0xff]
    %v1053 = vld [vmem:[#allocation8 + $0x8e8] sm:$0xff]
    %v1054 = vld [vmem:[#allocation8 + $0x8f0] sm:$0xff]
    %v1055 = vld [vmem:[#allocation8 + $0x8f8] sm:$0xff]
    %v1056 = vld [vmem:[#allocation8 + $0x900] sm:$0xff]
    %v1057 = vld [vmem:[#allocation8 + $0x908] sm:$0xff]
    %v1058 = vld [vmem:[#allocation8 + $0x910] sm:$0xff]
    %v1059 = vld [vmem:[#allocation8 + $0x918] sm:$0xff]
    %v1060 = vld [vmem:[#allocation8 + $0x920] sm:$0xff]
    %v1061 = vld [vmem:[#allocation8 + $0x928] sm:$0xff]
    %v1062 = vld [vmem:[#allocation8 + $0x930] sm:$0xff]
    %v1063 = vld [vmem:[#allocation8 + $0x938] sm:$0xff]
    %v1064 = vld [vmem:[#allocation8 + $0x940] sm:$0xff]
    %v1065 = vld [vmem:[#allocation8 + $0x948] sm:$0xff]
    %v1066 = vld [vmem:[#allocation8 + $0x950] sm:$0xff]
    %v1067 = vld [vmem:[#allocation8 + $0x958] sm:$0xff]
    %v1068 = vld [vmem:[#allocation8 + $0x960] sm:$0xff]
    %v1069 = vld [vmem:[#allocation8 + $0x968] sm:$0xff]
    %v1070 = vld [vmem:[#allocation8 + $0x970] sm:$0xff]
    %v1071 = vld [vmem:[#allocation8 + $0x978] sm:$0xff]
    %v1072 = vld [vmem:[#allocation8 + $0x980] sm:$0xff]
    %v1073 = vld [vmem:[#allocation8 + $0x988] sm:$0xff]
    %v1074 = vld [vmem:[#allocation8 + $0x990] sm:$0xff]
    %v1075 = vld [vmem:[#allocation8 + $0x998] sm:$0xff]
    %v1076 = vld [vmem:[#allocation8 + $0x9a0] sm:$0xff]
    %v1077 = vld [vmem:[#allocation8 + $0x9a8] sm:$0xff]
    %v1078 = vld [vmem:[#allocation8 + $0x9b0] sm:$0xff]
    %v1079 = vld [vmem:[#allocation8 + $0x9b8] sm:$0xff]
    %v1080 = vld [vmem:[#allocation8 + $0x9c0] sm:$0xff]
    %v1081 = vld [vmem:[#allocation8 + $0x9c8] sm:$0xff]
    %v1082 = vld [vmem:[#allocation8 + $0x9d0] sm:$0xff]
    %v1083 = vld [vmem:[#allocation8 + $0x9d8] sm:$0xff]
    %v1084 = vld [vmem:[#allocation8 + $0x9e0] sm:$0xff]
    %v1085 = vld [vmem:[#allocation8 + $0x9e8] sm:$0xff]
    %v1086 = vld [vmem:[#allocation8 + $0x9f0] sm:$0xff]
    %v1087 = vld [vmem:[#allocation8 + $0x9f8] sm:$0xff]
    %v1088 = vld [vmem:[#allocation8 + $0xa00] sm:$0xff]
    %v1089 = vld [vmem:[#allocation8 + $0xa08] sm:$0xff]
    %v1090 = vld [vmem:[#allocation8 + $0xa10] sm:$0xff]
    %v1091 = vld [vmem:[#allocation8 + $0xa18] sm:$0xff]
    %v1092 = vld [vmem:[#allocation8 + $0xa20] sm:$0xff]
    %v1093 = vld [vmem:[#allocation8 + $0xa28] sm:$0xff]
    %v1094 = vld [vmem:[#allocation8 + $0xa30] sm:$0xff]
    %v1095 = vld [vmem:[#allocation8 + $0xa38] sm:$0xff]
    %v1096 = vld [vmem:[#allocation8 + $0xa40] sm:$0xff]
    %v1097 = vld [vmem:[#allocation8 + $0xa48] sm:$0xff]
    %v1098 = vld [vmem:[#allocation8 + $0xa50] sm:$0xff]
    %v1099 = vld [vmem:[#allocation8 + $0xa58] sm:$0xff]
    %v1100 = vld [vmem:[#allocation8 + $0xa60] sm:$0xff]
    %v1101 = vld [vmem:[#allocation8 + $0xa68] sm:$0xff]
    %v1102 = vld [vmem:[#allocation8 + $0xa70] sm:$0xff]
    %v1103 = vld [vmem:[#allocation8 + $0xa78] sm:$0xff]
    %v1104 = vld [vmem:[#allocation8 + $0xa80] sm:$0xff]
    %v1105 = vld [vmem:[#allocation8 + $0xa88] sm:$0xff]
    %v1106 = vld [vmem:[#allocation8 + $0xa90] sm:$0xff]
    %v1107 = vld [vmem:[#allocation8 + $0xa98] sm:$0xff]
    %v1108 = vld [vmem:[#allocation8 + $0xaa0] sm:$0xff]
    %v1109 = vld [vmem:[#allocation8 + $0xaa8] sm:$0xff]
    %v1110 = vld [vmem:[#allocation8 + $0xab0] sm:$0xff]
    %v1111 = vld [vmem:[#allocation8 + $0xab8] sm:$0xff]
    %v1112 = vld [vmem:[#allocation8 + $0xac0] sm:$0xff]
    %v1113 = vld [vmem:[#allocation8 + $0xac8] sm:$0xff]
    %v1114 = vld [vmem:[#allocation8 + $0xad0] sm:$0xff]
    %v1115 = vld [vmem:[#allocation8 + $0xad8] sm:$0xff]
    %v1116 = vld [vmem:[#allocation8 + $0xae0] sm:$0xff]
    %v1117 = vld [vmem:[#allocation8 + $0xae8] sm:$0xff]
    %v1118 = vld [vmem:[#allocation8 + $0xaf0] sm:$0xff]
    %v1119 = vld [vmem:[#allocation8 + $0xaf8] sm:$0xff]
    %v1120 = vld [vmem:[#allocation8 + $0xb00] sm:$0xff]
    %v1121 = vld [vmem:[#allocation8 + $0xb08] sm:$0xff]
    %v1122 = vld [vmem:[#allocation8 + $0xb10] sm:$0xff]
    %v1123 = vld [vmem:[#allocation8 + $0xb18] sm:$0xff]
    %v1124 = vld [vmem:[#allocation8 + $0xb20] sm:$0xff]
    %v1125 = vld [vmem:[#allocation8 + $0xb28] sm:$0xff]
    %v1126 = vld [vmem:[#allocation8 + $0xb30] sm:$0xff]
    %v1127 = vld [vmem:[#allocation8 + $0xb38] sm:$0xff]
    %v1128 = vld [vmem:[#allocation8 + $0xb40] sm:$0xff]
    %v1129 = vld [vmem:[#allocation8 + $0xb48] sm:$0xff]
    %v1130 = vld [vmem:[#allocation8 + $0xb50] sm:$0xff]
    %v1131 = vld [vmem:[#allocation8 + $0xb58] sm:$0xff]
    %v1132 = vld [vmem:[#allocation8 + $0xb60] sm:$0xff]
    %v1133 = vld [vmem:[#allocation8 + $0xb68] sm:$0xff]
    %v1134 = vld [vmem:[#allocation8 + $0xb70] sm:$0xff]
    %v1135 = vld [vmem:[#allocation8 + $0xb78] sm:$0xff]
    %v1136 = vld [vmem:[#allocation8 + $0xb80] sm:$0xff]
    %v1137 = vld [vmem:[#allocation8 + $0xb88] sm:$0xff]
    %v1138 = vld [vmem:[#allocation8 + $0xb90] sm:$0xff]
    %v1139 = vld [vmem:[#allocation8 + $0xb98] sm:$0xff]
    %v1140 = vld [vmem:[#allocation8 + $0xba0] sm:$0xff]
    %v1141 = vld [vmem:[#allocation8 + $0xba8] sm:$0xff]
    %v1142 = vld [vmem:[#allocation8 + $0xbb0] sm:$0xff]
    %v1143 = vld [vmem:[#allocation8 + $0xbb8] sm:$0xff]
    %v1144 = vld [vmem:[#allocation8 + $0xbc0] sm:$0xff]
    %v1145 = vld [vmem:[#allocation8 + $0xbc8] sm:$0xff]
    %v1146 = vld [vmem:[#allocation8 + $0xbd0] sm:$0xff]
    %v1147 = vld [vmem:[#allocation8 + $0xbd8] sm:$0xff]
    %v1148 = vld [vmem:[#allocation8 + $0xbe0] sm:$0xff]
    %v1149 = vld [vmem:[#allocation8 + $0xbe8] sm:$0xff]
    %v1150 = vld [vmem:[#allocation8 + $0xbf0] sm:$0xff]
    %v1151 = vld [vmem:[#allocation8 + $0xbf8] sm:$0xff]
    %v1152 = vld [vmem:[#allocation8 + $0xc00] sm:$0xff]
    %v1153 = vld [vmem:[#allocation8 + $0xc08] sm:$0xff]
    %v1154 = vld [vmem:[#allocation8 + $0xc10] sm:$0xff]
    %v1155 = vld [vmem:[#allocation8 + $0xc18] sm:$0xff]
    %v1156 = vld [vmem:[#allocation8 + $0xc20] sm:$0xff]
    %v1157 = vld [vmem:[#allocation8 + $0xc28] sm:$0xff]
    %v1158 = vld [vmem:[#allocation8 + $0xc30] sm:$0xff]
    %v1159 = vld [vmem:[#allocation8 + $0xc38] sm:$0xff]
    %v1160 = vld [vmem:[#allocation8 + $0xc40] sm:$0xff]
    %v1161 = vld [vmem:[#allocation8 + $0xc48] sm:$0xff]
    %v1162 = vld [vmem:[#allocation8 + $0xc50] sm:$0xff]
    %v1163 = vld [vmem:[#allocation8 + $0xc58] sm:$0xff]
    %v1164 = vld [vmem:[#allocation8 + $0xc60] sm:$0xff]
    %v1165 = vld [vmem:[#allocation8 + $0xc68] sm:$0xff]
    %v1166 = vld [vmem:[#allocation8 + $0xc70] sm:$0xff]
    %v1167 = vld [vmem:[#allocation8 + $0xc78] sm:$0xff]
    %v1168 = vld [vmem:[#allocation8 + $0xc80] sm:$0xff]
    %v1169 = vld [vmem:[#allocation8 + $0xc88] sm:$0xff]
    %v1170 = vld [vmem:[#allocation8 + $0xc90] sm:$0xff]
    %v1171 = vld [vmem:[#allocation8 + $0xc98] sm:$0xff]
    %v1172 = vld [vmem:[#allocation8 + $0xca0] sm:$0xff]
    %v1173 = vld [vmem:[#allocation8 + $0xca8] sm:$0xff]
    %v1174 = vld [vmem:[#allocation8 + $0xcb0] sm:$0xff]
    %v1175 = vld [vmem:[#allocation8 + $0xcb8] sm:$0xff]
    %v1176 = vld [vmem:[#allocation8 + $0xcc0] sm:$0xff]
    %v1177 = vld [vmem:[#allocation8 + $0xcc8] sm:$0xff]
    %v1178 = vld [vmem:[#allocation8 + $0xcd0] sm:$0xff]
    %v1179 = vld [vmem:[#allocation8 + $0xcd8] sm:$0xff]
    %v1180 = vld [vmem:[#allocation8 + $0xce0] sm:$0xff]
    %v1181 = vld [vmem:[#allocation8 + $0xce8] sm:$0xff]
    %v1182 = vld [vmem:[#allocation8 + $0xcf0] sm:$0xff]
    %v1183 = vld [vmem:[#allocation8 + $0xcf8] sm:$0xff]
    %v1184 = vld [vmem:[#allocation8 + $0xd00] sm:$0xff]
    %v1185 = vld [vmem:[#allocation8 + $0xd08] sm:$0xff]
    %v1186 = vld [vmem:[#allocation8 + $0xd10] sm:$0xff]
    %v1187 = vld [vmem:[#allocation8 + $0xd18] sm:$0xff]
    %v1188 = vld [vmem:[#allocation8 + $0xd20] sm:$0xff]
    %v1189 = vld [vmem:[#allocation8 + $0xd28] sm:$0xff]
    %v1190 = vld [vmem:[#allocation8 + $0xd30] sm:$0xff]
    %v1191 = vld [vmem:[#allocation8 + $0xd38] sm:$0xff]
    %v1192 = vld [vmem:[#allocation8 + $0xd40] sm:$0xff]
    %v1193 = vld [vmem:[#allocation8 + $0xd48] sm:$0xff]
    %v1194 = vld [vmem:[#allocation8 + $0xd50] sm:$0xff]
    %v1195 = vld [vmem:[#allocation8 + $0xd58] sm:$0xff]
    %v1196 = vld [vmem:[#allocation8 + $0xd60] sm:$0xff]
    %v1197 = vld [vmem:[#allocation8 + $0xd68] sm:$0xff]
    %v1198 = vld [vmem:[#allocation8 + $0xd70] sm:$0xff]
    %v1199 = vld [vmem:[#allocation8 + $0xd78] sm:$0xff]
    %v1200 = vld [vmem:[#allocation8 + $0xd80] sm:$0xff]
    %v1201 = vld [vmem:[#allocation8 + $0xd88] sm:$0xff]
    %v1202 = vld [vmem:[#allocation8 + $0xd90] sm:$0xff]
    %v1203 = vld [vmem:[#allocation8 + $0xd98] sm:$0xff]
    %v1204 = vld [vmem:[#allocation8 + $0xda0] sm:$0xff]
    %v1205 = vld [vmem:[#allocation8 + $0xda8] sm:$0xff]
    %v1206 = vld [vmem:[#allocation8 + $0xdb0] sm:$0xff]
    %v1207 = vld [vmem:[#allocation8 + $0xdb8] sm:$0xff]
    %v1208 = vld [vmem:[#allocation8 + $0xdc0] sm:$0xff]
    %v1209 = vld [vmem:[#allocation8 + $0xdc8] sm:$0xff]
    %v1210 = vld [vmem:[#allocation8 + $0xdd0] sm:$0xff]
    %v1211 = vld [vmem:[#allocation8 + $0xdd8] sm:$0xff]
    %v1212 = vld [vmem:[#allocation8 + $0xde0] sm:$0xff]
    %v1213 = vld [vmem:[#allocation8 + $0xde8] sm:$0xff]
    %v1214 = vld [vmem:[#allocation8 + $0xdf0] sm:$0xff]
    %v1215 = vld [vmem:[#allocation8 + $0xdf8] sm:$0xff]
    %v1216 = vld [vmem:[#allocation8 + $0xe00] sm:$0xff]
    %v1217 = vld [vmem:[#allocation8 + $0xe08] sm:$0xff]
    %v1218 = vld [vmem:[#allocation8 + $0xe10] sm:$0xff]
    %v1219 = vld [vmem:[#allocation8 + $0xe18] sm:$0xff]
    %v1220 = vld [vmem:[#allocation8 + $0xe20] sm:$0xff]
    %v1221 = vld [vmem:[#allocation8 + $0xe28] sm:$0xff]
    %v1222 = vld [vmem:[#allocation8 + $0xe30] sm:$0xff]
    %v1223 = vld [vmem:[#allocation8 + $0xe38] sm:$0xff]
    %v1224 = vld [vmem:[#allocation8 + $0xe40] sm:$0xff]
    %v1225 = vld [vmem:[#allocation8 + $0xe48] sm:$0xff]
    %v1226 = vld [vmem:[#allocation8 + $0xe50] sm:$0xff]
    %v1227 = vld [vmem:[#allocation8 + $0xe58] sm:$0xff]
    %v1228 = vld [vmem:[#allocation8 + $0xe60] sm:$0xff]
    %v1229 = vld [vmem:[#allocation8 + $0xe68] sm:$0xff]
    %v1230 = vld [vmem:[#allocation8 + $0xe70] sm:$0xff]
    %v1231 = vld [vmem:[#allocation8 + $0xe78] sm:$0xff]
    %v1232 = vld [vmem:[#allocation8 + $0xe80] sm:$0xff]
    %v1233 = vld [vmem:[#allocation8 + $0xe88] sm:$0xff]
    %v1234 = vld [vmem:[#allocation8 + $0xe90] sm:$0xff]
    %v1235 = vld [vmem:[#allocation8 + $0xe98] sm:$0xff]
    %v1236 = vld [vmem:[#allocation8 + $0xea0] sm:$0xff]
    %v1237 = vld [vmem:[#allocation8 + $0xea8] sm:$0xff]
    %v1238 = vld [vmem:[#allocation8 + $0xeb0] sm:$0xff]
    %v1239 = vld [vmem:[#allocation8 + $0xeb8] sm:$0xff]
    %v1240 = vld [vmem:[#allocation8 + $0xec0] sm:$0xff]
    %v1241 = vld [vmem:[#allocation8 + $0xec8] sm:$0xff]
    %v1242 = vld [vmem:[#allocation8 + $0xed0] sm:$0xff]
    %v1243 = vld [vmem:[#allocation8 + $0xed8] sm:$0xff]
    %v1244 = vld [vmem:[#allocation8 + $0xee0] sm:$0xff]
    %v1245 = vld [vmem:[#allocation8 + $0xee8] sm:$0xff]
    %v1246 = vld [vmem:[#allocation8 + $0xef0] sm:$0xff]
    %v1247 = vld [vmem:[#allocation8 + $0xef8] sm:$0xff]
    %v1248 = vld [vmem:[#allocation8 + $0xf00] sm:$0xff]
    %v1249 = vld [vmem:[#allocation8 + $0xf08] sm:$0xff]
    %v1250 = vld [vmem:[#allocation8 + $0xf10] sm:$0xff]
    %v1251 = vld [vmem:[#allocation8 + $0xf18] sm:$0xff]
    %v1252 = vld [vmem:[#allocation8 + $0xf20] sm:$0xff]
    %v1253 = vld [vmem:[#allocation8 + $0xf28] sm:$0xff]
    %v1254 = vld [vmem:[#allocation8 + $0xf30] sm:$0xff]
    %v1255 = vld [vmem:[#allocation8 + $0xf38] sm:$0xff]
    %v1256 = vld [vmem:[#allocation8 + $0xf40] sm:$0xff]
    %v1257 = vld [vmem:[#allocation8 + $0xf48] sm:$0xff]
    %v1258 = vld [vmem:[#allocation8 + $0xf50] sm:$0xff]
    %v1259 = vld [vmem:[#allocation8 + $0xf58] sm:$0xff]
    %v1260 = vld [vmem:[#allocation8 + $0xf60] sm:$0xff]
    %v1261 = vld [vmem:[#allocation8 + $0xf68] sm:$0xff]
    %v1262 = vld [vmem:[#allocation8 + $0xf70] sm:$0xff]
    %v1263 = vld [vmem:[#allocation8 + $0xf78] sm:$0xff]
    %v1264 = vld [vmem:[#allocation8 + $0xf80] sm:$0xff]
    %v1265 = vld [vmem:[#allocation8 + $0xf88] sm:$0xff]
    %v1266 = vld [vmem:[#allocation8 + $0xf90] sm:$0xff]
    %v1267 = vld [vmem:[#allocation8 + $0xf98] sm:$0xff]
    %v1268 = vld [vmem:[#allocation8 + $0xfa0] sm:$0xff]
    %v1269 = vld [vmem:[#allocation8 + $0xfa8] sm:$0xff]
    %v1270 = vld [vmem:[#allocation8 + $0xfb0] sm:$0xff]
    %v1271 = vld [vmem:[#allocation8 + $0xfb8] sm:$0xff]
    %v1272 = vld [vmem:[#allocation8 + $0xfc0] sm:$0xff]
    %v1273 = vld [vmem:[#allocation8 + $0xfc8] sm:$0xff]
    %v1274 = vld [vmem:[#allocation8 + $0xfd0] sm:$0xff]
    %v1275 = vld [vmem:[#allocation8 + $0xfd8] sm:$0xff]
    %v1276 = vld [vmem:[#allocation8 + $0xfe0] sm:$0xff]
    %v1277 = vld [vmem:[#allocation8 + $0xfe8] sm:$0xff]
    %v1278 = vld [vmem:[#allocation8 + $0xff0] sm:$0xff]
    %v1279 = vld [vmem:[#allocation8 + $0xff8] sm:$0xff]
    %v1280 = vld [vmem:[#allocation8 + $0x1000] sm:$0xff]
    %v1281 = vld [vmem:[#allocation8 + $0x1008] sm:$0xff]
    %v1282 = vld [vmem:[#allocation8 + $0x1010] sm:$0xff]
    %v1283 = vld [vmem:[#allocation8 + $0x1018] sm:$0xff]
    %v1284 = vld [vmem:[#allocation8 + $0x1020] sm:$0xff]
    %v1285 = vld [vmem:[#allocation8 + $0x1028] sm:$0xff]
    %v1286 = vld [vmem:[#allocation8 + $0x1030] sm:$0xff]
    %v1287 = vld [vmem:[#allocation8 + $0x1038] sm:$0xff]
    %v1288 = vld [vmem:[#allocation8 + $0x1040] sm:$0xff]
    %v1289 = vld [vmem:[#allocation8 + $0x1048] sm:$0xff]
    %v1290 = vld [vmem:[#allocation8 + $0x1050] sm:$0xff]
    %v1291 = vld [vmem:[#allocation8 + $0x1058] sm:$0xff]
    %v1292 = vld [vmem:[#allocation8 + $0x1060] sm:$0xff]
    %v1293 = vld [vmem:[#allocation8 + $0x1068] sm:$0xff]
    %v1294 = vld [vmem:[#allocation8 + $0x1070] sm:$0xff]
    %v1295 = vld [vmem:[#allocation8 + $0x1078] sm:$0xff]
    %v1296 = vld [vmem:[#allocation8 + $0x1080] sm:$0xff]
    %v1297 = vld [vmem:[#allocation8 + $0x1088] sm:$0xff]
    %v1298 = vld [vmem:[#allocation8 + $0x1090] sm:$0xff]
    %v1299 = vld [vmem:[#allocation8 + $0x1098] sm:$0xff]
    %v1300 = vld [vmem:[#allocation8 + $0x10a0] sm:$0xff]
    %v1301 = vld [vmem:[#allocation8 + $0x10a8] sm:$0xff]
    %v1302 = vld [vmem:[#allocation8 + $0x10b0] sm:$0xff]
    %v1303 = vld [vmem:[#allocation8 + $0x10b8] sm:$0xff]
    %v1304 = vld [vmem:[#allocation8 + $0x10c0] sm:$0xff]
    %v1305 = vld [vmem:[#allocation8 + $0x10c8] sm:$0xff]
    %v1306 = vld [vmem:[#allocation8 + $0x10d0] sm:$0xff]
    %v1307 = vld [vmem:[#allocation8 + $0x10d8] sm:$0xff]
    %v1308 = vld [vmem:[#allocation8 + $0x10e0] sm:$0xff]
    %v1309 = vld [vmem:[#allocation8 + $0x10e8] sm:$0xff]
    %v1310 = vld [vmem:[#allocation8 + $0x10f0] sm:$0xff]
    %v1311 = vld [vmem:[#allocation8 + $0x10f8] sm:$0xff]
    %v1312 = vld [vmem:[#allocation8 + $0x1100] sm:$0xff]
    %v1313 = vld [vmem:[#allocation8 + $0x1108] sm:$0xff]
    %v1314 = vld [vmem:[#allocation8 + $0x1110] sm:$0xff]
    %v1315 = vld [vmem:[#allocation8 + $0x1118] sm:$0xff]
    %v1316 = vld [vmem:[#allocation8 + $0x1120] sm:$0xff]
    %v1317 = vld [vmem:[#allocation8 + $0x1128] sm:$0xff]
    %v1318 = vld [vmem:[#allocation8 + $0x1130] sm:$0xff]
    %v1319 = vld [vmem:[#allocation8 + $0x1138] sm:$0xff]
    %v1320 = vld [vmem:[#allocation8 + $0x1140] sm:$0xff]
    %v1321 = vld [vmem:[#allocation8 + $0x1148] sm:$0xff]
    %v1322 = vld [vmem:[#allocation8 + $0x1150] sm:$0xff]
    %v1323 = vld [vmem:[#allocation8 + $0x1158] sm:$0xff]
    %v1324 = vld [vmem:[#allocation8 + $0x1160] sm:$0xff]
    %v1325 = vld [vmem:[#allocation8 + $0x1168] sm:$0xff]
    %v1326 = vld [vmem:[#allocation8 + $0x1170] sm:$0xff]
    %v1327 = vld [vmem:[#allocation8 + $0x1178] sm:$0xff]
    %v1328 = vld [vmem:[#allocation8 + $0x1180] sm:$0xff]
    %v1329 = vld [vmem:[#allocation8 + $0x1188] sm:$0xff]
    %v1330 = vld [vmem:[#allocation8 + $0x1190] sm:$0xff]
    %v1331 = vld [vmem:[#allocation8 + $0x1198] sm:$0xff]
    %v1332 = vld [vmem:[#allocation8 + $0x11a0] sm:$0xff]
    %v1333 = vld [vmem:[#allocation8 + $0x11a8] sm:$0xff]
    %v1334 = vld [vmem:[#allocation8 + $0x11b0] sm:$0xff]
    %v1335 = vld [vmem:[#allocation8 + $0x11b8] sm:$0xff]
    %v1336 = vld [vmem:[#allocation8 + $0x11c0] sm:$0xff]
    %v1337 = vld [vmem:[#allocation8 + $0x11c8] sm:$0xff]
    %v1338 = vld [vmem:[#allocation8 + $0x11d0] sm:$0xff]
    %v1339 = vld [vmem:[#allocation8 + $0x11d8] sm:$0xff]
    %v1340 = vld [vmem:[#allocation8 + $0x11e0] sm:$0xff]
    %v1341 = vld [vmem:[#allocation8 + $0x11e8] sm:$0xff]
    %v1342 = vld [vmem:[#allocation8 + $0x11f0] sm:$0xff]
    %v1343 = vld [vmem:[#allocation8 + $0x11f8] sm:$0xff]
    %v1344 = vld [vmem:[#allocation8 + $0x1200] sm:$0xff]
    %v1345 = vld [vmem:[#allocation8 + $0x1208] sm:$0xff]
    %v1346 = vld [vmem:[#allocation8 + $0x1210] sm:$0xff]
    %v1347 = vld [vmem:[#allocation8 + $0x1218] sm:$0xff]
    %v1348 = vld [vmem:[#allocation8 + $0x1220] sm:$0xff]
    %v1349 = vld [vmem:[#allocation8 + $0x1228] sm:$0xff]
    %v1350 = vld [vmem:[#allocation8 + $0x1230] sm:$0xff]
    %v1351 = vld [vmem:[#allocation8 + $0x1238] sm:$0xff]
    %v1352 = vld [vmem:[#allocation8 + $0x1240] sm:$0xff]
    %v1353 = vld [vmem:[#allocation8 + $0x1248] sm:$0xff]
    %v1354 = vld [vmem:[#allocation8 + $0x1250] sm:$0xff]
    %v1355 = vld [vmem:[#allocation8 + $0x1258] sm:$0xff]
    %v1356 = vld [vmem:[#allocation8 + $0x1260] sm:$0xff]
    %v1357 = vld [vmem:[#allocation8 + $0x1268] sm:$0xff]
    %v1358 = vld [vmem:[#allocation8 + $0x1270] sm:$0xff]
    %v1359 = vld [vmem:[#allocation8 + $0x1278] sm:$0xff]
    %v1360 = vld [vmem:[#allocation8 + $0x1280] sm:$0xff]
    %v1361 = vld [vmem:[#allocation8 + $0x1288] sm:$0xff]
    %v1362 = vld [vmem:[#allocation8 + $0x1290] sm:$0xff]
    %v1363 = vld [vmem:[#allocation8 + $0x1298] sm:$0xff]
    %v1364 = vld [vmem:[#allocation8 + $0x12a0] sm:$0xff]
    %v1365 = vld [vmem:[#allocation8 + $0x12a8] sm:$0xff]
    %v1366 = vld [vmem:[#allocation8 + $0x12b0] sm:$0xff]
    %v1367 = vld [vmem:[#allocation8 + $0x12b8] sm:$0xff]
    %v1368 = vld [vmem:[#allocation8 + $0x12c0] sm:$0xff]
    %v1369 = vld [vmem:[#allocation8 + $0x12c8] sm:$0xff]
    %v1370 = vld [vmem:[#allocation8 + $0x12d0] sm:$0xff]
    %v1371 = vld [vmem:[#allocation8 + $0x12d8] sm:$0xff]
    %v1372 = vld [vmem:[#allocation8 + $0x12e0] sm:$0xff]
    %v1373 = vld [vmem:[#allocation8 + $0x12e8] sm:$0xff]
    %v1374 = vld [vmem:[#allocation8 + $0x12f0] sm:$0xff]
    %v1375 = vld [vmem:[#allocation8 + $0x12f8] sm:$0xff]
    %v1376 = vld [vmem:[#allocation8 + $0x1300] sm:$0xff]
    %v1377 = vld [vmem:[#allocation8 + $0x1308] sm:$0xff]
    %v1378 = vld [vmem:[#allocation8 + $0x1310] sm:$0xff]
    %v1379 = vld [vmem:[#allocation8 + $0x1318] sm:$0xff]
    %v1380 = vld [vmem:[#allocation8 + $0x1320] sm:$0xff]
    %v1381 = vld [vmem:[#allocation8 + $0x1328] sm:$0xff]
    %v1382 = vld [vmem:[#allocation8 + $0x1330] sm:$0xff]
    %v1383 = vld [vmem:[#allocation8 + $0x1338] sm:$0xff]
    %v1384 = vld [vmem:[#allocation8 + $0x1340] sm:$0xff]
    %v1385 = vld [vmem:[#allocation8 + $0x1348] sm:$0xff]
    %v1386 = vld [vmem:[#allocation8 + $0x1350] sm:$0xff]
    %v1387 = vld [vmem:[#allocation8 + $0x1358] sm:$0xff]
    %v1388 = vld [vmem:[#allocation8 + $0x1360] sm:$0xff]
    %v1389 = vld [vmem:[#allocation8 + $0x1368] sm:$0xff]
    %v1390 = vld [vmem:[#allocation8 + $0x1370] sm:$0xff]
    %v1391 = vld [vmem:[#allocation8 + $0x1378] sm:$0xff]
    %v1392 = vld [vmem:[#allocation8 + $0x1380] sm:$0xff]
    %v1393 = vld [vmem:[#allocation8 + $0x1388] sm:$0xff]
    %v1394 = vld [vmem:[#allocation8 + $0x1390] sm:$0xff]
    %v1395 = vld [vmem:[#allocation8 + $0x1398] sm:$0xff]
    %v1396 = vld [vmem:[#allocation8 + $0x13a0] sm:$0xff]
    %v1397 = vld [vmem:[#allocation8 + $0x13a8] sm:$0xff]
    %v1398 = vld [vmem:[#allocation8 + $0x13b0] sm:$0xff]
    %v1399 = vld [vmem:[#allocation8 + $0x13b8] sm:$0xff]
    %v1400 = vld [vmem:[#allocation8 + $0x13c0] sm:$0xff]
    %v1401 = vld [vmem:[#allocation8 + $0x13c8] sm:$0xff]
    %v1402 = vld [vmem:[#allocation8 + $0x13d0] sm:$0xff]
    %v1403 = vld [vmem:[#allocation8 + $0x13d8] sm:$0xff]
    %v1404 = vld [vmem:[#allocation8 + $0x13e0] sm:$0xff]
    %v1405 = vld [vmem:[#allocation8 + $0x13e8] sm:$0xff]
    %v1406 = vld [vmem:[#allocation8 + $0x13f0] sm:$0xff]
    %v1407 = vld [vmem:[#allocation8 + $0x13f8] sm:$0xff]
    %v1408 = vld [vmem:[#allocation8 + $0x1400] sm:$0xff]
    %v1409 = vld [vmem:[#allocation8 + $0x1408] sm:$0xff]
    %v1410 = vld [vmem:[#allocation8 + $0x1410] sm:$0xff]
    %v1411 = vld [vmem:[#allocation8 + $0x1418] sm:$0xff]
    %v1412 = vld [vmem:[#allocation8 + $0x1420] sm:$0xff]
    %v1413 = vld [vmem:[#allocation8 + $0x1428] sm:$0xff]
    %v1414 = vld [vmem:[#allocation8 + $0x1430] sm:$0xff]
    %v1415 = vld [vmem:[#allocation8 + $0x1438] sm:$0xff]
    %v1416 = vld [vmem:[#allocation8 + $0x1440] sm:$0xff]
    %v1417 = vld [vmem:[#allocation8 + $0x1448] sm:$0xff]
    %v1418 = vld [vmem:[#allocation8 + $0x1450] sm:$0xff]
    %v1419 = vld [vmem:[#allocation8 + $0x1458] sm:$0xff]
    %v1420 = vld [vmem:[#allocation8 + $0x1460] sm:$0xff]
    %v1421 = vld [vmem:[#allocation8 + $0x1468] sm:$0xff]
    %v1422 = vld [vmem:[#allocation8 + $0x1470] sm:$0xff]
    %v1423 = vld [vmem:[#allocation8 + $0x1478] sm:$0xff]
    %v1424 = vld [vmem:[#allocation8 + $0x1480] sm:$0xff]
    %v1425 = vld [vmem:[#allocation8 + $0x1488] sm:$0xff]
    %v1426 = vld [vmem:[#allocation8 + $0x1490] sm:$0xff]
    %v1427 = vld [vmem:[#allocation8 + $0x1498] sm:$0xff]
    %v1428 = vld [vmem:[#allocation8 + $0x14a0] sm:$0xff]
    %v1429 = vld [vmem:[#allocation8 + $0x14a8] sm:$0xff]
    %v1430 = vld [vmem:[#allocation8 + $0x14b0] sm:$0xff]
    %v1431 = vld [vmem:[#allocation8 + $0x14b8] sm:$0xff]
    %v1432 = vld [vmem:[#allocation8 + $0x14c0] sm:$0xff]
    %v1433 = vld [vmem:[#allocation8 + $0x14c8] sm:$0xff]
    %v1434 = vld [vmem:[#allocation8 + $0x14d0] sm:$0xff]
    %v1435 = vld [vmem:[#allocation8 + $0x14d8] sm:$0xff]
    %v1436 = vld [vmem:[#allocation8 + $0x14e0] sm:$0xff]
    %v1437 = vld [vmem:[#allocation8 + $0x14e8] sm:$0xff]
    %v1438 = vld [vmem:[#allocation8 + $0x14f0] sm:$0xff]
    %v1439 = vld [vmem:[#allocation8 + $0x14f8] sm:$0xff]
    %v1440 = vld [vmem:[#allocation8 + $0x1500] sm:$0xff]
    %v1441 = vld [vmem:[#allocation8 + $0x1508] sm:$0xff]
    %v1442 = vld [vmem:[#allocation8 + $0x1510] sm:$0xff]
    %v1443 = vld [vmem:[#allocation8 + $0x1518] sm:$0xff]
    %v1444 = vld [vmem:[#allocation8 + $0x1520] sm:$0xff]
    %v1445 = vld [vmem:[#allocation8 + $0x1528] sm:$0xff]
    %v1446 = vld [vmem:[#allocation8 + $0x1530] sm:$0xff]
    %v1447 = vld [vmem:[#allocation8 + $0x1538] sm:$0xff]
    %v1448 = vld [vmem:[#allocation8 + $0x1540] sm:$0xff]
    %v1449 = vld [vmem:[#allocation8 + $0x1548] sm:$0xff]
    %v1450 = vld [vmem:[#allocation8 + $0x1550] sm:$0xff]
    %v1451 = vld [vmem:[#allocation8 + $0x1558] sm:$0xff]
    %v1452 = vld [vmem:[#allocation8 + $0x1560] sm:$0xff]
    %v1453 = vld [vmem:[#allocation8 + $0x1568] sm:$0xff]
    %v1454 = vld [vmem:[#allocation8 + $0x1570] sm:$0xff]
    %v1455 = vld [vmem:[#allocation8 + $0x1578] sm:$0xff]
    %v1456 = vld [vmem:[#allocation8 + $0x1580] sm:$0xff]
    %v1457 = vld [vmem:[#allocation8 + $0x1588] sm:$0xff]
    %v1458 = vld [vmem:[#allocation8 + $0x1590] sm:$0xff]
    %v1459 = vld [vmem:[#allocation8 + $0x1598] sm:$0xff]
    %v1460 = vld [vmem:[#allocation8 + $0x15a0] sm:$0xff]
    %v1461 = vld [vmem:[#allocation8 + $0x15a8] sm:$0xff]
    %v1462 = vld [vmem:[#allocation8 + $0x15b0] sm:$0xff]
    %v1463 = vld [vmem:[#allocation8 + $0x15b8] sm:$0xff]
    %v1464 = vld [vmem:[#allocation8 + $0x15c0] sm:$0xff]
    %v1465 = vld [vmem:[#allocation8 + $0x15c8] sm:$0xff]
    %v1466 = vld [vmem:[#allocation8 + $0x15d0] sm:$0xff]
    %v1467 = vld [vmem:[#allocation8 + $0x15d8] sm:$0xff]
    %v1468 = vld [vmem:[#allocation8 + $0x15e0] sm:$0xff]
    %v1469 = vld [vmem:[#allocation8 + $0x15e8] sm:$0xff]
    %v1470 = vld [vmem:[#allocation8 + $0x15f0] sm:$0xff]
    %v1471 = vld [vmem:[#allocation8 + $0x15f8] sm:$0xff]
    %v1472 = vld [vmem:[#allocation8 + $0x1600] sm:$0xff]
    %v1473 = vld [vmem:[#allocation8 + $0x1608] sm:$0xff]
    %v1474 = vld [vmem:[#allocation8 + $0x1610] sm:$0xff]
    %v1475 = vld [vmem:[#allocation8 + $0x1618] sm:$0xff]
    %v1476 = vld [vmem:[#allocation8 + $0x1620] sm:$0xff]
    %v1477 = vld [vmem:[#allocation8 + $0x1628] sm:$0xff]
    %v1478 = vld [vmem:[#allocation8 + $0x1630] sm:$0xff]
    %v1479 = vld [vmem:[#allocation8 + $0x1638] sm:$0xff]
    %v1480 = vld [vmem:[#allocation8 + $0x1640] sm:$0xff]
    %v1481 = vld [vmem:[#allocation8 + $0x1648] sm:$0xff]
    %v1482 = vld [vmem:[#allocation8 + $0x1650] sm:$0xff]
    %v1483 = vld [vmem:[#allocation8 + $0x1658] sm:$0xff]
    %v1484 = vld [vmem:[#allocation8 + $0x1660] sm:$0xff]
    %v1485 = vld [vmem:[#allocation8 + $0x1668] sm:$0xff]
    %v1486 = vld [vmem:[#allocation8 + $0x1670] sm:$0xff]
    %v1487 = vld [vmem:[#allocation8 + $0x1678] sm:$0xff]
    %v1488 = vld [vmem:[#allocation8 + $0x1680] sm:$0xff]
    %v1489 = vld [vmem:[#allocation8 + $0x1688] sm:$0xff]
    %v1490 = vld [vmem:[#allocation8 + $0x1690] sm:$0xff]
    %v1491 = vld [vmem:[#allocation8 + $0x1698] sm:$0xff]
    %v1492 = vld [vmem:[#allocation8 + $0x16a0] sm:$0xff]
    %v1493 = vld [vmem:[#allocation8 + $0x16a8] sm:$0xff]
    %v1494 = vld [vmem:[#allocation8 + $0x16b0] sm:$0xff]
    %v1495 = vld [vmem:[#allocation8 + $0x16b8] sm:$0xff]
    %v1496 = vld [vmem:[#allocation8 + $0x16c0] sm:$0xff]
    %v1497 = vld [vmem:[#allocation8 + $0x16c8] sm:$0xff]
    %v1498 = vld [vmem:[#allocation8 + $0x16d0] sm:$0xff]
    %v1499 = vld [vmem:[#allocation8 + $0x16d8] sm:$0xff]
    %v1500 = vld [vmem:[#allocation8 + $0x16e0] sm:$0xff]
    %v1501 = vld [vmem:[#allocation8 + $0x16e8] sm:$0xff]
    %v1502 = vld [vmem:[#allocation8 + $0x16f0] sm:$0xff]
    %v1503 = vld [vmem:[#allocation8 + $0x16f8] sm:$0xff]
    %v1504 = vld [vmem:[#allocation8 + $0x1700] sm:$0xff]
    %v1505 = vld [vmem:[#allocation8 + $0x1708] sm:$0xff]
    %v1506 = vld [vmem:[#allocation8 + $0x1710] sm:$0xff]
    %v1507 = vld [vmem:[#allocation8 + $0x1718] sm:$0xff]
    %v1508 = vld [vmem:[#allocation8 + $0x1720] sm:$0xff]
    %v1509 = vld [vmem:[#allocation8 + $0x1728] sm:$0xff]
    %v1510 = vld [vmem:[#allocation8 + $0x1730] sm:$0xff]
    %v1511 = vld [vmem:[#allocation8 + $0x1738] sm:$0xff]
    %v1512 = vld [vmem:[#allocation8 + $0x1740] sm:$0xff]
    %v1513 = vld [vmem:[#allocation8 + $0x1748] sm:$0xff]
    %v1514 = vld [vmem:[#allocation8 + $0x1750] sm:$0xff]
    %v1515 = vld [vmem:[#allocation8 + $0x1758] sm:$0xff]
    %v1516 = vld [vmem:[#allocation8 + $0x1760] sm:$0xff]
    %v1517 = vld [vmem:[#allocation8 + $0x1768] sm:$0xff]
    %v1518 = vld [vmem:[#allocation8 + $0x1770] sm:$0xff]
    %v1519 = vld [vmem:[#allocation8 + $0x1778] sm:$0xff]
    %v1520 = vld [vmem:[#allocation8 + $0x1780] sm:$0xff]
    %v1521 = vld [vmem:[#allocation8 + $0x1788] sm:$0xff]
    %v1522 = vld [vmem:[#allocation8 + $0x1790] sm:$0xff]
    %v1523 = vld [vmem:[#allocation8 + $0x1798] sm:$0xff]
    %v1524 = vld [vmem:[#allocation8 + $0x17a0] sm:$0xff]
    %v1525 = vld [vmem:[#allocation8 + $0x17a8] sm:$0xff]
    %v1526 = vld [vmem:[#allocation8 + $0x17b0] sm:$0xff]
    %v1527 = vld [vmem:[#allocation8 + $0x17b8] sm:$0xff]
    %v1528 = vld [vmem:[#allocation8 + $0x17c0] sm:$0xff]
    %v1529 = vld [vmem:[#allocation8 + $0x17c8] sm:$0xff]
    %v1530 = vld [vmem:[#allocation8 + $0x17d0] sm:$0xff]
    %v1531 = vld [vmem:[#allocation8 + $0x17d8] sm:$0xff]
    %v1532 = vld [vmem:[#allocation8 + $0x17e0] sm:$0xff]
    %v1533 = vld [vmem:[#allocation8 + $0x17e8] sm:$0xff]
    %v1534 = vld [vmem:[#allocation8 + $0x17f0] sm:$0xff]
    %v1535 = vld [vmem:[#allocation8 + $0x17f8] sm:$0xff]
    %v1536 = vld [vmem:[#allocation8 + $0x1800] sm:$0xff]
    %v1537 = vld [vmem:[#allocation8 + $0x1808] sm:$0xff]
    %v1538 = vld [vmem:[#allocation8 + $0x1810] sm:$0xff]
    %v1539 = vld [vmem:[#allocation8 + $0x1818] sm:$0xff]
    %v1540 = vld [vmem:[#allocation8 + $0x1820] sm:$0xff]
    %v1541 = vld [vmem:[#allocation8 + $0x1828] sm:$0xff]
    %v1542 = vld [vmem:[#allocation8 + $0x1830] sm:$0xff]
    %v1543 = vld [vmem:[#allocation8 + $0x1838] sm:$0xff]
    %v1544 = vld [vmem:[#allocation8 + $0x1840] sm:$0xff]
    %v1545 = vld [vmem:[#allocation8 + $0x1848] sm:$0xff]
    %v1546 = vld [vmem:[#allocation8 + $0x1850] sm:$0xff]
    %v1547 = vld [vmem:[#allocation8 + $0x1858] sm:$0xff]
    %v1548 = vld [vmem:[#allocation8 + $0x1860] sm:$0xff]
    %v1549 = vld [vmem:[#allocation8 + $0x1868] sm:$0xff]
    %v1550 = vld [vmem:[#allocation8 + $0x1870] sm:$0xff]
    %v1551 = vld [vmem:[#allocation8 + $0x1878] sm:$0xff]
    %v1552 = vld [vmem:[#allocation8 + $0x1880] sm:$0xff]
    %v1553 = vld [vmem:[#allocation8 + $0x1888] sm:$0xff]
    %v1554 = vld [vmem:[#allocation8 + $0x1890] sm:$0xff]
    %v1555 = vld [vmem:[#allocation8 + $0x1898] sm:$0xff]
    %v1556 = vld [vmem:[#allocation8 + $0x18a0] sm:$0xff]
    %v1557 = vld [vmem:[#allocation8 + $0x18a8] sm:$0xff]
    %v1558 = vld [vmem:[#allocation8 + $0x18b0] sm:$0xff]
    %v1559 = vld [vmem:[#allocation8 + $0x18b8] sm:$0xff]
    %v1560 = vld [vmem:[#allocation8 + $0x18c0] sm:$0xff]
    %v1561 = vld [vmem:[#allocation8 + $0x18c8] sm:$0xff]
    %v1562 = vld [vmem:[#allocation8 + $0x18d0] sm:$0xff]
    %v1563 = vld [vmem:[#allocation8 + $0x18d8] sm:$0xff]
    %v1564 = vld [vmem:[#allocation8 + $0x18e0] sm:$0xff]
    %v1565 = vld [vmem:[#allocation8 + $0x18e8] sm:$0xff]
    %v1566 = vld [vmem:[#allocation8 + $0x18f0] sm:$0xff]
    %v1567 = vld [vmem:[#allocation8 + $0x18f8] sm:$0xff]
    %v1568 = vld [vmem:[#allocation8 + $0x1900] sm:$0xff]
    %v1569 = vld [vmem:[#allocation8 + $0x1908] sm:$0xff]
    %v1570 = vld [vmem:[#allocation8 + $0x1910] sm:$0xff]
    %v1571 = vld [vmem:[#allocation8 + $0x1918] sm:$0xff]
    %v1572 = vld [vmem:[#allocation8 + $0x1920] sm:$0xff]
    %v1573 = vld [vmem:[#allocation8 + $0x1928] sm:$0xff]
    %v1574 = vld [vmem:[#allocation8 + $0x1930] sm:$0xff]
    %v1575 = vld [vmem:[#allocation8 + $0x1938] sm:$0xff]
    %v1576 = vld [vmem:[#allocation8 + $0x1940] sm:$0xff]
    %v1577 = vld [vmem:[#allocation8 + $0x1948] sm:$0xff]
    %v1578 = vld [vmem:[#allocation8 + $0x1950] sm:$0xff]
    %v1579 = vld [vmem:[#allocation8 + $0x1958] sm:$0xff]
    %v1580 = vld [vmem:[#allocation8 + $0x1960] sm:$0xff]
    %v1581 = vld [vmem:[#allocation8 + $0x1968] sm:$0xff]
    %v1582 = vld [vmem:[#allocation8 + $0x1970] sm:$0xff]
    %v1583 = vld [vmem:[#allocation8 + $0x1978] sm:$0xff]
    %v1584 = vld [vmem:[#allocation8 + $0x1980] sm:$0xff]
    %v1585 = vld [vmem:[#allocation8 + $0x1988] sm:$0xff]
    %v1586 = vld [vmem:[#allocation8 + $0x1990] sm:$0xff]
    %v1587 = vld [vmem:[#allocation8 + $0x1998] sm:$0xff]
    %v1588 = vld [vmem:[#allocation8 + $0x19a0] sm:$0xff]
    %v1589 = vld [vmem:[#allocation8 + $0x19a8] sm:$0xff]
    %v1590 = vld [vmem:[#allocation8 + $0x19b0] sm:$0xff]
    %v1591 = vld [vmem:[#allocation8 + $0x19b8] sm:$0xff]
    %v1592 = vld [vmem:[#allocation8 + $0x19c0] sm:$0xff]
    %v1593 = vld [vmem:[#allocation8 + $0x19c8] sm:$0xff]
    %v1594 = vld [vmem:[#allocation8 + $0x19d0] sm:$0xff]
    %v1595 = vld [vmem:[#allocation8 + $0x19d8] sm:$0xff]
    %v1596 = vld [vmem:[#allocation8 + $0x19e0] sm:$0xff]
    %v1597 = vld [vmem:[#allocation8 + $0x19e8] sm:$0xff]
    %v1598 = vld [vmem:[#allocation8 + $0x19f0] sm:$0xff]
    %v1599 = vld [vmem:[#allocation8 + $0x19f8] sm:$0xff]
    %v1600 = vld [vmem:[#allocation8 + $0x1a00] sm:$0xff]
    %v1601 = vld [vmem:[#allocation8 + $0x1a08] sm:$0xff]
    %v1602 = vld [vmem:[#allocation8 + $0x1a10] sm:$0xff]
    %v1603 = vld [vmem:[#allocation8 + $0x1a18] sm:$0xff]
    %v1604 = vld [vmem:[#allocation8 + $0x1a20] sm:$0xff]
    %v1605 = vld [vmem:[#allocation8 + $0x1a28] sm:$0xff]
    %v1606 = vld [vmem:[#allocation8 + $0x1a30] sm:$0xff]
    %v1607 = vld [vmem:[#allocation8 + $0x1a38] sm:$0xff]
    %v1608 = vld [vmem:[#allocation8 + $0x1a40] sm:$0xff]
    %v1609 = vld [vmem:[#allocation8 + $0x1a48] sm:$0xff]
    %v1610 = vld [vmem:[#allocation8 + $0x1a50] sm:$0xff]
    %v1611 = vld [vmem:[#allocation8 + $0x1a58] sm:$0xff]
    %v1612 = vld [vmem:[#allocation8 + $0x1a60] sm:$0xff]
    %v1613 = vld [vmem:[#allocation8 + $0x1a68] sm:$0xff]
    %v1614 = vld [vmem:[#allocation8 + $0x1a70] sm:$0xff]
    %v1615 = vld [vmem:[#allocation8 + $0x1a78] sm:$0xff]
    %v1616 = vld [vmem:[#allocation8 + $0x1a80] sm:$0xff]
    %v1617 = vld [vmem:[#allocation8 + $0x1a88] sm:$0xff]
    %v1618 = vld [vmem:[#allocation8 + $0x1a90] sm:$0xff]
    %v1619 = vld [vmem:[#allocation8 + $0x1a98] sm:$0xff]
    %v1620 = vld [vmem:[#allocation8 + $0x1aa0] sm:$0xff]
    %v1621 = vld [vmem:[#allocation8 + $0x1aa8] sm:$0xff]
    %v1622 = vld [vmem:[#allocation8 + $0x1ab0] sm:$0xff]
    %v1623 = vld [vmem:[#allocation8 + $0x1ab8] sm:$0xff]
    %v1624 = vld [vmem:[#allocation8 + $0x1ac0] sm:$0xff]
    %v1625 = vld [vmem:[#allocation8 + $0x1ac8] sm:$0xff]
    %v1626 = vld [vmem:[#allocation8 + $0x1ad0] sm:$0xff]
    %v1627 = vld [vmem:[#allocation8 + $0x1ad8] sm:$0xff]
    %v1628 = vld [vmem:[#allocation8 + $0x1ae0] sm:$0xff]
    %v1629 = vld [vmem:[#allocation8 + $0x1ae8] sm:$0xff]
    %v1630 = vld [vmem:[#allocation8 + $0x1af0] sm:$0xff]
    %v1631 = vld [vmem:[#allocation8 + $0x1af8] sm:$0xff]
    %v1632 = vld [vmem:[#allocation8 + $0x1b00] sm:$0xff]
    %v1633 = vld [vmem:[#allocation8 + $0x1b08] sm:$0xff]
    %v1634 = vld [vmem:[#allocation8 + $0x1b10] sm:$0xff]
    %v1635 = vld [vmem:[#allocation8 + $0x1b18] sm:$0xff]
    %v1636 = vld [vmem:[#allocation8 + $0x1b20] sm:$0xff]
    %v1637 = vld [vmem:[#allocation8 + $0x1b28] sm:$0xff]
    %v1638 = vld [vmem:[#allocation8 + $0x1b30] sm:$0xff]
    %v1639 = vld [vmem:[#allocation8 + $0x1b38] sm:$0xff]
    %v1640 = vld [vmem:[#allocation8 + $0x1b40] sm:$0xff]
    %v1641 = vld [vmem:[#allocation8 + $0x1b48] sm:$0xff]
    %v1642 = vld [vmem:[#allocation8 + $0x1b50] sm:$0xff]
    %v1643 = vld [vmem:[#allocation8 + $0x1b58] sm:$0xff]
    %v1644 = vld [vmem:[#allocation8 + $0x1b60] sm:$0xff]
    %v1645 = vld [vmem:[#allocation8 + $0x1b68] sm:$0xff]
    %v1646 = vld [vmem:[#allocation8 + $0x1b70] sm:$0xff]
    %v1647 = vld [vmem:[#allocation8 + $0x1b78] sm:$0xff]
    %v1648 = vld [vmem:[#allocation8 + $0x1b80] sm:$0xff]
    %v1649 = vld [vmem:[#allocation8 + $0x1b88] sm:$0xff]
    %v1650 = vld [vmem:[#allocation8 + $0x1b90] sm:$0xff]
    %v1651 = vld [vmem:[#allocation8 + $0x1b98] sm:$0xff]
    %v1652 = vld [vmem:[#allocation8 + $0x1ba0] sm:$0xff]
    %v1653 = vld [vmem:[#allocation8 + $0x1ba8] sm:$0xff]
    %v1654 = vld [vmem:[#allocation8 + $0x1bb0] sm:$0xff]
    %v1655 = vld [vmem:[#allocation8 + $0x1bb8] sm:$0xff]
    %v1656 = vld [vmem:[#allocation8 + $0x1bc0] sm:$0xff]
    %v1657 = vld [vmem:[#allocation8 + $0x1bc8] sm:$0xff]
    %v1658 = vld [vmem:[#allocation8 + $0x1bd0] sm:$0xff]
    %v1659 = vld [vmem:[#allocation8 + $0x1bd8] sm:$0xff]
    %v1660 = vld [vmem:[#allocation8 + $0x1be0] sm:$0xff]
    %v1661 = vld [vmem:[#allocation8 + $0x1be8] sm:$0xff]
    %v1662 = vld [vmem:[#allocation8 + $0x1bf0] sm:$0xff]
    %v1663 = vld [vmem:[#allocation8 + $0x1bf8] sm:$0xff]
    %v1664 = vld [vmem:[#allocation8 + $0x1c00] sm:$0xff]
    %v1665 = vld [vmem:[#allocation8 + $0x1c08] sm:$0xff]
    %v1666 = vld [vmem:[#allocation8 + $0x1c10] sm:$0xff]
    %v1667 = vld [vmem:[#allocation8 + $0x1c18] sm:$0xff]
    %v1668 = vld [vmem:[#allocation8 + $0x1c20] sm:$0xff]
    %v1669 = vld [vmem:[#allocation8 + $0x1c28] sm:$0xff]
    %v1670 = vld [vmem:[#allocation8 + $0x1c30] sm:$0xff]
    %v1671 = vld [vmem:[#allocation8 + $0x1c38] sm:$0xff]
    %v1672 = vld [vmem:[#allocation8 + $0x1c40] sm:$0xff]
    %v1673 = vld [vmem:[#allocation8 + $0x1c48] sm:$0xff]
    %v1674 = vld [vmem:[#allocation8 + $0x1c50] sm:$0xff]
    %v1675 = vld [vmem:[#allocation8 + $0x1c58] sm:$0xff]
    %v1676 = vld [vmem:[#allocation8 + $0x1c60] sm:$0xff]
    %v1677 = vld [vmem:[#allocation8 + $0x1c68] sm:$0xff]
    %v1678 = vld [vmem:[#allocation8 + $0x1c70] sm:$0xff]
    %v1679 = vld [vmem:[#allocation8 + $0x1c78] sm:$0xff]
    %v1680 = vld [vmem:[#allocation8 + $0x1c80] sm:$0xff]
    %v1681 = vld [vmem:[#allocation8 + $0x1c88] sm:$0xff]
    %v1682 = vld [vmem:[#allocation8 + $0x1c90] sm:$0xff]
    %v1683 = vld [vmem:[#allocation8 + $0x1c98] sm:$0xff]
    %v1684 = vld [vmem:[#allocation8 + $0x1ca0] sm:$0xff]
    %v1685 = vld [vmem:[#allocation8 + $0x1ca8] sm:$0xff]
    %v1686 = vld [vmem:[#allocation8 + $0x1cb0] sm:$0xff]
    %v1687 = vld [vmem:[#allocation8 + $0x1cb8] sm:$0xff]
    %v1688 = vld [vmem:[#allocation8 + $0x1cc0] sm:$0xff]
    %v1689 = vld [vmem:[#allocation8 + $0x1cc8] sm:$0xff]
    %v1690 = vld [vmem:[#allocation8 + $0x1cd0] sm:$0xff]
    %v1691 = vld [vmem:[#allocation8 + $0x1cd8] sm:$0xff]
    %v1692 = vld [vmem:[#allocation8 + $0x1ce0] sm:$0xff]
    %v1693 = vld [vmem:[#allocation8 + $0x1ce8] sm:$0xff]
    %v1694 = vld [vmem:[#allocation8 + $0x1cf0] sm:$0xff]
    %v1695 = vld [vmem:[#allocation8 + $0x1cf8] sm:$0xff]
    %v1696 = vld [vmem:[#allocation8 + $0x1d00] sm:$0xff]
    %v1697 = vld [vmem:[#allocation8 + $0x1d08] sm:$0xff]
    %v1698 = vld [vmem:[#allocation8 + $0x1d10] sm:$0xff]
    %v1699 = vld [vmem:[#allocation8 + $0x1d18] sm:$0xff]
    %v1700 = vld [vmem:[#allocation8 + $0x1d20] sm:$0xff]
    %v1701 = vld [vmem:[#allocation8 + $0x1d28] sm:$0xff]
    %v1702 = vld [vmem:[#allocation8 + $0x1d30] sm:$0xff]
    %v1703 = vld [vmem:[#allocation8 + $0x1d38] sm:$0xff]
    %v1704 = vld [vmem:[#allocation8 + $0x1d40] sm:$0xff]
    %v1705 = vld [vmem:[#allocation8 + $0x1d48] sm:$0xff]
    %v1706 = vld [vmem:[#allocation8 + $0x1d50] sm:$0xff]
    %v1707 = vld [vmem:[#allocation8 + $0x1d58] sm:$0xff]
    %v1708 = vld [vmem:[#allocation8 + $0x1d60] sm:$0xff]
    %v1709 = vld [vmem:[#allocation8 + $0x1d68] sm:$0xff]
    %v1710 = vld [vmem:[#allocation8 + $0x1d70] sm:$0xff]
    %v1711 = vld [vmem:[#allocation8 + $0x1d78] sm:$0xff]
    %v1712 = vld [vmem:[#allocation8 + $0x1d80] sm:$0xff]
    %v1713 = vld [vmem:[#allocation8 + $0x1d88] sm:$0xff]
    %v1714 = vld [vmem:[#allocation8 + $0x1d90] sm:$0xff]
    %v1715 = vld [vmem:[#allocation8 + $0x1d98] sm:$0xff]
    %v1716 = vld [vmem:[#allocation8 + $0x1da0] sm:$0xff]
    %v1717 = vld [vmem:[#allocation8 + $0x1da8] sm:$0xff]
    %v1718 = vld [vmem:[#allocation8 + $0x1db0] sm:$0xff]
    %v1719 = vld [vmem:[#allocation8 + $0x1db8] sm:$0xff]
    %v1720 = vld [vmem:[#allocation8 + $0x1dc0] sm:$0xff]
    %v1721 = vld [vmem:[#allocation8 + $0x1dc8] sm:$0xff]
    %v1722 = vld [vmem:[#allocation8 + $0x1dd0] sm:$0xff]
    %v1723 = vld [vmem:[#allocation8 + $0x1dd8] sm:$0xff]
    %v1724 = vld [vmem:[#allocation8 + $0x1de0] sm:$0xff]
    %v1725 = vld [vmem:[#allocation8 + $0x1de8] sm:$0xff]
    %v1726 = vld [vmem:[#allocation8 + $0x1df0] sm:$0xff]
    %v1727 = vld [vmem:[#allocation8 + $0x1df8] sm:$0xff]
    %v1728 = vld [vmem:[#allocation8 + $0x1e00] sm:$0xff]
    %v1729 = vld [vmem:[#allocation8 + $0x1e08] sm:$0xff]
    %v1730 = vld [vmem:[#allocation8 + $0x1e10] sm:$0xff]
    %v1731 = vld [vmem:[#allocation8 + $0x1e18] sm:$0xff]
    %v1732 = vld [vmem:[#allocation8 + $0x1e20] sm:$0xff]
    %v1733 = vld [vmem:[#allocation8 + $0x1e28] sm:$0xff]
    %v1734 = vld [vmem:[#allocation8 + $0x1e30] sm:$0xff]
    %v1735 = vld [vmem:[#allocation8 + $0x1e38] sm:$0xff]
    %v1736 = vld [vmem:[#allocation8 + $0x1e40] sm:$0xff]
    %v1737 = vld [vmem:[#allocation8 + $0x1e48] sm:$0xff]
    %v1738 = vld [vmem:[#allocation8 + $0x1e50] sm:$0xff]
    %v1739 = vld [vmem:[#allocation8 + $0x1e58] sm:$0xff]
    %v1740 = vld [vmem:[#allocation8 + $0x1e60] sm:$0xff]
    %v1741 = vld [vmem:[#allocation8 + $0x1e68] sm:$0xff]
    %v1742 = vld [vmem:[#allocation8 + $0x1e70] sm:$0xff]
    %v1743 = vld [vmem:[#allocation8 + $0x1e78] sm:$0xff]
    %v1744 = vld [vmem:[#allocation8 + $0x1e80] sm:$0xff]
    %v1745 = vld [vmem:[#allocation8 + $0x1e88] sm:$0xff]
    %v1746 = vld [vmem:[#allocation8 + $0x1e90] sm:$0xff]
    %v1747 = vld [vmem:[#allocation8 + $0x1e98] sm:$0xff]
    %v1748 = vld [vmem:[#allocation8 + $0x1ea0] sm:$0xff]
    %v1749 = vld [vmem:[#allocation8 + $0x1ea8] sm:$0xff]
    %v1750 = vld [vmem:[#allocation8 + $0x1eb0] sm:$0xff]
    %v1751 = vld [vmem:[#allocation8 + $0x1eb8] sm:$0xff]
    %v1752 = vld [vmem:[#allocation8 + $0x1ec0] sm:$0xff]
    %v1753 = vld [vmem:[#allocation8 + $0x1ec8] sm:$0xff]
    %v1754 = vld [vmem:[#allocation8 + $0x1ed0] sm:$0xff]
    %v1755 = vld [vmem:[#allocation8 + $0x1ed8] sm:$0xff]
    %v1756 = vld [vmem:[#allocation8 + $0x1ee0] sm:$0xff]
    %v1757 = vld [vmem:[#allocation8 + $0x1ee8] sm:$0xff]
    %v1758 = vld [vmem:[#allocation8 + $0x1ef0] sm:$0xff]
    %v1759 = vld [vmem:[#allocation8 + $0x1ef8] sm:$0xff]
    %v1760 = vld [vmem:[#allocation8 + $0x1f00] sm:$0xff]
    %v1761 = vld [vmem:[#allocation8 + $0x1f08] sm:$0xff]
    %v1762 = vld [vmem:[#allocation8 + $0x1f10] sm:$0xff]
    %v1763 = vld [vmem:[#allocation8 + $0x1f18] sm:$0xff]
    %v1764 = vld [vmem:[#allocation8 + $0x1f20] sm:$0xff]
    %v1765 = vld [vmem:[#allocation8 + $0x1f28] sm:$0xff]
    %v1766 = vld [vmem:[#allocation8 + $0x1f30] sm:$0xff]
    %v1767 = vld [vmem:[#allocation8 + $0x1f38] sm:$0xff]
    %v1768 = vld [vmem:[#allocation8 + $0x1f40] sm:$0xff]
    %v1769 = vld [vmem:[#allocation8 + $0x1f48] sm:$0xff]
    %v1770 = vld [vmem:[#allocation8 + $0x1f50] sm:$0xff]
    %v1771 = vld [vmem:[#allocation8 + $0x1f58] sm:$0xff]
    %v1772 = vld [vmem:[#allocation8 + $0x1f60] sm:$0xff]
    %v1773 = vld [vmem:[#allocation8 + $0x1f68] sm:$0xff]
    %v1774 = vld [vmem:[#allocation8 + $0x1f70] sm:$0xff]
    %v1775 = vld [vmem:[#allocation8 + $0x1f78] sm:$0xff]
    %v1776 = vld [vmem:[#allocation8 + $0x1f80] sm:$0xff]
    %v1777 = vld [vmem:[#allocation8 + $0x1f88] sm:$0xff]
    %v1778 = vld [vmem:[#allocation8 + $0x1f90] sm:$0xff]
    %v1779 = vld [vmem:[#allocation8 + $0x1f98] sm:$0xff]
    %v1780 = vld [vmem:[#allocation8 + $0x1fa0] sm:$0xff]
    %v1781 = vld [vmem:[#allocation8 + $0x1fa8] sm:$0xff]
    %v1782 = vld [vmem:[#allocation8 + $0x1fb0] sm:$0xff]
    %v1783 = vld [vmem:[#allocation8 + $0x1fb8] sm:$0xff]
    %v1784 = vld [vmem:[#allocation8 + $0x1fc0] sm:$0xff]
    %v1785 = vld [vmem:[#allocation8 + $0x1fc8] sm:$0xff]
    %v1786 = vld [vmem:[#allocation8 + $0x1fd0] sm:$0xff]
    %v1787 = vld [vmem:[#allocation8 + $0x1fd8] sm:$0xff]
    %v1788 = vld [vmem:[#allocation8 + $0x1fe0] sm:$0xff]
    %v1789 = vld [vmem:[#allocation8 + $0x1fe8] sm:$0xff]
    %v1790 = vld [vmem:[#allocation8 + $0x1ff0] sm:$0xff]
    %v1791 = vld [vmem:[#allocation8 + $0x1ff8] sm:$0xff]
    %v1792 = vld [vmem:[#allocation10] sm:$0xff]
    %v1794 = vlaneseq
    %v1795 = vshrl.u32 %v1794, 7
    %v1796 = vsub.s32 0, %v1795
    %v1797 = vrot.slane %v1792, %v1796
    %v1798 = vlaneseq
    %v1799 = vshrl.u32 %v1798, 7
    %v1800 = vsub.s32 1, %v1799
    %v1801 = vrot.slane %v1792, %v1800
    %v1802 = vlaneseq
    %v1803 = vshrl.u32 %v1802, 7
    %v1804 = vsub.s32 2, %v1803
    %v1805 = vrot.slane %v1792, %v1804
    %v1806 = vlaneseq
    %v1807 = vshrl.u32 %v1806, 7
    %v1808 = vsub.s32 3, %v1807
    %v1809 = vrot.slane %v1792, %v1808
    %v1810 = vlaneseq
    %v1811 = vshrl.u32 %v1810, 7
    %v1812 = vsub.s32 4, %v1811
    %v1813 = vrot.slane %v1792, %v1812
    %v1814 = vlaneseq
    %v1815 = vshrl.u32 %v1814, 7
    %v1816 = vsub.s32 5, %v1815
    %v1817 = vrot.slane %v1792, %v1816
    %v1818 = vlaneseq
    %v1819 = vshrl.u32 %v1818, 7
    %v1820 = vsub.s32 6, %v1819
    %v1821 = vrot.slane %v1792, %v1820
    %v1822 = vlaneseq
    %v1823 = vshrl.u32 %v1822, 7
    %v1824 = vsub.s32 7, %v1823
    %v1825 = vrot.slane %v1792, %v1824
    %1834 = vmatprep.subr.mxu0 %v769
    %1835 = vmatpush1.msra.mxu0 %v768
    %1836 = vmatprep.subr.mxu0 %v777
    %1837 = vmatpush1.msra.mxu0 %v776
    %1838 = vmatprep.subr.mxu0 %v785
    %1839 = vmatpush1.msra.mxu0 %v784
    %1840 = vmatprep.subr.mxu0 %v793
    %1841 = vmatpush1.msra.mxu0 %v792
    %1842 = vmatprep.subr.mxu0 %v801
    %1843 = vmatpush1.msra.mxu0 %v800
    %1844 = vmatprep.subr.mxu0 %v809
    %1845 = vmatpush1.msra.mxu0 %v808
    %1846 = vmatprep.subr.mxu0 %v817
    %1847 = vmatpush1.msra.mxu0 %v816
    %1848 = vmatprep.subr.mxu0 %v825
    %1849 = vmatpush1.msra.mxu0 %v824
    %1850 = vmatprep.subr.mxu0 %v833
    %1851 = vmatpush1.msra.mxu0 %v832
    %1852 = vmatprep.subr.mxu0 %v841
    %1853 = vmatpush1.msra.mxu0 %v840
    %1854 = vmatprep.subr.mxu0 %v849
    %1855 = vmatpush1.msra.mxu0 %v848
    %1856 = vmatprep.subr.mxu0 %v857
    %1857 = vmatpush1.msra.mxu0 %v856
    %1858 = vmatprep.subr.mxu0 %v865
    %1859 = vmatpush1.msra.mxu0 %v864
    %1860 = vmatprep.subr.mxu0 %v873
    %1861 = vmatpush1.msra.mxu0 %v872
    %1862 = vmatprep.subr.mxu0 %v881
    %1863 = vmatpush1.msra.mxu0 %v880
    %1864 = vmatprep.subr.mxu0 %v889
    %1865 = vmatpush1.msra.mxu0 %v888
    %1866 = vmatprep.subr.mxu0 %v897
    %1867 = vmatpush1.msra.mxu0 %v896
    %1868 = vmatprep.subr.mxu0 %v905
    %1869 = vmatpush1.msra.mxu0 %v904
    %1870 = vmatprep.subr.mxu0 %v913
    %1871 = vmatpush1.msra.mxu0 %v912
    %1872 = vmatprep.subr.mxu0 %v921
    %1873 = vmatpush1.msra.mxu0 %v920
    %1874 = vmatprep.subr.mxu0 %v929
    %1875 = vmatpush1.msra.mxu0 %v928
    %1876 = vmatprep.subr.mxu0 %v937
    %1877 = vmatpush1.msra.mxu0 %v936
    %1878 = vmatprep.subr.mxu0 %v945
    %1879 = vmatpush1.msra.mxu0 %v944
    %1880 = vmatprep.subr.mxu0 %v953
    %1881 = vmatpush1.msra.mxu0 %v952
    %1882 = vmatprep.subr.mxu0 %v961
    %1883 = vmatpush1.msra.mxu0 %v960
    %1884 = vmatprep.subr.mxu0 %v969
    %1885 = vmatpush1.msra.mxu0 %v968
    %1886 = vmatprep.subr.mxu0 %v977
    %1887 = vmatpush1.msra.mxu0 %v976
    %1888 = vmatprep.subr.mxu0 %v985
    %1889 = vmatpush1.msra.mxu0 %v984
    %1890 = vmatprep.subr.mxu0 %v993
    %1891 = vmatpush1.msra.mxu0 %v992
    %1892 = vmatprep.subr.mxu0 %v1001
    %1893 = vmatpush1.msra.mxu0 %v1000
    %1894 = vmatprep.subr.mxu0 %v1009
    %1895 = vmatpush1.msra.mxu0 %v1008
    %1896 = vmatprep.subr.mxu0 %v1017
    %1897 = vmatpush1.msra.mxu0 %v1016
    %1898 = vmatprep.mubr.f32.mxu0 %v761
    %1899 = vmatmul.mubr.f32.gmra.mrb[0].mxu0 %v760
    %v1900 = vpop.f32.mrb[0].mxu0
    %v1901 = vadd.f32 %v1797, %v1900
    %v1902 = vpop.f32.mrb[0].mxu0
    %v1903 = vadd.f32 %v1801, %v1902
    %1904 = vdwg.mxu0
    %1905 = vmatprep.subr.mxu0 %v1025
    %1906 = vmatpush1.msra.mxu0 %v1024
    %1907 = vmatprep.subr.mxu0 %v1033
    %1908 = vmatpush1.msra.mxu0 %v1032
    %1909 = vmatprep.subr.mxu0 %v1041
    %1910 = vmatpush1.msra.mxu0 %v1040
    %1911 = vmatprep.subr.mxu0 %v1049
    %1912 = vmatpush1.msra.mxu0 %v1048
    %1913 = vmatprep.subr.mxu0 %v1057
    %1914 = vmatpush1.msra.mxu0 %v1056
    %1915 = vmatprep.subr.mxu0 %v1065
    %1916 = vmatpush1.msra.mxu0 %v1064
    %1917 = vmatprep.subr.mxu0 %v1073
    %1918 = vmatpush1.msra.mxu0 %v1072
    %1919 = vmatprep.subr.mxu0 %v1081
    %1920 = vmatpush1.msra.mxu0 %v1080
    %1921 = vmatprep.subr.mxu0 %v1089
    %1922 = vmatpush1.msra.mxu0 %v1088
    %1923 = vmatprep.subr.mxu0 %v1097
    %1924 = vmatpush1.msra.mxu0 %v1096
    %1925 = vmatprep.subr.mxu0 %v1105
    %1926 = vmatpush1.msra.mxu0 %v1104
    %1927 = vmatprep.subr.mxu0 %v1113
    %1928 = vmatpush1.msra.mxu0 %v1112
    %1929 = vmatprep.subr.mxu0 %v1121
    %1930 = vmatpush1.msra.mxu0 %v1120
    %1931 = vmatprep.subr.mxu0 %v1129
    %1932 = vmatpush1.msra.mxu0 %v1128
    %1933 = vmatprep.subr.mxu0 %v1137
    %1934 = vmatpush1.msra.mxu0 %v1136
    %1935 = vmatprep.subr.mxu0 %v1145
    %1936 = vmatpush1.msra.mxu0 %v1144
    %1937 = vmatprep.subr.mxu0 %v1153
    %1938 = vmatpush1.msra.mxu0 %v1152
    %1939 = vmatprep.subr.mxu0 %v1161
    %1940 = vmatpush1.msra.mxu0 %v1160
    %1941 = vmatprep.subr.mxu0 %v1169
    %1942 = vmatpush1.msra.mxu0 %v1168
    %1943 = vmatprep.subr.mxu0 %v1177
    %1944 = vmatpush1.msra.mxu0 %v1176
    %1945 = vmatprep.subr.mxu0 %v1185
    %1946 = vmatpush1.msra.mxu0 %v1184
    %1947 = vmatprep.subr.mxu0 %v1193
    %1948 = vmatpush1.msra.mxu0 %v1192
    %1949 = vmatprep.subr.mxu0 %v1201
    %1950 = vmatpush1.msra.mxu0 %v1200
    %1951 = vmatprep.subr.mxu0 %v1209
    %1952 = vmatpush1.msra.mxu0 %v1208
    %1953 = vmatprep.subr.mxu0 %v1217
    %1954 = vmatpush1.msra.mxu0 %v1216
    %1955 = vmatprep.subr.mxu0 %v1225
    %1956 = vmatpush1.msra.mxu0 %v1224
    %1957 = vmatprep.subr.mxu0 %v1233
    %1958 = vmatpush1.msra.mxu0 %v1232
    %1959 = vmatprep.subr.mxu0 %v1241
    %1960 = vmatpush1.msra.mxu0 %v1240
    %1961 = vmatprep.subr.mxu0 %v1249
    %1962 = vmatpush1.msra.mxu0 %v1248
    %1963 = vmatprep.subr.mxu0 %v1257
    %1964 = vmatpush1.msra.mxu0 %v1256
    %1965 = vmatprep.subr.mxu0 %v1265
    %1966 = vmatpush1.msra.mxu0 %v1264
    %1967 = vmatprep.subr.mxu0 %v1273
    %1968 = vmatpush1.msra.mxu0 %v1272
    %1969 = vmatprep.mubr.f32.mxu0 %v763
    %1970 = vmatmul.mubr.f32.gmra.mrb[0].mxu0 %v762
    %v1971 = vpop.f32.mrb[0].mxu0
    %v1972 = vadd.f32 %v1901, %v1971
    %v1973 = vpop.f32.mrb[0].mxu0
    %v1974 = vadd.f32 %v1903, %v1973
    %1975 = vdwg.mxu0
    %1976 = vmatprep.subr.mxu0 %v1281
    %1977 = vmatpush1.msra.mxu0 %v1280
    %1978 = vmatprep.subr.mxu0 %v1289
    %1979 = vmatpush1.msra.mxu0 %v1288
    %1980 = vmatprep.subr.mxu0 %v1297
    %1981 = vmatpush1.msra.mxu0 %v1296
    %1982 = vmatprep.subr.mxu0 %v1305
    %1983 = vmatpush1.msra.mxu0 %v1304
    %1984 = vmatprep.subr.mxu0 %v1313
    %1985 = vmatpush1.msra.mxu0 %v1312
    %1986 = vmatprep.subr.mxu0 %v1321
    %1987 = vmatpush1.msra.mxu0 %v1320
    %1988 = vmatprep.subr.mxu0 %v1329
    %1989 = vmatpush1.msra.mxu0 %v1328
    %1990 = vmatprep.subr.mxu0 %v1337
    %1991 = vmatpush1.msra.mxu0 %v1336
    %1992 = vmatprep.subr.mxu0 %v1345
    %1993 = vmatpush1.msra.mxu0 %v1344
    %1994 = vmatprep.subr.mxu0 %v1353
    %1995 = vmatpush1.msra.mxu0 %v1352
    %1996 = vmatprep.subr.mxu0 %v1361
    %1997 = vmatpush1.msra.mxu0 %v1360
    %1998 = vmatprep.subr.mxu0 %v1369
    %1999 = vmatpush1.msra.mxu0 %v1368
    %2000 = vmatprep.subr.mxu0 %v1377
    %2001 = vmatpush1.msra.mxu0 %v1376
    %2002 = vmatprep.subr.mxu0 %v1385
    %2003 = vmatpush1.msra.mxu0 %v1384
    %2004 = vmatprep.subr.mxu0 %v1393
    %2005 = vmatpush1.msra.mxu0 %v1392
    %2006 = vmatprep.subr.mxu0 %v1401
    %2007 = vmatpush1.msra.mxu0 %v1400
    %2008 = vmatprep.subr.mxu0 %v1409
    %2009 = vmatpush1.msra.mxu0 %v1408
    %2010 = vmatprep.subr.mxu0 %v1417
    %2011 = vmatpush1.msra.mxu0 %v1416
    %2012 = vmatprep.subr.mxu0 %v1425
    %2013 = vmatpush1.msra.mxu0 %v1424
    %2014 = vmatprep.subr.mxu0 %v1433
    %2015 = vmatpush1.msra.mxu0 %v1432
    %2016 = vmatprep.subr.mxu0 %v1441
    %2017 = vmatpush1.msra.mxu0 %v1440
    %2018 = vmatprep.subr.mxu0 %v1449
    %2019 = vmatpush1.msra.mxu0 %v1448
    %2020 = vmatprep.subr.mxu0 %v1457
    %2021 = vmatpush1.msra.mxu0 %v1456
    %2022 = vmatprep.subr.mxu0 %v1465
    %2023 = vmatpush1.msra.mxu0 %v1464
    %2024 = vmatprep.subr.mxu0 %v1473
    %2025 = vmatpush1.msra.mxu0 %v1472
    %2026 = vmatprep.subr.mxu0 %v1481
    %2027 = vmatpush1.msra.mxu0 %v1480
    %2028 = vmatprep.subr.mxu0 %v1489
    %2029 = vmatpush1.msra.mxu0 %v1488
    %2030 = vmatprep.subr.mxu0 %v1497
    %2031 = vmatpush1.msra.mxu0 %v1496
    %2032 = vmatprep.subr.mxu0 %v1505
    %2033 = vmatpush1.msra.mxu0 %v1504
    %2034 = vmatprep.subr.mxu0 %v1513
    %2035 = vmatpush1.msra.mxu0 %v1512
    %2036 = vmatprep.subr.mxu0 %v1521
    %2037 = vmatpush1.msra.mxu0 %v1520
    %2038 = vmatprep.subr.mxu0 %v1529
    %2039 = vmatpush1.msra.mxu0 %v1528
    %2040 = vmatprep.mubr.f32.mxu0 %v765
    %2041 = vmatmul.mubr.f32.gmra.mrb[0].mxu0 %v764
    %v2042 = vpop.f32.mrb[0].mxu0
    %v2043 = vadd.f32 %v1972, %v2042
    %v2044 = vpop.f32.mrb[0].mxu0
    %v2045 = vadd.f32 %v1974, %v2044
    %2046 = vdwg.mxu0
    %2047 = vmatprep.subr.mxu0 %v1537
    %2048 = vmatpush1.msra.mxu0 %v1536
    %2049 = vmatprep.subr.mxu0 %v1545
    %2050 = vmatpush1.msra.mxu0 %v1544
    %2051 = vmatprep.subr.mxu0 %v1553
    %2052 = vmatpush1.msra.mxu0 %v1552
    %2053 = vmatprep.subr.mxu0 %v1561
    %2054 = vmatpush1.msra.mxu0 %v1560
    %2055 = vmatprep.subr.mxu0 %v1569
    %2056 = vmatpush1.msra.mxu0 %v1568
    %2057 = vmatprep.subr.mxu0 %v1577
    %2058 = vmatpush1.msra.mxu0 %v1576
    %2059 = vmatprep.subr.mxu0 %v1585
    %2060 = vmatpush1.msra.mxu0 %v1584
    %2061 = vmatprep.subr.mxu0 %v1593
    %2062 = vmatpush1.msra.mxu0 %v1592
    %2063 = vmatprep.subr.mxu0 %v1601
    %2064 = vmatpush1.msra.mxu0 %v1600
    %2065 = vmatprep.subr.mxu0 %v1609
    %2066 = vmatpush1.msra.mxu0 %v1608
    %2067 = vmatprep.subr.mxu0 %v1617
    %2068 = vmatpush1.msra.mxu0 %v1616
    %2069 = vmatprep.subr.mxu0 %v1625
    %2070 = vmatpush1.msra.mxu0 %v1624
    %2071 = vmatprep.subr.mxu0 %v1633
    %2072 = vmatpush1.msra.mxu0 %v1632
    %2073 = vmatprep.subr.mxu0 %v1641
    %2074 = vmatpush1.msra.mxu0 %v1640
    %2075 = vmatprep.subr.mxu0 %v1649
    %2076 = vmatpush1.msra.mxu0 %v1648
    %2077 = vmatprep.subr.mxu0 %v1657
    %2078 = vmatpush1.msra.mxu0 %v1656
    %2079 = vmatprep.subr.mxu0 %v1665
    %2080 = vmatpush1.msra.mxu0 %v1664
    %2081 = vmatprep.subr.mxu0 %v1673
    %2082 = vmatpush1.msra.mxu0 %v1672
    %2083 = vmatprep.subr.mxu0 %v1681
    %2084 = vmatpush1.msra.mxu0 %v1680
    %2085 = vmatprep.subr.mxu0 %v1689
    %2086 = vmatpush1.msra.mxu0 %v1688
    %2087 = vmatprep.subr.mxu0 %v1697
    %2088 = vmatpush1.msra.mxu0 %v1696
    %2089 = vmatprep.subr.mxu0 %v1705
    %2090 = vmatpush1.msra.mxu0 %v1704
    %2091 = vmatprep.subr.mxu0 %v1713
    %2092 = vmatpush1.msra.mxu0 %v1712
    %2093 = vmatprep.subr.mxu0 %v1721
    %2094 = vmatpush1.msra.mxu0 %v1720
    %2095 = vmatprep.subr.mxu0 %v1729
    %2096 = vmatpush1.msra.mxu0 %v1728
    %2097 = vmatprep.subr.mxu0 %v1737
    %2098 = vmatpush1.msra.mxu0 %v1736
    %2099 = vmatprep.subr.mxu0 %v1745
    %2100 = vmatpush1.msra.mxu0 %v1744
    %2101 = vmatprep.subr.mxu0 %v1753
    %2102 = vmatpush1.msra.mxu0 %v1752
    %2103 = vmatprep.subr.mxu0 %v1761
    %2104 = vmatpush1.msra.mxu0 %v1760
    %2105 = vmatprep.subr.mxu0 %v1769
    %2106 = vmatpush1.msra.mxu0 %v1768
    %2107 = vmatprep.subr.mxu0 %v1777
    %2108 = vmatpush1.msra.mxu0 %v1776
    %2109 = vmatprep.subr.mxu0 %v1785
    %2110 = vmatpush1.msra.mxu0 %v1784
    %2111 = vmatprep.mubr.f32.mxu0 %v767
    %2112 = vmatmul.mubr.f32.gmra.mrb[0].mxu0 %v766
    %v2113 = vpop.f32.mrb[0].mxu0
    %v2114 = vadd.f32 %v2043, %v2113
    %v2115 = vpop.f32.mrb[0].mxu0
    %v2116 = vadd.f32 %v2045, %v2115
    %2117 = vdwg.mxu0
    %2118 = vmatprep.subr.mxu0 %v771
    %2119 = vmatpush1.msra.mxu0 %v770
    %2120 = vmatprep.subr.mxu0 %v779
    %2121 = vmatpush1.msra.mxu0 %v778
    %2122 = vmatprep.subr.mxu0 %v787
    %2123 = vmatpush1.msra.mxu0 %v786
    %2124 = vmatprep.subr.mxu0 %v795
    %2125 = vmatpush1.msra.mxu0 %v794
    %2126 = vmatprep.subr.mxu0 %v803
    %2127 = vmatpush1.msra.mxu0 %v802
    %2128 = vmatprep.subr.mxu0 %v811
    %2129 = vmatpush1.msra.mxu0 %v810
    %2130 = vmatprep.subr.mxu0 %v819
    %2131 = vmatpush1.msra.mxu0 %v818
    %2132 = vmatprep.subr.mxu0 %v827
    %2133 = vmatpush1.msra.mxu0 %v826
    %2134 = vmatprep.subr.mxu0 %v835
    %2135 = vmatpush1.msra.mxu0 %v834
    %2136 = vmatprep.subr.mxu0 %v843
    %2137 = vmatpush1.msra.mxu0 %v842
    %2138 = vmatprep.subr.mxu0 %v851
    %2139 = vmatpush1.msra.mxu0 %v850
    %2140 = vmatprep.subr.mxu0 %v859
    %2141 = vmatpush1.msra.mxu0 %v858
    %2142 = vmatprep.subr.mxu0 %v867
    %2143 = vmatpush1.msra.mxu0 %v866
    %2144 = vmatprep.subr.mxu0 %v875
    %2145 = vmatpush1.msra.mxu0 %v874
    %2146 = vmatprep.subr.mxu0 %v883
    %2147 = vmatpush1.msra.mxu0 %v882
    %2148 = vmatprep.subr.mxu0 %v891
    %2149 = vmatpush1.msra.mxu0 %v890
    %2150 = vmatprep.subr.mxu0 %v899
    %2151 = vmatpush1.msra.mxu0 %v898
    %2152 = vmatprep.subr.mxu0 %v907
    %2153 = vmatpush1.msra.mxu0 %v906
    %2154 = vmatprep.subr.mxu0 %v915
    %2155 = vmatpush1.msra.mxu0 %v914
    %2156 = vmatprep.subr.mxu0 %v923
    %2157 = vmatpush1.msra.mxu0 %v922
    %2158 = vmatprep.subr.mxu0 %v931
    %2159 = vmatpush1.msra.mxu0 %v930
    %2160 = vmatprep.subr.mxu0 %v939
    %2161 = vmatpush1.msra.mxu0 %v938
    %2162 = vmatprep.subr.mxu0 %v947
    %2163 = vmatpush1.msra.mxu0 %v946
    %2164 = vmatprep.subr.mxu0 %v955
    %2165 = vmatpush1.msra.mxu0 %v954
    %2166 = vmatprep.subr.mxu0 %v963
    %2167 = vmatpush1.msra.mxu0 %v962
    %2168 = vmatprep.subr.mxu0 %v971
    %2169 = vmatpush1.msra.mxu0 %v970
    %2170 = vmatprep.subr.mxu0 %v979
    %2171 = vmatpush1.msra.mxu0 %v978
    %2172 = vmatprep.subr.mxu0 %v987
    %2173 = vmatpush1.msra.mxu0 %v986
    %2174 = vmatprep.subr.mxu0 %v995
    %2175 = vmatpush1.msra.mxu0 %v994
    %2176 = vmatprep.subr.mxu0 %v1003
    %2177 = vmatpush1.msra.mxu0 %v1002
    %2178 = vmatprep.subr.mxu0 %v1011
    %2179 = vmatpush1.msra.mxu0 %v1010
    %2180 = vmatprep.subr.mxu0 %v1019
    %2181 = vmatpush1.msra.mxu0 %v1018
    %2182 = vmatprep.mubr.f32.mxu0 %v761
    %2183 = vmatmul.mubr.f32.gmra.mrb[0].mxu0 %v760
    %v2184 = vpop.f32.mrb[0].mxu0
    %v2185 = vadd.f32 %v1805, %v2184
    %v2186 = vpop.f32.mrb[0].mxu0
    %v2187 = vadd.f32 %v1809, %v2186
    %2188 = vdwg.mxu0
    %2189 = vmatprep.subr.mxu0 %v1027
    %2190 = vmatpush1.msra.mxu0 %v1026
    %2191 = vmatprep.subr.mxu0 %v1035
    %2192 = vmatpush1.msra.mxu0 %v1034
    %2193 = vmatprep.subr.mxu0 %v1043
    %2194 = vmatpush1.msra.mxu0 %v1042
    %2195 = vmatprep.subr.mxu0 %v1051
    %2196 = vmatpush1.msra.mxu0 %v1050
    %2197 = vmatprep.subr.mxu0 %v1059
    %2198 = vmatpush1.msra.mxu0 %v1058
    %2199 = vmatprep.subr.mxu0 %v1067
    %2200 = vmatpush1.msra.mxu0 %v1066
    %2201 = vmatprep.subr.mxu0 %v1075
    %2202 = vmatpush1.msra.mxu0 %v1074
    %2203 = vmatprep.subr.mxu0 %v1083
    %2204 = vmatpush1.msra.mxu0 %v1082
    %2205 = vmatprep.subr.mxu0 %v1091
    %2206 = vmatpush1.msra.mxu0 %v1090
    %2207 = vmatprep.subr.mxu0 %v1099
    %2208 = vmatpush1.msra.mxu0 %v1098
    %2209 = vmatprep.subr.mxu0 %v1107
    %2210 = vmatpush1.msra.mxu0 %v1106
    %2211 = vmatprep.subr.mxu0 %v1115
    %2212 = vmatpush1.msra.mxu0 %v1114
    %2213 = vmatprep.subr.mxu0 %v1123
    %2214 = vmatpush1.msra.mxu0 %v1122
    %2215 = vmatprep.subr.mxu0 %v1131
    %2216 = vmatpush1.msra.mxu0 %v1130
    %2217 = vmatprep.subr.mxu0 %v1139
    %2218 = vmatpush1.msra.mxu0 %v1138
    %2219 = vmatprep.subr.mxu0 %v1147
    %2220 = vmatpush1.msra.mxu0 %v1146
    %2221 = vmatprep.subr.mxu0 %v1155
    %2222 = vmatpush1.msra.mxu0 %v1154
    %2223 = vmatprep.subr.mxu0 %v1163
    %2224 = vmatpush1.msra.mxu0 %v1162
    %2225 = vmatprep.subr.mxu0 %v1171
    %2226 = vmatpush1.msra.mxu0 %v1170
    %2227 = vmatprep.subr.mxu0 %v1179
    %2228 = vmatpush1.msra.mxu0 %v1178
    %2229 = vmatprep.subr.mxu0 %v1187
    %2230 = vmatpush1.msra.mxu0 %v1186
    %2231 = vmatprep.subr.mxu0 %v1195
    %2232 = vmatpush1.msra.mxu0 %v1194
    %2233 = vmatprep.subr.mxu0 %v1203
    %2234 = vmatpush1.msra.mxu0 %v1202
    %2235 = vmatprep.subr.mxu0 %v1211
    %2236 = vmatpush1.msra.mxu0 %v1210
    %2237 = vmatprep.subr.mxu0 %v1219
    %2238 = vmatpush1.msra.mxu0 %v1218
    %2239 = vmatprep.subr.mxu0 %v1227
    %2240 = vmatpush1.msra.mxu0 %v1226
    %2241 = vmatprep.subr.mxu0 %v1235
    %2242 = vmatpush1.msra.mxu0 %v1234
    %2243 = vmatprep.subr.mxu0 %v1243
    %2244 = vmatpush1.msra.mxu0 %v1242
    %2245 = vmatprep.subr.mxu0 %v1251
    %2246 = vmatpush1.msra.mxu0 %v1250
    %2247 = vmatprep.subr.mxu0 %v1259
    %2248 = vmatpush1.msra.mxu0 %v1258
    %2249 = vmatprep.subr.mxu0 %v1267
    %2250 = vmatpush1.msra.mxu0 %v1266
    %2251 = vmatprep.subr.mxu0 %v1275
    %2252 = vmatpush1.msra.mxu0 %v1274
    %2253 = vmatprep.mubr.f32.mxu0 %v763
    %2254 = vmatmul.mubr.f32.gmra.mrb[0].mxu0 %v762
    %v2255 = vpop.f32.mrb[0].mxu0
    %v2256 = vadd.f32 %v2185, %v2255
    %v2257 = vpop.f32.mrb[0].mxu0
    %v2258 = vadd.f32 %v2187, %v2257
    %2259 = vdwg.mxu0
    %2260 = vmatprep.subr.mxu0 %v1283
    %2261 = vmatpush1.msra.mxu0 %v1282
    %2262 = vmatprep.subr.mxu0 %v1291
    %2263 = vmatpush1.msra.mxu0 %v1290
    %2264 = vmatprep.subr.mxu0 %v1299
    %2265 = vmatpush1.msra.mxu0 %v1298
    %2266 = vmatprep.subr.mxu0 %v1307
    %2267 = vmatpush1.msra.mxu0 %v1306
    %2268 = vmatprep.subr.mxu0 %v1315
    %2269 = vmatpush1.msra.mxu0 %v1314
    %2270 = vmatprep.subr.mxu0 %v1323
    %2271 = vmatpush1.msra.mxu0 %v1322
    %2272 = vmatprep.subr.mxu0 %v1331
    %2273 = vmatpush1.msra.mxu0 %v1330
    %2274 = vmatprep.subr.mxu0 %v1339
    %2275 = vmatpush1.msra.mxu0 %v1338
    %2276 = vmatprep.subr.mxu0 %v1347
    %2277 = vmatpush1.msra.mxu0 %v1346
    %2278 = vmatprep.subr.mxu0 %v1355
    %2279 = vmatpush1.msra.mxu0 %v1354
    %2280 = vmatprep.subr.mxu0 %v1363
    %2281 = vmatpush1.msra.mxu0 %v1362
    %2282 = vmatprep.subr.mxu0 %v1371
    %2283 = vmatpush1.msra.mxu0 %v1370
    %2284 = vmatprep.subr.mxu0 %v1379
    %2285 = vmatpush1.msra.mxu0 %v1378
    %2286 = vmatprep.subr.mxu0 %v1387
    %2287 = vmatpush1.msra.mxu0 %v1386
    %2288 = vmatprep.subr.mxu0 %v1395
    %2289 = vmatpush1.msra.mxu0 %v1394
    %2290 = vmatprep.subr.mxu0 %v1403
    %2291 = vmatpush1.msra.mxu0 %v1402
    %2292 = vmatprep.subr.mxu0 %v1411
    %2293 = vmatpush1.msra.mxu0 %v1410
    %2294 = vmatprep.subr.mxu0 %v1419
    %2295 = vmatpush1.msra.mxu0 %v1418
    %2296 = vmatprep.subr.mxu0 %v1427
    %2297 = vmatpush1.msra.mxu0 %v1426
    %2298 = vmatprep.subr.mxu0 %v1435
    %2299 = vmatpush1.msra.mxu0 %v1434
    %2300 = vmatprep.subr.mxu0 %v1443
    %2301 = vmatpush1.msra.mxu0 %v1442
    %2302 = vmatprep.subr.mxu0 %v1451
    %2303 = vmatpush1.msra.mxu0 %v1450
    %2304 = vmatprep.subr.mxu0 %v1459
    %2305 = vmatpush1.msra.mxu0 %v1458
    %2306 = vmatprep.subr.mxu0 %v1467
    %2307 = vmatpush1.msra.mxu0 %v1466
    %2308 = vmatprep.subr.mxu0 %v1475
    %2309 = vmatpush1.msra.mxu0 %v1474
    %2310 = vmatprep.subr.mxu0 %v1483
    %2311 = vmatpush1.msra.mxu0 %v1482
    %2312 = vmatprep.subr.mxu0 %v1491
    %2313 = vmatpush1.msra.mxu0 %v1490
    %2314 = vmatprep.subr.mxu0 %v1499
    %2315 = vmatpush1.msra.mxu0 %v1498
    %2316 = vmatprep.subr.mxu0 %v1507
    %2317 = vmatpush1.msra.mxu0 %v1506
    %2318 = vmatprep.subr.mxu0 %v1515
    %2319 = vmatpush1.msra.mxu0 %v1514
    %2320 = vmatprep.subr.mxu0 %v1523
    %2321 = vmatpush1.msra.mxu0 %v1522
    %2322 = vmatprep.subr.mxu0 %v1531
    %2323 = vmatpush1.msra.mxu0 %v1530
    %2324 = vmatprep.mubr.f32.mxu0 %v765
    %2325 = vmatmul.mubr.f32.gmra.mrb[0].mxu0 %v764
    %v2326 = vpop.f32.mrb[0].mxu0
    %v2327 = vadd.f32 %v2256, %v2326
    %v2328 = vpop.f32.mrb[0].mxu0
    %v2329 = vadd.f32 %v2258, %v2328
    %2330 = vdwg.mxu0
    %2331 = vmatprep.subr.mxu0 %v1539
    %2332 = vmatpush1.msra.mxu0 %v1538
    %2333 = vmatprep.subr.mxu0 %v1547
    %2334 = vmatpush1.msra.mxu0 %v1546
    %2335 = vmatprep.subr.mxu0 %v1555
    %2336 = vmatpush1.msra.mxu0 %v1554
    %2337 = vmatprep.subr.mxu0 %v1563
    %2338 = vmatpush1.msra.mxu0 %v1562
    %2339 = vmatprep.subr.mxu0 %v1571
    %2340 = vmatpush1.msra.mxu0 %v1570
    %2341 = vmatprep.subr.mxu0 %v1579
    %2342 = vmatpush1.msra.mxu0 %v1578
    %2343 = vmatprep.subr.mxu0 %v1587
    %2344 = vmatpush1.msra.mxu0 %v1586
    %2345 = vmatprep.subr.mxu0 %v1595
    %2346 = vmatpush1.msra.mxu0 %v1594
    %2347 = vmatprep.subr.mxu0 %v1603
    %2348 = vmatpush1.msra.mxu0 %v1602
    %2349 = vmatprep.subr.mxu0 %v1611
    %2350 = vmatpush1.msra.mxu0 %v1610
    %2351 = vmatprep.subr.mxu0 %v1619
    %2352 = vmatpush1.msra.mxu0 %v1618
    %2353 = vmatprep.subr.mxu0 %v1627
    %2354 = vmatpush1.msra.mxu0 %v1626
    %2355 = vmatprep.subr.mxu0 %v1635
    %2356 = vmatpush1.msra.mxu0 %v1634
    %2357 = vmatprep.subr.mxu0 %v1643
    %2358 = vmatpush1.msra.mxu0 %v1642
    %2359 = vmatprep.subr.mxu0 %v1651
    %2360 = vmatpush1.msra.mxu0 %v1650
    %2361 = vmatprep.subr.mxu0 %v1659
    %2362 = vmatpush1.msra.mxu0 %v1658
    %2363 = vmatprep.subr.mxu0 %v1667
    %2364 = vmatpush1.msra.mxu0 %v1666
    %2365 = vmatprep.subr.mxu0 %v1675
    %2366 = vmatpush1.msra.mxu0 %v1674
    %2367 = vmatprep.subr.mxu0 %v1683
    %2368 = vmatpush1.msra.mxu0 %v1682
    %2369 = vmatprep.subr.mxu0 %v1691
    %2370 = vmatpush1.msra.mxu0 %v1690
    %2371 = vmatprep.subr.mxu0 %v1699
    %2372 = vmatpush1.msra.mxu0 %v1698
    %2373 = vmatprep.subr.mxu0 %v1707
    %2374 = vmatpush1.msra.mxu0 %v1706
    %2375 = vmatprep.subr.mxu0 %v1715
    %2376 = vmatpush1.msra.mxu0 %v1714
    %2377 = vmatprep.subr.mxu0 %v1723
    %2378 = vmatpush1.msra.mxu0 %v1722
    %2379 = vmatprep.subr.mxu0 %v1731
    %2380 = vmatpush1.msra.mxu0 %v1730
    %2381 = vmatprep.subr.mxu0 %v1739
    %2382 = vmatpush1.msra.mxu0 %v1738
    %2383 = vmatprep.subr.mxu0 %v1747
    %2384 = vmatpush1.msra.mxu0 %v1746
    %2385 = vmatprep.subr.mxu0 %v1755
    %2386 = vmatpush1.msra.mxu0 %v1754
    %2387 = vmatprep.subr.mxu0 %v1763
    %2388 = vmatpush1.msra.mxu0 %v1762
    %2389 = vmatprep.subr.mxu0 %v1771
    %2390 = vmatpush1.msra.mxu0 %v1770
    %2391 = vmatprep.subr.mxu0 %v1779
    %2392 = vmatpush1.msra.mxu0 %v1778
    %2393 = vmatprep.subr.mxu0 %v1787
    %2394 = vmatpush1.msra.mxu0 %v1786
    %2395 = vmatprep.mubr.f32.mxu0 %v767
    %2396 = vmatmul.mubr.f32.gmra.mrb[0].mxu0 %v766
    %v2397 = vpop.f32.mrb[0].mxu0
    %v2398 = vadd.f32 %v2327, %v2397
    %v2399 = vpop.f32.mrb[0].mxu0
    %v2400 = vadd.f32 %v2329, %v2399
    %2401 = vdwg.mxu0
    %2402 = vmatprep.subr.mxu0 %v773
    %2403 = vmatpush1.msra.mxu0 %v772
    %2404 = vmatprep.subr.mxu0 %v781
    %2405 = vmatpush1.msra.mxu0 %v780
    %2406 = vmatprep.subr.mxu0 %v789
    %2407 = vmatpush1.msra.mxu0 %v788
    %2408 = vmatprep.subr.mxu0 %v797
    %2409 = vmatpush1.msra.mxu0 %v796
    %2410 = vmatprep.subr.mxu0 %v805
    %2411 = vmatpush1.msra.mxu0 %v804
    %2412 = vmatprep.subr.mxu0 %v813
    %2413 = vmatpush1.msra.mxu0 %v812
    %2414 = vmatprep.subr.mxu0 %v821
    %2415 = vmatpush1.msra.mxu0 %v820
    %2416 = vmatprep.subr.mxu0 %v829
    %2417 = vmatpush1.msra.mxu0 %v828
    %2418 = vmatprep.subr.mxu0 %v837
    %2419 = vmatpush1.msra.mxu0 %v836
    %2420 = vmatprep.subr.mxu0 %v845
    %2421 = vmatpush1.msra.mxu0 %v844
    %2422 = vmatprep.subr.mxu0 %v853
    %2423 = vmatpush1.msra.mxu0 %v852
    %2424 = vmatprep.subr.mxu0 %v861
    %2425 = vmatpush1.msra.mxu0 %v860
    %2426 = vmatprep.subr.mxu0 %v869
    %2427 = vmatpush1.msra.mxu0 %v868
    %2428 = vmatprep.subr.mxu0 %v877
    %2429 = vmatpush1.msra.mxu0 %v876
    %2430 = vmatprep.subr.mxu0 %v885
    %2431 = vmatpush1.msra.mxu0 %v884
    %2432 = vmatprep.subr.mxu0 %v893
    %2433 = vmatpush1.msra.mxu0 %v892
    %2434 = vmatprep.subr.mxu0 %v901
    %2435 = vmatpush1.msra.mxu0 %v900
    %2436 = vmatprep.subr.mxu0 %v909
    %2437 = vmatpush1.msra.mxu0 %v908
    %2438 = vmatprep.subr.mxu0 %v917
    %2439 = vmatpush1.msra.mxu0 %v916
    %2440 = vmatprep.subr.mxu0 %v925
    %2441 = vmatpush1.msra.mxu0 %v924
    %2442 = vmatprep.subr.mxu0 %v933
    %2443 = vmatpush1.msra.mxu0 %v932
    %2444 = vmatprep.subr.mxu0 %v941
    %2445 = vmatpush1.msra.mxu0 %v940
    %2446 = vmatprep.subr.mxu0 %v949
    %2447 = vmatpush1.msra.mxu0 %v948
    %2448 = vmatprep.subr.mxu0 %v957
    %2449 = vmatpush1.msra.mxu0 %v956
    %2450 = vmatprep.subr.mxu0 %v965
    %2451 = vmatpush1.msra.mxu0 %v964
    %2452 = vmatprep.subr.mxu0 %v973
    %2453 = vmatpush1.msra.mxu0 %v972
    %2454 = vmatprep.subr.mxu0 %v981
    %2455 = vmatpush1.msra.mxu0 %v980
    %2456 = vmatprep.subr.mxu0 %v989
    %2457 = vmatpush1.msra.mxu0 %v988
    %2458 = vmatprep.subr.mxu0 %v997
    %2459 = vmatpush1.msra.mxu0 %v996
    %2460 = vmatprep.subr.mxu0 %v1005
    %2461 = vmatpush1.msra.mxu0 %v1004
    %2462 = vmatprep.subr.mxu0 %v1013
    %2463 = vmatpush1.msra.mxu0 %v1012
    %2464 = vmatprep.subr.mxu0 %v1021
    %2465 = vmatpush1.msra.mxu0 %v1020
    %2466 = vmatprep.mubr.f32.mxu0 %v761
    %2467 = vmatmul.mubr.f32.gmra.mrb[0].mxu0 %v760
    %v2468 = vpop.f32.mrb[0].mxu0
    %v2469 = vadd.f32 %v1813, %v2468
    %v2470 = vpop.f32.mrb[0].mxu0
    %v2471 = vadd.f32 %v1817, %v2470
    %2472 = vdwg.mxu0
    %2473 = vmatprep.subr.mxu0 %v1029
    %2474 = vmatpush1.msra.mxu0 %v1028
    %2475 = vmatprep.subr.mxu0 %v1037
    %2476 = vmatpush1.msra.mxu0 %v1036
    %2477 = vmatprep.subr.mxu0 %v1045
    %2478 = vmatpush1.msra.mxu0 %v1044
    %2479 = vmatprep.subr.mxu0 %v1053
    %2480 = vmatpush1.msra.mxu0 %v1052
    %2481 = vmatprep.subr.mxu0 %v1061
    %2482 = vmatpush1.msra.mxu0 %v1060
    %2483 = vmatprep.subr.mxu0 %v1069
    %2484 = vmatpush1.msra.mxu0 %v1068
    %2485 = vmatprep.subr.mxu0 %v1077
    %2486 = vmatpush1.msra.mxu0 %v1076
    %2487 = vmatprep.subr.mxu0 %v1085
    %2488 = vmatpush1.msra.mxu0 %v1084
    %2489 = vmatprep.subr.mxu0 %v1093
    %2490 = vmatpush1.msra.mxu0 %v1092
    %2491 = vmatprep.subr.mxu0 %v1101
    %2492 = vmatpush1.msra.mxu0 %v1100
    %2493 = vmatprep.subr.mxu0 %v1109
    %2494 = vmatpush1.msra.mxu0 %v1108
    %2495 = vmatprep.subr.mxu0 %v1117
    %2496 = vmatpush1.msra.mxu0 %v1116
    %2497 = vmatprep.subr.mxu0 %v1125
    %2498 = vmatpush1.msra.mxu0 %v1124
    %2499 = vmatprep.subr.mxu0 %v1133
    %2500 = vmatpush1.msra.mxu0 %v1132
    %2501 = vmatprep.subr.mxu0 %v1141
    %2502 = vmatpush1.msra.mxu0 %v1140
    %2503 = vmatprep.subr.mxu0 %v1149
    %2504 = vmatpush1.msra.mxu0 %v1148
    %2505 = vmatprep.subr.mxu0 %v1157
    %2506 = vmatpush1.msra.mxu0 %v1156
    %2507 = vmatprep.subr.mxu0 %v1165
    %2508 = vmatpush1.msra.mxu0 %v1164
    %2509 = vmatprep.subr.mxu0 %v1173
    %2510 = vmatpush1.msra.mxu0 %v1172
    %2511 = vmatprep.subr.mxu0 %v1181
    %2512 = vmatpush1.msra.mxu0 %v1180
    %2513 = vmatprep.subr.mxu0 %v1189
    %2514 = vmatpush1.msra.mxu0 %v1188
    %2515 = vmatprep.subr.mxu0 %v1197
    %2516 = vmatpush1.msra.mxu0 %v1196
    %2517 = vmatprep.subr.mxu0 %v1205
    %2518 = vmatpush1.msra.mxu0 %v1204
    %2519 = vmatprep.subr.mxu0 %v1213
    %2520 = vmatpush1.msra.mxu0 %v1212
    %2521 = vmatprep.subr.mxu0 %v1221
    %2522 = vmatpush1.msra.mxu0 %v1220
    %2523 = vmatprep.subr.mxu0 %v1229
    %2524 = vmatpush1.msra.mxu0 %v1228
    %2525 = vmatprep.subr.mxu0 %v1237
    %2526 = vmatpush1.msra.mxu0 %v1236
    %2527 = vmatprep.subr.mxu0 %v1245
    %2528 = vmatpush1.msra.mxu0 %v1244
    %2529 = vmatprep.subr.mxu0 %v1253
    %2530 = vmatpush1.msra.mxu0 %v1252
    %2531 = vmatprep.subr.mxu0 %v1261
    %2532 = vmatpush1.msra.mxu0 %v1260
    %2533 = vmatprep.subr.mxu0 %v1269
    %2534 = vmatpush1.msra.mxu0 %v1268
    %2535 = vmatprep.subr.mxu0 %v1277
    %2536 = vmatpush1.msra.mxu0 %v1276
    %2537 = vmatprep.mubr.f32.mxu0 %v763
    %2538 = vmatmul.mubr.f32.gmra.mrb[0].mxu0 %v762
    %v2539 = vpop.f32.mrb[0].mxu0
    %v2540 = vadd.f32 %v2469, %v2539
    %v2541 = vpop.f32.mrb[0].mxu0
    %v2542 = vadd.f32 %v2471, %v2541
    %2543 = vdwg.mxu0
    %2544 = vmatprep.subr.mxu0 %v1285
    %2545 = vmatpush1.msra.mxu0 %v1284
    %2546 = vmatprep.subr.mxu0 %v1293
    %2547 = vmatpush1.msra.mxu0 %v1292
    %2548 = vmatprep.subr.mxu0 %v1301
    %2549 = vmatpush1.msra.mxu0 %v1300
    %2550 = vmatprep.subr.mxu0 %v1309
    %2551 = vmatpush1.msra.mxu0 %v1308
    %2552 = vmatprep.subr.mxu0 %v1317
    %2553 = vmatpush1.msra.mxu0 %v1316
    %2554 = vmatprep.subr.mxu0 %v1325
    %2555 = vmatpush1.msra.mxu0 %v1324
    %2556 = vmatprep.subr.mxu0 %v1333
    %2557 = vmatpush1.msra.mxu0 %v1332
    %2558 = vmatprep.subr.mxu0 %v1341
    %2559 = vmatpush1.msra.mxu0 %v1340
    %2560 = vmatprep.subr.mxu0 %v1349
    %2561 = vmatpush1.msra.mxu0 %v1348
    %2562 = vmatprep.subr.mxu0 %v1357
    %2563 = vmatpush1.msra.mxu0 %v1356
    %2564 = vmatprep.subr.mxu0 %v1365
    %2565 = vmatpush1.msra.mxu0 %v1364
    %2566 = vmatprep.subr.mxu0 %v1373
    %2567 = vmatpush1.msra.mxu0 %v1372
    %2568 = vmatprep.subr.mxu0 %v1381
    %2569 = vmatpush1.msra.mxu0 %v1380
    %2570 = vmatprep.subr.mxu0 %v1389
    %2571 = vmatpush1.msra.mxu0 %v1388
    %2572 = vmatprep.subr.mxu0 %v1397
    %2573 = vmatpush1.msra.mxu0 %v1396
    %2574 = vmatprep.subr.mxu0 %v1405
    %2575 = vmatpush1.msra.mxu0 %v1404
    %2576 = vmatprep.subr.mxu0 %v1413
    %2577 = vmatpush1.msra.mxu0 %v1412
    %2578 = vmatprep.subr.mxu0 %v1421
    %2579 = vmatpush1.msra.mxu0 %v1420
    %2580 = vmatprep.subr.mxu0 %v1429
    %2581 = vmatpush1.msra.mxu0 %v1428
    %2582 = vmatprep.subr.mxu0 %v1437
    %2583 = vmatpush1.msra.mxu0 %v1436
    %2584 = vmatprep.subr.mxu0 %v1445
    %2585 = vmatpush1.msra.mxu0 %v1444
    %2586 = vmatprep.subr.mxu0 %v1453
    %2587 = vmatpush1.msra.mxu0 %v1452
    %2588 = vmatprep.subr.mxu0 %v1461
    %2589 = vmatpush1.msra.mxu0 %v1460
    %2590 = vmatprep.subr.mxu0 %v1469
    %2591 = vmatpush1.msra.mxu0 %v1468
    %2592 = vmatprep.subr.mxu0 %v1477
    %2593 = vmatpush1.msra.mxu0 %v1476
    %2594 = vmatprep.subr.mxu0 %v1485
    %2595 = vmatpush1.msra.mxu0 %v1484
    %2596 = vmatprep.subr.mxu0 %v1493
    %2597 = vmatpush1.msra.mxu0 %v1492
    %2598 = vmatprep.subr.mxu0 %v1501
    %2599 = vmatpush1.msra.mxu0 %v1500
    %2600 = vmatprep.subr.mxu0 %v1509
    %2601 = vmatpush1.msra.mxu0 %v1508
    %2602 = vmatprep.subr.mxu0 %v1517
    %2603 = vmatpush1.msra.mxu0 %v1516
    %2604 = vmatprep.subr.mxu0 %v1525
    %2605 = vmatpush1.msra.mxu0 %v1524
    %2606 = vmatprep.subr.mxu0 %v1533
    %2607 = vmatpush1.msra.mxu0 %v1532
    %2608 = vmatprep.mubr.f32.mxu0 %v765
    %2609 = vmatmul.mubr.f32.gmra.mrb[0].mxu0 %v764
    %v2610 = vpop.f32.mrb[0].mxu0
    %v2611 = vadd.f32 %v2540, %v2610
    %v2612 = vpop.f32.mrb[0].mxu0
    %v2613 = vadd.f32 %v2542, %v2612
    %2614 = vdwg.mxu0
    %2615 = vmatprep.subr.mxu0 %v1541
    %2616 = vmatpush1.msra.mxu0 %v1540
    %2617 = vmatprep.subr.mxu0 %v1549
    %2618 = vmatpush1.msra.mxu0 %v1548
    %2619 = vmatprep.subr.mxu0 %v1557
    %2620 = vmatpush1.msra.mxu0 %v1556
    %2621 = vmatprep.subr.mxu0 %v1565
    %2622 = vmatpush1.msra.mxu0 %v1564
    %2623 = vmatprep.subr.mxu0 %v1573
    %2624 = vmatpush1.msra.mxu0 %v1572
    %2625 = vmatprep.subr.mxu0 %v1581
    %2626 = vmatpush1.msra.mxu0 %v1580
    %2627 = vmatprep.subr.mxu0 %v1589
    %2628 = vmatpush1.msra.mxu0 %v1588
    %2629 = vmatprep.subr.mxu0 %v1597
    %2630 = vmatpush1.msra.mxu0 %v1596
    %2631 = vmatprep.subr.mxu0 %v1605
    %2632 = vmatpush1.msra.mxu0 %v1604
    %2633 = vmatprep.subr.mxu0 %v1613
    %2634 = vmatpush1.msra.mxu0 %v1612
    %2635 = vmatprep.subr.mxu0 %v1621
    %2636 = vmatpush1.msra.mxu0 %v1620
    %2637 = vmatprep.subr.mxu0 %v1629
    %2638 = vmatpush1.msra.mxu0 %v1628
    %2639 = vmatprep.subr.mxu0 %v1637
    %2640 = vmatpush1.msra.mxu0 %v1636
    %2641 = vmatprep.subr.mxu0 %v1645
    %2642 = vmatpush1.msra.mxu0 %v1644
    %2643 = vmatprep.subr.mxu0 %v1653
    %2644 = vmatpush1.msra.mxu0 %v1652
    %2645 = vmatprep.subr.mxu0 %v1661
    %2646 = vmatpush1.msra.mxu0 %v1660
    %2647 = vmatprep.subr.mxu0 %v1669
    %2648 = vmatpush1.msra.mxu0 %v1668
    %2649 = vmatprep.subr.mxu0 %v1677
    %2650 = vmatpush1.msra.mxu0 %v1676
    %2651 = vmatprep.subr.mxu0 %v1685
    %2652 = vmatpush1.msra.mxu0 %v1684
    %2653 = vmatprep.subr.mxu0 %v1693
    %2654 = vmatpush1.msra.mxu0 %v1692
    %2655 = vmatprep.subr.mxu0 %v1701
    %2656 = vmatpush1.msra.mxu0 %v1700
    %2657 = vmatprep.subr.mxu0 %v1709
    %2658 = vmatpush1.msra.mxu0 %v1708
    %2659 = vmatprep.subr.mxu0 %v1717
    %2660 = vmatpush1.msra.mxu0 %v1716
    %2661 = vmatprep.subr.mxu0 %v1725
    %2662 = vmatpush1.msra.mxu0 %v1724
    %2663 = vmatprep.subr.mxu0 %v1733
    %2664 = vmatpush1.msra.mxu0 %v1732
    %2665 = vmatprep.subr.mxu0 %v1741
    %2666 = vmatpush1.msra.mxu0 %v1740
    %2667 = vmatprep.subr.mxu0 %v1749
    %2668 = vmatpush1.msra.mxu0 %v1748
    %2669 = vmatprep.subr.mxu0 %v1757
    %2670 = vmatpush1.msra.mxu0 %v1756
    %2671 = vmatprep.subr.mxu0 %v1765
    %2672 = vmatpush1.msra.mxu0 %v1764
    %2673 = vmatprep.subr.mxu0 %v1773
    %2674 = vmatpush1.msra.mxu0 %v1772
    %2675 = vmatprep.subr.mxu0 %v1781
    %2676 = vmatpush1.msra.mxu0 %v1780
    %2677 = vmatprep.subr.mxu0 %v1789
    %2678 = vmatpush1.msra.mxu0 %v1788
    %2679 = vmatprep.mubr.f32.mxu0 %v767
    %2680 = vmatmul.mubr.f32.gmra.mrb[0].mxu0 %v766
    %v2681 = vpop.f32.mrb[0].mxu0
    %v2682 = vadd.f32 %v2611, %v2681
    %v2683 = vpop.f32.mrb[0].mxu0
    %v2684 = vadd.f32 %v2613, %v2683
    %2685 = vdwg.mxu0
    %2686 = vmatprep.subr.mxu0 %v775
    %2687 = vmatpush1.msra.mxu0 %v774
    %2688 = vmatprep.subr.mxu0 %v783
    %2689 = vmatpush1.msra.mxu0 %v782
    %2690 = vmatprep.subr.mxu0 %v791
    %2691 = vmatpush1.msra.mxu0 %v790
    %2692 = vmatprep.subr.mxu0 %v799
    %2693 = vmatpush1.msra.mxu0 %v798
    %2694 = vmatprep.subr.mxu0 %v807
    %2695 = vmatpush1.msra.mxu0 %v806
    %2696 = vmatprep.subr.mxu0 %v815
    %2697 = vmatpush1.msra.mxu0 %v814
    %2698 = vmatprep.subr.mxu0 %v823
    %2699 = vmatpush1.msra.mxu0 %v822
    %2700 = vmatprep.subr.mxu0 %v831
    %2701 = vmatpush1.msra.mxu0 %v830
    %2702 = vmatprep.subr.mxu0 %v839
    %2703 = vmatpush1.msra.mxu0 %v838
    %2704 = vmatprep.subr.mxu0 %v847
    %2705 = vmatpush1.msra.mxu0 %v846
    %2706 = vmatprep.subr.mxu0 %v855
    %2707 = vmatpush1.msra.mxu0 %v854
    %2708 = vmatprep.subr.mxu0 %v863
    %2709 = vmatpush1.msra.mxu0 %v862
    %2710 = vmatprep.subr.mxu0 %v871
    %2711 = vmatpush1.msra.mxu0 %v870
    %2712 = vmatprep.subr.mxu0 %v879
    %2713 = vmatpush1.msra.mxu0 %v878
    %2714 = vmatprep.subr.mxu0 %v887
    %2715 = vmatpush1.msra.mxu0 %v886
    %2716 = vmatprep.subr.mxu0 %v895
    %2717 = vmatpush1.msra.mxu0 %v894
    %2718 = vmatprep.subr.mxu0 %v903
    %2719 = vmatpush1.msra.mxu0 %v902
    %2720 = vmatprep.subr.mxu0 %v911
    %2721 = vmatpush1.msra.mxu0 %v910
    %2722 = vmatprep.subr.mxu0 %v919
    %2723 = vmatpush1.msra.mxu0 %v918
    %2724 = vmatprep.subr.mxu0 %v927
    %2725 = vmatpush1.msra.mxu0 %v926
    %2726 = vmatprep.subr.mxu0 %v935
    %2727 = vmatpush1.msra.mxu0 %v934
    %2728 = vmatprep.subr.mxu0 %v943
    %2729 = vmatpush1.msra.mxu0 %v942
    %2730 = vmatprep.subr.mxu0 %v951
    %2731 = vmatpush1.msra.mxu0 %v950
    %2732 = vmatprep.subr.mxu0 %v959
    %2733 = vmatpush1.msra.mxu0 %v958
    %2734 = vmatprep.subr.mxu0 %v967
    %2735 = vmatpush1.msra.mxu0 %v966
    %2736 = vmatprep.subr.mxu0 %v975
    %2737 = vmatpush1.msra.mxu0 %v974
    %2738 = vmatprep.subr.mxu0 %v983
    %2739 = vmatpush1.msra.mxu0 %v982
    %2740 = vmatprep.subr.mxu0 %v991
    %2741 = vmatpush1.msra.mxu0 %v990
    %2742 = vmatprep.subr.mxu0 %v999
    %2743 = vmatpush1.msra.mxu0 %v998
    %2744 = vmatprep.subr.mxu0 %v1007
    %2745 = vmatpush1.msra.mxu0 %v1006
    %2746 = vmatprep.subr.mxu0 %v1015
    %2747 = vmatpush1.msra.mxu0 %v1014
    %2748 = vmatprep.subr.mxu0 %v1023
    %2749 = vmatpush1.msra.mxu0 %v1022
    %2750 = vmatprep.mubr.f32.mxu0 %v761
    %2751 = vmatmul.mubr.f32.gmra.mrb[0].mxu0 %v760
    %v2752 = vpop.f32.mrb[0].mxu0
    %v2753 = vadd.f32 %v1821, %v2752
    %v2754 = vpop.f32.mrb[0].mxu0
    %v2755 = vadd.f32 %v1825, %v2754
    %2756 = vdwg.mxu0
    %2757 = vmatprep.subr.mxu0 %v1031
    %2758 = vmatpush1.msra.mxu0 %v1030
    %2759 = vmatprep.subr.mxu0 %v1039
    %2760 = vmatpush1.msra.mxu0 %v1038
    %2761 = vmatprep.subr.mxu0 %v1047
    %2762 = vmatpush1.msra.mxu0 %v1046
    %2763 = vmatprep.subr.mxu0 %v1055
    %2764 = vmatpush1.msra.mxu0 %v1054
    %2765 = vmatprep.subr.mxu0 %v1063
    %2766 = vmatpush1.msra.mxu0 %v1062
    %2767 = vmatprep.subr.mxu0 %v1071
    %2768 = vmatpush1.msra.mxu0 %v1070
    %2769 = vmatprep.subr.mxu0 %v1079
    %2770 = vmatpush1.msra.mxu0 %v1078
    %2771 = vmatprep.subr.mxu0 %v1087
    %2772 = vmatpush1.msra.mxu0 %v1086
    %2773 = vmatprep.subr.mxu0 %v1095
    %2774 = vmatpush1.msra.mxu0 %v1094
    %2775 = vmatprep.subr.mxu0 %v1103
    %2776 = vmatpush1.msra.mxu0 %v1102
    %2777 = vmatprep.subr.mxu0 %v1111
    %2778 = vmatpush1.msra.mxu0 %v1110
    %2779 = vmatprep.subr.mxu0 %v1119
    %2780 = vmatpush1.msra.mxu0 %v1118
    %2781 = vmatprep.subr.mxu0 %v1127
    %2782 = vmatpush1.msra.mxu0 %v1126
    %2783 = vmatprep.subr.mxu0 %v1135
    %2784 = vmatpush1.msra.mxu0 %v1134
    %2785 = vmatprep.subr.mxu0 %v1143
    %2786 = vmatpush1.msra.mxu0 %v1142
    %2787 = vmatprep.subr.mxu0 %v1151
    %2788 = vmatpush1.msra.mxu0 %v1150
    %2789 = vmatprep.subr.mxu0 %v1159
    %2790 = vmatpush1.msra.mxu0 %v1158
    %2791 = vmatprep.subr.mxu0 %v1167
    %2792 = vmatpush1.msra.mxu0 %v1166
    %2793 = vmatprep.subr.mxu0 %v1175
    %2794 = vmatpush1.msra.mxu0 %v1174
    %2795 = vmatprep.subr.mxu0 %v1183
    %2796 = vmatpush1.msra.mxu0 %v1182
    %2797 = vmatprep.subr.mxu0 %v1191
    %2798 = vmatpush1.msra.mxu0 %v1190
    %2799 = vmatprep.subr.mxu0 %v1199
    %2800 = vmatpush1.msra.mxu0 %v1198
    %2801 = vmatprep.subr.mxu0 %v1207
    %2802 = vmatpush1.msra.mxu0 %v1206
    %2803 = vmatprep.subr.mxu0 %v1215
    %2804 = vmatpush1.msra.mxu0 %v1214
    %2805 = vmatprep.subr.mxu0 %v1223
    %2806 = vmatpush1.msra.mxu0 %v1222
    %2807 = vmatprep.subr.mxu0 %v1231
    %2808 = vmatpush1.msra.mxu0 %v1230
    %2809 = vmatprep.subr.mxu0 %v1239
    %2810 = vmatpush1.msra.mxu0 %v1238
    %2811 = vmatprep.subr.mxu0 %v1247
    %2812 = vmatpush1.msra.mxu0 %v1246
    %2813 = vmatprep.subr.mxu0 %v1255
    %2814 = vmatpush1.msra.mxu0 %v1254
    %2815 = vmatprep.subr.mxu0 %v1263
    %2816 = vmatpush1.msra.mxu0 %v1262
    %2817 = vmatprep.subr.mxu0 %v1271
    %2818 = vmatpush1.msra.mxu0 %v1270
    %2819 = vmatprep.subr.mxu0 %v1279
    %2820 = vmatpush1.msra.mxu0 %v1278
    %2821 = vmatprep.mubr.f32.mxu0 %v763
    %2822 = vmatmul.mubr.f32.gmra.mrb[0].mxu0 %v762
    %v2823 = vpop.f32.mrb[0].mxu0
    %v2824 = vadd.f32 %v2753, %v2823
    %v2825 = vpop.f32.mrb[0].mxu0
    %v2826 = vadd.f32 %v2755, %v2825
    %2827 = vdwg.mxu0
    %2828 = vmatprep.subr.mxu0 %v1287
    %2829 = vmatpush1.msra.mxu0 %v1286
    %2830 = vmatprep.subr.mxu0 %v1295
    %2831 = vmatpush1.msra.mxu0 %v1294
    %2832 = vmatprep.subr.mxu0 %v1303
    %2833 = vmatpush1.msra.mxu0 %v1302
    %2834 = vmatprep.subr.mxu0 %v1311
    %2835 = vmatpush1.msra.mxu0 %v1310
    %2836 = vmatprep.subr.mxu0 %v1319
    %2837 = vmatpush1.msra.mxu0 %v1318
    %2838 = vmatprep.subr.mxu0 %v1327
    %2839 = vmatpush1.msra.mxu0 %v1326
    %2840 = vmatprep.subr.mxu0 %v1335
    %2841 = vmatpush1.msra.mxu0 %v1334
    %2842 = vmatprep.subr.mxu0 %v1343
    %2843 = vmatpush1.msra.mxu0 %v1342
    %2844 = vmatprep.subr.mxu0 %v1351
    %2845 = vmatpush1.msra.mxu0 %v1350
    %2846 = vmatprep.subr.mxu0 %v1359
    %2847 = vmatpush1.msra.mxu0 %v1358
    %2848 = vmatprep.subr.mxu0 %v1367
    %2849 = vmatpush1.msra.mxu0 %v1366
    %2850 = vmatprep.subr.mxu0 %v1375
    %2851 = vmatpush1.msra.mxu0 %v1374
    %2852 = vmatprep.subr.mxu0 %v1383
    %2853 = vmatpush1.msra.mxu0 %v1382
    %2854 = vmatprep.subr.mxu0 %v1391
    %2855 = vmatpush1.msra.mxu0 %v1390
    %2856 = vmatprep.subr.mxu0 %v1399
    %2857 = vmatpush1.msra.mxu0 %v1398
    %2858 = vmatprep.subr.mxu0 %v1407
    %2859 = vmatpush1.msra.mxu0 %v1406
    %2860 = vmatprep.subr.mxu0 %v1415
    %2861 = vmatpush1.msra.mxu0 %v1414
    %2862 = vmatprep.subr.mxu0 %v1423
    %2863 = vmatpush1.msra.mxu0 %v1422
    %2864 = vmatprep.subr.mxu0 %v1431
    %2865 = vmatpush1.msra.mxu0 %v1430
    %2866 = vmatprep.subr.mxu0 %v1439
    %2867 = vmatpush1.msra.mxu0 %v1438
    %2868 = vmatprep.subr.mxu0 %v1447
    %2869 = vmatpush1.msra.mxu0 %v1446
    %2870 = vmatprep.subr.mxu0 %v1455
    %2871 = vmatpush1.msra.mxu0 %v1454
    %2872 = vmatprep.subr.mxu0 %v1463
    %2873 = vmatpush1.msra.mxu0 %v1462
    %2874 = vmatprep.subr.mxu0 %v1471
    %2875 = vmatpush1.msra.mxu0 %v1470
    %2876 = vmatprep.subr.mxu0 %v1479
    %2877 = vmatpush1.msra.mxu0 %v1478
    %2878 = vmatprep.subr.mxu0 %v1487
    %2879 = vmatpush1.msra.mxu0 %v1486
    %2880 = vmatprep.subr.mxu0 %v1495
    %2881 = vmatpush1.msra.mxu0 %v1494
    %2882 = vmatprep.subr.mxu0 %v1503
    %2883 = vmatpush1.msra.mxu0 %v1502
    %2884 = vmatprep.subr.mxu0 %v1511
    %2885 = vmatpush1.msra.mxu0 %v1510
    %2886 = vmatprep.subr.mxu0 %v1519
    %2887 = vmatpush1.msra.mxu0 %v1518
    %2888 = vmatprep.subr.mxu0 %v1527
    %2889 = vmatpush1.msra.mxu0 %v1526
    %2890 = vmatprep.subr.mxu0 %v1535
    %2891 = vmatpush1.msra.mxu0 %v1534
    %2892 = vmatprep.mubr.f32.mxu0 %v765
    %2893 = vmatmul.mubr.f32.gmra.mrb[0].mxu0 %v764
    %v2894 = vpop.f32.mrb[0].mxu0
    %v2895 = vadd.f32 %v2824, %v2894
    %v2896 = vpop.f32.mrb[0].mxu0
    %v2897 = vadd.f32 %v2826, %v2896
    %2898 = vdwg.mxu0
    %2899 = vmatprep.subr.mxu0 %v1543
    %2900 = vmatpush1.msra.mxu0 %v1542
    %2901 = vmatprep.subr.mxu0 %v1551
    %2902 = vmatpush1.msra.mxu0 %v1550
    %2903 = vmatprep.subr.mxu0 %v1559
    %2904 = vmatpush1.msra.mxu0 %v1558
    %2905 = vmatprep.subr.mxu0 %v1567
    %2906 = vmatpush1.msra.mxu0 %v1566
    %2907 = vmatprep.subr.mxu0 %v1575
    %2908 = vmatpush1.msra.mxu0 %v1574
    %2909 = vmatprep.subr.mxu0 %v1583
    %2910 = vmatpush1.msra.mxu0 %v1582
    %2911 = vmatprep.subr.mxu0 %v1591
    %2912 = vmatpush1.msra.mxu0 %v1590
    %2913 = vmatprep.subr.mxu0 %v1599
    %2914 = vmatpush1.msra.mxu0 %v1598
    %2915 = vmatprep.subr.mxu0 %v1607
    %2916 = vmatpush1.msra.mxu0 %v1606
    %2917 = vmatprep.subr.mxu0 %v1615
    %2918 = vmatpush1.msra.mxu0 %v1614
    %2919 = vmatprep.subr.mxu0 %v1623
    %2920 = vmatpush1.msra.mxu0 %v1622
    %2921 = vmatprep.subr.mxu0 %v1631
    %2922 = vmatpush1.msra.mxu0 %v1630
    %2923 = vmatprep.subr.mxu0 %v1639
    %2924 = vmatpush1.msra.mxu0 %v1638
    %2925 = vmatprep.subr.mxu0 %v1647
    %2926 = vmatpush1.msra.mxu0 %v1646
    %2927 = vmatprep.subr.mxu0 %v1655
    %2928 = vmatpush1.msra.mxu0 %v1654
    %2929 = vmatprep.subr.mxu0 %v1663
    %2930 = vmatpush1.msra.mxu0 %v1662
    %2931 = vmatprep.subr.mxu0 %v1671
    %2932 = vmatpush1.msra.mxu0 %v1670
    %2933 = vmatprep.subr.mxu0 %v1679
    %2934 = vmatpush1.msra.mxu0 %v1678
    %2935 = vmatprep.subr.mxu0 %v1687
    %2936 = vmatpush1.msra.mxu0 %v1686
    %2937 = vmatprep.subr.mxu0 %v1695
    %2938 = vmatpush1.msra.mxu0 %v1694
    %2939 = vmatprep.subr.mxu0 %v1703
    %2940 = vmatpush1.msra.mxu0 %v1702
    %2941 = vmatprep.subr.mxu0 %v1711
    %2942 = vmatpush1.msra.mxu0 %v1710
    %2943 = vmatprep.subr.mxu0 %v1719
    %2944 = vmatpush1.msra.mxu0 %v1718
    %2945 = vmatprep.subr.mxu0 %v1727
    %2946 = vmatpush1.msra.mxu0 %v1726
    %2947 = vmatprep.subr.mxu0 %v1735
    %2948 = vmatpush1.msra.mxu0 %v1734
    %2949 = vmatprep.subr.mxu0 %v1743
    %2950 = vmatpush1.msra.mxu0 %v1742
    %2951 = vmatprep.subr.mxu0 %v1751
    %2952 = vmatpush1.msra.mxu0 %v1750
    %2953 = vmatprep.subr.mxu0 %v1759
    %2954 = vmatpush1.msra.mxu0 %v1758
    %2955 = vmatprep.subr.mxu0 %v1767
    %2956 = vmatpush1.msra.mxu0 %v1766
    %2957 = vmatprep.subr.mxu0 %v1775
    %2958 = vmatpush1.msra.mxu0 %v1774
    %2959 = vmatprep.subr.mxu0 %v1783
    %2960 = vmatpush1.msra.mxu0 %v1782
    %2961 = vmatprep.subr.mxu0 %v1791
    %2962 = vmatpush1.msra.mxu0 %v1790
    %2963 = vmatprep.mubr.f32.mxu0 %v767
    %2964 = vmatmul.mubr.f32.gmra.mrb[0].mxu0 %v766
    %v2965 = vpop.f32.mrb[0].mxu0
    %v2966 = vadd.f32 %v2895, %v2965
    %v2967 = vpop.f32.mrb[0].mxu0
    %v2968 = vadd.f32 %v2897, %v2967
    %2969 = vdwg.mxu0
    %v2970 = vmax.f32 %v2114, 0.0
    %v2971 = vmax.f32 %v2116, 0.0
    %v2972 = vmax.f32 %v2398, 0.0
    %v2973 = vmax.f32 %v2400, 0.0
    %v2974 = vmax.f32 %v2682, 0.0
    %v2975 = vmax.f32 %v2684, 0.0
    %v2976 = vmax.f32 %v2966, 0.0
    %v2977 = vmax.f32 %v2968, 0.0
    %v2978 = vld [vmem:[#allocation11] sm:$0xff]
    %v2979 = vld [vmem:[#allocation11 + $0x8] sm:$0xff]
    %v2980 = vld [vmem:[#allocation11 + $0x10] sm:$0xff]
    %v2981 = vld [vmem:[#allocation11 + $0x18] sm:$0xff]
    %v2982 = vld [vmem:[#allocation11 + $0x20] sm:$0xff]
    %v2983 = vld [vmem:[#allocation11 + $0x28] sm:$0xff]
    %v2984 = vld [vmem:[#allocation11 + $0x30] sm:$0xff]
    %v2985 = vld [vmem:[#allocation11 + $0x38] sm:$0xff]
    %v2986 = vld [vmem:[#allocation11 + $0x40] sm:$0xff]
    %v2987 = vld [vmem:[#allocation11 + $0x48] sm:$0xff]
    %v2988 = vld [vmem:[#allocation11 + $0x50] sm:$0xff]
    %v2989 = vld [vmem:[#allocation11 + $0x58] sm:$0xff]
    %v2990 = vld [vmem:[#allocation11 + $0x60] sm:$0xff]
    %v2991 = vld [vmem:[#allocation11 + $0x68] sm:$0xff]
    %v2992 = vld [vmem:[#allocation11 + $0x70] sm:$0xff]
    %v2993 = vld [vmem:[#allocation11 + $0x78] sm:$0xff]
    %v2994 = vld [vmem:[#allocation11 + $0x80] sm:$0xff]
    %v2995 = vld [vmem:[#allocation11 + $0x88] sm:$0xff]
    %v2996 = vld [vmem:[#allocation11 + $0x90] sm:$0xff]
    %v2997 = vld [vmem:[#allocation11 + $0x98] sm:$0xff]
    %v2998 = vld [vmem:[#allocation11 + $0xa0] sm:$0xff]
    %v2999 = vld [vmem:[#allocation11 + $0xa8] sm:$0xff]
    %v3000 = vld [vmem:[#allocation11 + $0xb0] sm:$0xff]
    %v3001 = vld [vmem:[#allocation11 + $0xb8] sm:$0xff]
    %v3002 = vld [vmem:[#allocation11 + $0xc0] sm:$0xff]
    %v3003 = vld [vmem:[#allocation11 + $0xc8] sm:$0xff]
    %v3004 = vld [vmem:[#allocation11 + $0xd0] sm:$0xff]
    %v3005 = vld [vmem:[#allocation11 + $0xd8] sm:$0xff]
    %v3006 = vld [vmem:[#allocation11 + $0xe0] sm:$0xff]
    %v3007 = vld [vmem:[#allocation11 + $0xe8] sm:$0xff]
    %v3008 = vld [vmem:[#allocation11 + $0xf0] sm:$0xff]
    %v3009 = vld [vmem:[#allocation11 + $0xf8] sm:$0xff]
    %v3010 = vld [vmem:[#allocation11 + $0x100] sm:$0xff]
    %v3011 = vld [vmem:[#allocation11 + $0x108] sm:$0xff]
    %v3012 = vld [vmem:[#allocation11 + $0x110] sm:$0xff]
    %v3013 = vld [vmem:[#allocation11 + $0x118] sm:$0xff]
    %v3014 = vld [vmem:[#allocation11 + $0x120] sm:$0xff]
    %v3015 = vld [vmem:[#allocation11 + $0x128] sm:$0xff]
    %v3016 = vld [vmem:[#allocation11 + $0x130] sm:$0xff]
    %v3017 = vld [vmem:[#allocation11 + $0x138] sm:$0xff]
    %v3018 = vld [vmem:[#allocation11 + $0x140] sm:$0xff]
    %v3019 = vld [vmem:[#allocation11 + $0x148] sm:$0xff]
    %v3020 = vld [vmem:[#allocation11 + $0x150] sm:$0xff]
    %v3021 = vld [vmem:[#allocation11 + $0x158] sm:$0xff]
    %v3022 = vld [vmem:[#allocation11 + $0x160] sm:$0xff]
    %v3023 = vld [vmem:[#allocation11 + $0x168] sm:$0xff]
    %v3024 = vld [vmem:[#allocation11 + $0x170] sm:$0xff]
    %v3025 = vld [vmem:[#allocation11 + $0x178] sm:$0xff]
    %v3026 = vld [vmem:[#allocation11 + $0x180] sm:$0xff]
    %v3027 = vld [vmem:[#allocation11 + $0x188] sm:$0xff]
    %v3028 = vld [vmem:[#allocation11 + $0x190] sm:$0xff]
    %v3029 = vld [vmem:[#allocation11 + $0x198] sm:$0xff]
    %v3030 = vld [vmem:[#allocation11 + $0x1a0] sm:$0xff]
    %v3031 = vld [vmem:[#allocation11 + $0x1a8] sm:$0xff]
    %v3032 = vld [vmem:[#allocation11 + $0x1b0] sm:$0xff]
    %v3033 = vld [vmem:[#allocation11 + $0x1b8] sm:$0xff]
    %v3034 = vld [vmem:[#allocation11 + $0x1c0] sm:$0xff]
    %v3035 = vld [vmem:[#allocation11 + $0x1c8] sm:$0xff]
    %v3036 = vld [vmem:[#allocation11 + $0x1d0] sm:$0xff]
    %v3037 = vld [vmem:[#allocation11 + $0x1d8] sm:$0xff]
    %v3038 = vld [vmem:[#allocation11 + $0x1e0] sm:$0xff]
    %v3039 = vld [vmem:[#allocation11 + $0x1e8] sm:$0xff]
    %v3040 = vld [vmem:[#allocation11 + $0x1f0] sm:$0xff]
    %v3041 = vld [vmem:[#allocation11 + $0x1f8] sm:$0xff]
    %v3042 = vld [vmem:[#allocation11 + $0x200] sm:$0xff]
    %v3043 = vld [vmem:[#allocation11 + $0x208] sm:$0xff]
    %v3044 = vld [vmem:[#allocation11 + $0x210] sm:$0xff]
    %v3045 = vld [vmem:[#allocation11 + $0x218] sm:$0xff]
    %v3046 = vld [vmem:[#allocation11 + $0x220] sm:$0xff]
    %v3047 = vld [vmem:[#allocation11 + $0x228] sm:$0xff]
    %v3048 = vld [vmem:[#allocation11 + $0x230] sm:$0xff]
    %v3049 = vld [vmem:[#allocation11 + $0x238] sm:$0xff]
    %v3050 = vld [vmem:[#allocation11 + $0x240] sm:$0xff]
    %v3051 = vld [vmem:[#allocation11 + $0x248] sm:$0xff]
    %v3052 = vld [vmem:[#allocation11 + $0x250] sm:$0xff]
    %v3053 = vld [vmem:[#allocation11 + $0x258] sm:$0xff]
    %v3054 = vld [vmem:[#allocation11 + $0x260] sm:$0xff]
    %v3055 = vld [vmem:[#allocation11 + $0x268] sm:$0xff]
    %v3056 = vld [vmem:[#allocation11 + $0x270] sm:$0xff]
    %v3057 = vld [vmem:[#allocation11 + $0x278] sm:$0xff]
    %v3058 = vld [vmem:[#allocation11 + $0x280] sm:$0xff]
    %v3059 = vld [vmem:[#allocation11 + $0x288] sm:$0xff]
    %v3060 = vld [vmem:[#allocation11 + $0x290] sm:$0xff]
    %v3061 = vld [vmem:[#allocation11 + $0x298] sm:$0xff]
    %v3062 = vld [vmem:[#allocation11 + $0x2a0] sm:$0xff]
    %v3063 = vld [vmem:[#allocation11 + $0x2a8] sm:$0xff]
    %v3064 = vld [vmem:[#allocation11 + $0x2b0] sm:$0xff]
    %v3065 = vld [vmem:[#allocation11 + $0x2b8] sm:$0xff]
    %v3066 = vld [vmem:[#allocation11 + $0x2c0] sm:$0xff]
    %v3067 = vld [vmem:[#allocation11 + $0x2c8] sm:$0xff]
    %v3068 = vld [vmem:[#allocation11 + $0x2d0] sm:$0xff]
    %v3069 = vld [vmem:[#allocation11 + $0x2d8] sm:$0xff]
    %v3070 = vld [vmem:[#allocation11 + $0x2e0] sm:$0xff]
    %v3071 = vld [vmem:[#allocation11 + $0x2e8] sm:$0xff]
    %v3072 = vld [vmem:[#allocation11 + $0x2f0] sm:$0xff]
    %v3073 = vld [vmem:[#allocation11 + $0x2f8] sm:$0xff]
    %v3074 = vld [vmem:[#allocation11 + $0x300] sm:$0xff]
    %v3075 = vld [vmem:[#allocation11 + $0x308] sm:$0xff]
    %v3076 = vld [vmem:[#allocation11 + $0x310] sm:$0xff]
    %v3077 = vld [vmem:[#allocation11 + $0x318] sm:$0xff]
    %v3078 = vld [vmem:[#allocation11 + $0x320] sm:$0xff]
    %v3079 = vld [vmem:[#allocation11 + $0x328] sm:$0xff]
    %v3080 = vld [vmem:[#allocation11 + $0x330] sm:$0xff]
    %v3081 = vld [vmem:[#allocation11 + $0x338] sm:$0xff]
    %v3082 = vld [vmem:[#allocation11 + $0x340] sm:$0xff]
    %v3083 = vld [vmem:[#allocation11 + $0x348] sm:$0xff]
    %v3084 = vld [vmem:[#allocation11 + $0x350] sm:$0xff]
    %v3085 = vld [vmem:[#allocation11 + $0x358] sm:$0xff]
    %v3086 = vld [vmem:[#allocation11 + $0x360] sm:$0xff]
    %v3087 = vld [vmem:[#allocation11 + $0x368] sm:$0xff]
    %v3088 = vld [vmem:[#allocation11 + $0x370] sm:$0xff]
    %v3089 = vld [vmem:[#allocation11 + $0x378] sm:$0xff]
    %v3090 = vld [vmem:[#allocation11 + $0x380] sm:$0xff]
    %v3091 = vld [vmem:[#allocation11 + $0x388] sm:$0xff]
    %v3092 = vld [vmem:[#allocation11 + $0x390] sm:$0xff]
    %v3093 = vld [vmem:[#allocation11 + $0x398] sm:$0xff]
    %v3094 = vld [vmem:[#allocation11 + $0x3a0] sm:$0xff]
    %v3095 = vld [vmem:[#allocation11 + $0x3a8] sm:$0xff]
    %v3096 = vld [vmem:[#allocation11 + $0x3b0] sm:$0xff]
    %v3097 = vld [vmem:[#allocation11 + $0x3b8] sm:$0xff]
    %v3098 = vld [vmem:[#allocation11 + $0x3c0] sm:$0xff]
    %v3099 = vld [vmem:[#allocation11 + $0x3c8] sm:$0xff]
    %v3100 = vld [vmem:[#allocation11 + $0x3d0] sm:$0xff]
    %v3101 = vld [vmem:[#allocation11 + $0x3d8] sm:$0xff]
    %v3102 = vld [vmem:[#allocation11 + $0x3e0] sm:$0xff]
    %v3103 = vld [vmem:[#allocation11 + $0x3e8] sm:$0xff]
    %v3104 = vld [vmem:[#allocation11 + $0x3f0] sm:$0xff]
    %v3105 = vld [vmem:[#allocation11 + $0x3f8] sm:$0xff]
    %v3106 = vld [vmem:[#allocation11 + $0x400] sm:$0xff]
    %v3107 = vld [vmem:[#allocation11 + $0x408] sm:$0xff]
    %v3108 = vld [vmem:[#allocation11 + $0x410] sm:$0xff]
    %v3109 = vld [vmem:[#allocation11 + $0x418] sm:$0xff]
    %v3110 = vld [vmem:[#allocation11 + $0x420] sm:$0xff]
    %v3111 = vld [vmem:[#allocation11 + $0x428] sm:$0xff]
    %v3112 = vld [vmem:[#allocation11 + $0x430] sm:$0xff]
    %v3113 = vld [vmem:[#allocation11 + $0x438] sm:$0xff]
    %v3114 = vld [vmem:[#allocation11 + $0x440] sm:$0xff]
    %v3115 = vld [vmem:[#allocation11 + $0x448] sm:$0xff]
    %v3116 = vld [vmem:[#allocation11 + $0x450] sm:$0xff]
    %v3117 = vld [vmem:[#allocation11 + $0x458] sm:$0xff]
    %v3118 = vld [vmem:[#allocation11 + $0x460] sm:$0xff]
    %v3119 = vld [vmem:[#allocation11 + $0x468] sm:$0xff]
    %v3120 = vld [vmem:[#allocation11 + $0x470] sm:$0xff]
    %v3121 = vld [vmem:[#allocation11 + $0x478] sm:$0xff]
    %v3122 = vld [vmem:[#allocation11 + $0x480] sm:$0xff]
    %v3123 = vld [vmem:[#allocation11 + $0x488] sm:$0xff]
    %v3124 = vld [vmem:[#allocation11 + $0x490] sm:$0xff]
    %v3125 = vld [vmem:[#allocation11 + $0x498] sm:$0xff]
    %v3126 = vld [vmem:[#allocation11 + $0x4a0] sm:$0xff]
    %v3127 = vld [vmem:[#allocation11 + $0x4a8] sm:$0xff]
    %v3128 = vld [vmem:[#allocation11 + $0x4b0] sm:$0xff]
    %v3129 = vld [vmem:[#allocation11 + $0x4b8] sm:$0xff]
    %v3130 = vld [vmem:[#allocation11 + $0x4c0] sm:$0xff]
    %v3131 = vld [vmem:[#allocation11 + $0x4c8] sm:$0xff]
    %v3132 = vld [vmem:[#allocation11 + $0x4d0] sm:$0xff]
    %v3133 = vld [vmem:[#allocation11 + $0x4d8] sm:$0xff]
    %v3134 = vld [vmem:[#allocation11 + $0x4e0] sm:$0xff]
    %v3135 = vld [vmem:[#allocation11 + $0x4e8] sm:$0xff]
    %v3136 = vld [vmem:[#allocation11 + $0x4f0] sm:$0xff]
    %v3137 = vld [vmem:[#allocation11 + $0x4f8] sm:$0xff]
    %v3138 = vld [vmem:[#allocation11 + $0x500] sm:$0xff]
    %v3139 = vld [vmem:[#allocation11 + $0x508] sm:$0xff]
    %v3140 = vld [vmem:[#allocation11 + $0x510] sm:$0xff]
    %v3141 = vld [vmem:[#allocation11 + $0x518] sm:$0xff]
    %v3142 = vld [vmem:[#allocation11 + $0x520] sm:$0xff]
    %v3143 = vld [vmem:[#allocation11 + $0x528] sm:$0xff]
    %v3144 = vld [vmem:[#allocation11 + $0x530] sm:$0xff]
    %v3145 = vld [vmem:[#allocation11 + $0x538] sm:$0xff]
    %v3146 = vld [vmem:[#allocation11 + $0x540] sm:$0xff]
    %v3147 = vld [vmem:[#allocation11 + $0x548] sm:$0xff]
    %v3148 = vld [vmem:[#allocation11 + $0x550] sm:$0xff]
    %v3149 = vld [vmem:[#allocation11 + $0x558] sm:$0xff]
    %v3150 = vld [vmem:[#allocation11 + $0x560] sm:$0xff]
    %v3151 = vld [vmem:[#allocation11 + $0x568] sm:$0xff]
    %v3152 = vld [vmem:[#allocation11 + $0x570] sm:$0xff]
    %v3153 = vld [vmem:[#allocation11 + $0x578] sm:$0xff]
    %v3154 = vld [vmem:[#allocation11 + $0x580] sm:$0xff]
    %v3155 = vld [vmem:[#allocation11 + $0x588] sm:$0xff]
    %v3156 = vld [vmem:[#allocation11 + $0x590] sm:$0xff]
    %v3157 = vld [vmem:[#allocation11 + $0x598] sm:$0xff]
    %v3158 = vld [vmem:[#allocation11 + $0x5a0] sm:$0xff]
    %v3159 = vld [vmem:[#allocation11 + $0x5a8] sm:$0xff]
    %v3160 = vld [vmem:[#allocation11 + $0x5b0] sm:$0xff]
    %v3161 = vld [vmem:[#allocation11 + $0x5b8] sm:$0xff]
    %v3162 = vld [vmem:[#allocation11 + $0x5c0] sm:$0xff]
    %v3163 = vld [vmem:[#allocation11 + $0x5c8] sm:$0xff]
    %v3164 = vld [vmem:[#allocation11 + $0x5d0] sm:$0xff]
    %v3165 = vld [vmem:[#allocation11 + $0x5d8] sm:$0xff]
    %v3166 = vld [vmem:[#allocation11 + $0x5e0] sm:$0xff]
    %v3167 = vld [vmem:[#allocation11 + $0x5e8] sm:$0xff]
    %v3168 = vld [vmem:[#allocation11 + $0x5f0] sm:$0xff]
    %v3169 = vld [vmem:[#allocation11 + $0x5f8] sm:$0xff]
    %v3170 = vld [vmem:[#allocation11 + $0x600] sm:$0xff]
    %v3171 = vld [vmem:[#allocation11 + $0x608] sm:$0xff]
    %v3172 = vld [vmem:[#allocation11 + $0x610] sm:$0xff]
    %v3173 = vld [vmem:[#allocation11 + $0x618] sm:$0xff]
    %v3174 = vld [vmem:[#allocation11 + $0x620] sm:$0xff]
    %v3175 = vld [vmem:[#allocation11 + $0x628] sm:$0xff]
    %v3176 = vld [vmem:[#allocation11 + $0x630] sm:$0xff]
    %v3177 = vld [vmem:[#allocation11 + $0x638] sm:$0xff]
    %v3178 = vld [vmem:[#allocation11 + $0x640] sm:$0xff]
    %v3179 = vld [vmem:[#allocation11 + $0x648] sm:$0xff]
    %v3180 = vld [vmem:[#allocation11 + $0x650] sm:$0xff]
    %v3181 = vld [vmem:[#allocation11 + $0x658] sm:$0xff]
    %v3182 = vld [vmem:[#allocation11 + $0x660] sm:$0xff]
    %v3183 = vld [vmem:[#allocation11 + $0x668] sm:$0xff]
    %v3184 = vld [vmem:[#allocation11 + $0x670] sm:$0xff]
    %v3185 = vld [vmem:[#allocation11 + $0x678] sm:$0xff]
    %v3186 = vld [vmem:[#allocation11 + $0x680] sm:$0xff]
    %v3187 = vld [vmem:[#allocation11 + $0x688] sm:$0xff]
    %v3188 = vld [vmem:[#allocation11 + $0x690] sm:$0xff]
    %v3189 = vld [vmem:[#allocation11 + $0x698] sm:$0xff]
    %v3190 = vld [vmem:[#allocation11 + $0x6a0] sm:$0xff]
    %v3191 = vld [vmem:[#allocation11 + $0x6a8] sm:$0xff]
    %v3192 = vld [vmem:[#allocation11 + $0x6b0] sm:$0xff]
    %v3193 = vld [vmem:[#allocation11 + $0x6b8] sm:$0xff]
    %v3194 = vld [vmem:[#allocation11 + $0x6c0] sm:$0xff]
    %v3195 = vld [vmem:[#allocation11 + $0x6c8] sm:$0xff]
    %v3196 = vld [vmem:[#allocation11 + $0x6d0] sm:$0xff]
    %v3197 = vld [vmem:[#allocation11 + $0x6d8] sm:$0xff]
    %v3198 = vld [vmem:[#allocation11 + $0x6e0] sm:$0xff]
    %v3199 = vld [vmem:[#allocation11 + $0x6e8] sm:$0xff]
    %v3200 = vld [vmem:[#allocation11 + $0x6f0] sm:$0xff]
    %v3201 = vld [vmem:[#allocation11 + $0x6f8] sm:$0xff]
    %v3202 = vld [vmem:[#allocation11 + $0x700] sm:$0xff]
    %v3203 = vld [vmem:[#allocation11 + $0x708] sm:$0xff]
    %v3204 = vld [vmem:[#allocation11 + $0x710] sm:$0xff]
    %v3205 = vld [vmem:[#allocation11 + $0x718] sm:$0xff]
    %v3206 = vld [vmem:[#allocation11 + $0x720] sm:$0xff]
    %v3207 = vld [vmem:[#allocation11 + $0x728] sm:$0xff]
    %v3208 = vld [vmem:[#allocation11 + $0x730] sm:$0xff]
    %v3209 = vld [vmem:[#allocation11 + $0x738] sm:$0xff]
    %v3210 = vld [vmem:[#allocation11 + $0x740] sm:$0xff]
    %v3211 = vld [vmem:[#allocation11 + $0x748] sm:$0xff]
    %v3212 = vld [vmem:[#allocation11 + $0x750] sm:$0xff]
    %v3213 = vld [vmem:[#allocation11 + $0x758] sm:$0xff]
    %v3214 = vld [vmem:[#allocation11 + $0x760] sm:$0xff]
    %v3215 = vld [vmem:[#allocation11 + $0x768] sm:$0xff]
    %v3216 = vld [vmem:[#allocation11 + $0x770] sm:$0xff]
    %v3217 = vld [vmem:[#allocation11 + $0x778] sm:$0xff]
    %v3218 = vld [vmem:[#allocation11 + $0x780] sm:$0xff]
    %v3219 = vld [vmem:[#allocation11 + $0x788] sm:$0xff]
    %v3220 = vld [vmem:[#allocation11 + $0x790] sm:$0xff]
    %v3221 = vld [vmem:[#allocation11 + $0x798] sm:$0xff]
    %v3222 = vld [vmem:[#allocation11 + $0x7a0] sm:$0xff]
    %v3223 = vld [vmem:[#allocation11 + $0x7a8] sm:$0xff]
    %v3224 = vld [vmem:[#allocation11 + $0x7b0] sm:$0xff]
    %v3225 = vld [vmem:[#allocation11 + $0x7b8] sm:$0xff]
    %v3226 = vld [vmem:[#allocation11 + $0x7c0] sm:$0xff]
    %v3227 = vld [vmem:[#allocation11 + $0x7c8] sm:$0xff]
    %v3228 = vld [vmem:[#allocation11 + $0x7d0] sm:$0xff]
    %v3229 = vld [vmem:[#allocation11 + $0x7d8] sm:$0xff]
    %v3230 = vld [vmem:[#allocation11 + $0x7e0] sm:$0xff]
    %v3231 = vld [vmem:[#allocation11 + $0x7e8] sm:$0xff]
    %v3232 = vld [vmem:[#allocation11 + $0x7f0] sm:$0xff]
    %v3233 = vld [vmem:[#allocation11 + $0x7f8] sm:$0xff]
    %v3234 = vld [vmem:[#allocation11 + $0x800] sm:$0xff]
    %v3235 = vld [vmem:[#allocation11 + $0x808] sm:$0xff]
    %v3236 = vld [vmem:[#allocation11 + $0x810] sm:$0xff]
    %v3237 = vld [vmem:[#allocation11 + $0x818] sm:$0xff]
    %v3238 = vld [vmem:[#allocation11 + $0x820] sm:$0xff]
    %v3239 = vld [vmem:[#allocation11 + $0x828] sm:$0xff]
    %v3240 = vld [vmem:[#allocation11 + $0x830] sm:$0xff]
    %v3241 = vld [vmem:[#allocation11 + $0x838] sm:$0xff]
    %v3242 = vld [vmem:[#allocation11 + $0x840] sm:$0xff]
    %v3243 = vld [vmem:[#allocation11 + $0x848] sm:$0xff]
    %v3244 = vld [vmem:[#allocation11 + $0x850] sm:$0xff]
    %v3245 = vld [vmem:[#allocation11 + $0x858] sm:$0xff]
    %v3246 = vld [vmem:[#allocation11 + $0x860] sm:$0xff]
    %v3247 = vld [vmem:[#allocation11 + $0x868] sm:$0xff]
    %v3248 = vld [vmem:[#allocation11 + $0x870] sm:$0xff]
    %v3249 = vld [vmem:[#allocation11 + $0x878] sm:$0xff]
    %v3250 = vld [vmem:[#allocation11 + $0x880] sm:$0xff]
    %v3251 = vld [vmem:[#allocation11 + $0x888] sm:$0xff]
    %v3252 = vld [vmem:[#allocation11 + $0x890] sm:$0xff]
    %v3253 = vld [vmem:[#allocation11 + $0x898] sm:$0xff]
    %v3254 = vld [vmem:[#allocation11 + $0x8a0] sm:$0xff]
    %v3255 = vld [vmem:[#allocation11 + $0x8a8] sm:$0xff]
    %v3256 = vld [vmem:[#allocation11 + $0x8b0] sm:$0xff]
    %v3257 = vld [vmem:[#allocation11 + $0x8b8] sm:$0xff]
    %v3258 = vld [vmem:[#allocation11 + $0x8c0] sm:$0xff]
    %v3259 = vld [vmem:[#allocation11 + $0x8c8] sm:$0xff]
    %v3260 = vld [vmem:[#allocation11 + $0x8d0] sm:$0xff]
    %v3261 = vld [vmem:[#allocation11 + $0x8d8] sm:$0xff]
    %v3262 = vld [vmem:[#allocation11 + $0x8e0] sm:$0xff]
    %v3263 = vld [vmem:[#allocation11 + $0x8e8] sm:$0xff]
    %v3264 = vld [vmem:[#allocation11 + $0x8f0] sm:$0xff]
    %v3265 = vld [vmem:[#allocation11 + $0x8f8] sm:$0xff]
    %v3266 = vld [vmem:[#allocation11 + $0x900] sm:$0xff]
    %v3267 = vld [vmem:[#allocation11 + $0x908] sm:$0xff]
    %v3268 = vld [vmem:[#allocation11 + $0x910] sm:$0xff]
    %v3269 = vld [vmem:[#allocation11 + $0x918] sm:$0xff]
    %v3270 = vld [vmem:[#allocation11 + $0x920] sm:$0xff]
    %v3271 = vld [vmem:[#allocation11 + $0x928] sm:$0xff]
    %v3272 = vld [vmem:[#allocation11 + $0x930] sm:$0xff]
    %v3273 = vld [vmem:[#allocation11 + $0x938] sm:$0xff]
    %v3274 = vld [vmem:[#allocation11 + $0x940] sm:$0xff]
    %v3275 = vld [vmem:[#allocation11 + $0x948] sm:$0xff]
    %v3276 = vld [vmem:[#allocation11 + $0x950] sm:$0xff]
    %v3277 = vld [vmem:[#allocation11 + $0x958] sm:$0xff]
    %v3278 = vld [vmem:[#allocation11 + $0x960] sm:$0xff]
    %v3279 = vld [vmem:[#allocation11 + $0x968] sm:$0xff]
    %v3280 = vld [vmem:[#allocation11 + $0x970] sm:$0xff]
    %v3281 = vld [vmem:[#allocation11 + $0x978] sm:$0xff]
    %v3282 = vld [vmem:[#allocation11 + $0x980] sm:$0xff]
    %v3283 = vld [vmem:[#allocation11 + $0x988] sm:$0xff]
    %v3284 = vld [vmem:[#allocation11 + $0x990] sm:$0xff]
    %v3285 = vld [vmem:[#allocation11 + $0x998] sm:$0xff]
    %v3286 = vld [vmem:[#allocation11 + $0x9a0] sm:$0xff]
    %v3287 = vld [vmem:[#allocation11 + $0x9a8] sm:$0xff]
    %v3288 = vld [vmem:[#allocation11 + $0x9b0] sm:$0xff]
    %v3289 = vld [vmem:[#allocation11 + $0x9b8] sm:$0xff]
    %v3290 = vld [vmem:[#allocation11 + $0x9c0] sm:$0xff]
    %v3291 = vld [vmem:[#allocation11 + $0x9c8] sm:$0xff]
    %v3292 = vld [vmem:[#allocation11 + $0x9d0] sm:$0xff]
    %v3293 = vld [vmem:[#allocation11 + $0x9d8] sm:$0xff]
    %v3294 = vld [vmem:[#allocation11 + $0x9e0] sm:$0xff]
    %v3295 = vld [vmem:[#allocation11 + $0x9e8] sm:$0xff]
    %v3296 = vld [vmem:[#allocation11 + $0x9f0] sm:$0xff]
    %v3297 = vld [vmem:[#allocation11 + $0x9f8] sm:$0xff]
    %v3298 = vld [vmem:[#allocation11 + $0xa00] sm:$0xff]
    %v3299 = vld [vmem:[#allocation11 + $0xa08] sm:$0xff]
    %v3300 = vld [vmem:[#allocation11 + $0xa10] sm:$0xff]
    %v3301 = vld [vmem:[#allocation11 + $0xa18] sm:$0xff]
    %v3302 = vld [vmem:[#allocation11 + $0xa20] sm:$0xff]
    %v3303 = vld [vmem:[#allocation11 + $0xa28] sm:$0xff]
    %v3304 = vld [vmem:[#allocation11 + $0xa30] sm:$0xff]
    %v3305 = vld [vmem:[#allocation11 + $0xa38] sm:$0xff]
    %v3306 = vld [vmem:[#allocation11 + $0xa40] sm:$0xff]
    %v3307 = vld [vmem:[#allocation11 + $0xa48] sm:$0xff]
    %v3308 = vld [vmem:[#allocation11 + $0xa50] sm:$0xff]
    %v3309 = vld [vmem:[#allocation11 + $0xa58] sm:$0xff]
    %v3310 = vld [vmem:[#allocation11 + $0xa60] sm:$0xff]
    %v3311 = vld [vmem:[#allocation11 + $0xa68] sm:$0xff]
    %v3312 = vld [vmem:[#allocation11 + $0xa70] sm:$0xff]
    %v3313 = vld [vmem:[#allocation11 + $0xa78] sm:$0xff]
    %v3314 = vld [vmem:[#allocation11 + $0xa80] sm:$0xff]
    %v3315 = vld [vmem:[#allocation11 + $0xa88] sm:$0xff]
    %v3316 = vld [vmem:[#allocation11 + $0xa90] sm:$0xff]
    %v3317 = vld [vmem:[#allocation11 + $0xa98] sm:$0xff]
    %v3318 = vld [vmem:[#allocation11 + $0xaa0] sm:$0xff]
    %v3319 = vld [vmem:[#allocation11 + $0xaa8] sm:$0xff]
    %v3320 = vld [vmem:[#allocation11 + $0xab0] sm:$0xff]
    %v3321 = vld [vmem:[#allocation11 + $0xab8] sm:$0xff]
    %v3322 = vld [vmem:[#allocation11 + $0xac0] sm:$0xff]
    %v3323 = vld [vmem:[#allocation11 + $0xac8] sm:$0xff]
    %v3324 = vld [vmem:[#allocation11 + $0xad0] sm:$0xff]
    %v3325 = vld [vmem:[#allocation11 + $0xad8] sm:$0xff]
    %v3326 = vld [vmem:[#allocation11 + $0xae0] sm:$0xff]
    %v3327 = vld [vmem:[#allocation11 + $0xae8] sm:$0xff]
    %v3328 = vld [vmem:[#allocation11 + $0xaf0] sm:$0xff]
    %v3329 = vld [vmem:[#allocation11 + $0xaf8] sm:$0xff]
    %v3330 = vld [vmem:[#allocation11 + $0xb00] sm:$0xff]
    %v3331 = vld [vmem:[#allocation11 + $0xb08] sm:$0xff]
    %v3332 = vld [vmem:[#allocation11 + $0xb10] sm:$0xff]
    %v3333 = vld [vmem:[#allocation11 + $0xb18] sm:$0xff]
    %v3334 = vld [vmem:[#allocation11 + $0xb20] sm:$0xff]
    %v3335 = vld [vmem:[#allocation11 + $0xb28] sm:$0xff]
    %v3336 = vld [vmem:[#allocation11 + $0xb30] sm:$0xff]
    %v3337 = vld [vmem:[#allocation11 + $0xb38] sm:$0xff]
    %v3338 = vld [vmem:[#allocation11 + $0xb40] sm:$0xff]
    %v3339 = vld [vmem:[#allocation11 + $0xb48] sm:$0xff]
    %v3340 = vld [vmem:[#allocation11 + $0xb50] sm:$0xff]
    %v3341 = vld [vmem:[#allocation11 + $0xb58] sm:$0xff]
    %v3342 = vld [vmem:[#allocation11 + $0xb60] sm:$0xff]
    %v3343 = vld [vmem:[#allocation11 + $0xb68] sm:$0xff]
    %v3344 = vld [vmem:[#allocation11 + $0xb70] sm:$0xff]
    %v3345 = vld [vmem:[#allocation11 + $0xb78] sm:$0xff]
    %v3346 = vld [vmem:[#allocation11 + $0xb80] sm:$0xff]
    %v3347 = vld [vmem:[#allocation11 + $0xb88] sm:$0xff]
    %v3348 = vld [vmem:[#allocation11 + $0xb90] sm:$0xff]
    %v3349 = vld [vmem:[#allocation11 + $0xb98] sm:$0xff]
    %v3350 = vld [vmem:[#allocation11 + $0xba0] sm:$0xff]
    %v3351 = vld [vmem:[#allocation11 + $0xba8] sm:$0xff]
    %v3352 = vld [vmem:[#allocation11 + $0xbb0] sm:$0xff]
    %v3353 = vld [vmem:[#allocation11 + $0xbb8] sm:$0xff]
    %v3354 = vld [vmem:[#allocation11 + $0xbc0] sm:$0xff]
    %v3355 = vld [vmem:[#allocation11 + $0xbc8] sm:$0xff]
    %v3356 = vld [vmem:[#allocation11 + $0xbd0] sm:$0xff]
    %v3357 = vld [vmem:[#allocation11 + $0xbd8] sm:$0xff]
    %v3358 = vld [vmem:[#allocation11 + $0xbe0] sm:$0xff]
    %v3359 = vld [vmem:[#allocation11 + $0xbe8] sm:$0xff]
    %v3360 = vld [vmem:[#allocation11 + $0xbf0] sm:$0xff]
    %v3361 = vld [vmem:[#allocation11 + $0xbf8] sm:$0xff]
    %v3362 = vld [vmem:[#allocation11 + $0xc00] sm:$0xff]
    %v3363 = vld [vmem:[#allocation11 + $0xc08] sm:$0xff]
    %v3364 = vld [vmem:[#allocation11 + $0xc10] sm:$0xff]
    %v3365 = vld [vmem:[#allocation11 + $0xc18] sm:$0xff]
    %v3366 = vld [vmem:[#allocation11 + $0xc20] sm:$0xff]
    %v3367 = vld [vmem:[#allocation11 + $0xc28] sm:$0xff]
    %v3368 = vld [vmem:[#allocation11 + $0xc30] sm:$0xff]
    %v3369 = vld [vmem:[#allocation11 + $0xc38] sm:$0xff]
    %v3370 = vld [vmem:[#allocation11 + $0xc40] sm:$0xff]
    %v3371 = vld [vmem:[#allocation11 + $0xc48] sm:$0xff]
    %v3372 = vld [vmem:[#allocation11 + $0xc50] sm:$0xff]
    %v3373 = vld [vmem:[#allocation11 + $0xc58] sm:$0xff]
    %v3374 = vld [vmem:[#allocation11 + $0xc60] sm:$0xff]
    %v3375 = vld [vmem:[#allocation11 + $0xc68] sm:$0xff]
    %v3376 = vld [vmem:[#allocation11 + $0xc70] sm:$0xff]
    %v3377 = vld [vmem:[#allocation11 + $0xc78] sm:$0xff]
    %v3378 = vld [vmem:[#allocation11 + $0xc80] sm:$0xff]
    %v3379 = vld [vmem:[#allocation11 + $0xc88] sm:$0xff]
    %v3380 = vld [vmem:[#allocation11 + $0xc90] sm:$0xff]
    %v3381 = vld [vmem:[#allocation11 + $0xc98] sm:$0xff]
    %v3382 = vld [vmem:[#allocation11 + $0xca0] sm:$0xff]
    %v3383 = vld [vmem:[#allocation11 + $0xca8] sm:$0xff]
    %v3384 = vld [vmem:[#allocation11 + $0xcb0] sm:$0xff]
    %v3385 = vld [vmem:[#allocation11 + $0xcb8] sm:$0xff]
    %v3386 = vld [vmem:[#allocation11 + $0xcc0] sm:$0xff]
    %v3387 = vld [vmem:[#allocation11 + $0xcc8] sm:$0xff]
    %v3388 = vld [vmem:[#allocation11 + $0xcd0] sm:$0xff]
    %v3389 = vld [vmem:[#allocation11 + $0xcd8] sm:$0xff]
    %v3390 = vld [vmem:[#allocation11 + $0xce0] sm:$0xff]
    %v3391 = vld [vmem:[#allocation11 + $0xce8] sm:$0xff]
    %v3392 = vld [vmem:[#allocation11 + $0xcf0] sm:$0xff]
    %v3393 = vld [vmem:[#allocation11 + $0xcf8] sm:$0xff]
    %v3394 = vld [vmem:[#allocation11 + $0xd00] sm:$0xff]
    %v3395 = vld [vmem:[#allocation11 + $0xd08] sm:$0xff]
    %v3396 = vld [vmem:[#allocation11 + $0xd10] sm:$0xff]
    %v3397 = vld [vmem:[#allocation11 + $0xd18] sm:$0xff]
    %v3398 = vld [vmem:[#allocation11 + $0xd20] sm:$0xff]
    %v3399 = vld [vmem:[#allocation11 + $0xd28] sm:$0xff]
    %v3400 = vld [vmem:[#allocation11 + $0xd30] sm:$0xff]
    %v3401 = vld [vmem:[#allocation11 + $0xd38] sm:$0xff]
    %v3402 = vld [vmem:[#allocation11 + $0xd40] sm:$0xff]
    %v3403 = vld [vmem:[#allocation11 + $0xd48] sm:$0xff]
    %v3404 = vld [vmem:[#allocation11 + $0xd50] sm:$0xff]
    %v3405 = vld [vmem:[#allocation11 + $0xd58] sm:$0xff]
    %v3406 = vld [vmem:[#allocation11 + $0xd60] sm:$0xff]
    %v3407 = vld [vmem:[#allocation11 + $0xd68] sm:$0xff]
    %v3408 = vld [vmem:[#allocation11 + $0xd70] sm:$0xff]
    %v3409 = vld [vmem:[#allocation11 + $0xd78] sm:$0xff]
    %v3410 = vld [vmem:[#allocation11 + $0xd80] sm:$0xff]
    %v3411 = vld [vmem:[#allocation11 + $0xd88] sm:$0xff]
    %v3412 = vld [vmem:[#allocation11 + $0xd90] sm:$0xff]
    %v3413 = vld [vmem:[#allocation11 + $0xd98] sm:$0xff]
    %v3414 = vld [vmem:[#allocation11 + $0xda0] sm:$0xff]
    %v3415 = vld [vmem:[#allocation11 + $0xda8] sm:$0xff]
    %v3416 = vld [vmem:[#allocation11 + $0xdb0] sm:$0xff]
    %v3417 = vld [vmem:[#allocation11 + $0xdb8] sm:$0xff]
    %v3418 = vld [vmem:[#allocation11 + $0xdc0] sm:$0xff]
    %v3419 = vld [vmem:[#allocation11 + $0xdc8] sm:$0xff]
    %v3420 = vld [vmem:[#allocation11 + $0xdd0] sm:$0xff]
    %v3421 = vld [vmem:[#allocation11 + $0xdd8] sm:$0xff]
    %v3422 = vld [vmem:[#allocation11 + $0xde0] sm:$0xff]
    %v3423 = vld [vmem:[#allocation11 + $0xde8] sm:$0xff]
    %v3424 = vld [vmem:[#allocation11 + $0xdf0] sm:$0xff]
    %v3425 = vld [vmem:[#allocation11 + $0xdf8] sm:$0xff]
    %v3426 = vld [vmem:[#allocation11 + $0xe00] sm:$0xff]
    %v3427 = vld [vmem:[#allocation11 + $0xe08] sm:$0xff]
    %v3428 = vld [vmem:[#allocation11 + $0xe10] sm:$0xff]
    %v3429 = vld [vmem:[#allocation11 + $0xe18] sm:$0xff]
    %v3430 = vld [vmem:[#allocation11 + $0xe20] sm:$0xff]
    %v3431 = vld [vmem:[#allocation11 + $0xe28] sm:$0xff]
    %v3432 = vld [vmem:[#allocation11 + $0xe30] sm:$0xff]
    %v3433 = vld [vmem:[#allocation11 + $0xe38] sm:$0xff]
    %v3434 = vld [vmem:[#allocation11 + $0xe40] sm:$0xff]
    %v3435 = vld [vmem:[#allocation11 + $0xe48] sm:$0xff]
    %v3436 = vld [vmem:[#allocation11 + $0xe50] sm:$0xff]
    %v3437 = vld [vmem:[#allocation11 + $0xe58] sm:$0xff]
    %v3438 = vld [vmem:[#allocation11 + $0xe60] sm:$0xff]
    %v3439 = vld [vmem:[#allocation11 + $0xe68] sm:$0xff]
    %v3440 = vld [vmem:[#allocation11 + $0xe70] sm:$0xff]
    %v3441 = vld [vmem:[#allocation11 + $0xe78] sm:$0xff]
    %v3442 = vld [vmem:[#allocation11 + $0xe80] sm:$0xff]
    %v3443 = vld [vmem:[#allocation11 + $0xe88] sm:$0xff]
    %v3444 = vld [vmem:[#allocation11 + $0xe90] sm:$0xff]
    %v3445 = vld [vmem:[#allocation11 + $0xe98] sm:$0xff]
    %v3446 = vld [vmem:[#allocation11 + $0xea0] sm:$0xff]
    %v3447 = vld [vmem:[#allocation11 + $0xea8] sm:$0xff]
    %v3448 = vld [vmem:[#allocation11 + $0xeb0] sm:$0xff]
    %v3449 = vld [vmem:[#allocation11 + $0xeb8] sm:$0xff]
    %v3450 = vld [vmem:[#allocation11 + $0xec0] sm:$0xff]
    %v3451 = vld [vmem:[#allocation11 + $0xec8] sm:$0xff]
    %v3452 = vld [vmem:[#allocation11 + $0xed0] sm:$0xff]
    %v3453 = vld [vmem:[#allocation11 + $0xed8] sm:$0xff]
    %v3454 = vld [vmem:[#allocation11 + $0xee0] sm:$0xff]
    %v3455 = vld [vmem:[#allocation11 + $0xee8] sm:$0xff]
    %v3456 = vld [vmem:[#allocation11 + $0xef0] sm:$0xff]
    %v3457 = vld [vmem:[#allocation11 + $0xef8] sm:$0xff]
    %v3458 = vld [vmem:[#allocation11 + $0xf00] sm:$0xff]
    %v3459 = vld [vmem:[#allocation11 + $0xf08] sm:$0xff]
    %v3460 = vld [vmem:[#allocation11 + $0xf10] sm:$0xff]
    %v3461 = vld [vmem:[#allocation11 + $0xf18] sm:$0xff]
    %v3462 = vld [vmem:[#allocation11 + $0xf20] sm:$0xff]
    %v3463 = vld [vmem:[#allocation11 + $0xf28] sm:$0xff]
    %v3464 = vld [vmem:[#allocation11 + $0xf30] sm:$0xff]
    %v3465 = vld [vmem:[#allocation11 + $0xf38] sm:$0xff]
    %v3466 = vld [vmem:[#allocation11 + $0xf40] sm:$0xff]
    %v3467 = vld [vmem:[#allocation11 + $0xf48] sm:$0xff]
    %v3468 = vld [vmem:[#allocation11 + $0xf50] sm:$0xff]
    %v3469 = vld [vmem:[#allocation11 + $0xf58] sm:$0xff]
    %v3470 = vld [vmem:[#allocation11 + $0xf60] sm:$0xff]
    %v3471 = vld [vmem:[#allocation11 + $0xf68] sm:$0xff]
    %v3472 = vld [vmem:[#allocation11 + $0xf70] sm:$0xff]
    %v3473 = vld [vmem:[#allocation11 + $0xf78] sm:$0xff]
    %v3474 = vld [vmem:[#allocation11 + $0xf80] sm:$0xff]
    %v3475 = vld [vmem:[#allocation11 + $0xf88] sm:$0xff]
    %v3476 = vld [vmem:[#allocation11 + $0xf90] sm:$0xff]
    %v3477 = vld [vmem:[#allocation11 + $0xf98] sm:$0xff]
    %v3478 = vld [vmem:[#allocation11 + $0xfa0] sm:$0xff]
    %v3479 = vld [vmem:[#allocation11 + $0xfa8] sm:$0xff]
    %v3480 = vld [vmem:[#allocation11 + $0xfb0] sm:$0xff]
    %v3481 = vld [vmem:[#allocation11 + $0xfb8] sm:$0xff]
    %v3482 = vld [vmem:[#allocation11 + $0xfc0] sm:$0xff]
    %v3483 = vld [vmem:[#allocation11 + $0xfc8] sm:$0xff]
    %v3484 = vld [vmem:[#allocation11 + $0xfd0] sm:$0xff]
    %v3485 = vld [vmem:[#allocation11 + $0xfd8] sm:$0xff]
    %v3486 = vld [vmem:[#allocation11 + $0xfe0] sm:$0xff]
    %v3487 = vld [vmem:[#allocation11 + $0xfe8] sm:$0xff]
    %v3488 = vld [vmem:[#allocation11 + $0xff0] sm:$0xff]
    %v3489 = vld [vmem:[#allocation11 + $0xff8] sm:$0xff]
    %v3490 = vld [vmem:[#allocation11 + $0x1000] sm:$0xff]
    %v3491 = vld [vmem:[#allocation11 + $0x1008] sm:$0xff]
    %v3492 = vld [vmem:[#allocation11 + $0x1010] sm:$0xff]
    %v3493 = vld [vmem:[#allocation11 + $0x1018] sm:$0xff]
    %v3494 = vld [vmem:[#allocation11 + $0x1020] sm:$0xff]
    %v3495 = vld [vmem:[#allocation11 + $0x1028] sm:$0xff]
    %v3496 = vld [vmem:[#allocation11 + $0x1030] sm:$0xff]
    %v3497 = vld [vmem:[#allocation11 + $0x1038] sm:$0xff]
    %v3498 = vld [vmem:[#allocation11 + $0x1040] sm:$0xff]
    %v3499 = vld [vmem:[#allocation11 + $0x1048] sm:$0xff]
    %v3500 = vld [vmem:[#allocation11 + $0x1050] sm:$0xff]
    %v3501 = vld [vmem:[#allocation11 + $0x1058] sm:$0xff]
    %v3502 = vld [vmem:[#allocation11 + $0x1060] sm:$0xff]
    %v3503 = vld [vmem:[#allocation11 + $0x1068] sm:$0xff]
    %v3504 = vld [vmem:[#allocation11 + $0x1070] sm:$0xff]
    %v3505 = vld [vmem:[#allocation11 + $0x1078] sm:$0xff]
    %v3506 = vld [vmem:[#allocation11 + $0x1080] sm:$0xff]
    %v3507 = vld [vmem:[#allocation11 + $0x1088] sm:$0xff]
    %v3508 = vld [vmem:[#allocation11 + $0x1090] sm:$0xff]
    %v3509 = vld [vmem:[#allocation11 + $0x1098] sm:$0xff]
    %v3510 = vld [vmem:[#allocation11 + $0x10a0] sm:$0xff]
    %v3511 = vld [vmem:[#allocation11 + $0x10a8] sm:$0xff]
    %v3512 = vld [vmem:[#allocation11 + $0x10b0] sm:$0xff]
    %v3513 = vld [vmem:[#allocation11 + $0x10b8] sm:$0xff]
    %v3514 = vld [vmem:[#allocation11 + $0x10c0] sm:$0xff]
    %v3515 = vld [vmem:[#allocation11 + $0x10c8] sm:$0xff]
    %v3516 = vld [vmem:[#allocation11 + $0x10d0] sm:$0xff]
    %v3517 = vld [vmem:[#allocation11 + $0x10d8] sm:$0xff]
    %v3518 = vld [vmem:[#allocation11 + $0x10e0] sm:$0xff]
    %v3519 = vld [vmem:[#allocation11 + $0x10e8] sm:$0xff]
    %v3520 = vld [vmem:[#allocation11 + $0x10f0] sm:$0xff]
    %v3521 = vld [vmem:[#allocation11 + $0x10f8] sm:$0xff]
    %v3522 = vld [vmem:[#allocation11 + $0x1100] sm:$0xff]
    %v3523 = vld [vmem:[#allocation11 + $0x1108] sm:$0xff]
    %v3524 = vld [vmem:[#allocation11 + $0x1110] sm:$0xff]
    %v3525 = vld [vmem:[#allocation11 + $0x1118] sm:$0xff]
    %v3526 = vld [vmem:[#allocation11 + $0x1120] sm:$0xff]
    %v3527 = vld [vmem:[#allocation11 + $0x1128] sm:$0xff]
    %v3528 = vld [vmem:[#allocation11 + $0x1130] sm:$0xff]
    %v3529 = vld [vmem:[#allocation11 + $0x1138] sm:$0xff]
    %v3530 = vld [vmem:[#allocation11 + $0x1140] sm:$0xff]
    %v3531 = vld [vmem:[#allocation11 + $0x1148] sm:$0xff]
    %v3532 = vld [vmem:[#allocation11 + $0x1150] sm:$0xff]
    %v3533 = vld [vmem:[#allocation11 + $0x1158] sm:$0xff]
    %v3534 = vld [vmem:[#allocation11 + $0x1160] sm:$0xff]
    %v3535 = vld [vmem:[#allocation11 + $0x1168] sm:$0xff]
    %v3536 = vld [vmem:[#allocation11 + $0x1170] sm:$0xff]
    %v3537 = vld [vmem:[#allocation11 + $0x1178] sm:$0xff]
    %v3538 = vld [vmem:[#allocation11 + $0x1180] sm:$0xff]
    %v3539 = vld [vmem:[#allocation11 + $0x1188] sm:$0xff]
    %v3540 = vld [vmem:[#allocation11 + $0x1190] sm:$0xff]
    %v3541 = vld [vmem:[#allocation11 + $0x1198] sm:$0xff]
    %v3542 = vld [vmem:[#allocation11 + $0x11a0] sm:$0xff]
    %v3543 = vld [vmem:[#allocation11 + $0x11a8] sm:$0xff]
    %v3544 = vld [vmem:[#allocation11 + $0x11b0] sm:$0xff]
    %v3545 = vld [vmem:[#allocation11 + $0x11b8] sm:$0xff]
    %v3546 = vld [vmem:[#allocation11 + $0x11c0] sm:$0xff]
    %v3547 = vld [vmem:[#allocation11 + $0x11c8] sm:$0xff]
    %v3548 = vld [vmem:[#allocation11 + $0x11d0] sm:$0xff]
    %v3549 = vld [vmem:[#allocation11 + $0x11d8] sm:$0xff]
    %v3550 = vld [vmem:[#allocation11 + $0x11e0] sm:$0xff]
    %v3551 = vld [vmem:[#allocation11 + $0x11e8] sm:$0xff]
    %v3552 = vld [vmem:[#allocation11 + $0x11f0] sm:$0xff]
    %v3553 = vld [vmem:[#allocation11 + $0x11f8] sm:$0xff]
    %v3554 = vld [vmem:[#allocation11 + $0x1200] sm:$0xff]
    %v3555 = vld [vmem:[#allocation11 + $0x1208] sm:$0xff]
    %v3556 = vld [vmem:[#allocation11 + $0x1210] sm:$0xff]
    %v3557 = vld [vmem:[#allocation11 + $0x1218] sm:$0xff]
    %v3558 = vld [vmem:[#allocation11 + $0x1220] sm:$0xff]
    %v3559 = vld [vmem:[#allocation11 + $0x1228] sm:$0xff]
    %v3560 = vld [vmem:[#allocation11 + $0x1230] sm:$0xff]
    %v3561 = vld [vmem:[#allocation11 + $0x1238] sm:$0xff]
    %v3562 = vld [vmem:[#allocation11 + $0x1240] sm:$0xff]
    %v3563 = vld [vmem:[#allocation11 + $0x1248] sm:$0xff]
    %v3564 = vld [vmem:[#allocation11 + $0x1250] sm:$0xff]
    %v3565 = vld [vmem:[#allocation11 + $0x1258] sm:$0xff]
    %v3566 = vld [vmem:[#allocation11 + $0x1260] sm:$0xff]
    %v3567 = vld [vmem:[#allocation11 + $0x1268] sm:$0xff]
    %v3568 = vld [vmem:[#allocation11 + $0x1270] sm:$0xff]
    %v3569 = vld [vmem:[#allocation11 + $0x1278] sm:$0xff]
    %v3570 = vld [vmem:[#allocation11 + $0x1280] sm:$0xff]
    %v3571 = vld [vmem:[#allocation11 + $0x1288] sm:$0xff]
    %v3572 = vld [vmem:[#allocation11 + $0x1290] sm:$0xff]
    %v3573 = vld [vmem:[#allocation11 + $0x1298] sm:$0xff]
    %v3574 = vld [vmem:[#allocation11 + $0x12a0] sm:$0xff]
    %v3575 = vld [vmem:[#allocation11 + $0x12a8] sm:$0xff]
    %v3576 = vld [vmem:[#allocation11 + $0x12b0] sm:$0xff]
    %v3577 = vld [vmem:[#allocation11 + $0x12b8] sm:$0xff]
    %v3578 = vld [vmem:[#allocation11 + $0x12c0] sm:$0xff]
    %v3579 = vld [vmem:[#allocation11 + $0x12c8] sm:$0xff]
    %v3580 = vld [vmem:[#allocation11 + $0x12d0] sm:$0xff]
    %v3581 = vld [vmem:[#allocation11 + $0x12d8] sm:$0xff]
    %v3582 = vld [vmem:[#allocation11 + $0x12e0] sm:$0xff]
    %v3583 = vld [vmem:[#allocation11 + $0x12e8] sm:$0xff]
    %v3584 = vld [vmem:[#allocation11 + $0x12f0] sm:$0xff]
    %v3585 = vld [vmem:[#allocation11 + $0x12f8] sm:$0xff]
    %v3586 = vld [vmem:[#allocation11 + $0x1300] sm:$0xff]
    %v3587 = vld [vmem:[#allocation11 + $0x1308] sm:$0xff]
    %v3588 = vld [vmem:[#allocation11 + $0x1310] sm:$0xff]
    %v3589 = vld [vmem:[#allocation11 + $0x1318] sm:$0xff]
    %v3590 = vld [vmem:[#allocation11 + $0x1320] sm:$0xff]
    %v3591 = vld [vmem:[#allocation11 + $0x1328] sm:$0xff]
    %v3592 = vld [vmem:[#allocation11 + $0x1330] sm:$0xff]
    %v3593 = vld [vmem:[#allocation11 + $0x1338] sm:$0xff]
    %v3594 = vld [vmem:[#allocation11 + $0x1340] sm:$0xff]
    %v3595 = vld [vmem:[#allocation11 + $0x1348] sm:$0xff]
    %v3596 = vld [vmem:[#allocation11 + $0x1350] sm:$0xff]
    %v3597 = vld [vmem:[#allocation11 + $0x1358] sm:$0xff]
    %v3598 = vld [vmem:[#allocation11 + $0x1360] sm:$0xff]
    %v3599 = vld [vmem:[#allocation11 + $0x1368] sm:$0xff]
    %v3600 = vld [vmem:[#allocation11 + $0x1370] sm:$0xff]
    %v3601 = vld [vmem:[#allocation11 + $0x1378] sm:$0xff]
    %v3602 = vld [vmem:[#allocation11 + $0x1380] sm:$0xff]
    %v3603 = vld [vmem:[#allocation11 + $0x1388] sm:$0xff]
    %v3604 = vld [vmem:[#allocation11 + $0x1390] sm:$0xff]
    %v3605 = vld [vmem:[#allocation11 + $0x1398] sm:$0xff]
    %v3606 = vld [vmem:[#allocation11 + $0x13a0] sm:$0xff]
    %v3607 = vld [vmem:[#allocation11 + $0x13a8] sm:$0xff]
    %v3608 = vld [vmem:[#allocation11 + $0x13b0] sm:$0xff]
    %v3609 = vld [vmem:[#allocation11 + $0x13b8] sm:$0xff]
    %v3610 = vld [vmem:[#allocation11 + $0x13c0] sm:$0xff]
    %v3611 = vld [vmem:[#allocation11 + $0x13c8] sm:$0xff]
    %v3612 = vld [vmem:[#allocation11 + $0x13d0] sm:$0xff]
    %v3613 = vld [vmem:[#allocation11 + $0x13d8] sm:$0xff]
    %v3614 = vld [vmem:[#allocation11 + $0x13e0] sm:$0xff]
    %v3615 = vld [vmem:[#allocation11 + $0x13e8] sm:$0xff]
    %v3616 = vld [vmem:[#allocation11 + $0x13f0] sm:$0xff]
    %v3617 = vld [vmem:[#allocation11 + $0x13f8] sm:$0xff]
    %v3618 = vld [vmem:[#allocation11 + $0x1400] sm:$0xff]
    %v3619 = vld [vmem:[#allocation11 + $0x1408] sm:$0xff]
    %v3620 = vld [vmem:[#allocation11 + $0x1410] sm:$0xff]
    %v3621 = vld [vmem:[#allocation11 + $0x1418] sm:$0xff]
    %v3622 = vld [vmem:[#allocation11 + $0x1420] sm:$0xff]
    %v3623 = vld [vmem:[#allocation11 + $0x1428] sm:$0xff]
    %v3624 = vld [vmem:[#allocation11 + $0x1430] sm:$0xff]
    %v3625 = vld [vmem:[#allocation11 + $0x1438] sm:$0xff]
    %v3626 = vld [vmem:[#allocation11 + $0x1440] sm:$0xff]
    %v3627 = vld [vmem:[#allocation11 + $0x1448] sm:$0xff]
    %v3628 = vld [vmem:[#allocation11 + $0x1450] sm:$0xff]
    %v3629 = vld [vmem:[#allocation11 + $0x1458] sm:$0xff]
    %v3630 = vld [vmem:[#allocation11 + $0x1460] sm:$0xff]
    %v3631 = vld [vmem:[#allocation11 + $0x1468] sm:$0xff]
    %v3632 = vld [vmem:[#allocation11 + $0x1470] sm:$0xff]
    %v3633 = vld [vmem:[#allocation11 + $0x1478] sm:$0xff]
    %v3634 = vld [vmem:[#allocation11 + $0x1480] sm:$0xff]
    %v3635 = vld [vmem:[#allocation11 + $0x1488] sm:$0xff]
    %v3636 = vld [vmem:[#allocation11 + $0x1490] sm:$0xff]
    %v3637 = vld [vmem:[#allocation11 + $0x1498] sm:$0xff]
    %v3638 = vld [vmem:[#allocation11 + $0x14a0] sm:$0xff]
    %v3639 = vld [vmem:[#allocation11 + $0x14a8] sm:$0xff]
    %v3640 = vld [vmem:[#allocation11 + $0x14b0] sm:$0xff]
    %v3641 = vld [vmem:[#allocation11 + $0x14b8] sm:$0xff]
    %v3642 = vld [vmem:[#allocation11 + $0x14c0] sm:$0xff]
    %v3643 = vld [vmem:[#allocation11 + $0x14c8] sm:$0xff]
    %v3644 = vld [vmem:[#allocation11 + $0x14d0] sm:$0xff]
    %v3645 = vld [vmem:[#allocation11 + $0x14d8] sm:$0xff]
    %v3646 = vld [vmem:[#allocation11 + $0x14e0] sm:$0xff]
    %v3647 = vld [vmem:[#allocation11 + $0x14e8] sm:$0xff]
    %v3648 = vld [vmem:[#allocation11 + $0x14f0] sm:$0xff]
    %v3649 = vld [vmem:[#allocation11 + $0x14f8] sm:$0xff]
    %v3650 = vld [vmem:[#allocation11 + $0x1500] sm:$0xff]
    %v3651 = vld [vmem:[#allocation11 + $0x1508] sm:$0xff]
    %v3652 = vld [vmem:[#allocation11 + $0x1510] sm:$0xff]
    %v3653 = vld [vmem:[#allocation11 + $0x1518] sm:$0xff]
    %v3654 = vld [vmem:[#allocation11 + $0x1520] sm:$0xff]
    %v3655 = vld [vmem:[#allocation11 + $0x1528] sm:$0xff]
    %v3656 = vld [vmem:[#allocation11 + $0x1530] sm:$0xff]
    %v3657 = vld [vmem:[#allocation11 + $0x1538] sm:$0xff]
    %v3658 = vld [vmem:[#allocation11 + $0x1540] sm:$0xff]
    %v3659 = vld [vmem:[#allocation11 + $0x1548] sm:$0xff]
    %v3660 = vld [vmem:[#allocation11 + $0x1550] sm:$0xff]
    %v3661 = vld [vmem:[#allocation11 + $0x1558] sm:$0xff]
    %v3662 = vld [vmem:[#allocation11 + $0x1560] sm:$0xff]
    %v3663 = vld [vmem:[#allocation11 + $0x1568] sm:$0xff]
    %v3664 = vld [vmem:[#allocation11 + $0x1570] sm:$0xff]
    %v3665 = vld [vmem:[#allocation11 + $0x1578] sm:$0xff]
    %v3666 = vld [vmem:[#allocation11 + $0x1580] sm:$0xff]
    %v3667 = vld [vmem:[#allocation11 + $0x1588] sm:$0xff]
    %v3668 = vld [vmem:[#allocation11 + $0x1590] sm:$0xff]
    %v3669 = vld [vmem:[#allocation11 + $0x1598] sm:$0xff]
    %v3670 = vld [vmem:[#allocation11 + $0x15a0] sm:$0xff]
    %v3671 = vld [vmem:[#allocation11 + $0x15a8] sm:$0xff]
    %v3672 = vld [vmem:[#allocation11 + $0x15b0] sm:$0xff]
    %v3673 = vld [vmem:[#allocation11 + $0x15b8] sm:$0xff]
    %v3674 = vld [vmem:[#allocation11 + $0x15c0] sm:$0xff]
    %v3675 = vld [vmem:[#allocation11 + $0x15c8] sm:$0xff]
    %v3676 = vld [vmem:[#allocation11 + $0x15d0] sm:$0xff]
    %v3677 = vld [vmem:[#allocation11 + $0x15d8] sm:$0xff]
    %v3678 = vld [vmem:[#allocation11 + $0x15e0] sm:$0xff]
    %v3679 = vld [vmem:[#allocation11 + $0x15e8] sm:$0xff]
    %v3680 = vld [vmem:[#allocation11 + $0x15f0] sm:$0xff]
    %v3681 = vld [vmem:[#allocation11 + $0x15f8] sm:$0xff]
    %v3682 = vld [vmem:[#allocation11 + $0x1600] sm:$0xff]
    %v3683 = vld [vmem:[#allocation11 + $0x1608] sm:$0xff]
    %v3684 = vld [vmem:[#allocation11 + $0x1610] sm:$0xff]
    %v3685 = vld [vmem:[#allocation11 + $0x1618] sm:$0xff]
    %v3686 = vld [vmem:[#allocation11 + $0x1620] sm:$0xff]
    %v3687 = vld [vmem:[#allocation11 + $0x1628] sm:$0xff]
    %v3688 = vld [vmem:[#allocation11 + $0x1630] sm:$0xff]
    %v3689 = vld [vmem:[#allocation11 + $0x1638] sm:$0xff]
    %v3690 = vld [vmem:[#allocation11 + $0x1640] sm:$0xff]
    %v3691 = vld [vmem:[#allocation11 + $0x1648] sm:$0xff]
    %v3692 = vld [vmem:[#allocation11 + $0x1650] sm:$0xff]
    %v3693 = vld [vmem:[#allocation11 + $0x1658] sm:$0xff]
    %v3694 = vld [vmem:[#allocation11 + $0x1660] sm:$0xff]
    %v3695 = vld [vmem:[#allocation11 + $0x1668] sm:$0xff]
    %v3696 = vld [vmem:[#allocation11 + $0x1670] sm:$0xff]
    %v3697 = vld [vmem:[#allocation11 + $0x1678] sm:$0xff]
    %v3698 = vld [vmem:[#allocation11 + $0x1680] sm:$0xff]
    %v3699 = vld [vmem:[#allocation11 + $0x1688] sm:$0xff]
    %v3700 = vld [vmem:[#allocation11 + $0x1690] sm:$0xff]
    %v3701 = vld [vmem:[#allocation11 + $0x1698] sm:$0xff]
    %v3702 = vld [vmem:[#allocation11 + $0x16a0] sm:$0xff]
    %v3703 = vld [vmem:[#allocation11 + $0x16a8] sm:$0xff]
    %v3704 = vld [vmem:[#allocation11 + $0x16b0] sm:$0xff]
    %v3705 = vld [vmem:[#allocation11 + $0x16b8] sm:$0xff]
    %v3706 = vld [vmem:[#allocation11 + $0x16c0] sm:$0xff]
    %v3707 = vld [vmem:[#allocation11 + $0x16c8] sm:$0xff]
    %v3708 = vld [vmem:[#allocation11 + $0x16d0] sm:$0xff]
    %v3709 = vld [vmem:[#allocation11 + $0x16d8] sm:$0xff]
    %v3710 = vld [vmem:[#allocation11 + $0x16e0] sm:$0xff]
    %v3711 = vld [vmem:[#allocation11 + $0x16e8] sm:$0xff]
    %v3712 = vld [vmem:[#allocation11 + $0x16f0] sm:$0xff]
    %v3713 = vld [vmem:[#allocation11 + $0x16f8] sm:$0xff]
    %v3714 = vld [vmem:[#allocation11 + $0x1700] sm:$0xff]
    %v3715 = vld [vmem:[#allocation11 + $0x1708] sm:$0xff]
    %v3716 = vld [vmem:[#allocation11 + $0x1710] sm:$0xff]
    %v3717 = vld [vmem:[#allocation11 + $0x1718] sm:$0xff]
    %v3718 = vld [vmem:[#allocation11 + $0x1720] sm:$0xff]
    %v3719 = vld [vmem:[#allocation11 + $0x1728] sm:$0xff]
    %v3720 = vld [vmem:[#allocation11 + $0x1730] sm:$0xff]
    %v3721 = vld [vmem:[#allocation11 + $0x1738] sm:$0xff]
    %v3722 = vld [vmem:[#allocation11 + $0x1740] sm:$0xff]
    %v3723 = vld [vmem:[#allocation11 + $0x1748] sm:$0xff]
    %v3724 = vld [vmem:[#allocation11 + $0x1750] sm:$0xff]
    %v3725 = vld [vmem:[#allocation11 + $0x1758] sm:$0xff]
    %v3726 = vld [vmem:[#allocation11 + $0x1760] sm:$0xff]
    %v3727 = vld [vmem:[#allocation11 + $0x1768] sm:$0xff]
    %v3728 = vld [vmem:[#allocation11 + $0x1770] sm:$0xff]
    %v3729 = vld [vmem:[#allocation11 + $0x1778] sm:$0xff]
    %v3730 = vld [vmem:[#allocation11 + $0x1780] sm:$0xff]
    %v3731 = vld [vmem:[#allocation11 + $0x1788] sm:$0xff]
    %v3732 = vld [vmem:[#allocation11 + $0x1790] sm:$0xff]
    %v3733 = vld [vmem:[#allocation11 + $0x1798] sm:$0xff]
    %v3734 = vld [vmem:[#allocation11 + $0x17a0] sm:$0xff]
    %v3735 = vld [vmem:[#allocation11 + $0x17a8] sm:$0xff]
    %v3736 = vld [vmem:[#allocation11 + $0x17b0] sm:$0xff]
    %v3737 = vld [vmem:[#allocation11 + $0x17b8] sm:$0xff]
    %v3738 = vld [vmem:[#allocation11 + $0x17c0] sm:$0xff]
    %v3739 = vld [vmem:[#allocation11 + $0x17c8] sm:$0xff]
    %v3740 = vld [vmem:[#allocation11 + $0x17d0] sm:$0xff]
    %v3741 = vld [vmem:[#allocation11 + $0x17d8] sm:$0xff]
    %v3742 = vld [vmem:[#allocation11 + $0x17e0] sm:$0xff]
    %v3743 = vld [vmem:[#allocation11 + $0x17e8] sm:$0xff]
    %v3744 = vld [vmem:[#allocation11 + $0x17f0] sm:$0xff]
    %v3745 = vld [vmem:[#allocation11 + $0x17f8] sm:$0xff]
    %v3746 = vld [vmem:[#allocation11 + $0x1800] sm:$0xff]
    %v3747 = vld [vmem:[#allocation11 + $0x1808] sm:$0xff]
    %v3748 = vld [vmem:[#allocation11 + $0x1810] sm:$0xff]
    %v3749 = vld [vmem:[#allocation11 + $0x1818] sm:$0xff]
    %v3750 = vld [vmem:[#allocation11 + $0x1820] sm:$0xff]
    %v3751 = vld [vmem:[#allocation11 + $0x1828] sm:$0xff]
    %v3752 = vld [vmem:[#allocation11 + $0x1830] sm:$0xff]
    %v3753 = vld [vmem:[#allocation11 + $0x1838] sm:$0xff]
    %v3754 = vld [vmem:[#allocation11 + $0x1840] sm:$0xff]
    %v3755 = vld [vmem:[#allocation11 + $0x1848] sm:$0xff]
    %v3756 = vld [vmem:[#allocation11 + $0x1850] sm:$0xff]
    %v3757 = vld [vmem:[#allocation11 + $0x1858] sm:$0xff]
    %v3758 = vld [vmem:[#allocation11 + $0x1860] sm:$0xff]
    %v3759 = vld [vmem:[#allocation11 + $0x1868] sm:$0xff]
    %v3760 = vld [vmem:[#allocation11 + $0x1870] sm:$0xff]
    %v3761 = vld [vmem:[#allocation11 + $0x1878] sm:$0xff]
    %v3762 = vld [vmem:[#allocation11 + $0x1880] sm:$0xff]
    %v3763 = vld [vmem:[#allocation11 + $0x1888] sm:$0xff]
    %v3764 = vld [vmem:[#allocation11 + $0x1890] sm:$0xff]
    %v3765 = vld [vmem:[#allocation11 + $0x1898] sm:$0xff]
    %v3766 = vld [vmem:[#allocation11 + $0x18a0] sm:$0xff]
    %v3767 = vld [vmem:[#allocation11 + $0x18a8] sm:$0xff]
    %v3768 = vld [vmem:[#allocation11 + $0x18b0] sm:$0xff]
    %v3769 = vld [vmem:[#allocation11 + $0x18b8] sm:$0xff]
    %v3770 = vld [vmem:[#allocation11 + $0x18c0] sm:$0xff]
    %v3771 = vld [vmem:[#allocation11 + $0x18c8] sm:$0xff]
    %v3772 = vld [vmem:[#allocation11 + $0x18d0] sm:$0xff]
    %v3773 = vld [vmem:[#allocation11 + $0x18d8] sm:$0xff]
    %v3774 = vld [vmem:[#allocation11 + $0x18e0] sm:$0xff]
    %v3775 = vld [vmem:[#allocation11 + $0x18e8] sm:$0xff]
    %v3776 = vld [vmem:[#allocation11 + $0x18f0] sm:$0xff]
    %v3777 = vld [vmem:[#allocation11 + $0x18f8] sm:$0xff]
    %v3778 = vld [vmem:[#allocation11 + $0x1900] sm:$0xff]
    %v3779 = vld [vmem:[#allocation11 + $0x1908] sm:$0xff]
    %v3780 = vld [vmem:[#allocation11 + $0x1910] sm:$0xff]
    %v3781 = vld [vmem:[#allocation11 + $0x1918] sm:$0xff]
    %v3782 = vld [vmem:[#allocation11 + $0x1920] sm:$0xff]
    %v3783 = vld [vmem:[#allocation11 + $0x1928] sm:$0xff]
    %v3784 = vld [vmem:[#allocation11 + $0x1930] sm:$0xff]
    %v3785 = vld [vmem:[#allocation11 + $0x1938] sm:$0xff]
    %v3786 = vld [vmem:[#allocation11 + $0x1940] sm:$0xff]
    %v3787 = vld [vmem:[#allocation11 + $0x1948] sm:$0xff]
    %v3788 = vld [vmem:[#allocation11 + $0x1950] sm:$0xff]
    %v3789 = vld [vmem:[#allocation11 + $0x1958] sm:$0xff]
    %v3790 = vld [vmem:[#allocation11 + $0x1960] sm:$0xff]
    %v3791 = vld [vmem:[#allocation11 + $0x1968] sm:$0xff]
    %v3792 = vld [vmem:[#allocation11 + $0x1970] sm:$0xff]
    %v3793 = vld [vmem:[#allocation11 + $0x1978] sm:$0xff]
    %v3794 = vld [vmem:[#allocation11 + $0x1980] sm:$0xff]
    %v3795 = vld [vmem:[#allocation11 + $0x1988] sm:$0xff]
    %v3796 = vld [vmem:[#allocation11 + $0x1990] sm:$0xff]
    %v3797 = vld [vmem:[#allocation11 + $0x1998] sm:$0xff]
    %v3798 = vld [vmem:[#allocation11 + $0x19a0] sm:$0xff]
    %v3799 = vld [vmem:[#allocation11 + $0x19a8] sm:$0xff]
    %v3800 = vld [vmem:[#allocation11 + $0x19b0] sm:$0xff]
    %v3801 = vld [vmem:[#allocation11 + $0x19b8] sm:$0xff]
    %v3802 = vld [vmem:[#allocation11 + $0x19c0] sm:$0xff]
    %v3803 = vld [vmem:[#allocation11 + $0x19c8] sm:$0xff]
    %v3804 = vld [vmem:[#allocation11 + $0x19d0] sm:$0xff]
    %v3805 = vld [vmem:[#allocation11 + $0x19d8] sm:$0xff]
    %v3806 = vld [vmem:[#allocation11 + $0x19e0] sm:$0xff]
    %v3807 = vld [vmem:[#allocation11 + $0x19e8] sm:$0xff]
    %v3808 = vld [vmem:[#allocation11 + $0x19f0] sm:$0xff]
    %v3809 = vld [vmem:[#allocation11 + $0x19f8] sm:$0xff]
    %v3810 = vld [vmem:[#allocation11 + $0x1a00] sm:$0xff]
    %v3811 = vld [vmem:[#allocation11 + $0x1a08] sm:$0xff]
    %v3812 = vld [vmem:[#allocation11 + $0x1a10] sm:$0xff]
    %v3813 = vld [vmem:[#allocation11 + $0x1a18] sm:$0xff]
    %v3814 = vld [vmem:[#allocation11 + $0x1a20] sm:$0xff]
    %v3815 = vld [vmem:[#allocation11 + $0x1a28] sm:$0xff]
    %v3816 = vld [vmem:[#allocation11 + $0x1a30] sm:$0xff]
    %v3817 = vld [vmem:[#allocation11 + $0x1a38] sm:$0xff]
    %v3818 = vld [vmem:[#allocation11 + $0x1a40] sm:$0xff]
    %v3819 = vld [vmem:[#allocation11 + $0x1a48] sm:$0xff]
    %v3820 = vld [vmem:[#allocation11 + $0x1a50] sm:$0xff]
    %v3821 = vld [vmem:[#allocation11 + $0x1a58] sm:$0xff]
    %v3822 = vld [vmem:[#allocation11 + $0x1a60] sm:$0xff]
    %v3823 = vld [vmem:[#allocation11 + $0x1a68] sm:$0xff]
    %v3824 = vld [vmem:[#allocation11 + $0x1a70] sm:$0xff]
    %v3825 = vld [vmem:[#allocation11 + $0x1a78] sm:$0xff]
    %v3826 = vld [vmem:[#allocation11 + $0x1a80] sm:$0xff]
    %v3827 = vld [vmem:[#allocation11 + $0x1a88] sm:$0xff]
    %v3828 = vld [vmem:[#allocation11 + $0x1a90] sm:$0xff]
    %v3829 = vld [vmem:[#allocation11 + $0x1a98] sm:$0xff]
    %v3830 = vld [vmem:[#allocation11 + $0x1aa0] sm:$0xff]
    %v3831 = vld [vmem:[#allocation11 + $0x1aa8] sm:$0xff]
    %v3832 = vld [vmem:[#allocation11 + $0x1ab0] sm:$0xff]
    %v3833 = vld [vmem:[#allocation11 + $0x1ab8] sm:$0xff]
    %v3834 = vld [vmem:[#allocation11 + $0x1ac0] sm:$0xff]
    %v3835 = vld [vmem:[#allocation11 + $0x1ac8] sm:$0xff]
    %v3836 = vld [vmem:[#allocation11 + $0x1ad0] sm:$0xff]
    %v3837 = vld [vmem:[#allocation11 + $0x1ad8] sm:$0xff]
    %v3838 = vld [vmem:[#allocation11 + $0x1ae0] sm:$0xff]
    %v3839 = vld [vmem:[#allocation11 + $0x1ae8] sm:$0xff]
    %v3840 = vld [vmem:[#allocation11 + $0x1af0] sm:$0xff]
    %v3841 = vld [vmem:[#allocation11 + $0x1af8] sm:$0xff]
    %v3842 = vld [vmem:[#allocation11 + $0x1b00] sm:$0xff]
    %v3843 = vld [vmem:[#allocation11 + $0x1b08] sm:$0xff]
    %v3844 = vld [vmem:[#allocation11 + $0x1b10] sm:$0xff]
    %v3845 = vld [vmem:[#allocation11 + $0x1b18] sm:$0xff]
    %v3846 = vld [vmem:[#allocation11 + $0x1b20] sm:$0xff]
    %v3847 = vld [vmem:[#allocation11 + $0x1b28] sm:$0xff]
    %v3848 = vld [vmem:[#allocation11 + $0x1b30] sm:$0xff]
    %v3849 = vld [vmem:[#allocation11 + $0x1b38] sm:$0xff]
    %v3850 = vld [vmem:[#allocation11 + $0x1b40] sm:$0xff]
    %v3851 = vld [vmem:[#allocation11 + $0x1b48] sm:$0xff]
    %v3852 = vld [vmem:[#allocation11 + $0x1b50] sm:$0xff]
    %v3853 = vld [vmem:[#allocation11 + $0x1b58] sm:$0xff]
    %v3854 = vld [vmem:[#allocation11 + $0x1b60] sm:$0xff]
    %v3855 = vld [vmem:[#allocation11 + $0x1b68] sm:$0xff]
    %v3856 = vld [vmem:[#allocation11 + $0x1b70] sm:$0xff]
    %v3857 = vld [vmem:[#allocation11 + $0x1b78] sm:$0xff]
    %v3858 = vld [vmem:[#allocation11 + $0x1b80] sm:$0xff]
    %v3859 = vld [vmem:[#allocation11 + $0x1b88] sm:$0xff]
    %v3860 = vld [vmem:[#allocation11 + $0x1b90] sm:$0xff]
    %v3861 = vld [vmem:[#allocation11 + $0x1b98] sm:$0xff]
    %v3862 = vld [vmem:[#allocation11 + $0x1ba0] sm:$0xff]
    %v3863 = vld [vmem:[#allocation11 + $0x1ba8] sm:$0xff]
    %v3864 = vld [vmem:[#allocation11 + $0x1bb0] sm:$0xff]
    %v3865 = vld [vmem:[#allocation11 + $0x1bb8] sm:$0xff]
    %v3866 = vld [vmem:[#allocation11 + $0x1bc0] sm:$0xff]
    %v3867 = vld [vmem:[#allocation11 + $0x1bc8] sm:$0xff]
    %v3868 = vld [vmem:[#allocation11 + $0x1bd0] sm:$0xff]
    %v3869 = vld [vmem:[#allocation11 + $0x1bd8] sm:$0xff]
    %v3870 = vld [vmem:[#allocation11 + $0x1be0] sm:$0xff]
    %v3871 = vld [vmem:[#allocation11 + $0x1be8] sm:$0xff]
    %v3872 = vld [vmem:[#allocation11 + $0x1bf0] sm:$0xff]
    %v3873 = vld [vmem:[#allocation11 + $0x1bf8] sm:$0xff]
    %v3874 = vld [vmem:[#allocation11 + $0x1c00] sm:$0xff]
    %v3875 = vld [vmem:[#allocation11 + $0x1c08] sm:$0xff]
    %v3876 = vld [vmem:[#allocation11 + $0x1c10] sm:$0xff]
    %v3877 = vld [vmem:[#allocation11 + $0x1c18] sm:$0xff]
    %v3878 = vld [vmem:[#allocation11 + $0x1c20] sm:$0xff]
    %v3879 = vld [vmem:[#allocation11 + $0x1c28] sm:$0xff]
    %v3880 = vld [vmem:[#allocation11 + $0x1c30] sm:$0xff]
    %v3881 = vld [vmem:[#allocation11 + $0x1c38] sm:$0xff]
    %v3882 = vld [vmem:[#allocation11 + $0x1c40] sm:$0xff]
    %v3883 = vld [vmem:[#allocation11 + $0x1c48] sm:$0xff]
    %v3884 = vld [vmem:[#allocation11 + $0x1c50] sm:$0xff]
    %v3885 = vld [vmem:[#allocation11 + $0x1c58] sm:$0xff]
    %v3886 = vld [vmem:[#allocation11 + $0x1c60] sm:$0xff]
    %v3887 = vld [vmem:[#allocation11 + $0x1c68] sm:$0xff]
    %v3888 = vld [vmem:[#allocation11 + $0x1c70] sm:$0xff]
    %v3889 = vld [vmem:[#allocation11 + $0x1c78] sm:$0xff]
    %v3890 = vld [vmem:[#allocation11 + $0x1c80] sm:$0xff]
    %v3891 = vld [vmem:[#allocation11 + $0x1c88] sm:$0xff]
    %v3892 = vld [vmem:[#allocation11 + $0x1c90] sm:$0xff]
    %v3893 = vld [vmem:[#allocation11 + $0x1c98] sm:$0xff]
    %v3894 = vld [vmem:[#allocation11 + $0x1ca0] sm:$0xff]
    %v3895 = vld [vmem:[#allocation11 + $0x1ca8] sm:$0xff]
    %v3896 = vld [vmem:[#allocation11 + $0x1cb0] sm:$0xff]
    %v3897 = vld [vmem:[#allocation11 + $0x1cb8] sm:$0xff]
    %v3898 = vld [vmem:[#allocation11 + $0x1cc0] sm:$0xff]
    %v3899 = vld [vmem:[#allocation11 + $0x1cc8] sm:$0xff]
    %v3900 = vld [vmem:[#allocation11 + $0x1cd0] sm:$0xff]
    %v3901 = vld [vmem:[#allocation11 + $0x1cd8] sm:$0xff]
    %v3902 = vld [vmem:[#allocation11 + $0x1ce0] sm:$0xff]
    %v3903 = vld [vmem:[#allocation11 + $0x1ce8] sm:$0xff]
    %v3904 = vld [vmem:[#allocation11 + $0x1cf0] sm:$0xff]
    %v3905 = vld [vmem:[#allocation11 + $0x1cf8] sm:$0xff]
    %v3906 = vld [vmem:[#allocation11 + $0x1d00] sm:$0xff]
    %v3907 = vld [vmem:[#allocation11 + $0x1d08] sm:$0xff]
    %v3908 = vld [vmem:[#allocation11 + $0x1d10] sm:$0xff]
    %v3909 = vld [vmem:[#allocation11 + $0x1d18] sm:$0xff]
    %v3910 = vld [vmem:[#allocation11 + $0x1d20] sm:$0xff]
    %v3911 = vld [vmem:[#allocation11 + $0x1d28] sm:$0xff]
    %v3912 = vld [vmem:[#allocation11 + $0x1d30] sm:$0xff]
    %v3913 = vld [vmem:[#allocation11 + $0x1d38] sm:$0xff]
    %v3914 = vld [vmem:[#allocation11 + $0x1d40] sm:$0xff]
    %v3915 = vld [vmem:[#allocation11 + $0x1d48] sm:$0xff]
    %v3916 = vld [vmem:[#allocation11 + $0x1d50] sm:$0xff]
    %v3917 = vld [vmem:[#allocation11 + $0x1d58] sm:$0xff]
    %v3918 = vld [vmem:[#allocation11 + $0x1d60] sm:$0xff]
    %v3919 = vld [vmem:[#allocation11 + $0x1d68] sm:$0xff]
    %v3920 = vld [vmem:[#allocation11 + $0x1d70] sm:$0xff]
    %v3921 = vld [vmem:[#allocation11 + $0x1d78] sm:$0xff]
    %v3922 = vld [vmem:[#allocation11 + $0x1d80] sm:$0xff]
    %v3923 = vld [vmem:[#allocation11 + $0x1d88] sm:$0xff]
    %v3924 = vld [vmem:[#allocation11 + $0x1d90] sm:$0xff]
    %v3925 = vld [vmem:[#allocation11 + $0x1d98] sm:$0xff]
    %v3926 = vld [vmem:[#allocation11 + $0x1da0] sm:$0xff]
    %v3927 = vld [vmem:[#allocation11 + $0x1da8] sm:$0xff]
    %v3928 = vld [vmem:[#allocation11 + $0x1db0] sm:$0xff]
    %v3929 = vld [vmem:[#allocation11 + $0x1db8] sm:$0xff]
    %v3930 = vld [vmem:[#allocation11 + $0x1dc0] sm:$0xff]
    %v3931 = vld [vmem:[#allocation11 + $0x1dc8] sm:$0xff]
    %v3932 = vld [vmem:[#allocation11 + $0x1dd0] sm:$0xff]
    %v3933 = vld [vmem:[#allocation11 + $0x1dd8] sm:$0xff]
    %v3934 = vld [vmem:[#allocation11 + $0x1de0] sm:$0xff]
    %v3935 = vld [vmem:[#allocation11 + $0x1de8] sm:$0xff]
    %v3936 = vld [vmem:[#allocation11 + $0x1df0] sm:$0xff]
    %v3937 = vld [vmem:[#allocation11 + $0x1df8] sm:$0xff]
    %v3938 = vld [vmem:[#allocation11 + $0x1e00] sm:$0xff]
    %v3939 = vld [vmem:[#allocation11 + $0x1e08] sm:$0xff]
    %v3940 = vld [vmem:[#allocation11 + $0x1e10] sm:$0xff]
    %v3941 = vld [vmem:[#allocation11 + $0x1e18] sm:$0xff]
    %v3942 = vld [vmem:[#allocation11 + $0x1e20] sm:$0xff]
    %v3943 = vld [vmem:[#allocation11 + $0x1e28] sm:$0xff]
    %v3944 = vld [vmem:[#allocation11 + $0x1e30] sm:$0xff]
    %v3945 = vld [vmem:[#allocation11 + $0x1e38] sm:$0xff]
    %v3946 = vld [vmem:[#allocation11 + $0x1e40] sm:$0xff]
    %v3947 = vld [vmem:[#allocation11 + $0x1e48] sm:$0xff]
    %v3948 = vld [vmem:[#allocation11 + $0x1e50] sm:$0xff]
    %v3949 = vld [vmem:[#allocation11 + $0x1e58] sm:$0xff]
    %v3950 = vld [vmem:[#allocation11 + $0x1e60] sm:$0xff]
    %v3951 = vld [vmem:[#allocation11 + $0x1e68] sm:$0xff]
    %v3952 = vld [vmem:[#allocation11 + $0x1e70] sm:$0xff]
    %v3953 = vld [vmem:[#allocation11 + $0x1e78] sm:$0xff]
    %v3954 = vld [vmem:[#allocation11 + $0x1e80] sm:$0xff]
    %v3955 = vld [vmem:[#allocation11 + $0x1e88] sm:$0xff]
    %v3956 = vld [vmem:[#allocation11 + $0x1e90] sm:$0xff]
    %v3957 = vld [vmem:[#allocation11 + $0x1e98] sm:$0xff]
    %v3958 = vld [vmem:[#allocation11 + $0x1ea0] sm:$0xff]
    %v3959 = vld [vmem:[#allocation11 + $0x1ea8] sm:$0xff]
    %v3960 = vld [vmem:[#allocation11 + $0x1eb0] sm:$0xff]
    %v3961 = vld [vmem:[#allocation11 + $0x1eb8] sm:$0xff]
    %v3962 = vld [vmem:[#allocation11 + $0x1ec0] sm:$0xff]
    %v3963 = vld [vmem:[#allocation11 + $0x1ec8] sm:$0xff]
    %v3964 = vld [vmem:[#allocation11 + $0x1ed0] sm:$0xff]
    %v3965 = vld [vmem:[#allocation11 + $0x1ed8] sm:$0xff]
    %v3966 = vld [vmem:[#allocation11 + $0x1ee0] sm:$0xff]
    %v3967 = vld [vmem:[#allocation11 + $0x1ee8] sm:$0xff]
    %v3968 = vld [vmem:[#allocation11 + $0x1ef0] sm:$0xff]
    %v3969 = vld [vmem:[#allocation11 + $0x1ef8] sm:$0xff]
    %v3970 = vld [vmem:[#allocation11 + $0x1f00] sm:$0xff]
    %v3971 = vld [vmem:[#allocation11 + $0x1f08] sm:$0xff]
    %v3972 = vld [vmem:[#allocation11 + $0x1f10] sm:$0xff]
    %v3973 = vld [vmem:[#allocation11 + $0x1f18] sm:$0xff]
    %v3974 = vld [vmem:[#allocation11 + $0x1f20] sm:$0xff]
    %v3975 = vld [vmem:[#allocation11 + $0x1f28] sm:$0xff]
    %v3976 = vld [vmem:[#allocation11 + $0x1f30] sm:$0xff]
    %v3977 = vld [vmem:[#allocation11 + $0x1f38] sm:$0xff]
    %v3978 = vld [vmem:[#allocation11 + $0x1f40] sm:$0xff]
    %v3979 = vld [vmem:[#allocation11 + $0x1f48] sm:$0xff]
    %v3980 = vld [vmem:[#allocation11 + $0x1f50] sm:$0xff]
    %v3981 = vld [vmem:[#allocation11 + $0x1f58] sm:$0xff]
    %v3982 = vld [vmem:[#allocation11 + $0x1f60] sm:$0xff]
    %v3983 = vld [vmem:[#allocation11 + $0x1f68] sm:$0xff]
    %v3984 = vld [vmem:[#allocation11 + $0x1f70] sm:$0xff]
    %v3985 = vld [vmem:[#allocation11 + $0x1f78] sm:$0xff]
    %v3986 = vld [vmem:[#allocation11 + $0x1f80] sm:$0xff]
    %v3987 = vld [vmem:[#allocation11 + $0x1f88] sm:$0xff]
    %v3988 = vld [vmem:[#allocation11 + $0x1f90] sm:$0xff]
    %v3989 = vld [vmem:[#allocation11 + $0x1f98] sm:$0xff]
    %v3990 = vld [vmem:[#allocation11 + $0x1fa0] sm:$0xff]
    %v3991 = vld [vmem:[#allocation11 + $0x1fa8] sm:$0xff]
    %v3992 = vld [vmem:[#allocation11 + $0x1fb0] sm:$0xff]
    %v3993 = vld [vmem:[#allocation11 + $0x1fb8] sm:$0xff]
    %v3994 = vld [vmem:[#allocation11 + $0x1fc0] sm:$0xff]
    %v3995 = vld [vmem:[#allocation11 + $0x1fc8] sm:$0xff]
    %v3996 = vld [vmem:[#allocation11 + $0x1fd0] sm:$0xff]
    %v3997 = vld [vmem:[#allocation11 + $0x1fd8] sm:$0xff]
    %v3998 = vld [vmem:[#allocation11 + $0x1fe0] sm:$0xff]
    %v3999 = vld [vmem:[#allocation11 + $0x1fe8] sm:$0xff]
    %v4000 = vld [vmem:[#allocation11 + $0x1ff0] sm:$0xff]
    %v4001 = vld [vmem:[#allocation11 + $0x1ff8] sm:$0xff]
    %v4002 = vld [vmem:[#allocation13] sm:$0xff]
    %v4004 = vlaneseq
    %v4005 = vshrl.u32 %v4004, 7
    %v4006 = vsub.s32 0, %v4005
    %v4007 = vrot.slane %v4002, %v4006
    %v4008 = vlaneseq
    %v4009 = vshrl.u32 %v4008, 7
    %v4010 = vsub.s32 1, %v4009
    %v4011 = vrot.slane %v4002, %v4010
    %v4012 = vlaneseq
    %v4013 = vshrl.u32 %v4012, 7
    %v4014 = vsub.s32 2, %v4013
    %v4015 = vrot.slane %v4002, %v4014
    %v4016 = vlaneseq
    %v4017 = vshrl.u32 %v4016, 7
    %v4018 = vsub.s32 3, %v4017
    %v4019 = vrot.slane %v4002, %v4018
    %v4020 = vlaneseq
    %v4021 = vshrl.u32 %v4020, 7
    %v4022 = vsub.s32 4, %v4021
    %v4023 = vrot.slane %v4002, %v4022
    %v4024 = vlaneseq
    %v4025 = vshrl.u32 %v4024, 7
    %v4026 = vsub.s32 5, %v4025
    %v4027 = vrot.slane %v4002, %v4026
    %v4028 = vlaneseq
    %v4029 = vshrl.u32 %v4028, 7
    %v4030 = vsub.s32 6, %v4029
    %v4031 = vrot.slane %v4002, %v4030
    %v4032 = vlaneseq
    %v4033 = vshrl.u32 %v4032, 7
    %v4034 = vsub.s32 7, %v4033
    %v4035 = vrot.slane %v4002, %v4034
    %4044 = vmatprep.subr.mxu0 %v2979
    %4045 = vmatpush1.msra.mxu0 %v2978
    %4046 = vmatprep.subr.mxu0 %v2987
    %4047 = vmatpush1.msra.mxu0 %v2986
    %4048 = vmatprep.subr.mxu0 %v2995
    %4049 = vmatpush1.msra.mxu0 %v2994
    %4050 = vmatprep.subr.mxu0 %v3003
    %4051 = vmatpush1.msra.mxu0 %v3002
    %4052 = vmatprep.subr.mxu0 %v3011
    %4053 = vmatpush1.msra.mxu0 %v3010
    %4054 = vmatprep.subr.mxu0 %v3019
    %4055 = vmatpush1.msra.mxu0 %v3018
    %4056 = vmatprep.subr.mxu0 %v3027
    %4057 = vmatpush1.msra.mxu0 %v3026
    %4058 = vmatprep.subr.mxu0 %v3035
    %4059 = vmatpush1.msra.mxu0 %v3034
    %4060 = vmatprep.subr.mxu0 %v3043
    %4061 = vmatpush1.msra.mxu0 %v3042
    %4062 = vmatprep.subr.mxu0 %v3051
    %4063 = vmatpush1.msra.mxu0 %v3050
    %4064 = vmatprep.subr.mxu0 %v3059
    %4065 = vmatpush1.msra.mxu0 %v3058
    %4066 = vmatprep.subr.mxu0 %v3067
    %4067 = vmatpush1.msra.mxu0 %v3066
    %4068 = vmatprep.subr.mxu0 %v3075
    %4069 = vmatpush1.msra.mxu0 %v3074
    %4070 = vmatprep.subr.mxu0 %v3083
    %4071 = vmatpush1.msra.mxu0 %v3082
    %4072 = vmatprep.subr.mxu0 %v3091
    %4073 = vmatpush1.msra.mxu0 %v3090
    %4074 = vmatprep.subr.mxu0 %v3099
    %4075 = vmatpush1.msra.mxu0 %v3098
    %4076 = vmatprep.subr.mxu0 %v3107
    %4077 = vmatpush1.msra.mxu0 %v3106
    %4078 = vmatprep.subr.mxu0 %v3115
    %4079 = vmatpush1.msra.mxu0 %v3114
    %4080 = vmatprep.subr.mxu0 %v3123
    %4081 = vmatpush1.msra.mxu0 %v3122
    %4082 = vmatprep.subr.mxu0 %v3131
    %4083 = vmatpush1.msra.mxu0 %v3130
    %4084 = vmatprep.subr.mxu0 %v3139
    %4085 = vmatpush1.msra.mxu0 %v3138
    %4086 = vmatprep.subr.mxu0 %v3147
    %4087 = vmatpush1.msra.mxu0 %v3146
    %4088 = vmatprep.subr.mxu0 %v3155
    %4089 = vmatpush1.msra.mxu0 %v3154
    %4090 = vmatprep.subr.mxu0 %v3163
    %4091 = vmatpush1.msra.mxu0 %v3162
    %4092 = vmatprep.subr.mxu0 %v3171
    %4093 = vmatpush1.msra.mxu0 %v3170
    %4094 = vmatprep.subr.mxu0 %v3179
    %4095 = vmatpush1.msra.mxu0 %v3178
    %4096 = vmatprep.subr.mxu0 %v3187
    %4097 = vmatpush1.msra.mxu0 %v3186
    %4098 = vmatprep.subr.mxu0 %v3195
    %4099 = vmatpush1.msra.mxu0 %v3194
    %4100 = vmatprep.subr.mxu0 %v3203
    %4101 = vmatpush1.msra.mxu0 %v3202
    %4102 = vmatprep.subr.mxu0 %v3211
    %4103 = vmatpush1.msra.mxu0 %v3210
    %4104 = vmatprep.subr.mxu0 %v3219
    %4105 = vmatpush1.msra.mxu0 %v3218
    %4106 = vmatprep.subr.mxu0 %v3227
    %4107 = vmatpush1.msra.mxu0 %v3226
    %4108 = vmatprep.mubr.f32.mxu0 %v2971
    %4109 = vmatmul.mubr.f32.gmra.mrb[0].mxu0 %v2970
    %v4110 = vpop.f32.mrb[0].mxu0
    %v4111 = vadd.f32 %v4007, %v4110
    %v4112 = vpop.f32.mrb[0].mxu0
    %v4113 = vadd.f32 %v4011, %v4112
    %4114 = vdwg.mxu0
    %4115 = vmatprep.subr.mxu0 %v3235
    %4116 = vmatpush1.msra.mxu0 %v3234
    %4117 = vmatprep.subr.mxu0 %v3243
    %4118 = vmatpush1.msra.mxu0 %v3242
    %4119 = vmatprep.subr.mxu0 %v3251
    %4120 = vmatpush1.msra.mxu0 %v3250
    %4121 = vmatprep.subr.mxu0 %v3259
    %4122 = vmatpush1.msra.mxu0 %v3258
    %4123 = vmatprep.subr.mxu0 %v3267
    %4124 = vmatpush1.msra.mxu0 %v3266
    %4125 = vmatprep.subr.mxu0 %v3275
    %4126 = vmatpush1.msra.mxu0 %v3274
    %4127 = vmatprep.subr.mxu0 %v3283
    %4128 = vmatpush1.msra.mxu0 %v3282
    %4129 = vmatprep.subr.mxu0 %v3291
    %4130 = vmatpush1.msra.mxu0 %v3290
    %4131 = vmatprep.subr.mxu0 %v3299
    %4132 = vmatpush1.msra.mxu0 %v3298
    %4133 = vmatprep.subr.mxu0 %v3307
    %4134 = vmatpush1.msra.mxu0 %v3306
    %4135 = vmatprep.subr.mxu0 %v3315
    %4136 = vmatpush1.msra.mxu0 %v3314
    %4137 = vmatprep.subr.mxu0 %v3323
    %4138 = vmatpush1.msra.mxu0 %v3322
    %4139 = vmatprep.subr.mxu0 %v3331
    %4140 = vmatpush1.msra.mxu0 %v3330
    %4141 = vmatprep.subr.mxu0 %v3339
    %4142 = vmatpush1.msra.mxu0 %v3338
    %4143 = vmatprep.subr.mxu0 %v3347
    %4144 = vmatpush1.msra.mxu0 %v3346
    %4145 = vmatprep.subr.mxu0 %v3355
    %4146 = vmatpush1.msra.mxu0 %v3354
    %4147 = vmatprep.subr.mxu0 %v3363
    %4148 = vmatpush1.msra.mxu0 %v3362
    %4149 = vmatprep.subr.mxu0 %v3371
    %4150 = vmatpush1.msra.mxu0 %v3370
    %4151 = vmatprep.subr.mxu0 %v3379
    %4152 = vmatpush1.msra.mxu0 %v3378
    %4153 = vmatprep.subr.mxu0 %v3387
    %4154 = vmatpush1.msra.mxu0 %v3386
    %4155 = vmatprep.subr.mxu0 %v3395
    %4156 = vmatpush1.msra.mxu0 %v3394
    %4157 = vmatprep.subr.mxu0 %v3403
    %4158 = vmatpush1.msra.mxu0 %v3402
    %4159 = vmatprep.subr.mxu0 %v3411
    %4160 = vmatpush1.msra.mxu0 %v3410
    %4161 = vmatprep.subr.mxu0 %v3419
    %4162 = vmatpush1.msra.mxu0 %v3418
    %4163 = vmatprep.subr.mxu0 %v3427
    %4164 = vmatpush1.msra.mxu0 %v3426
    %4165 = vmatprep.subr.mxu0 %v3435
    %4166 = vmatpush1.msra.mxu0 %v3434
    %4167 = vmatprep.subr.mxu0 %v3443
    %4168 = vmatpush1.msra.mxu0 %v3442
    %4169 = vmatprep.subr.mxu0 %v3451
    %4170 = vmatpush1.msra.mxu0 %v3450
    %4171 = vmatprep.subr.mxu0 %v3459
    %4172 = vmatpush1.msra.mxu0 %v3458
    %4173 = vmatprep.subr.mxu0 %v3467
    %4174 = vmatpush1.msra.mxu0 %v3466
    %4175 = vmatprep.subr.mxu0 %v3475
    %4176 = vmatpush1.msra.mxu0 %v3474
    %4177 = vmatprep.subr.mxu0 %v3483
    %4178 = vmatpush1.msra.mxu0 %v3482
    %4179 = vmatprep.mubr.f32.mxu0 %v2973
    %4180 = vmatmul.mubr.f32.gmra.mrb[0].mxu0 %v2972
    %v4181 = vpop.f32.mrb[0].mxu0
    %v4182 = vadd.f32 %v4111, %v4181
    %v4183 = vpop.f32.mrb[0].mxu0
    %v4184 = vadd.f32 %v4113, %v4183
    %4185 = vdwg.mxu0
    %4186 = vmatprep.subr.mxu0 %v3491
    %4187 = vmatpush1.msra.mxu0 %v3490
    %4188 = vmatprep.subr.mxu0 %v3499
    %4189 = vmatpush1.msra.mxu0 %v3498
    %4190 = vmatprep.subr.mxu0 %v3507
    %4191 = vmatpush1.msra.mxu0 %v3506
    %4192 = vmatprep.subr.mxu0 %v3515
    %4193 = vmatpush1.msra.mxu0 %v3514
    %4194 = vmatprep.subr.mxu0 %v3523
    %4195 = vmatpush1.msra.mxu0 %v3522
    %4196 = vmatprep.subr.mxu0 %v3531
    %4197 = vmatpush1.msra.mxu0 %v3530
    %4198 = vmatprep.subr.mxu0 %v3539
    %4199 = vmatpush1.msra.mxu0 %v3538
    %4200 = vmatprep.subr.mxu0 %v3547
    %4201 = vmatpush1.msra.mxu0 %v3546
    %4202 = vmatprep.subr.mxu0 %v3555
    %4203 = vmatpush1.msra.mxu0 %v3554
    %4204 = vmatprep.subr.mxu0 %v3563
    %4205 = vmatpush1.msra.mxu0 %v3562
    %4206 = vmatprep.subr.mxu0 %v3571
    %4207 = vmatpush1.msra.mxu0 %v3570
    %4208 = vmatprep.subr.mxu0 %v3579
    %4209 = vmatpush1.msra.mxu0 %v3578
    %4210 = vmatprep.subr.mxu0 %v3587
    %4211 = vmatpush1.msra.mxu0 %v3586
    %4212 = vmatprep.subr.mxu0 %v3595
    %4213 = vmatpush1.msra.mxu0 %v3594
    %4214 = vmatprep.subr.mxu0 %v3603
    %4215 = vmatpush1.msra.mxu0 %v3602
    %4216 = vmatprep.subr.mxu0 %v3611
    %4217 = vmatpush1.msra.mxu0 %v3610
    %4218 = vmatprep.subr.mxu0 %v3619
    %4219 = vmatpush1.msra.mxu0 %v3618
    %4220 = vmatprep.subr.mxu0 %v3627
    %4221 = vmatpush1.msra.mxu0 %v3626
    %4222 = vmatprep.subr.mxu0 %v3635
    %4223 = vmatpush1.msra.mxu0 %v3634
    %4224 = vmatprep.subr.mxu0 %v3643
    %4225 = vmatpush1.msra.mxu0 %v3642
    %4226 = vmatprep.subr.mxu0 %v3651
    %4227 = vmatpush1.msra.mxu0 %v3650
    %4228 = vmatprep.subr.mxu0 %v3659
    %4229 = vmatpush1.msra.mxu0 %v3658
    %4230 = vmatprep.subr.mxu0 %v3667
    %4231 = vmatpush1.msra.mxu0 %v3666
    %4232 = vmatprep.subr.mxu0 %v3675
    %4233 = vmatpush1.msra.mxu0 %v3674
    %4234 = vmatprep.subr.mxu0 %v3683
    %4235 = vmatpush1.msra.mxu0 %v3682
    %4236 = vmatprep.subr.mxu0 %v3691
    %4237 = vmatpush1.msra.mxu0 %v3690
    %4238 = vmatprep.subr.mxu0 %v3699
    %4239 = vmatpush1.msra.mxu0 %v3698
    %4240 = vmatprep.subr.mxu0 %v3707
    %4241 = vmatpush1.msra.mxu0 %v3706
    %4242 = vmatprep.subr.mxu0 %v3715
    %4243 = vmatpush1.msra.mxu0 %v3714
    %4244 = vmatprep.subr.mxu0 %v3723
    %4245 = vmatpush1.msra.mxu0 %v3722
    %4246 = vmatprep.subr.mxu0 %v3731
    %4247 = vmatpush1.msra.mxu0 %v3730
    %4248 = vmatprep.subr.mxu0 %v3739
    %4249 = vmatpush1.msra.mxu0 %v3738
    %4250 = vmatprep.mubr.f32.mxu0 %v2975
    %4251 = vmatmul.mubr.f32.gmra.mrb[0].mxu0 %v2974
    %v4252 = vpop.f32.mrb[0].mxu0
    %v4253 = vadd.f32 %v4182, %v4252
    %v4254 = vpop.f32.mrb[0].mxu0
    %v4255 = vadd.f32 %v4184, %v4254
    %4256 = vdwg.mxu0
    %4257 = vmatprep.subr.mxu0 %v3747
    %4258 = vmatpush1.msra.mxu0 %v3746
    %4259 = vmatprep.subr.mxu0 %v3755
    %4260 = vmatpush1.msra.mxu0 %v3754
    %4261 = vmatprep.subr.mxu0 %v3763
    %4262 = vmatpush1.msra.mxu0 %v3762
    %4263 = vmatprep.subr.mxu0 %v3771
    %4264 = vmatpush1.msra.mxu0 %v3770
    %4265 = vmatprep.subr.mxu0 %v3779
    %4266 = vmatpush1.msra.mxu0 %v3778
    %4267 = vmatprep.subr.mxu0 %v3787
    %4268 = vmatpush1.msra.mxu0 %v3786
    %4269 = vmatprep.subr.mxu0 %v3795
    %4270 = vmatpush1.msra.mxu0 %v3794
    %4271 = vmatprep.subr.mxu0 %v3803
    %4272 = vmatpush1.msra.mxu0 %v3802
    %4273 = vmatprep.subr.mxu0 %v3811
    %4274 = vmatpush1.msra.mxu0 %v3810
    %4275 = vmatprep.subr.mxu0 %v3819
    %4276 = vmatpush1.msra.mxu0 %v3818
    %4277 = vmatprep.subr.mxu0 %v3827
    %4278 = vmatpush1.msra.mxu0 %v3826
    %4279 = vmatprep.subr.mxu0 %v3835
    %4280 = vmatpush1.msra.mxu0 %v3834
    %4281 = vmatprep.subr.mxu0 %v3843
    %4282 = vmatpush1.msra.mxu0 %v3842
    %4283 = vmatprep.subr.mxu0 %v3851
    %4284 = vmatpush1.msra.mxu0 %v3850
    %4285 = vmatprep.subr.mxu0 %v3859
    %4286 = vmatpush1.msra.mxu0 %v3858
    %4287 = vmatprep.subr.mxu0 %v3867
    %4288 = vmatpush1.msra.mxu0 %v3866
    %4289 = vmatprep.subr.mxu0 %v3875
    %4290 = vmatpush1.msra.mxu0 %v3874
    %4291 = vmatprep.subr.mxu0 %v3883
    %4292 = vmatpush1.msra.mxu0 %v3882
    %4293 = vmatprep.subr.mxu0 %v3891
    %4294 = vmatpush1.msra.mxu0 %v3890
    %4295 = vmatprep.subr.mxu0 %v3899
    %4296 = vmatpush1.msra.mxu0 %v3898
    %4297 = vmatprep.subr.mxu0 %v3907
    %4298 = vmatpush1.msra.mxu0 %v3906
    %4299 = vmatprep.subr.mxu0 %v3915
    %4300 = vmatpush1.msra.mxu0 %v3914
    %4301 = vmatprep.subr.mxu0 %v3923
    %4302 = vmatpush1.msra.mxu0 %v3922
    %4303 = vmatprep.subr.mxu0 %v3931
    %4304 = vmatpush1.msra.mxu0 %v3930
    %4305 = vmatprep.subr.mxu0 %v3939
    %4306 = vmatpush1.msra.mxu0 %v3938
    %4307 = vmatprep.subr.mxu0 %v3947
    %4308 = vmatpush1.msra.mxu0 %v3946
    %4309 = vmatprep.subr.mxu0 %v3955
    %4310 = vmatpush1.msra.mxu0 %v3954
    %4311 = vmatprep.subr.mxu0 %v3963
    %4312 = vmatpush1.msra.mxu0 %v3962
    %4313 = vmatprep.subr.mxu0 %v3971
    %4314 = vmatpush1.msra.mxu0 %v3970
    %4315 = vmatprep.subr.mxu0 %v3979
    %4316 = vmatpush1.msra.mxu0 %v3978
    %4317 = vmatprep.subr.mxu0 %v3987
    %4318 = vmatpush1.msra.mxu0 %v3986
    %4319 = vmatprep.subr.mxu0 %v3995
    %4320 = vmatpush1.msra.mxu0 %v3994
    %4321 = vmatprep.mubr.f32.mxu0 %v2977
    %4322 = vmatmul.mubr.f32.gmra.mrb[0].mxu0 %v2976
    %v4323 = vpop.f32.mrb[0].mxu0
    %v4324 = vadd.f32 %v4253, %v4323
    %v4325 = vpop.f32.mrb[0].mxu0
    %v4326 = vadd.f32 %v4255, %v4325
    %4327 = vdwg.mxu0
    %4328 = vmatprep.subr.mxu0 %v2981
    %4329 = vmatpush1.msra.mxu0 %v2980
    %4330 = vmatprep.subr.mxu0 %v2989
    %4331 = vmatpush1.msra.mxu0 %v2988
    %4332 = vmatprep.subr.mxu0 %v2997
    %4333 = vmatpush1.msra.mxu0 %v2996
    %4334 = vmatprep.subr.mxu0 %v3005
    %4335 = vmatpush1.msra.mxu0 %v3004
    %4336 = vmatprep.subr.mxu0 %v3013
    %4337 = vmatpush1.msra.mxu0 %v3012
    %4338 = vmatprep.subr.mxu0 %v3021
    %4339 = vmatpush1.msra.mxu0 %v3020
    %4340 = vmatprep.subr.mxu0 %v3029
    %4341 = vmatpush1.msra.mxu0 %v3028
    %4342 = vmatprep.subr.mxu0 %v3037
    %4343 = vmatpush1.msra.mxu0 %v3036
    %4344 = vmatprep.subr.mxu0 %v3045
    %4345 = vmatpush1.msra.mxu0 %v3044
    %4346 = vmatprep.subr.mxu0 %v3053
    %4347 = vmatpush1.msra.mxu0 %v3052
    %4348 = vmatprep.subr.mxu0 %v3061
    %4349 = vmatpush1.msra.mxu0 %v3060
    %4350 = vmatprep.subr.mxu0 %v3069
    %4351 = vmatpush1.msra.mxu0 %v3068
    %4352 = vmatprep.subr.mxu0 %v3077
    %4353 = vmatpush1.msra.mxu0 %v3076
    %4354 = vmatprep.subr.mxu0 %v3085
    %4355 = vmatpush1.msra.mxu0 %v3084
    %4356 = vmatprep.subr.mxu0 %v3093
    %4357 = vmatpush1.msra.mxu0 %v3092
    %4358 = vmatprep.subr.mxu0 %v3101
    %4359 = vmatpush1.msra.mxu0 %v3100
    %4360 = vmatprep.subr.mxu0 %v3109
    %4361 = vmatpush1.msra.mxu0 %v3108
    %4362 = vmatprep.subr.mxu0 %v3117
    %4363 = vmatpush1.msra.mxu0 %v3116
    %4364 = vmatprep.subr.mxu0 %v3125
    %4365 = vmatpush1.msra.mxu0 %v3124
    %4366 = vmatprep.subr.mxu0 %v3133
    %4367 = vmatpush1.msra.mxu0 %v3132
    %4368 = vmatprep.subr.mxu0 %v3141
    %4369 = vmatpush1.msra.mxu0 %v3140
    %4370 = vmatprep.subr.mxu0 %v3149
    %4371 = vmatpush1.msra.mxu0 %v3148
    %4372 = vmatprep.subr.mxu0 %v3157
    %4373 = vmatpush1.msra.mxu0 %v3156
    %4374 = vmatprep.subr.mxu0 %v3165
    %4375 = vmatpush1.msra.mxu0 %v3164
    %4376 = vmatprep.subr.mxu0 %v3173
    %4377 = vmatpush1.msra.mxu0 %v3172
    %4378 = vmatprep.subr.mxu0 %v3181
    %4379 = vmatpush1.msra.mxu0 %v3180
    %4380 = vmatprep.subr.mxu0 %v3189
    %4381 = vmatpush1.msra.mxu0 %v3188
    %4382 = vmatprep.subr.mxu0 %v3197
    %4383 = vmatpush1.msra.mxu0 %v3196
    %4384 = vmatprep.subr.mxu0 %v3205
    %4385 = vmatpush1.msra.mxu0 %v3204
    %4386 = vmatprep.subr.mxu0 %v3213
    %4387 = vmatpush1.msra.mxu0 %v3212
    %4388 = vmatprep.subr.mxu0 %v3221
    %4389 = vmatpush1.msra.mxu0 %v3220
    %4390 = vmatprep.subr.mxu0 %v3229
    %4391 = vmatpush1.msra.mxu0 %v3228
    %4392 = vmatprep.mubr.f32.mxu0 %v2971
    %4393 = vmatmul.mubr.f32.gmra.mrb[0].mxu0 %v2970
    %v4394 = vpop.f32.mrb[0].mxu0
    %v4395 = vadd.f32 %v4015, %v4394
    %v4396 = vpop.f32.mrb[0].mxu0
    %v4397 = vadd.f32 %v4019, %v4396
    %4398 = vdwg.mxu0
    %4399 = vmatprep.subr.mxu0 %v3237
    %4400 = vmatpush1.msra.mxu0 %v3236
    %4401 = vmatprep.subr.mxu0 %v3245
    %4402 = vmatpush1.msra.mxu0 %v3244
    %4403 = vmatprep.subr.mxu0 %v3253
    %4404 = vmatpush1.msra.mxu0 %v3252
    %4405 = vmatprep.subr.mxu0 %v3261
    %4406 = vmatpush1.msra.mxu0 %v3260
    %4407 = vmatprep.subr.mxu0 %v3269
    %4408 = vmatpush1.msra.mxu0 %v3268
    %4409 = vmatprep.subr.mxu0 %v3277
    %4410 = vmatpush1.msra.mxu0 %v3276
    %4411 = vmatprep.subr.mxu0 %v3285
    %4412 = vmatpush1.msra.mxu0 %v3284
    %4413 = vmatprep.subr.mxu0 %v3293
    %4414 = vmatpush1.msra.mxu0 %v3292
    %4415 = vmatprep.subr.mxu0 %v3301
    %4416 = vmatpush1.msra.mxu0 %v3300
    %4417 = vmatprep.subr.mxu0 %v3309
    %4418 = vmatpush1.msra.mxu0 %v3308
    %4419 = vmatprep.subr.mxu0 %v3317
    %4420 = vmatpush1.msra.mxu0 %v3316
    %4421 = vmatprep.subr.mxu0 %v3325
    %4422 = vmatpush1.msra.mxu0 %v3324
    %4423 = vmatprep.subr.mxu0 %v3333
    %4424 = vmatpush1.msra.mxu0 %v3332
    %4425 = vmatprep.subr.mxu0 %v3341
    %4426 = vmatpush1.msra.mxu0 %v3340
    %4427 = vmatprep.subr.mxu0 %v3349
    %4428 = vmatpush1.msra.mxu0 %v3348
    %4429 = vmatprep.subr.mxu0 %v3357
    %4430 = vmatpush1.msra.mxu0 %v3356
    %4431 = vmatprep.subr.mxu0 %v3365
    %4432 = vmatpush1.msra.mxu0 %v3364
    %4433 = vmatprep.subr.mxu0 %v3373
    %4434 = vmatpush1.msra.mxu0 %v3372
    %4435 = vmatprep.subr.mxu0 %v3381
    %4436 = vmatpush1.msra.mxu0 %v3380
    %4437 = vmatprep.subr.mxu0 %v3389
    %4438 = vmatpush1.msra.mxu0 %v3388
    %4439 = vmatprep.subr.mxu0 %v3397
    %4440 = vmatpush1.msra.mxu0 %v3396
    %4441 = vmatprep.subr.mxu0 %v3405
    %4442 = vmatpush1.msra.mxu0 %v3404
    %4443 = vmatprep.subr.mxu0 %v3413
    %4444 = vmatpush1.msra.mxu0 %v3412
    %4445 = vmatprep.subr.mxu0 %v3421
    %4446 = vmatpush1.msra.mxu0 %v3420
    %4447 = vmatprep.subr.mxu0 %v3429
    %4448 = vmatpush1.msra.mxu0 %v3428
    %4449 = vmatprep.subr.mxu0 %v3437
    %4450 = vmatpush1.msra.mxu0 %v3436
    %4451 = vmatprep.subr.mxu0 %v3445
    %4452 = vmatpush1.msra.mxu0 %v3444
    %4453 = vmatprep.subr.mxu0 %v3453
    %4454 = vmatpush1.msra.mxu0 %v3452
    %4455 = vmatprep.subr.mxu0 %v3461
    %4456 = vmatpush1.msra.mxu0 %v3460
    %4457 = vmatprep.subr.mxu0 %v3469
    %4458 = vmatpush1.msra.mxu0 %v3468
    %4459 = vmatprep.subr.mxu0 %v3477
    %4460 = vmatpush1.msra.mxu0 %v3476
    %4461 = vmatprep.subr.mxu0 %v3485
    %4462 = vmatpush1.msra.mxu0 %v3484
    %4463 = vmatprep.mubr.f32.mxu0 %v2973
    %4464 = vmatmul.mubr.f32.gmra.mrb[0].mxu0 %v2972
    %v4465 = vpop.f32.mrb[0].mxu0
    %v4466 = vadd.f32 %v4395, %v4465
    %v4467 = vpop.f32.mrb[0].mxu0
    %v4468 = vadd.f32 %v4397, %v4467
    %4469 = vdwg.mxu0
    %4470 = vmatprep.subr.mxu0 %v3493
    %4471 = vmatpush1.msra.mxu0 %v3492
    %4472 = vmatprep.subr.mxu0 %v3501
    %4473 = vmatpush1.msra.mxu0 %v3500
    %4474 = vmatprep.subr.mxu0 %v3509
    %4475 = vmatpush1.msra.mxu0 %v3508
    %4476 = vmatprep.subr.mxu0 %v3517
    %4477 = vmatpush1.msra.mxu0 %v3516
    %4478 = vmatprep.subr.mxu0 %v3525
    %4479 = vmatpush1.msra.mxu0 %v3524
    %4480 = vmatprep.subr.mxu0 %v3533
    %4481 = vmatpush1.msra.mxu0 %v3532
    %4482 = vmatprep.subr.mxu0 %v3541
    %4483 = vmatpush1.msra.mxu0 %v3540
    %4484 = vmatprep.subr.mxu0 %v3549
    %4485 = vmatpush1.msra.mxu0 %v3548
    %4486 = vmatprep.subr.mxu0 %v3557
    %4487 = vmatpush1.msra.mxu0 %v3556
    %4488 = vmatprep.subr.mxu0 %v3565
    %4489 = vmatpush1.msra.mxu0 %v3564
    %4490 = vmatprep.subr.mxu0 %v3573
    %4491 = vmatpush1.msra.mxu0 %v3572
    %4492 = vmatprep.subr.mxu0 %v3581
    %4493 = vmatpush1.msra.mxu0 %v3580
    %4494 = vmatprep.subr.mxu0 %v3589
    %4495 = vmatpush1.msra.mxu0 %v3588
    %4496 = vmatprep.subr.mxu0 %v3597
    %4497 = vmatpush1.msra.mxu0 %v3596
    %4498 = vmatprep.subr.mxu0 %v3605
    %4499 = vmatpush1.msra.mxu0 %v3604
    %4500 = vmatprep.subr.mxu0 %v3613
    %4501 = vmatpush1.msra.mxu0 %v3612
    %4502 = vmatprep.subr.mxu0 %v3621
    %4503 = vmatpush1.msra.mxu0 %v3620
    %4504 = vmatprep.subr.mxu0 %v3629
    %4505 = vmatpush1.msra.mxu0 %v3628
    %4506 = vmatprep.subr.mxu0 %v3637
    %4507 = vmatpush1.msra.mxu0 %v3636
    %4508 = vmatprep.subr.mxu0 %v3645
    %4509 = vmatpush1.msra.mxu0 %v3644
    %4510 = vmatprep.subr.mxu0 %v3653
    %4511 = vmatpush1.msra.mxu0 %v3652
    %4512 = vmatprep.subr.mxu0 %v3661
    %4513 = vmatpush1.msra.mxu0 %v3660
    %4514 = vmatprep.subr.mxu0 %v3669
    %4515 = vmatpush1.msra.mxu0 %v3668
    %4516 = vmatprep.subr.mxu0 %v3677
    %4517 = vmatpush1.msra.mxu0 %v3676
    %4518 = vmatprep.subr.mxu0 %v3685
    %4519 = vmatpush1.msra.mxu0 %v3684
    %4520 = vmatprep.subr.mxu0 %v3693
    %4521 = vmatpush1.msra.mxu0 %v3692
    %4522 = vmatprep.subr.mxu0 %v3701
    %4523 = vmatpush1.msra.mxu0 %v3700
    %4524 = vmatprep.subr.mxu0 %v3709
    %4525 = vmatpush1.msra.mxu0 %v3708
    %4526 = vmatprep.subr.mxu0 %v3717
    %4527 = vmatpush1.msra.mxu0 %v3716
    %4528 = vmatprep.subr.mxu0 %v3725
    %4529 = vmatpush1.msra.mxu0 %v3724
    %4530 = vmatprep.subr.mxu0 %v3733
    %4531 = vmatpush1.msra.mxu0 %v3732
    %4532 = vmatprep.subr.mxu0 %v3741
    %4533 = vmatpush1.msra.mxu0 %v3740
    %4534 = vmatprep.mubr.f32.mxu0 %v2975
    %4535 = vmatmul.mubr.f32.gmra.mrb[0].mxu0 %v2974
    %v4536 = vpop.f32.mrb[0].mxu0
    %v4537 = vadd.f32 %v4466, %v4536
    %v4538 = vpop.f32.mrb[0].mxu0
    %v4539 = vadd.f32 %v4468, %v4538
    %4540 = vdwg.mxu0
    %4541 = vmatprep.subr.mxu0 %v3749
    %4542 = vmatpush1.msra.mxu0 %v3748
    %4543 = vmatprep.subr.mxu0 %v3757
    %4544 = vmatpush1.msra.mxu0 %v3756
    %4545 = vmatprep.subr.mxu0 %v3765
    %4546 = vmatpush1.msra.mxu0 %v3764
    %4547 = vmatprep.subr.mxu0 %v3773
    %4548 = vmatpush1.msra.mxu0 %v3772
    %4549 = vmatprep.subr.mxu0 %v3781
    %4550 = vmatpush1.msra.mxu0 %v3780
    %4551 = vmatprep.subr.mxu0 %v3789
    %4552 = vmatpush1.msra.mxu0 %v3788
    %4553 = vmatprep.subr.mxu0 %v3797
    %4554 = vmatpush1.msra.mxu0 %v3796
    %4555 = vmatprep.subr.mxu0 %v3805
    %4556 = vmatpush1.msra.mxu0 %v3804
    %4557 = vmatprep.subr.mxu0 %v3813
    %4558 = vmatpush1.msra.mxu0 %v3812
    %4559 = vmatprep.subr.mxu0 %v3821
    %4560 = vmatpush1.msra.mxu0 %v3820
    %4561 = vmatprep.subr.mxu0 %v3829
    %4562 = vmatpush1.msra.mxu0 %v3828
    %4563 = vmatprep.subr.mxu0 %v3837
    %4564 = vmatpush1.msra.mxu0 %v3836
    %4565 = vmatprep.subr.mxu0 %v3845
    %4566 = vmatpush1.msra.mxu0 %v3844
    %4567 = vmatprep.subr.mxu0 %v3853
    %4568 = vmatpush1.msra.mxu0 %v3852
    %4569 = vmatprep.subr.mxu0 %v3861
    %4570 = vmatpush1.msra.mxu0 %v3860
    %4571 = vmatprep.subr.mxu0 %v3869
    %4572 = vmatpush1.msra.mxu0 %v3868
    %4573 = vmatprep.subr.mxu0 %v3877
    %4574 = vmatpush1.msra.mxu0 %v3876
    %4575 = vmatprep.subr.mxu0 %v3885
    %4576 = vmatpush1.msra.mxu0 %v3884
    %4577 = vmatprep.subr.mxu0 %v3893
    %4578 = vmatpush1.msra.mxu0 %v3892
    %4579 = vmatprep.subr.mxu0 %v3901
    %4580 = vmatpush1.msra.mxu0 %v3900
    %4581 = vmatprep.subr.mxu0 %v3909
    %4582 = vmatpush1.msra.mxu0 %v3908
    %4583 = vmatprep.subr.mxu0 %v3917
    %4584 = vmatpush1.msra.mxu0 %v3916
    %4585 = vmatprep.subr.mxu0 %v3925
    %4586 = vmatpush1.msra.mxu0 %v3924
    %4587 = vmatprep.subr.mxu0 %v3933
    %4588 = vmatpush1.msra.mxu0 %v3932
    %4589 = vmatprep.subr.mxu0 %v3941
    %4590 = vmatpush1.msra.mxu0 %v3940
    %4591 = vmatprep.subr.mxu0 %v3949
    %4592 = vmatpush1.msra.mxu0 %v3948
    %4593 = vmatprep.subr.mxu0 %v3957
    %4594 = vmatpush1.msra.mxu0 %v3956
    %4595 = vmatprep.subr.mxu0 %v3965
    %4596 = vmatpush1.msra.mxu0 %v3964
    %4597 = vmatprep.subr.mxu0 %v3973
    %4598 = vmatpush1.msra.mxu0 %v3972
    %4599 = vmatprep.subr.mxu0 %v3981
    %4600 = vmatpush1.msra.mxu0 %v3980
    %4601 = vmatprep.subr.mxu0 %v3989
    %4602 = vmatpush1.msra.mxu0 %v3988
    %4603 = vmatprep.subr.mxu0 %v3997
    %4604 = vmatpush1.msra.mxu0 %v3996
    %4605 = vmatprep.mubr.f32.mxu0 %v2977
    %4606 = vmatmul.mubr.f32.gmra.mrb[0].mxu0 %v2976
    %v4607 = vpop.f32.mrb[0].mxu0
    %v4608 = vadd.f32 %v4537, %v4607
    %v4609 = vpop.f32.mrb[0].mxu0
    %v4610 = vadd.f32 %v4539, %v4609
    %4611 = vdwg.mxu0
    %4612 = vmatprep.subr.mxu0 %v2983
    %4613 = vmatpush1.msra.mxu0 %v2982
    %4614 = vmatprep.subr.mxu0 %v2991
    %4615 = vmatpush1.msra.mxu0 %v2990
    %4616 = vmatprep.subr.mxu0 %v2999
    %4617 = vmatpush1.msra.mxu0 %v2998
    %4618 = vmatprep.subr.mxu0 %v3007
    %4619 = vmatpush1.msra.mxu0 %v3006
    %4620 = vmatprep.subr.mxu0 %v3015
    %4621 = vmatpush1.msra.mxu0 %v3014
    %4622 = vmatprep.subr.mxu0 %v3023
    %4623 = vmatpush1.msra.mxu0 %v3022
    %4624 = vmatprep.subr.mxu0 %v3031
    %4625 = vmatpush1.msra.mxu0 %v3030
    %4626 = vmatprep.subr.mxu0 %v3039
    %4627 = vmatpush1.msra.mxu0 %v3038
    %4628 = vmatprep.subr.mxu0 %v3047
    %4629 = vmatpush1.msra.mxu0 %v3046
    %4630 = vmatprep.subr.mxu0 %v3055
    %4631 = vmatpush1.msra.mxu0 %v3054
    %4632 = vmatprep.subr.mxu0 %v3063
    %4633 = vmatpush1.msra.mxu0 %v3062
    %4634 = vmatprep.subr.mxu0 %v3071
    %4635 = vmatpush1.msra.mxu0 %v3070
    %4636 = vmatprep.subr.mxu0 %v3079
    %4637 = vmatpush1.msra.mxu0 %v3078
    %4638 = vmatprep.subr.mxu0 %v3087
    %4639 = vmatpush1.msra.mxu0 %v3086
    %4640 = vmatprep.subr.mxu0 %v3095
    %4641 = vmatpush1.msra.mxu0 %v3094
    %4642 = vmatprep.subr.mxu0 %v3103
    %4643 = vmatpush1.msra.mxu0 %v3102
    %4644 = vmatprep.subr.mxu0 %v3111
    %4645 = vmatpush1.msra.mxu0 %v3110
    %4646 = vmatprep.subr.mxu0 %v3119
    %4647 = vmatpush1.msra.mxu0 %v3118
    %4648 = vmatprep.subr.mxu0 %v3127
    %4649 = vmatpush1.msra.mxu0 %v3126
    %4650 = vmatprep.subr.mxu0 %v3135
    %4651 = vmatpush1.msra.mxu0 %v3134
    %4652 = vmatprep.subr.mxu0 %v3143
    %4653 = vmatpush1.msra.mxu0 %v3142
    %4654 = vmatprep.subr.mxu0 %v3151
    %4655 = vmatpush1.msra.mxu0 %v3150
    %4656 = vmatprep.subr.mxu0 %v3159
    %4657 = vmatpush1.msra.mxu0 %v3158
    %4658 = vmatprep.subr.mxu0 %v3167
    %4659 = vmatpush1.msra.mxu0 %v3166
    %4660 = vmatprep.subr.mxu0 %v3175
    %4661 = vmatpush1.msra.mxu0 %v3174
    %4662 = vmatprep.subr.mxu0 %v3183
    %4663 = vmatpush1.msra.mxu0 %v3182
    %4664 = vmatprep.subr.mxu0 %v3191
    %4665 = vmatpush1.msra.mxu0 %v3190
    %4666 = vmatprep.subr.mxu0 %v3199
    %4667 = vmatpush1.msra.mxu0 %v3198
    %4668 = vmatprep.subr.mxu0 %v3207
    %4669 = vmatpush1.msra.mxu0 %v3206
    %4670 = vmatprep.subr.mxu0 %v3215
    %4671 = vmatpush1.msra.mxu0 %v3214
    %4672 = vmatprep.subr.mxu0 %v3223
    %4673 = vmatpush1.msra.mxu0 %v3222
    %4674 = vmatprep.subr.mxu0 %v3231
    %4675 = vmatpush1.msra.mxu0 %v3230
    %4676 = vmatprep.mubr.f32.mxu0 %v2971
    %4677 = vmatmul.mubr.f32.gmra.mrb[0].mxu0 %v2970
    %v4678 = vpop.f32.mrb[0].mxu0
    %v4679 = vadd.f32 %v4023, %v4678
    %v4680 = vpop.f32.mrb[0].mxu0
    %v4681 = vadd.f32 %v4027, %v4680
    %4682 = vdwg.mxu0
    %4683 = vmatprep.subr.mxu0 %v3239
    %4684 = vmatpush1.msra.mxu0 %v3238
    %4685 = vmatprep.subr.mxu0 %v3247
    %4686 = vmatpush1.msra.mxu0 %v3246
    %4687 = vmatprep.subr.mxu0 %v3255
    %4688 = vmatpush1.msra.mxu0 %v3254
    %4689 = vmatprep.subr.mxu0 %v3263
    %4690 = vmatpush1.msra.mxu0 %v3262
    %4691 = vmatprep.subr.mxu0 %v3271
    %4692 = vmatpush1.msra.mxu0 %v3270
    %4693 = vmatprep.subr.mxu0 %v3279
    %4694 = vmatpush1.msra.mxu0 %v3278
    %4695 = vmatprep.subr.mxu0 %v3287
    %4696 = vmatpush1.msra.mxu0 %v3286
    %4697 = vmatprep.subr.mxu0 %v3295
    %4698 = vmatpush1.msra.mxu0 %v3294
    %4699 = vmatprep.subr.mxu0 %v3303
    %4700 = vmatpush1.msra.mxu0 %v3302
    %4701 = vmatprep.subr.mxu0 %v3311
    %4702 = vmatpush1.msra.mxu0 %v3310
    %4703 = vmatprep.subr.mxu0 %v3319
    %4704 = vmatpush1.msra.mxu0 %v3318
    %4705 = vmatprep.subr.mxu0 %v3327
    %4706 = vmatpush1.msra.mxu0 %v3326
    %4707 = vmatprep.subr.mxu0 %v3335
    %4708 = vmatpush1.msra.mxu0 %v3334
    %4709 = vmatprep.subr.mxu0 %v3343
    %4710 = vmatpush1.msra.mxu0 %v3342
    %4711 = vmatprep.subr.mxu0 %v3351
    %4712 = vmatpush1.msra.mxu0 %v3350
    %4713 = vmatprep.subr.mxu0 %v3359
    %4714 = vmatpush1.msra.mxu0 %v3358
    %4715 = vmatprep.subr.mxu0 %v3367
    %4716 = vmatpush1.msra.mxu0 %v3366
    %4717 = vmatprep.subr.mxu0 %v3375
    %4718 = vmatpush1.msra.mxu0 %v3374
    %4719 = vmatprep.subr.mxu0 %v3383
    %4720 = vmatpush1.msra.mxu0 %v3382
    %4721 = vmatprep.subr.mxu0 %v3391
    %4722 = vmatpush1.msra.mxu0 %v3390
    %4723 = vmatprep.subr.mxu0 %v3399
    %4724 = vmatpush1.msra.mxu0 %v3398
    %4725 = vmatprep.subr.mxu0 %v3407
    %4726 = vmatpush1.msra.mxu0 %v3406
    %4727 = vmatprep.subr.mxu0 %v3415
    %4728 = vmatpush1.msra.mxu0 %v3414
    %4729 = vmatprep.subr.mxu0 %v3423
    %4730 = vmatpush1.msra.mxu0 %v3422
    %4731 = vmatprep.subr.mxu0 %v3431
    %4732 = vmatpush1.msra.mxu0 %v3430
    %4733 = vmatprep.subr.mxu0 %v3439
    %4734 = vmatpush1.msra.mxu0 %v3438
    %4735 = vmatprep.subr.mxu0 %v3447
    %4736 = vmatpush1.msra.mxu0 %v3446
    %4737 = vmatprep.subr.mxu0 %v3455
    %4738 = vmatpush1.msra.mxu0 %v3454
    %4739 = vmatprep.subr.mxu0 %v3463
    %4740 = vmatpush1.msra.mxu0 %v3462
    %4741 = vmatprep.subr.mxu0 %v3471
    %4742 = vmatpush1.msra.mxu0 %v3470
    %4743 = vmatprep.subr.mxu0 %v3479
    %4744 = vmatpush1.msra.mxu0 %v3478
    %4745 = vmatprep.subr.mxu0 %v3487
    %4746 = vmatpush1.msra.mxu0 %v3486
    %4747 = vmatprep.mubr.f32.mxu0 %v2973
    %4748 = vmatmul.mubr.f32.gmra.mrb[0].mxu0 %v2972
    %v4749 = vpop.f32.mrb[0].mxu0
    %v4750 = vadd.f32 %v4679, %v4749
    %v4751 = vpop.f32.mrb[0].mxu0
    %v4752 = vadd.f32 %v4681, %v4751
    %4753 = vdwg.mxu0
    %4754 = vmatprep.subr.mxu0 %v3495
    %4755 = vmatpush1.msra.mxu0 %v3494
    %4756 = vmatprep.subr.mxu0 %v3503
    %4757 = vmatpush1.msra.mxu0 %v3502
    %4758 = vmatprep.subr.mxu0 %v3511
    %4759 = vmatpush1.msra.mxu0 %v3510
    %4760 = vmatprep.subr.mxu0 %v3519
    %4761 = vmatpush1.msra.mxu0 %v3518
    %4762 = vmatprep.subr.mxu0 %v3527
    %4763 = vmatpush1.msra.mxu0 %v3526
    %4764 = vmatprep.subr.mxu0 %v3535
    %4765 = vmatpush1.msra.mxu0 %v3534
    %4766 = vmatprep.subr.mxu0 %v3543
    %4767 = vmatpush1.msra.mxu0 %v3542
    %4768 = vmatprep.subr.mxu0 %v3551
    %4769 = vmatpush1.msra.mxu0 %v3550
    %4770 = vmatprep.subr.mxu0 %v3559
    %4771 = vmatpush1.msra.mxu0 %v3558
    %4772 = vmatprep.subr.mxu0 %v3567
    %4773 = vmatpush1.msra.mxu0 %v3566
    %4774 = vmatprep.subr.mxu0 %v3575
    %4775 = vmatpush1.msra.mxu0 %v3574
    %4776 = vmatprep.subr.mxu0 %v3583
    %4777 = vmatpush1.msra.mxu0 %v3582
    %4778 = vmatprep.subr.mxu0 %v3591
    %4779 = vmatpush1.msra.mxu0 %v3590
    %4780 = vmatprep.subr.mxu0 %v3599
    %4781 = vmatpush1.msra.mxu0 %v3598
    %4782 = vmatprep.subr.mxu0 %v3607
    %4783 = vmatpush1.msra.mxu0 %v3606
    %4784 = vmatprep.subr.mxu0 %v3615
    %4785 = vmatpush1.msra.mxu0 %v3614
    %4786 = vmatprep.subr.mxu0 %v3623
    %4787 = vmatpush1.msra.mxu0 %v3622
    %4788 = vmatprep.subr.mxu0 %v3631
    %4789 = vmatpush1.msra.mxu0 %v3630
    %4790 = vmatprep.subr.mxu0 %v3639
    %4791 = vmatpush1.msra.mxu0 %v3638
    %4792 = vmatprep.subr.mxu0 %v3647
    %4793 = vmatpush1.msra.mxu0 %v3646
    %4794 = vmatprep.subr.mxu0 %v3655
    %4795 = vmatpush1.msra.mxu0 %v3654
    %4796 = vmatprep.subr.mxu0 %v3663
    %4797 = vmatpush1.msra.mxu0 %v3662
    %4798 = vmatprep.subr.mxu0 %v3671
    %4799 = vmatpush1.msra.mxu0 %v3670
    %4800 = vmatprep.subr.mxu0 %v3679
    %4801 = vmatpush1.msra.mxu0 %v3678
    %4802 = vmatprep.subr.mxu0 %v3687
    %4803 = vmatpush1.msra.mxu0 %v3686
    %4804 = vmatprep.subr.mxu0 %v3695
    %4805 = vmatpush1.msra.mxu0 %v3694
    %4806 = vmatprep.subr.mxu0 %v3703
    %4807 = vmatpush1.msra.mxu0 %v3702
    %4808 = vmatprep.subr.mxu0 %v3711
    %4809 = vmatpush1.msra.mxu0 %v3710
    %4810 = vmatprep.subr.mxu0 %v3719
    %4811 = vmatpush1.msra.mxu0 %v3718
    %4812 = vmatprep.subr.mxu0 %v3727
    %4813 = vmatpush1.msra.mxu0 %v3726
    %4814 = vmatprep.subr.mxu0 %v3735
    %4815 = vmatpush1.msra.mxu0 %v3734
    %4816 = vmatprep.subr.mxu0 %v3743
    %4817 = vmatpush1.msra.mxu0 %v3742
    %4818 = vmatprep.mubr.f32.mxu0 %v2975
    %4819 = vmatmul.mubr.f32.gmra.mrb[0].mxu0 %v2974
    %v4820 = vpop.f32.mrb[0].mxu0
    %v4821 = vadd.f32 %v4750, %v4820
    %v4822 = vpop.f32.mrb[0].mxu0
    %v4823 = vadd.f32 %v4752, %v4822
    %4824 = vdwg.mxu0
    %4825 = vmatprep.subr.mxu0 %v3751
    %4826 = vmatpush1.msra.mxu0 %v3750
    %4827 = vmatprep.subr.mxu0 %v3759
    %4828 = vmatpush1.msra.mxu0 %v3758
    %4829 = vmatprep.subr.mxu0 %v3767
    %4830 = vmatpush1.msra.mxu0 %v3766
    %4831 = vmatprep.subr.mxu0 %v3775
    %4832 = vmatpush1.msra.mxu0 %v3774
    %4833 = vmatprep.subr.mxu0 %v3783
    %4834 = vmatpush1.msra.mxu0 %v3782
    %4835 = vmatprep.subr.mxu0 %v3791
    %4836 = vmatpush1.msra.mxu0 %v3790
    %4837 = vmatprep.subr.mxu0 %v3799
    %4838 = vmatpush1.msra.mxu0 %v3798
    %4839 = vmatprep.subr.mxu0 %v3807
    %4840 = vmatpush1.msra.mxu0 %v3806
    %4841 = vmatprep.subr.mxu0 %v3815
    %4842 = vmatpush1.msra.mxu0 %v3814
    %4843 = vmatprep.subr.mxu0 %v3823
    %4844 = vmatpush1.msra.mxu0 %v3822
    %4845 = vmatprep.subr.mxu0 %v3831
    %4846 = vmatpush1.msra.mxu0 %v3830
    %4847 = vmatprep.subr.mxu0 %v3839
    %4848 = vmatpush1.msra.mxu0 %v3838
    %4849 = vmatprep.subr.mxu0 %v3847
    %4850 = vmatpush1.msra.mxu0 %v3846
    %4851 = vmatprep.subr.mxu0 %v3855
    %4852 = vmatpush1.msra.mxu0 %v3854
    %4853 = vmatprep.subr.mxu0 %v3863
    %4854 = vmatpush1.msra.mxu0 %v3862
    %4855 = vmatprep.subr.mxu0 %v3871
    %4856 = vmatpush1.msra.mxu0 %v3870
    %4857 = vmatprep.subr.mxu0 %v3879
    %4858 = vmatpush1.msra.mxu0 %v3878
    %4859 = vmatprep.subr.mxu0 %v3887
    %4860 = vmatpush1.msra.mxu0 %v3886
    %4861 = vmatprep.subr.mxu0 %v3895
    %4862 = vmatpush1.msra.mxu0 %v3894
    %4863 = vmatprep.subr.mxu0 %v3903
    %4864 = vmatpush1.msra.mxu0 %v3902
    %4865 = vmatprep.subr.mxu0 %v3911
    %4866 = vmatpush1.msra.mxu0 %v3910
    %4867 = vmatprep.subr.mxu0 %v3919
    %4868 = vmatpush1.msra.mxu0 %v3918
    %4869 = vmatprep.subr.mxu0 %v3927
    %4870 = vmatpush1.msra.mxu0 %v3926
    %4871 = vmatprep.subr.mxu0 %v3935
    %4872 = vmatpush1.msra.mxu0 %v3934
    %4873 = vmatprep.subr.mxu0 %v3943
    %4874 = vmatpush1.msra.mxu0 %v3942
    %4875 = vmatprep.subr.mxu0 %v3951
    %4876 = vmatpush1.msra.mxu0 %v3950
    %4877 = vmatprep.subr.mxu0 %v3959
    %4878 = vmatpush1.msra.mxu0 %v3958
    %4879 = vmatprep.subr.mxu0 %v3967
    %4880 = vmatpush1.msra.mxu0 %v3966
    %4881 = vmatprep.subr.mxu0 %v3975
    %4882 = vmatpush1.msra.mxu0 %v3974
    %4883 = vmatprep.subr.mxu0 %v3983
    %4884 = vmatpush1.msra.mxu0 %v3982
    %4885 = vmatprep.subr.mxu0 %v3991
    %4886 = vmatpush1.msra.mxu0 %v3990
    %4887 = vmatprep.subr.mxu0 %v3999
    %4888 = vmatpush1.msra.mxu0 %v3998
    %4889 = vmatprep.mubr.f32.mxu0 %v2977
    %4890 = vmatmul.mubr.f32.gmra.mrb[0].mxu0 %v2976
    %v4891 = vpop.f32.mrb[0].mxu0
    %v4892 = vadd.f32 %v4821, %v4891
    %v4893 = vpop.f32.mrb[0].mxu0
    %v4894 = vadd.f32 %v4823, %v4893
    %4895 = vdwg.mxu0
    %4896 = vmatprep.subr.mxu0 %v2985
    %4897 = vmatpush1.msra.mxu0 %v2984
    %4898 = vmatprep.subr.mxu0 %v2993
    %4899 = vmatpush1.msra.mxu0 %v2992
    %4900 = vmatprep.subr.mxu0 %v3001
    %4901 = vmatpush1.msra.mxu0 %v3000
    %4902 = vmatprep.subr.mxu0 %v3009
    %4903 = vmatpush1.msra.mxu0 %v3008
    %4904 = vmatprep.subr.mxu0 %v3017
    %4905 = vmatpush1.msra.mxu0 %v3016
    %4906 = vmatprep.subr.mxu0 %v3025
    %4907 = vmatpush1.msra.mxu0 %v3024
    %4908 = vmatprep.subr.mxu0 %v3033
    %4909 = vmatpush1.msra.mxu0 %v3032
    %4910 = vmatprep.subr.mxu0 %v3041
    %4911 = vmatpush1.msra.mxu0 %v3040
    %4912 = vmatprep.subr.mxu0 %v3049
    %4913 = vmatpush1.msra.mxu0 %v3048
    %4914 = vmatprep.subr.mxu0 %v3057
    %4915 = vmatpush1.msra.mxu0 %v3056
    %4916 = vmatprep.subr.mxu0 %v3065
    %4917 = vmatpush1.msra.mxu0 %v3064
    %4918 = vmatprep.subr.mxu0 %v3073
    %4919 = vmatpush1.msra.mxu0 %v3072
    %4920 = vmatprep.subr.mxu0 %v3081
    %4921 = vmatpush1.msra.mxu0 %v3080
    %4922 = vmatprep.subr.mxu0 %v3089
    %4923 = vmatpush1.msra.mxu0 %v3088
    %4924 = vmatprep.subr.mxu0 %v3097
    %4925 = vmatpush1.msra.mxu0 %v3096
    %4926 = vmatprep.subr.mxu0 %v3105
    %4927 = vmatpush1.msra.mxu0 %v3104
    %4928 = vmatprep.subr.mxu0 %v3113
    %4929 = vmatpush1.msra.mxu0 %v3112
    %4930 = vmatprep.subr.mxu0 %v3121
    %4931 = vmatpush1.msra.mxu0 %v3120
    %4932 = vmatprep.subr.mxu0 %v3129
    %4933 = vmatpush1.msra.mxu0 %v3128
    %4934 = vmatprep.subr.mxu0 %v3137
    %4935 = vmatpush1.msra.mxu0 %v3136
    %4936 = vmatprep.subr.mxu0 %v3145
    %4937 = vmatpush1.msra.mxu0 %v3144
    %4938 = vmatprep.subr.mxu0 %v3153
    %4939 = vmatpush1.msra.mxu0 %v3152
    %4940 = vmatprep.subr.mxu0 %v3161
    %4941 = vmatpush1.msra.mxu0 %v3160
    %4942 = vmatprep.subr.mxu0 %v3169
    %4943 = vmatpush1.msra.mxu0 %v3168
    %4944 = vmatprep.subr.mxu0 %v3177
    %4945 = vmatpush1.msra.mxu0 %v3176
    %4946 = vmatprep.subr.mxu0 %v3185
    %4947 = vmatpush1.msra.mxu0 %v3184
    %4948 = vmatprep.subr.mxu0 %v3193
    %4949 = vmatpush1.msra.mxu0 %v3192
    %4950 = vmatprep.subr.mxu0 %v3201
    %4951 = vmatpush1.msra.mxu0 %v3200
    %4952 = vmatprep.subr.mxu0 %v3209
    %4953 = vmatpush1.msra.mxu0 %v3208
    %4954 = vmatprep.subr.mxu0 %v3217
    %4955 = vmatpush1.msra.mxu0 %v3216
    %4956 = vmatprep.subr.mxu0 %v3225
    %4957 = vmatpush1.msra.mxu0 %v3224
    %4958 = vmatprep.subr.mxu0 %v3233
    %4959 = vmatpush1.msra.mxu0 %v3232
    %4960 = vmatprep.mubr.f32.mxu0 %v2971
    %4961 = vmatmul.mubr.f32.gmra.mrb[0].mxu0 %v2970
    %v4962 = vpop.f32.mrb[0].mxu0
    %v4963 = vadd.f32 %v4031, %v4962
    %v4964 = vpop.f32.mrb[0].mxu0
    %v4965 = vadd.f32 %v4035, %v4964
    %4966 = vdwg.mxu0
    %4967 = vmatprep.subr.mxu0 %v3241
    %4968 = vmatpush1.msra.mxu0 %v3240
    %4969 = vmatprep.subr.mxu0 %v3249
    %4970 = vmatpush1.msra.mxu0 %v3248
    %4971 = vmatprep.subr.mxu0 %v3257
    %4972 = vmatpush1.msra.mxu0 %v3256
    %4973 = vmatprep.subr.mxu0 %v3265
    %4974 = vmatpush1.msra.mxu0 %v3264
    %4975 = vmatprep.subr.mxu0 %v3273
    %4976 = vmatpush1.msra.mxu0 %v3272
    %4977 = vmatprep.subr.mxu0 %v3281
    %4978 = vmatpush1.msra.mxu0 %v3280
    %4979 = vmatprep.subr.mxu0 %v3289
    %4980 = vmatpush1.msra.mxu0 %v3288
    %4981 = vmatprep.subr.mxu0 %v3297
    %4982 = vmatpush1.msra.mxu0 %v3296
    %4983 = vmatprep.subr.mxu0 %v3305
    %4984 = vmatpush1.msra.mxu0 %v3304
    %4985 = vmatprep.subr.mxu0 %v3313
    %4986 = vmatpush1.msra.mxu0 %v3312
    %4987 = vmatprep.subr.mxu0 %v3321
    %4988 = vmatpush1.msra.mxu0 %v3320
    %4989 = vmatprep.subr.mxu0 %v3329
    %4990 = vmatpush1.msra.mxu0 %v3328
    %4991 = vmatprep.subr.mxu0 %v3337
    %4992 = vmatpush1.msra.mxu0 %v3336
    %4993 = vmatprep.subr.mxu0 %v3345
    %4994 = vmatpush1.msra.mxu0 %v3344
    %4995 = vmatprep.subr.mxu0 %v3353
    %4996 = vmatpush1.msra.mxu0 %v3352
    %4997 = vmatprep.subr.mxu0 %v3361
    %4998 = vmatpush1.msra.mxu0 %v3360
    %4999 = vmatprep.subr.mxu0 %v3369
    %5000 = vmatpush1.msra.mxu0 %v3368
    %5001 = vmatprep.subr.mxu0 %v3377
    %5002 = vmatpush1.msra.mxu0 %v3376
    %5003 = vmatprep.subr.mxu0 %v3385
    %5004 = vmatpush1.msra.mxu0 %v3384
    %5005 = vmatprep.subr.mxu0 %v3393
    %5006 = vmatpush1.msra.mxu0 %v3392
    %5007 = vmatprep.subr.mxu0 %v3401
    %5008 = vmatpush1.msra.mxu0 %v3400
    %5009 = vmatprep.subr.mxu0 %v3409
    %5010 = vmatpush1.msra.mxu0 %v3408
    %5011 = vmatprep.subr.mxu0 %v3417
    %5012 = vmatpush1.msra.mxu0 %v3416
    %5013 = vmatprep.subr.mxu0 %v3425
    %5014 = vmatpush1.msra.mxu0 %v3424
    %5015 = vmatprep.subr.mxu0 %v3433
    %5016 = vmatpush1.msra.mxu0 %v3432
    %5017 = vmatprep.subr.mxu0 %v3441
    %5018 = vmatpush1.msra.mxu0 %v3440
    %5019 = vmatprep.subr.mxu0 %v3449
    %5020 = vmatpush1.msra.mxu0 %v3448
    %5021 = vmatprep.subr.mxu0 %v3457
    %5022 = vmatpush1.msra.mxu0 %v3456
    %5023 = vmatprep.subr.mxu0 %v3465
    %5024 = vmatpush1.msra.mxu0 %v3464
    %5025 = vmatprep.subr.mxu0 %v3473
    %5026 = vmatpush1.msra.mxu0 %v3472
    %5027 = vmatprep.subr.mxu0 %v3481
    %5028 = vmatpush1.msra.mxu0 %v3480
    %5029 = vmatprep.subr.mxu0 %v3489
    %5030 = vmatpush1.msra.mxu0 %v3488
    %5031 = vmatprep.mubr.f32.mxu0 %v2973
    %5032 = vmatmul.mubr.f32.gmra.mrb[0].mxu0 %v2972
    %v5033 = vpop.f32.mrb[0].mxu0
    %v5034 = vadd.f32 %v4963, %v5033
    %v5035 = vpop.f32.mrb[0].mxu0
    %v5036 = vadd.f32 %v4965, %v5035
    %5037 = vdwg.mxu0
    %5038 = vmatprep.subr.mxu0 %v3497
    %5039 = vmatpush1.msra.mxu0 %v3496
    %5040 = vmatprep.subr.mxu0 %v3505
    %5041 = vmatpush1.msra.mxu0 %v3504
    %5042 = vmatprep.subr.mxu0 %v3513
    %5043 = vmatpush1.msra.mxu0 %v3512
    %5044 = vmatprep.subr.mxu0 %v3521
    %5045 = vmatpush1.msra.mxu0 %v3520
    %5046 = vmatprep.subr.mxu0 %v3529
    %5047 = vmatpush1.msra.mxu0 %v3528
    %5048 = vmatprep.subr.mxu0 %v3537
    %5049 = vmatpush1.msra.mxu0 %v3536
    %5050 = vmatprep.subr.mxu0 %v3545
    %5051 = vmatpush1.msra.mxu0 %v3544
    %5052 = vmatprep.subr.mxu0 %v3553
    %5053 = vmatpush1.msra.mxu0 %v3552
    %5054 = vmatprep.subr.mxu0 %v3561
    %5055 = vmatpush1.msra.mxu0 %v3560
    %5056 = vmatprep.subr.mxu0 %v3569
    %5057 = vmatpush1.msra.mxu0 %v3568
    %5058 = vmatprep.subr.mxu0 %v3577
    %5059 = vmatpush1.msra.mxu0 %v3576
    %5060 = vmatprep.subr.mxu0 %v3585
    %5061 = vmatpush1.msra.mxu0 %v3584
    %5062 = vmatprep.subr.mxu0 %v3593
    %5063 = vmatpush1.msra.mxu0 %v3592
    %5064 = vmatprep.subr.mxu0 %v3601
    %5065 = vmatpush1.msra.mxu0 %v3600
    %5066 = vmatprep.subr.mxu0 %v3609
    %5067 = vmatpush1.msra.mxu0 %v3608
    %5068 = vmatprep.subr.mxu0 %v3617
    %5069 = vmatpush1.msra.mxu0 %v3616
    %5070 = vmatprep.subr.mxu0 %v3625
    %5071 = vmatpush1.msra.mxu0 %v3624
    %5072 = vmatprep.subr.mxu0 %v3633
    %5073 = vmatpush1.msra.mxu0 %v3632
    %5074 = vmatprep.subr.mxu0 %v3641
    %5075 = vmatpush1.msra.mxu0 %v3640
    %5076 = vmatprep.subr.mxu0 %v3649
    %5077 = vmatpush1.msra.mxu0 %v3648
    %5078 = vmatprep.subr.mxu0 %v3657
    %5079 = vmatpush1.msra.mxu0 %v3656
    %5080 = vmatprep.subr.mxu0 %v3665
    %5081 = vmatpush1.msra.mxu0 %v3664
    %5082 = vmatprep.subr.mxu0 %v3673
    %5083 = vmatpush1.msra.mxu0 %v3672
    %5084 = vmatprep.subr.mxu0 %v3681
    %5085 = vmatpush1.msra.mxu0 %v3680
    %5086 = vmatprep.subr.mxu0 %v3689
    %5087 = vmatpush1.msra.mxu0 %v3688
    %5088 = vmatprep.subr.mxu0 %v3697
    %5089 = vmatpush1.msra.mxu0 %v3696
    %5090 = vmatprep.subr.mxu0 %v3705
    %5091 = vmatpush1.msra.mxu0 %v3704
    %5092 = vmatprep.subr.mxu0 %v3713
    %5093 = vmatpush1.msra.mxu0 %v3712
    %5094 = vmatprep.subr.mxu0 %v3721
    %5095 = vmatpush1.msra.mxu0 %v3720
    %5096 = vmatprep.subr.mxu0 %v3729
    %5097 = vmatpush1.msra.mxu0 %v3728
    %5098 = vmatprep.subr.mxu0 %v3737
    %5099 = vmatpush1.msra.mxu0 %v3736
    %5100 = vmatprep.subr.mxu0 %v3745
    %5101 = vmatpush1.msra.mxu0 %v3744
    %5102 = vmatprep.mubr.f32.mxu0 %v2975
    %5103 = vmatmul.mubr.f32.gmra.mrb[0].mxu0 %v2974
    %v5104 = vpop.f32.mrb[0].mxu0
    %v5105 = vadd.f32 %v5034, %v5104
    %v5106 = vpop.f32.mrb[0].mxu0
    %v5107 = vadd.f32 %v5036, %v5106
    %5108 = vdwg.mxu0
    %5109 = vmatprep.subr.mxu0 %v3753
    %5110 = vmatpush1.msra.mxu0 %v3752
    %5111 = vmatprep.subr.mxu0 %v3761
    %5112 = vmatpush1.msra.mxu0 %v3760
    %5113 = vmatprep.subr.mxu0 %v3769
    %5114 = vmatpush1.msra.mxu0 %v3768
    %5115 = vmatprep.subr.mxu0 %v3777
    %5116 = vmatpush1.msra.mxu0 %v3776
    %5117 = vmatprep.subr.mxu0 %v3785
    %5118 = vmatpush1.msra.mxu0 %v3784
    %5119 = vmatprep.subr.mxu0 %v3793
    %5120 = vmatpush1.msra.mxu0 %v3792
    %5121 = vmatprep.subr.mxu0 %v3801
    %5122 = vmatpush1.msra.mxu0 %v3800
    %5123 = vmatprep.subr.mxu0 %v3809
    %5124 = vmatpush1.msra.mxu0 %v3808
    %5125 = vmatprep.subr.mxu0 %v3817
    %5126 = vmatpush1.msra.mxu0 %v3816
    %5127 = vmatprep.subr.mxu0 %v3825
    %5128 = vmatpush1.msra.mxu0 %v3824
    %5129 = vmatprep.subr.mxu0 %v3833
    %5130 = vmatpush1.msra.mxu0 %v3832
    %5131 = vmatprep.subr.mxu0 %v3841
    %5132 = vmatpush1.msra.mxu0 %v3840
    %5133 = vmatprep.subr.mxu0 %v3849
    %5134 = vmatpush1.msra.mxu0 %v3848
    %5135 = vmatprep.subr.mxu0 %v3857
    %5136 = vmatpush1.msra.mxu0 %v3856
    %5137 = vmatprep.subr.mxu0 %v3865
    %5138 = vmatpush1.msra.mxu0 %v3864
    %5139 = vmatprep.subr.mxu0 %v3873
    %5140 = vmatpush1.msra.mxu0 %v3872
    %5141 = vmatprep.subr.mxu0 %v3881
    %5142 = vmatpush1.msra.mxu0 %v3880
    %5143 = vmatprep.subr.mxu0 %v3889
    %5144 = vmatpush1.msra.mxu0 %v3888
    %5145 = vmatprep.subr.mxu0 %v3897
    %5146 = vmatpush1.msra.mxu0 %v3896
    %5147 = vmatprep.subr.mxu0 %v3905
    %5148 = vmatpush1.msra.mxu0 %v3904
    %5149 = vmatprep.subr.mxu0 %v3913
    %5150 = vmatpush1.msra.mxu0 %v3912
    %5151 = vmatprep.subr.mxu0 %v3921
    %5152 = vmatpush1.msra.mxu0 %v3920
    %5153 = vmatprep.subr.mxu0 %v3929
    %5154 = vmatpush1.msra.mxu0 %v3928
    %5155 = vmatprep.subr.mxu0 %v3937
    %5156 = vmatpush1.msra.mxu0 %v3936
    %5157 = vmatprep.subr.mxu0 %v3945
    %5158 = vmatpush1.msra.mxu0 %v3944
    %5159 = vmatprep.subr.mxu0 %v3953
    %5160 = vmatpush1.msra.mxu0 %v3952
    %5161 = vmatprep.subr.mxu0 %v3961
    %5162 = vmatpush1.msra.mxu0 %v3960
    %5163 = vmatprep.subr.mxu0 %v3969
    %5164 = vmatpush1.msra.mxu0 %v3968
    %5165 = vmatprep.subr.mxu0 %v3977
    %5166 = vmatpush1.msra.mxu0 %v3976
    %5167 = vmatprep.subr.mxu0 %v3985
    %5168 = vmatpush1.msra.mxu0 %v3984
    %5169 = vmatprep.subr.mxu0 %v3993
    %5170 = vmatpush1.msra.mxu0 %v3992
    %5171 = vmatprep.subr.mxu0 %v4001
    %5172 = vmatpush1.msra.mxu0 %v4000
    %5173 = vmatprep.mubr.f32.mxu0 %v2977
    %5174 = vmatmul.mubr.f32.gmra.mrb[0].mxu0 %v2976
    %v5175 = vpop.f32.mrb[0].mxu0
    %v5176 = vadd.f32 %v5105, %v5175
    %v5177 = vpop.f32.mrb[0].mxu0
    %v5178 = vadd.f32 %v5107, %v5177
    %5179 = vdwg.mxu0
    %v5180 = vmax.f32 %v4324, 0.0
    %v5181 = vmax.f32 %v4326, 0.0
    %v5182 = vmax.f32 %v4608, 0.0
    %v5183 = vmax.f32 %v4610, 0.0
    %v5184 = vmax.f32 %v4892, 0.0
    %v5185 = vmax.f32 %v4894, 0.0
    %v5186 = vmax.f32 %v5176, 0.0
    %v5187 = vmax.f32 %v5178, 0.0
    %v5188 = vld [vmem:[#allocation14] sm:$0xff]
    %v5189 = vld [vmem:[#allocation14 + $0x8] sm:$0xff]
    %v5190 = vld [vmem:[#allocation14 + $0x10] sm:$0xff]
    %v5191 = vld [vmem:[#allocation14 + $0x18] sm:$0xff]
    %v5192 = vld [vmem:[#allocation14 + $0x20] sm:$0xff]
    %v5193 = vld [vmem:[#allocation14 + $0x28] sm:$0xff]
    %v5194 = vld [vmem:[#allocation14 + $0x30] sm:$0xff]
    %v5195 = vld [vmem:[#allocation14 + $0x38] sm:$0xff]
    %v5196 = vld [vmem:[#allocation14 + $0x40] sm:$0xff]
    %v5197 = vld [vmem:[#allocation14 + $0x48] sm:$0xff]
    %v5198 = vld [vmem:[#allocation14 + $0x50] sm:$0xff]
    %v5199 = vld [vmem:[#allocation14 + $0x58] sm:$0xff]
    %v5200 = vld [vmem:[#allocation14 + $0x60] sm:$0xff]
    %v5201 = vld [vmem:[#allocation14 + $0x68] sm:$0xff]
    %v5202 = vld [vmem:[#allocation14 + $0x70] sm:$0xff]
    %v5203 = vld [vmem:[#allocation14 + $0x78] sm:$0xff]
    %v5204 = vld [vmem:[#allocation14 + $0x80] sm:$0xff]
    %v5205 = vld [vmem:[#allocation14 + $0x88] sm:$0xff]
    %v5206 = vld [vmem:[#allocation14 + $0x90] sm:$0xff]
    %v5207 = vld [vmem:[#allocation14 + $0x98] sm:$0xff]
    %v5208 = vld [vmem:[#allocation14 + $0xa0] sm:$0xff]
    %v5209 = vld [vmem:[#allocation14 + $0xa8] sm:$0xff]
    %v5210 = vld [vmem:[#allocation14 + $0xb0] sm:$0xff]
    %v5211 = vld [vmem:[#allocation14 + $0xb8] sm:$0xff]
    %v5212 = vld [vmem:[#allocation14 + $0xc0] sm:$0xff]
    %v5213 = vld [vmem:[#allocation14 + $0xc8] sm:$0xff]
    %v5214 = vld [vmem:[#allocation14 + $0xd0] sm:$0xff]
    %v5215 = vld [vmem:[#allocation14 + $0xd8] sm:$0xff]
    %v5216 = vld [vmem:[#allocation14 + $0xe0] sm:$0xff]
    %v5217 = vld [vmem:[#allocation14 + $0xe8] sm:$0xff]
    %v5218 = vld [vmem:[#allocation14 + $0xf0] sm:$0xff]
    %v5219 = vld [vmem:[#allocation14 + $0xf8] sm:$0xff]
    %v5220 = vld [vmem:[#allocation14 + $0x100] sm:$0xff]
    %v5221 = vld [vmem:[#allocation14 + $0x108] sm:$0xff]
    %v5222 = vld [vmem:[#allocation14 + $0x110] sm:$0xff]
    %v5223 = vld [vmem:[#allocation14 + $0x118] sm:$0xff]
    %v5224 = vld [vmem:[#allocation14 + $0x120] sm:$0xff]
    %v5225 = vld [vmem:[#allocation14 + $0x128] sm:$0xff]
    %v5226 = vld [vmem:[#allocation14 + $0x130] sm:$0xff]
    %v5227 = vld [vmem:[#allocation14 + $0x138] sm:$0xff]
    %v5228 = vld [vmem:[#allocation14 + $0x140] sm:$0xff]
    %v5229 = vld [vmem:[#allocation14 + $0x148] sm:$0xff]
    %v5230 = vld [vmem:[#allocation14 + $0x150] sm:$0xff]
    %v5231 = vld [vmem:[#allocation14 + $0x158] sm:$0xff]
    %v5232 = vld [vmem:[#allocation14 + $0x160] sm:$0xff]
    %v5233 = vld [vmem:[#allocation14 + $0x168] sm:$0xff]
    %v5234 = vld [vmem:[#allocation14 + $0x170] sm:$0xff]
    %v5235 = vld [vmem:[#allocation14 + $0x178] sm:$0xff]
    %v5236 = vld [vmem:[#allocation14 + $0x180] sm:$0xff]
    %v5237 = vld [vmem:[#allocation14 + $0x188] sm:$0xff]
    %v5238 = vld [vmem:[#allocation14 + $0x190] sm:$0xff]
    %v5239 = vld [vmem:[#allocation14 + $0x198] sm:$0xff]
    %v5240 = vld [vmem:[#allocation14 + $0x1a0] sm:$0xff]
    %v5241 = vld [vmem:[#allocation14 + $0x1a8] sm:$0xff]
    %v5242 = vld [vmem:[#allocation14 + $0x1b0] sm:$0xff]
    %v5243 = vld [vmem:[#allocation14 + $0x1b8] sm:$0xff]
    %v5244 = vld [vmem:[#allocation14 + $0x1c0] sm:$0xff]
    %v5245 = vld [vmem:[#allocation14 + $0x1c8] sm:$0xff]
    %v5246 = vld [vmem:[#allocation14 + $0x1d0] sm:$0xff]
    %v5247 = vld [vmem:[#allocation14 + $0x1d8] sm:$0xff]
    %v5248 = vld [vmem:[#allocation14 + $0x1e0] sm:$0xff]
    %v5249 = vld [vmem:[#allocation14 + $0x1e8] sm:$0xff]
    %v5250 = vld [vmem:[#allocation14 + $0x1f0] sm:$0xff]
    %v5251 = vld [vmem:[#allocation14 + $0x1f8] sm:$0xff]
    %v5252 = vld [vmem:[#allocation14 + $0x200] sm:$0xff]
    %v5253 = vld [vmem:[#allocation14 + $0x208] sm:$0xff]
    %v5254 = vld [vmem:[#allocation14 + $0x210] sm:$0xff]
    %v5255 = vld [vmem:[#allocation14 + $0x218] sm:$0xff]
    %v5256 = vld [vmem:[#allocation14 + $0x220] sm:$0xff]
    %v5257 = vld [vmem:[#allocation14 + $0x228] sm:$0xff]
    %v5258 = vld [vmem:[#allocation14 + $0x230] sm:$0xff]
    %v5259 = vld [vmem:[#allocation14 + $0x238] sm:$0xff]
    %v5260 = vld [vmem:[#allocation14 + $0x240] sm:$0xff]
    %v5261 = vld [vmem:[#allocation14 + $0x248] sm:$0xff]
    %v5262 = vld [vmem:[#allocation14 + $0x250] sm:$0xff]
    %v5263 = vld [vmem:[#allocation14 + $0x258] sm:$0xff]
    %v5264 = vld [vmem:[#allocation14 + $0x260] sm:$0xff]
    %v5265 = vld [vmem:[#allocation14 + $0x268] sm:$0xff]
    %v5266 = vld [vmem:[#allocation14 + $0x270] sm:$0xff]
    %v5267 = vld [vmem:[#allocation14 + $0x278] sm:$0xff]
    %v5268 = vld [vmem:[#allocation14 + $0x280] sm:$0xff]
    %v5269 = vld [vmem:[#allocation14 + $0x288] sm:$0xff]
    %v5270 = vld [vmem:[#allocation14 + $0x290] sm:$0xff]
    %v5271 = vld [vmem:[#allocation14 + $0x298] sm:$0xff]
    %v5272 = vld [vmem:[#allocation14 + $0x2a0] sm:$0xff]
    %v5273 = vld [vmem:[#allocation14 + $0x2a8] sm:$0xff]
    %v5274 = vld [vmem:[#allocation14 + $0x2b0] sm:$0xff]
    %v5275 = vld [vmem:[#allocation14 + $0x2b8] sm:$0xff]
    %v5276 = vld [vmem:[#allocation14 + $0x2c0] sm:$0xff]
    %v5277 = vld [vmem:[#allocation14 + $0x2c8] sm:$0xff]
    %v5278 = vld [vmem:[#allocation14 + $0x2d0] sm:$0xff]
    %v5279 = vld [vmem:[#allocation14 + $0x2d8] sm:$0xff]
    %v5280 = vld [vmem:[#allocation14 + $0x2e0] sm:$0xff]
    %v5281 = vld [vmem:[#allocation14 + $0x2e8] sm:$0xff]
    %v5282 = vld [vmem:[#allocation14 + $0x2f0] sm:$0xff]
    %v5283 = vld [vmem:[#allocation14 + $0x2f8] sm:$0xff]
    %v5284 = vld [vmem:[#allocation14 + $0x300] sm:$0xff]
    %v5285 = vld [vmem:[#allocation14 + $0x308] sm:$0xff]
    %v5286 = vld [vmem:[#allocation14 + $0x310] sm:$0xff]
    %v5287 = vld [vmem:[#allocation14 + $0x318] sm:$0xff]
    %v5288 = vld [vmem:[#allocation14 + $0x320] sm:$0xff]
    %v5289 = vld [vmem:[#allocation14 + $0x328] sm:$0xff]
    %v5290 = vld [vmem:[#allocation14 + $0x330] sm:$0xff]
    %v5291 = vld [vmem:[#allocation14 + $0x338] sm:$0xff]
    %v5292 = vld [vmem:[#allocation14 + $0x340] sm:$0xff]
    %v5293 = vld [vmem:[#allocation14 + $0x348] sm:$0xff]
    %v5294 = vld [vmem:[#allocation14 + $0x350] sm:$0xff]
    %v5295 = vld [vmem:[#allocation14 + $0x358] sm:$0xff]
    %v5296 = vld [vmem:[#allocation14 + $0x360] sm:$0xff]
    %v5297 = vld [vmem:[#allocation14 + $0x368] sm:$0xff]
    %v5298 = vld [vmem:[#allocation14 + $0x370] sm:$0xff]
    %v5299 = vld [vmem:[#allocation14 + $0x378] sm:$0xff]
    %v5300 = vld [vmem:[#allocation14 + $0x380] sm:$0xff]
    %v5301 = vld [vmem:[#allocation14 + $0x388] sm:$0xff]
    %v5302 = vld [vmem:[#allocation14 + $0x390] sm:$0xff]
    %v5303 = vld [vmem:[#allocation14 + $0x398] sm:$0xff]
    %v5304 = vld [vmem:[#allocation14 + $0x3a0] sm:$0xff]
    %v5305 = vld [vmem:[#allocation14 + $0x3a8] sm:$0xff]
    %v5306 = vld [vmem:[#allocation14 + $0x3b0] sm:$0xff]
    %v5307 = vld [vmem:[#allocation14 + $0x3b8] sm:$0xff]
    %v5308 = vld [vmem:[#allocation14 + $0x3c0] sm:$0xff]
    %v5309 = vld [vmem:[#allocation14 + $0x3c8] sm:$0xff]
    %v5310 = vld [vmem:[#allocation14 + $0x3d0] sm:$0xff]
    %v5311 = vld [vmem:[#allocation14 + $0x3d8] sm:$0xff]
    %v5312 = vld [vmem:[#allocation14 + $0x3e0] sm:$0xff]
    %v5313 = vld [vmem:[#allocation14 + $0x3e8] sm:$0xff]
    %v5314 = vld [vmem:[#allocation14 + $0x3f0] sm:$0xff]
    %v5315 = vld [vmem:[#allocation14 + $0x3f8] sm:$0xff]
    %v5316 = vld [vmem:[#allocation14 + $0x400] sm:$0xff]
    %v5317 = vld [vmem:[#allocation14 + $0x408] sm:$0xff]
    %v5318 = vld [vmem:[#allocation14 + $0x410] sm:$0xff]
    %v5319 = vld [vmem:[#allocation14 + $0x418] sm:$0xff]
    %v5320 = vld [vmem:[#allocation14 + $0x420] sm:$0xff]
    %v5321 = vld [vmem:[#allocation14 + $0x428] sm:$0xff]
    %v5322 = vld [vmem:[#allocation14 + $0x430] sm:$0xff]
    %v5323 = vld [vmem:[#allocation14 + $0x438] sm:$0xff]
    %v5324 = vld [vmem:[#allocation14 + $0x440] sm:$0xff]
    %v5325 = vld [vmem:[#allocation14 + $0x448] sm:$0xff]
    %v5326 = vld [vmem:[#allocation14 + $0x450] sm:$0xff]
    %v5327 = vld [vmem:[#allocation14 + $0x458] sm:$0xff]
    %v5328 = vld [vmem:[#allocation14 + $0x460] sm:$0xff]
    %v5329 = vld [vmem:[#allocation14 + $0x468] sm:$0xff]
    %v5330 = vld [vmem:[#allocation14 + $0x470] sm:$0xff]
    %v5331 = vld [vmem:[#allocation14 + $0x478] sm:$0xff]
    %v5332 = vld [vmem:[#allocation14 + $0x480] sm:$0xff]
    %v5333 = vld [vmem:[#allocation14 + $0x488] sm:$0xff]
    %v5334 = vld [vmem:[#allocation14 + $0x490] sm:$0xff]
    %v5335 = vld [vmem:[#allocation14 + $0x498] sm:$0xff]
    %v5336 = vld [vmem:[#allocation14 + $0x4a0] sm:$0xff]
    %v5337 = vld [vmem:[#allocation14 + $0x4a8] sm:$0xff]
    %v5338 = vld [vmem:[#allocation14 + $0x4b0] sm:$0xff]
    %v5339 = vld [vmem:[#allocation14 + $0x4b8] sm:$0xff]
    %v5340 = vld [vmem:[#allocation14 + $0x4c0] sm:$0xff]
    %v5341 = vld [vmem:[#allocation14 + $0x4c8] sm:$0xff]
    %v5342 = vld [vmem:[#allocation14 + $0x4d0] sm:$0xff]
    %v5343 = vld [vmem:[#allocation14 + $0x4d8] sm:$0xff]
    %v5344 = vld [vmem:[#allocation14 + $0x4e0] sm:$0xff]
    %v5345 = vld [vmem:[#allocation14 + $0x4e8] sm:$0xff]
    %v5346 = vld [vmem:[#allocation14 + $0x4f0] sm:$0xff]
    %v5347 = vld [vmem:[#allocation14 + $0x4f8] sm:$0xff]
    %v5348 = vld [vmem:[#allocation14 + $0x500] sm:$0xff]
    %v5349 = vld [vmem:[#allocation14 + $0x508] sm:$0xff]
    %v5350 = vld [vmem:[#allocation14 + $0x510] sm:$0xff]
    %v5351 = vld [vmem:[#allocation14 + $0x518] sm:$0xff]
    %v5352 = vld [vmem:[#allocation14 + $0x520] sm:$0xff]
    %v5353 = vld [vmem:[#allocation14 + $0x528] sm:$0xff]
    %v5354 = vld [vmem:[#allocation14 + $0x530] sm:$0xff]
    %v5355 = vld [vmem:[#allocation14 + $0x538] sm:$0xff]
    %v5356 = vld [vmem:[#allocation14 + $0x540] sm:$0xff]
    %v5357 = vld [vmem:[#allocation14 + $0x548] sm:$0xff]
    %v5358 = vld [vmem:[#allocation14 + $0x550] sm:$0xff]
    %v5359 = vld [vmem:[#allocation14 + $0x558] sm:$0xff]
    %v5360 = vld [vmem:[#allocation14 + $0x560] sm:$0xff]
    %v5361 = vld [vmem:[#allocation14 + $0x568] sm:$0xff]
    %v5362 = vld [vmem:[#allocation14 + $0x570] sm:$0xff]
    %v5363 = vld [vmem:[#allocation14 + $0x578] sm:$0xff]
    %v5364 = vld [vmem:[#allocation14 + $0x580] sm:$0xff]
    %v5365 = vld [vmem:[#allocation14 + $0x588] sm:$0xff]
    %v5366 = vld [vmem:[#allocation14 + $0x590] sm:$0xff]
    %v5367 = vld [vmem:[#allocation14 + $0x598] sm:$0xff]
    %v5368 = vld [vmem:[#allocation14 + $0x5a0] sm:$0xff]
    %v5369 = vld [vmem:[#allocation14 + $0x5a8] sm:$0xff]
    %v5370 = vld [vmem:[#allocation14 + $0x5b0] sm:$0xff]
    %v5371 = vld [vmem:[#allocation14 + $0x5b8] sm:$0xff]
    %v5372 = vld [vmem:[#allocation14 + $0x5c0] sm:$0xff]
    %v5373 = vld [vmem:[#allocation14 + $0x5c8] sm:$0xff]
    %v5374 = vld [vmem:[#allocation14 + $0x5d0] sm:$0xff]
    %v5375 = vld [vmem:[#allocation14 + $0x5d8] sm:$0xff]
    %v5376 = vld [vmem:[#allocation14 + $0x5e0] sm:$0xff]
    %v5377 = vld [vmem:[#allocation14 + $0x5e8] sm:$0xff]
    %v5378 = vld [vmem:[#allocation14 + $0x5f0] sm:$0xff]
    %v5379 = vld [vmem:[#allocation14 + $0x5f8] sm:$0xff]
    %v5380 = vld [vmem:[#allocation14 + $0x600] sm:$0xff]
    %v5381 = vld [vmem:[#allocation14 + $0x608] sm:$0xff]
    %v5382 = vld [vmem:[#allocation14 + $0x610] sm:$0xff]
    %v5383 = vld [vmem:[#allocation14 + $0x618] sm:$0xff]
    %v5384 = vld [vmem:[#allocation14 + $0x620] sm:$0xff]
    %v5385 = vld [vmem:[#allocation14 + $0x628] sm:$0xff]
    %v5386 = vld [vmem:[#allocation14 + $0x630] sm:$0xff]
    %v5387 = vld [vmem:[#allocation14 + $0x638] sm:$0xff]
    %v5388 = vld [vmem:[#allocation14 + $0x640] sm:$0xff]
    %v5389 = vld [vmem:[#allocation14 + $0x648] sm:$0xff]
    %v5390 = vld [vmem:[#allocation14 + $0x650] sm:$0xff]
    %v5391 = vld [vmem:[#allocation14 + $0x658] sm:$0xff]
    %v5392 = vld [vmem:[#allocation14 + $0x660] sm:$0xff]
    %v5393 = vld [vmem:[#allocation14 + $0x668] sm:$0xff]
    %v5394 = vld [vmem:[#allocation14 + $0x670] sm:$0xff]
    %v5395 = vld [vmem:[#allocation14 + $0x678] sm:$0xff]
    %v5396 = vld [vmem:[#allocation14 + $0x680] sm:$0xff]
    %v5397 = vld [vmem:[#allocation14 + $0x688] sm:$0xff]
    %v5398 = vld [vmem:[#allocation14 + $0x690] sm:$0xff]
    %v5399 = vld [vmem:[#allocation14 + $0x698] sm:$0xff]
    %v5400 = vld [vmem:[#allocation14 + $0x6a0] sm:$0xff]
    %v5401 = vld [vmem:[#allocation14 + $0x6a8] sm:$0xff]
    %v5402 = vld [vmem:[#allocation14 + $0x6b0] sm:$0xff]
    %v5403 = vld [vmem:[#allocation14 + $0x6b8] sm:$0xff]
    %v5404 = vld [vmem:[#allocation14 + $0x6c0] sm:$0xff]
    %v5405 = vld [vmem:[#allocation14 + $0x6c8] sm:$0xff]
    %v5406 = vld [vmem:[#allocation14 + $0x6d0] sm:$0xff]
    %v5407 = vld [vmem:[#allocation14 + $0x6d8] sm:$0xff]
    %v5408 = vld [vmem:[#allocation14 + $0x6e0] sm:$0xff]
    %v5409 = vld [vmem:[#allocation14 + $0x6e8] sm:$0xff]
    %v5410 = vld [vmem:[#allocation14 + $0x6f0] sm:$0xff]
    %v5411 = vld [vmem:[#allocation14 + $0x6f8] sm:$0xff]
    %v5412 = vld [vmem:[#allocation14 + $0x700] sm:$0xff]
    %v5413 = vld [vmem:[#allocation14 + $0x708] sm:$0xff]
    %v5414 = vld [vmem:[#allocation14 + $0x710] sm:$0xff]
    %v5415 = vld [vmem:[#allocation14 + $0x718] sm:$0xff]
    %v5416 = vld [vmem:[#allocation14 + $0x720] sm:$0xff]
    %v5417 = vld [vmem:[#allocation14 + $0x728] sm:$0xff]
    %v5418 = vld [vmem:[#allocation14 + $0x730] sm:$0xff]
    %v5419 = vld [vmem:[#allocation14 + $0x738] sm:$0xff]
    %v5420 = vld [vmem:[#allocation14 + $0x740] sm:$0xff]
    %v5421 = vld [vmem:[#allocation14 + $0x748] sm:$0xff]
    %v5422 = vld [vmem:[#allocation14 + $0x750] sm:$0xff]
    %v5423 = vld [vmem:[#allocation14 + $0x758] sm:$0xff]
    %v5424 = vld [vmem:[#allocation14 + $0x760] sm:$0xff]
    %v5425 = vld [vmem:[#allocation14 + $0x768] sm:$0xff]
    %v5426 = vld [vmem:[#allocation14 + $0x770] sm:$0xff]
    %v5427 = vld [vmem:[#allocation14 + $0x778] sm:$0xff]
    %v5428 = vld [vmem:[#allocation14 + $0x780] sm:$0xff]
    %v5429 = vld [vmem:[#allocation14 + $0x788] sm:$0xff]
    %v5430 = vld [vmem:[#allocation14 + $0x790] sm:$0xff]
    %v5431 = vld [vmem:[#allocation14 + $0x798] sm:$0xff]
    %v5432 = vld [vmem:[#allocation14 + $0x7a0] sm:$0xff]
    %v5433 = vld [vmem:[#allocation14 + $0x7a8] sm:$0xff]
    %v5434 = vld [vmem:[#allocation14 + $0x7b0] sm:$0xff]
    %v5435 = vld [vmem:[#allocation14 + $0x7b8] sm:$0xff]
    %v5436 = vld [vmem:[#allocation14 + $0x7c0] sm:$0xff]
    %v5437 = vld [vmem:[#allocation14 + $0x7c8] sm:$0xff]
    %v5438 = vld [vmem:[#allocation14 + $0x7d0] sm:$0xff]
    %v5439 = vld [vmem:[#allocation14 + $0x7d8] sm:$0xff]
    %v5440 = vld [vmem:[#allocation14 + $0x7e0] sm:$0xff]
    %v5441 = vld [vmem:[#allocation14 + $0x7e8] sm:$0xff]
    %v5442 = vld [vmem:[#allocation14 + $0x7f0] sm:$0xff]
    %v5443 = vld [vmem:[#allocation14 + $0x7f8] sm:$0xff]
    %v5444 = vld [vmem:[#allocation14 + $0x800] sm:$0xff]
    %v5445 = vld [vmem:[#allocation14 + $0x808] sm:$0xff]
    %v5446 = vld [vmem:[#allocation14 + $0x810] sm:$0xff]
    %v5447 = vld [vmem:[#allocation14 + $0x818] sm:$0xff]
    %v5448 = vld [vmem:[#allocation14 + $0x820] sm:$0xff]
    %v5449 = vld [vmem:[#allocation14 + $0x828] sm:$0xff]
    %v5450 = vld [vmem:[#allocation14 + $0x830] sm:$0xff]
    %v5451 = vld [vmem:[#allocation14 + $0x838] sm:$0xff]
    %v5452 = vld [vmem:[#allocation14 + $0x840] sm:$0xff]
    %v5453 = vld [vmem:[#allocation14 + $0x848] sm:$0xff]
    %v5454 = vld [vmem:[#allocation14 + $0x850] sm:$0xff]
    %v5455 = vld [vmem:[#allocation14 + $0x858] sm:$0xff]
    %v5456 = vld [vmem:[#allocation14 + $0x860] sm:$0xff]
    %v5457 = vld [vmem:[#allocation14 + $0x868] sm:$0xff]
    %v5458 = vld [vmem:[#allocation14 + $0x870] sm:$0xff]
    %v5459 = vld [vmem:[#allocation14 + $0x878] sm:$0xff]
    %v5460 = vld [vmem:[#allocation14 + $0x880] sm:$0xff]
    %v5461 = vld [vmem:[#allocation14 + $0x888] sm:$0xff]
    %v5462 = vld [vmem:[#allocation14 + $0x890] sm:$0xff]
    %v5463 = vld [vmem:[#allocation14 + $0x898] sm:$0xff]
    %v5464 = vld [vmem:[#allocation14 + $0x8a0] sm:$0xff]
    %v5465 = vld [vmem:[#allocation14 + $0x8a8] sm:$0xff]
    %v5466 = vld [vmem:[#allocation14 + $0x8b0] sm:$0xff]
    %v5467 = vld [vmem:[#allocation14 + $0x8b8] sm:$0xff]
    %v5468 = vld [vmem:[#allocation14 + $0x8c0] sm:$0xff]
    %v5469 = vld [vmem:[#allocation14 + $0x8c8] sm:$0xff]
    %v5470 = vld [vmem:[#allocation14 + $0x8d0] sm:$0xff]
    %v5471 = vld [vmem:[#allocation14 + $0x8d8] sm:$0xff]
    %v5472 = vld [vmem:[#allocation14 + $0x8e0] sm:$0xff]
    %v5473 = vld [vmem:[#allocation14 + $0x8e8] sm:$0xff]
    %v5474 = vld [vmem:[#allocation14 + $0x8f0] sm:$0xff]
    %v5475 = vld [vmem:[#allocation14 + $0x8f8] sm:$0xff]
    %v5476 = vld [vmem:[#allocation14 + $0x900] sm:$0xff]
    %v5477 = vld [vmem:[#allocation14 + $0x908] sm:$0xff]
    %v5478 = vld [vmem:[#allocation14 + $0x910] sm:$0xff]
    %v5479 = vld [vmem:[#allocation14 + $0x918] sm:$0xff]
    %v5480 = vld [vmem:[#allocation14 + $0x920] sm:$0xff]
    %v5481 = vld [vmem:[#allocation14 + $0x928] sm:$0xff]
    %v5482 = vld [vmem:[#allocation14 + $0x930] sm:$0xff]
    %v5483 = vld [vmem:[#allocation14 + $0x938] sm:$0xff]
    %v5484 = vld [vmem:[#allocation14 + $0x940] sm:$0xff]
    %v5485 = vld [vmem:[#allocation14 + $0x948] sm:$0xff]
    %v5486 = vld [vmem:[#allocation14 + $0x950] sm:$0xff]
    %v5487 = vld [vmem:[#allocation14 + $0x958] sm:$0xff]
    %v5488 = vld [vmem:[#allocation14 + $0x960] sm:$0xff]
    %v5489 = vld [vmem:[#allocation14 + $0x968] sm:$0xff]
    %v5490 = vld [vmem:[#allocation14 + $0x970] sm:$0xff]
    %v5491 = vld [vmem:[#allocation14 + $0x978] sm:$0xff]
    %v5492 = vld [vmem:[#allocation14 + $0x980] sm:$0xff]
    %v5493 = vld [vmem:[#allocation14 + $0x988] sm:$0xff]
    %v5494 = vld [vmem:[#allocation14 + $0x990] sm:$0xff]
    %v5495 = vld [vmem:[#allocation14 + $0x998] sm:$0xff]
    %v5496 = vld [vmem:[#allocation14 + $0x9a0] sm:$0xff]
    %v5497 = vld [vmem:[#allocation14 + $0x9a8] sm:$0xff]
    %v5498 = vld [vmem:[#allocation14 + $0x9b0] sm:$0xff]
    %v5499 = vld [vmem:[#allocation14 + $0x9b8] sm:$0xff]
    %v5500 = vld [vmem:[#allocation14 + $0x9c0] sm:$0xff]
    %v5501 = vld [vmem:[#allocation14 + $0x9c8] sm:$0xff]
    %v5502 = vld [vmem:[#allocation14 + $0x9d0] sm:$0xff]
    %v5503 = vld [vmem:[#allocation14 + $0x9d8] sm:$0xff]
    %v5504 = vld [vmem:[#allocation14 + $0x9e0] sm:$0xff]
    %v5505 = vld [vmem:[#allocation14 + $0x9e8] sm:$0xff]
    %v5506 = vld [vmem:[#allocation14 + $0x9f0] sm:$0xff]
    %v5507 = vld [vmem:[#allocation14 + $0x9f8] sm:$0xff]
    %v5508 = vld [vmem:[#allocation14 + $0xa00] sm:$0xff]
    %v5509 = vld [vmem:[#allocation14 + $0xa08] sm:$0xff]
    %v5510 = vld [vmem:[#allocation14 + $0xa10] sm:$0xff]
    %v5511 = vld [vmem:[#allocation14 + $0xa18] sm:$0xff]
    %v5512 = vld [vmem:[#allocation14 + $0xa20] sm:$0xff]
    %v5513 = vld [vmem:[#allocation14 + $0xa28] sm:$0xff]
    %v5514 = vld [vmem:[#allocation14 + $0xa30] sm:$0xff]
    %v5515 = vld [vmem:[#allocation14 + $0xa38] sm:$0xff]
    %v5516 = vld [vmem:[#allocation14 + $0xa40] sm:$0xff]
    %v5517 = vld [vmem:[#allocation14 + $0xa48] sm:$0xff]
    %v5518 = vld [vmem:[#allocation14 + $0xa50] sm:$0xff]
    %v5519 = vld [vmem:[#allocation14 + $0xa58] sm:$0xff]
    %v5520 = vld [vmem:[#allocation14 + $0xa60] sm:$0xff]
    %v5521 = vld [vmem:[#allocation14 + $0xa68] sm:$0xff]
    %v5522 = vld [vmem:[#allocation14 + $0xa70] sm:$0xff]
    %v5523 = vld [vmem:[#allocation14 + $0xa78] sm:$0xff]
    %v5524 = vld [vmem:[#allocation14 + $0xa80] sm:$0xff]
    %v5525 = vld [vmem:[#allocation14 + $0xa88] sm:$0xff]
    %v5526 = vld [vmem:[#allocation14 + $0xa90] sm:$0xff]
    %v5527 = vld [vmem:[#allocation14 + $0xa98] sm:$0xff]
    %v5528 = vld [vmem:[#allocation14 + $0xaa0] sm:$0xff]
    %v5529 = vld [vmem:[#allocation14 + $0xaa8] sm:$0xff]
    %v5530 = vld [vmem:[#allocation14 + $0xab0] sm:$0xff]
    %v5531 = vld [vmem:[#allocation14 + $0xab8] sm:$0xff]
    %v5532 = vld [vmem:[#allocation14 + $0xac0] sm:$0xff]
    %v5533 = vld [vmem:[#allocation14 + $0xac8] sm:$0xff]
    %v5534 = vld [vmem:[#allocation14 + $0xad0] sm:$0xff]
    %v5535 = vld [vmem:[#allocation14 + $0xad8] sm:$0xff]
    %v5536 = vld [vmem:[#allocation14 + $0xae0] sm:$0xff]
    %v5537 = vld [vmem:[#allocation14 + $0xae8] sm:$0xff]
    %v5538 = vld [vmem:[#allocation14 + $0xaf0] sm:$0xff]
    %v5539 = vld [vmem:[#allocation14 + $0xaf8] sm:$0xff]
    %v5540 = vld [vmem:[#allocation14 + $0xb00] sm:$0xff]
    %v5541 = vld [vmem:[#allocation14 + $0xb08] sm:$0xff]
    %v5542 = vld [vmem:[#allocation14 + $0xb10] sm:$0xff]
    %v5543 = vld [vmem:[#allocation14 + $0xb18] sm:$0xff]
    %v5544 = vld [vmem:[#allocation14 + $0xb20] sm:$0xff]
    %v5545 = vld [vmem:[#allocation14 + $0xb28] sm:$0xff]
    %v5546 = vld [vmem:[#allocation14 + $0xb30] sm:$0xff]
    %v5547 = vld [vmem:[#allocation14 + $0xb38] sm:$0xff]
    %v5548 = vld [vmem:[#allocation14 + $0xb40] sm:$0xff]
    %v5549 = vld [vmem:[#allocation14 + $0xb48] sm:$0xff]
    %v5550 = vld [vmem:[#allocation14 + $0xb50] sm:$0xff]
    %v5551 = vld [vmem:[#allocation14 + $0xb58] sm:$0xff]
    %v5552 = vld [vmem:[#allocation14 + $0xb60] sm:$0xff]
    %v5553 = vld [vmem:[#allocation14 + $0xb68] sm:$0xff]
    %v5554 = vld [vmem:[#allocation14 + $0xb70] sm:$0xff]
    %v5555 = vld [vmem:[#allocation14 + $0xb78] sm:$0xff]
    %v5556 = vld [vmem:[#allocation14 + $0xb80] sm:$0xff]
    %v5557 = vld [vmem:[#allocation14 + $0xb88] sm:$0xff]
    %v5558 = vld [vmem:[#allocation14 + $0xb90] sm:$0xff]
    %v5559 = vld [vmem:[#allocation14 + $0xb98] sm:$0xff]
    %v5560 = vld [vmem:[#allocation14 + $0xba0] sm:$0xff]
    %v5561 = vld [vmem:[#allocation14 + $0xba8] sm:$0xff]
    %v5562 = vld [vmem:[#allocation14 + $0xbb0] sm:$0xff]
    %v5563 = vld [vmem:[#allocation14 + $0xbb8] sm:$0xff]
    %v5564 = vld [vmem:[#allocation14 + $0xbc0] sm:$0xff]
    %v5565 = vld [vmem:[#allocation14 + $0xbc8] sm:$0xff]
    %v5566 = vld [vmem:[#allocation14 + $0xbd0] sm:$0xff]
    %v5567 = vld [vmem:[#allocation14 + $0xbd8] sm:$0xff]
    %v5568 = vld [vmem:[#allocation14 + $0xbe0] sm:$0xff]
    %v5569 = vld [vmem:[#allocation14 + $0xbe8] sm:$0xff]
    %v5570 = vld [vmem:[#allocation14 + $0xbf0] sm:$0xff]
    %v5571 = vld [vmem:[#allocation14 + $0xbf8] sm:$0xff]
    %v5572 = vld [vmem:[#allocation14 + $0xc00] sm:$0xff]
    %v5573 = vld [vmem:[#allocation14 + $0xc08] sm:$0xff]
    %v5574 = vld [vmem:[#allocation14 + $0xc10] sm:$0xff]
    %v5575 = vld [vmem:[#allocation14 + $0xc18] sm:$0xff]
    %v5576 = vld [vmem:[#allocation14 + $0xc20] sm:$0xff]
    %v5577 = vld [vmem:[#allocation14 + $0xc28] sm:$0xff]
    %v5578 = vld [vmem:[#allocation14 + $0xc30] sm:$0xff]
    %v5579 = vld [vmem:[#allocation14 + $0xc38] sm:$0xff]
    %v5580 = vld [vmem:[#allocation14 + $0xc40] sm:$0xff]
    %v5581 = vld [vmem:[#allocation14 + $0xc48] sm:$0xff]
    %v5582 = vld [vmem:[#allocation14 + $0xc50] sm:$0xff]
    %v5583 = vld [vmem:[#allocation14 + $0xc58] sm:$0xff]
    %v5584 = vld [vmem:[#allocation14 + $0xc60] sm:$0xff]
    %v5585 = vld [vmem:[#allocation14 + $0xc68] sm:$0xff]
    %v5586 = vld [vmem:[#allocation14 + $0xc70] sm:$0xff]
    %v5587 = vld [vmem:[#allocation14 + $0xc78] sm:$0xff]
    %v5588 = vld [vmem:[#allocation14 + $0xc80] sm:$0xff]
    %v5589 = vld [vmem:[#allocation14 + $0xc88] sm:$0xff]
    %v5590 = vld [vmem:[#allocation14 + $0xc90] sm:$0xff]
    %v5591 = vld [vmem:[#allocation14 + $0xc98] sm:$0xff]
    %v5592 = vld [vmem:[#allocation14 + $0xca0] sm:$0xff]
    %v5593 = vld [vmem:[#allocation14 + $0xca8] sm:$0xff]
    %v5594 = vld [vmem:[#allocation14 + $0xcb0] sm:$0xff]
    %v5595 = vld [vmem:[#allocation14 + $0xcb8] sm:$0xff]
    %v5596 = vld [vmem:[#allocation14 + $0xcc0] sm:$0xff]
    %v5597 = vld [vmem:[#allocation14 + $0xcc8] sm:$0xff]
    %v5598 = vld [vmem:[#allocation14 + $0xcd0] sm:$0xff]
    %v5599 = vld [vmem:[#allocation14 + $0xcd8] sm:$0xff]
    %v5600 = vld [vmem:[#allocation14 + $0xce0] sm:$0xff]
    %v5601 = vld [vmem:[#allocation14 + $0xce8] sm:$0xff]
    %v5602 = vld [vmem:[#allocation14 + $0xcf0] sm:$0xff]
    %v5603 = vld [vmem:[#allocation14 + $0xcf8] sm:$0xff]
    %v5604 = vld [vmem:[#allocation14 + $0xd00] sm:$0xff]
    %v5605 = vld [vmem:[#allocation14 + $0xd08] sm:$0xff]
    %v5606 = vld [vmem:[#allocation14 + $0xd10] sm:$0xff]
    %v5607 = vld [vmem:[#allocation14 + $0xd18] sm:$0xff]
    %v5608 = vld [vmem:[#allocation14 + $0xd20] sm:$0xff]
    %v5609 = vld [vmem:[#allocation14 + $0xd28] sm:$0xff]
    %v5610 = vld [vmem:[#allocation14 + $0xd30] sm:$0xff]
    %v5611 = vld [vmem:[#allocation14 + $0xd38] sm:$0xff]
    %v5612 = vld [vmem:[#allocation14 + $0xd40] sm:$0xff]
    %v5613 = vld [vmem:[#allocation14 + $0xd48] sm:$0xff]
    %v5614 = vld [vmem:[#allocation14 + $0xd50] sm:$0xff]
    %v5615 = vld [vmem:[#allocation14 + $0xd58] sm:$0xff]
    %v5616 = vld [vmem:[#allocation14 + $0xd60] sm:$0xff]
    %v5617 = vld [vmem:[#allocation14 + $0xd68] sm:$0xff]
    %v5618 = vld [vmem:[#allocation14 + $0xd70] sm:$0xff]
    %v5619 = vld [vmem:[#allocation14 + $0xd78] sm:$0xff]
    %v5620 = vld [vmem:[#allocation14 + $0xd80] sm:$0xff]
    %v5621 = vld [vmem:[#allocation14 + $0xd88] sm:$0xff]
    %v5622 = vld [vmem:[#allocation14 + $0xd90] sm:$0xff]
    %v5623 = vld [vmem:[#allocation14 + $0xd98] sm:$0xff]
    %v5624 = vld [vmem:[#allocation14 + $0xda0] sm:$0xff]
    %v5625 = vld [vmem:[#allocation14 + $0xda8] sm:$0xff]
    %v5626 = vld [vmem:[#allocation14 + $0xdb0] sm:$0xff]
    %v5627 = vld [vmem:[#allocation14 + $0xdb8] sm:$0xff]
    %v5628 = vld [vmem:[#allocation14 + $0xdc0] sm:$0xff]
    %v5629 = vld [vmem:[#allocation14 + $0xdc8] sm:$0xff]
    %v5630 = vld [vmem:[#allocation14 + $0xdd0] sm:$0xff]
    %v5631 = vld [vmem:[#allocation14 + $0xdd8] sm:$0xff]
    %v5632 = vld [vmem:[#allocation14 + $0xde0] sm:$0xff]
    %v5633 = vld [vmem:[#allocation14 + $0xde8] sm:$0xff]
    %v5634 = vld [vmem:[#allocation14 + $0xdf0] sm:$0xff]
    %v5635 = vld [vmem:[#allocation14 + $0xdf8] sm:$0xff]
    %v5636 = vld [vmem:[#allocation14 + $0xe00] sm:$0xff]
    %v5637 = vld [vmem:[#allocation14 + $0xe08] sm:$0xff]
    %v5638 = vld [vmem:[#allocation14 + $0xe10] sm:$0xff]
    %v5639 = vld [vmem:[#allocation14 + $0xe18] sm:$0xff]
    %v5640 = vld [vmem:[#allocation14 + $0xe20] sm:$0xff]
    %v5641 = vld [vmem:[#allocation14 + $0xe28] sm:$0xff]
    %v5642 = vld [vmem:[#allocation14 + $0xe30] sm:$0xff]
    %v5643 = vld [vmem:[#allocation14 + $0xe38] sm:$0xff]
    %v5644 = vld [vmem:[#allocation14 + $0xe40] sm:$0xff]
    %v5645 = vld [vmem:[#allocation14 + $0xe48] sm:$0xff]
    %v5646 = vld [vmem:[#allocation14 + $0xe50] sm:$0xff]
    %v5647 = vld [vmem:[#allocation14 + $0xe58] sm:$0xff]
    %v5648 = vld [vmem:[#allocation14 + $0xe60] sm:$0xff]
    %v5649 = vld [vmem:[#allocation14 + $0xe68] sm:$0xff]
    %v5650 = vld [vmem:[#allocation14 + $0xe70] sm:$0xff]
    %v5651 = vld [vmem:[#allocation14 + $0xe78] sm:$0xff]
    %v5652 = vld [vmem:[#allocation14 + $0xe80] sm:$0xff]
    %v5653 = vld [vmem:[#allocation14 + $0xe88] sm:$0xff]
    %v5654 = vld [vmem:[#allocation14 + $0xe90] sm:$0xff]
    %v5655 = vld [vmem:[#allocation14 + $0xe98] sm:$0xff]
    %v5656 = vld [vmem:[#allocation14 + $0xea0] sm:$0xff]
    %v5657 = vld [vmem:[#allocation14 + $0xea8] sm:$0xff]
    %v5658 = vld [vmem:[#allocation14 + $0xeb0] sm:$0xff]
    %v5659 = vld [vmem:[#allocation14 + $0xeb8] sm:$0xff]
    %v5660 = vld [vmem:[#allocation14 + $0xec0] sm:$0xff]
    %v5661 = vld [vmem:[#allocation14 + $0xec8] sm:$0xff]
    %v5662 = vld [vmem:[#allocation14 + $0xed0] sm:$0xff]
    %v5663 = vld [vmem:[#allocation14 + $0xed8] sm:$0xff]
    %v5664 = vld [vmem:[#allocation14 + $0xee0] sm:$0xff]
    %v5665 = vld [vmem:[#allocation14 + $0xee8] sm:$0xff]
    %v5666 = vld [vmem:[#allocation14 + $0xef0] sm:$0xff]
    %v5667 = vld [vmem:[#allocation14 + $0xef8] sm:$0xff]
    %v5668 = vld [vmem:[#allocation14 + $0xf00] sm:$0xff]
    %v5669 = vld [vmem:[#allocation14 + $0xf08] sm:$0xff]
    %v5670 = vld [vmem:[#allocation14 + $0xf10] sm:$0xff]
    %v5671 = vld [vmem:[#allocation14 + $0xf18] sm:$0xff]
    %v5672 = vld [vmem:[#allocation14 + $0xf20] sm:$0xff]
    %v5673 = vld [vmem:[#allocation14 + $0xf28] sm:$0xff]
    %v5674 = vld [vmem:[#allocation14 + $0xf30] sm:$0xff]
    %v5675 = vld [vmem:[#allocation14 + $0xf38] sm:$0xff]
    %v5676 = vld [vmem:[#allocation14 + $0xf40] sm:$0xff]
    %v5677 = vld [vmem:[#allocation14 + $0xf48] sm:$0xff]
    %v5678 = vld [vmem:[#allocation14 + $0xf50] sm:$0xff]
    %v5679 = vld [vmem:[#allocation14 + $0xf58] sm:$0xff]
    %v5680 = vld [vmem:[#allocation14 + $0xf60] sm:$0xff]
    %v5681 = vld [vmem:[#allocation14 + $0xf68] sm:$0xff]
    %v5682 = vld [vmem:[#allocation14 + $0xf70] sm:$0xff]
    %v5683 = vld [vmem:[#allocation14 + $0xf78] sm:$0xff]
    %v5684 = vld [vmem:[#allocation14 + $0xf80] sm:$0xff]
    %v5685 = vld [vmem:[#allocation14 + $0xf88] sm:$0xff]
    %v5686 = vld [vmem:[#allocation14 + $0xf90] sm:$0xff]
    %v5687 = vld [vmem:[#allocation14 + $0xf98] sm:$0xff]
    %v5688 = vld [vmem:[#allocation14 + $0xfa0] sm:$0xff]
    %v5689 = vld [vmem:[#allocation14 + $0xfa8] sm:$0xff]
    %v5690 = vld [vmem:[#allocation14 + $0xfb0] sm:$0xff]
    %v5691 = vld [vmem:[#allocation14 + $0xfb8] sm:$0xff]
    %v5692 = vld [vmem:[#allocation14 + $0xfc0] sm:$0xff]
    %v5693 = vld [vmem:[#allocation14 + $0xfc8] sm:$0xff]
    %v5694 = vld [vmem:[#allocation14 + $0xfd0] sm:$0xff]
    %v5695 = vld [vmem:[#allocation14 + $0xfd8] sm:$0xff]
    %v5696 = vld [vmem:[#allocation14 + $0xfe0] sm:$0xff]
    %v5697 = vld [vmem:[#allocation14 + $0xfe8] sm:$0xff]
    %v5698 = vld [vmem:[#allocation14 + $0xff0] sm:$0xff]
    %v5699 = vld [vmem:[#allocation14 + $0xff8] sm:$0xff]
    %v5700 = vld [vmem:[#allocation16] sm:$0xf]
    %v5702 = vlaneseq
    %v5703 = vshrl.u32 %v5702, 7
    %v5704 = vsub.s32 0, %v5703
    %v5705 = vrot.slane %v5700, %v5704
    %v5706 = vlaneseq
    %v5707 = vshrl.u32 %v5706, 7
    %v5708 = vsub.s32 1, %v5707
    %v5709 = vrot.slane %v5700, %v5708
    %v5710 = vlaneseq
    %v5711 = vshrl.u32 %v5710, 7
    %v5712 = vsub.s32 2, %v5711
    %v5713 = vrot.slane %v5700, %v5712
    %v5714 = vlaneseq
    %v5715 = vshrl.u32 %v5714, 7
    %v5716 = vsub.s32 3, %v5715
    %v5717 = vrot.slane %v5700, %v5716
    %5722 = vmatprep.subr.mxu0 %v5189
    %5723 = vmatpush1.msra.mxu0 %v5188
    %5724 = vmatprep.subr.mxu0 %v5193
    %5725 = vmatpush1.msra.mxu0 %v5192
    %5726 = vmatprep.subr.mxu0 %v5197
    %5727 = vmatpush1.msra.mxu0 %v5196
    %5728 = vmatprep.subr.mxu0 %v5201
    %5729 = vmatpush1.msra.mxu0 %v5200
    %5730 = vmatprep.subr.mxu0 %v5205
    %5731 = vmatpush1.msra.mxu0 %v5204
    %5732 = vmatprep.subr.mxu0 %v5209
    %5733 = vmatpush1.msra.mxu0 %v5208
    %5734 = vmatprep.subr.mxu0 %v5213
    %5735 = vmatpush1.msra.mxu0 %v5212
    %5736 = vmatprep.subr.mxu0 %v5217
    %5737 = vmatpush1.msra.mxu0 %v5216
    %5738 = vmatprep.subr.mxu0 %v5221
    %5739 = vmatpush1.msra.mxu0 %v5220
    %5740 = vmatprep.subr.mxu0 %v5225
    %5741 = vmatpush1.msra.mxu0 %v5224
    %5742 = vmatprep.subr.mxu0 %v5229
    %5743 = vmatpush1.msra.mxu0 %v5228
    %5744 = vmatprep.subr.mxu0 %v5233
    %5745 = vmatpush1.msra.mxu0 %v5232
    %5746 = vmatprep.subr.mxu0 %v5237
    %5747 = vmatpush1.msra.mxu0 %v5236
    %5748 = vmatprep.subr.mxu0 %v5241
    %5749 = vmatpush1.msra.mxu0 %v5240
    %5750 = vmatprep.subr.mxu0 %v5245
    %5751 = vmatpush1.msra.mxu0 %v5244
    %5752 = vmatprep.subr.mxu0 %v5249
    %5753 = vmatpush1.msra.mxu0 %v5248
    %5754 = vmatprep.subr.mxu0 %v5253
    %5755 = vmatpush1.msra.mxu0 %v5252
    %5756 = vmatprep.subr.mxu0 %v5257
    %5757 = vmatpush1.msra.mxu0 %v5256
    %5758 = vmatprep.subr.mxu0 %v5261
    %5759 = vmatpush1.msra.mxu0 %v5260
    %5760 = vmatprep.subr.mxu0 %v5265
    %5761 = vmatpush1.msra.mxu0 %v5264
    %5762 = vmatprep.subr.mxu0 %v5269
    %5763 = vmatpush1.msra.mxu0 %v5268
    %5764 = vmatprep.subr.mxu0 %v5273
    %5765 = vmatpush1.msra.mxu0 %v5272
    %5766 = vmatprep.subr.mxu0 %v5277
    %5767 = vmatpush1.msra.mxu0 %v5276
    %5768 = vmatprep.subr.mxu0 %v5281
    %5769 = vmatpush1.msra.mxu0 %v5280
    %5770 = vmatprep.subr.mxu0 %v5285
    %5771 = vmatpush1.msra.mxu0 %v5284
    %5772 = vmatprep.subr.mxu0 %v5289
    %5773 = vmatpush1.msra.mxu0 %v5288
    %5774 = vmatprep.subr.mxu0 %v5293
    %5775 = vmatpush1.msra.mxu0 %v5292
    %5776 = vmatprep.subr.mxu0 %v5297
    %5777 = vmatpush1.msra.mxu0 %v5296
    %5778 = vmatprep.subr.mxu0 %v5301
    %5779 = vmatpush1.msra.mxu0 %v5300
    %5780 = vmatprep.subr.mxu0 %v5305
    %5781 = vmatpush1.msra.mxu0 %v5304
    %5782 = vmatprep.subr.mxu0 %v5309
    %5783 = vmatpush1.msra.mxu0 %v5308
    %5784 = vmatprep.subr.mxu0 %v5313
    %5785 = vmatpush1.msra.mxu0 %v5312
    %5786 = vmatprep.mubr.f32.mxu0 %v5181
    %5787 = vmatmul.mubr.f32.gmra.mrb[0].mxu0 %v5180
    %v5788 = vpop.f32.mrb[0].mxu0
    %v5789 = vadd.f32 %v5705, %v5788
    %v5790 = vpop.f32.mrb[0].mxu0
    %v5791 = vadd.f32 %v5709, %v5790
    %5792 = vdwg.mxu0
    %5793 = vmatprep.subr.mxu0 %v5317
    %5794 = vmatpush1.msra.mxu0 %v5316
    %5795 = vmatprep.subr.mxu0 %v5321
    %5796 = vmatpush1.msra.mxu0 %v5320
    %5797 = vmatprep.subr.mxu0 %v5325
    %5798 = vmatpush1.msra.mxu0 %v5324
    %5799 = vmatprep.subr.mxu0 %v5329
    %5800 = vmatpush1.msra.mxu0 %v5328
    %5801 = vmatprep.subr.mxu0 %v5333
    %5802 = vmatpush1.msra.mxu0 %v5332
    %5803 = vmatprep.subr.mxu0 %v5337
    %5804 = vmatpush1.msra.mxu0 %v5336
    %5805 = vmatprep.subr.mxu0 %v5341
    %5806 = vmatpush1.msra.mxu0 %v5340
    %5807 = vmatprep.subr.mxu0 %v5345
    %5808 = vmatpush1.msra.mxu0 %v5344
    %5809 = vmatprep.subr.mxu0 %v5349
    %5810 = vmatpush1.msra.mxu0 %v5348
    %5811 = vmatprep.subr.mxu0 %v5353
    %5812 = vmatpush1.msra.mxu0 %v5352
    %5813 = vmatprep.subr.mxu0 %v5357
    %5814 = vmatpush1.msra.mxu0 %v5356
    %5815 = vmatprep.subr.mxu0 %v5361
    %5816 = vmatpush1.msra.mxu0 %v5360
    %5817 = vmatprep.subr.mxu0 %v5365
    %5818 = vmatpush1.msra.mxu0 %v5364
    %5819 = vmatprep.subr.mxu0 %v5369
    %5820 = vmatpush1.msra.mxu0 %v5368
    %5821 = vmatprep.subr.mxu0 %v5373
    %5822 = vmatpush1.msra.mxu0 %v5372
    %5823 = vmatprep.subr.mxu0 %v5377
    %5824 = vmatpush1.msra.mxu0 %v5376
    %5825 = vmatprep.subr.mxu0 %v5381
    %5826 = vmatpush1.msra.mxu0 %v5380
    %5827 = vmatprep.subr.mxu0 %v5385
    %5828 = vmatpush1.msra.mxu0 %v5384
    %5829 = vmatprep.subr.mxu0 %v5389
    %5830 = vmatpush1.msra.mxu0 %v5388
    %5831 = vmatprep.subr.mxu0 %v5393
    %5832 = vmatpush1.msra.mxu0 %v5392
    %5833 = vmatprep.subr.mxu0 %v5397
    %5834 = vmatpush1.msra.mxu0 %v5396
    %5835 = vmatprep.subr.mxu0 %v5401
    %5836 = vmatpush1.msra.mxu0 %v5400
    %5837 = vmatprep.subr.mxu0 %v5405
    %5838 = vmatpush1.msra.mxu0 %v5404
    %5839 = vmatprep.subr.mxu0 %v5409
    %5840 = vmatpush1.msra.mxu0 %v5408
    %5841 = vmatprep.subr.mxu0 %v5413
    %5842 = vmatpush1.msra.mxu0 %v5412
    %5843 = vmatprep.subr.mxu0 %v5417
    %5844 = vmatpush1.msra.mxu0 %v5416
    %5845 = vmatprep.subr.mxu0 %v5421
    %5846 = vmatpush1.msra.mxu0 %v5420
    %5847 = vmatprep.subr.mxu0 %v5425
    %5848 = vmatpush1.msra.mxu0 %v5424
    %5849 = vmatprep.subr.mxu0 %v5429
    %5850 = vmatpush1.msra.mxu0 %v5428
    %5851 = vmatprep.subr.mxu0 %v5433
    %5852 = vmatpush1.msra.mxu0 %v5432
    %5853 = vmatprep.subr.mxu0 %v5437
    %5854 = vmatpush1.msra.mxu0 %v5436
    %5855 = vmatprep.subr.mxu0 %v5441
    %5856 = vmatpush1.msra.mxu0 %v5440
    %5857 = vmatprep.mubr.f32.mxu0 %v5183
    %5858 = vmatmul.mubr.f32.gmra.mrb[0].mxu0 %v5182
    %v5859 = vpop.f32.mrb[0].mxu0
    %v5860 = vadd.f32 %v5789, %v5859
    %v5861 = vpop.f32.mrb[0].mxu0
    %v5862 = vadd.f32 %v5791, %v5861
    %5863 = vdwg.mxu0
    %5864 = vmatprep.subr.mxu0 %v5445
    %5865 = vmatpush1.msra.mxu0 %v5444
    %5866 = vmatprep.subr.mxu0 %v5449
    %5867 = vmatpush1.msra.mxu0 %v5448
    %5868 = vmatprep.subr.mxu0 %v5453
    %5869 = vmatpush1.msra.mxu0 %v5452
    %5870 = vmatprep.subr.mxu0 %v5457
    %5871 = vmatpush1.msra.mxu0 %v5456
    %5872 = vmatprep.subr.mxu0 %v5461
    %5873 = vmatpush1.msra.mxu0 %v5460
    %5874 = vmatprep.subr.mxu0 %v5465
    %5875 = vmatpush1.msra.mxu0 %v5464
    %5876 = vmatprep.subr.mxu0 %v5469
    %5877 = vmatpush1.msra.mxu0 %v5468
    %5878 = vmatprep.subr.mxu0 %v5473
    %5879 = vmatpush1.msra.mxu0 %v5472
    %5880 = vmatprep.subr.mxu0 %v5477
    %5881 = vmatpush1.msra.mxu0 %v5476
    %5882 = vmatprep.subr.mxu0 %v5481
    %5883 = vmatpush1.msra.mxu0 %v5480
    %5884 = vmatprep.subr.mxu0 %v5485
    %5885 = vmatpush1.msra.mxu0 %v5484
    %5886 = vmatprep.subr.mxu0 %v5489
    %5887 = vmatpush1.msra.mxu0 %v5488
    %5888 = vmatprep.subr.mxu0 %v5493
    %5889 = vmatpush1.msra.mxu0 %v5492
    %5890 = vmatprep.subr.mxu0 %v5497
    %5891 = vmatpush1.msra.mxu0 %v5496
    %5892 = vmatprep.subr.mxu0 %v5501
    %5893 = vmatpush1.msra.mxu0 %v5500
    %5894 = vmatprep.subr.mxu0 %v5505
    %5895 = vmatpush1.msra.mxu0 %v5504
    %5896 = vmatprep.subr.mxu0 %v5509
    %5897 = vmatpush1.msra.mxu0 %v5508
    %5898 = vmatprep.subr.mxu0 %v5513
    %5899 = vmatpush1.msra.mxu0 %v5512
    %5900 = vmatprep.subr.mxu0 %v5517
    %5901 = vmatpush1.msra.mxu0 %v5516
    %5902 = vmatprep.subr.mxu0 %v5521
    %5903 = vmatpush1.msra.mxu0 %v5520
    %5904 = vmatprep.subr.mxu0 %v5525
    %5905 = vmatpush1.msra.mxu0 %v5524
    %5906 = vmatprep.subr.mxu0 %v5529
    %5907 = vmatpush1.msra.mxu0 %v5528
    %5908 = vmatprep.subr.mxu0 %v5533
    %5909 = vmatpush1.msra.mxu0 %v5532
    %5910 = vmatprep.subr.mxu0 %v5537
    %5911 = vmatpush1.msra.mxu0 %v5536
    %5912 = vmatprep.subr.mxu0 %v5541
    %5913 = vmatpush1.msra.mxu0 %v5540
    %5914 = vmatprep.subr.mxu0 %v5545
    %5915 = vmatpush1.msra.mxu0 %v5544
    %5916 = vmatprep.subr.mxu0 %v5549
    %5917 = vmatpush1.msra.mxu0 %v5548
    %5918 = vmatprep.subr.mxu0 %v5553
    %5919 = vmatpush1.msra.mxu0 %v5552
    %5920 = vmatprep.subr.mxu0 %v5557
    %5921 = vmatpush1.msra.mxu0 %v5556
    %5922 = vmatprep.subr.mxu0 %v5561
    %5923 = vmatpush1.msra.mxu0 %v5560
    %5924 = vmatprep.subr.mxu0 %v5565
    %5925 = vmatpush1.msra.mxu0 %v5564
    %5926 = vmatprep.subr.mxu0 %v5569
    %5927 = vmatpush1.msra.mxu0 %v5568
    %5928 = vmatprep.mubr.f32.mxu0 %v5185
    %5929 = vmatmul.mubr.f32.gmra.mrb[0].mxu0 %v5184
    %v5930 = vpop.f32.mrb[0].mxu0
    %v5931 = vadd.f32 %v5860, %v5930
    %v5932 = vpop.f32.mrb[0].mxu0
    %v5933 = vadd.f32 %v5862, %v5932
    %5934 = vdwg.mxu0
    %5935 = vmatprep.subr.mxu0 %v5573
    %5936 = vmatpush1.msra.mxu0 %v5572
    %5937 = vmatprep.subr.mxu0 %v5577
    %5938 = vmatpush1.msra.mxu0 %v5576
    %5939 = vmatprep.subr.mxu0 %v5581
    %5940 = vmatpush1.msra.mxu0 %v5580
    %5941 = vmatprep.subr.mxu0 %v5585
    %5942 = vmatpush1.msra.mxu0 %v5584
    %5943 = vmatprep.subr.mxu0 %v5589
    %5944 = vmatpush1.msra.mxu0 %v5588
    %5945 = vmatprep.subr.mxu0 %v5593
    %5946 = vmatpush1.msra.mxu0 %v5592
    %5947 = vmatprep.subr.mxu0 %v5597
    %5948 = vmatpush1.msra.mxu0 %v5596
    %5949 = vmatprep.subr.mxu0 %v5601
    %5950 = vmatpush1.msra.mxu0 %v5600
    %5951 = vmatprep.subr.mxu0 %v5605
    %5952 = vmatpush1.msra.mxu0 %v5604
    %5953 = vmatprep.subr.mxu0 %v5609
    %5954 = vmatpush1.msra.mxu0 %v5608
    %5955 = vmatprep.subr.mxu0 %v5613
    %5956 = vmatpush1.msra.mxu0 %v5612
    %5957 = vmatprep.subr.mxu0 %v5617
    %5958 = vmatpush1.msra.mxu0 %v5616
    %5959 = vmatprep.subr.mxu0 %v5621
    %5960 = vmatpush1.msra.mxu0 %v5620
    %5961 = vmatprep.subr.mxu0 %v5625
    %5962 = vmatpush1.msra.mxu0 %v5624
    %5963 = vmatprep.subr.mxu0 %v5629
    %5964 = vmatpush1.msra.mxu0 %v5628
    %5965 = vmatprep.subr.mxu0 %v5633
    %5966 = vmatpush1.msra.mxu0 %v5632
    %5967 = vmatprep.subr.mxu0 %v5637
    %5968 = vmatpush1.msra.mxu0 %v5636
    %5969 = vmatprep.subr.mxu0 %v5641
    %5970 = vmatpush1.msra.mxu0 %v5640
    %5971 = vmatprep.subr.mxu0 %v5645
    %5972 = vmatpush1.msra.mxu0 %v5644
    %5973 = vmatprep.subr.mxu0 %v5649
    %5974 = vmatpush1.msra.mxu0 %v5648
    %5975 = vmatprep.subr.mxu0 %v5653
    %5976 = vmatpush1.msra.mxu0 %v5652
    %5977 = vmatprep.subr.mxu0 %v5657
    %5978 = vmatpush1.msra.mxu0 %v5656
    %5979 = vmatprep.subr.mxu0 %v5661
    %5980 = vmatpush1.msra.mxu0 %v5660
    %5981 = vmatprep.subr.mxu0 %v5665
    %5982 = vmatpush1.msra.mxu0 %v5664
    %5983 = vmatprep.subr.mxu0 %v5669
    %5984 = vmatpush1.msra.mxu0 %v5668
    %5985 = vmatprep.subr.mxu0 %v5673
    %5986 = vmatpush1.msra.mxu0 %v5672
    %5987 = vmatprep.subr.mxu0 %v5677
    %5988 = vmatpush1.msra.mxu0 %v5676
    %5989 = vmatprep.subr.mxu0 %v5681
    %5990 = vmatpush1.msra.mxu0 %v5680
    %5991 = vmatprep.subr.mxu0 %v5685
    %5992 = vmatpush1.msra.mxu0 %v5684
    %5993 = vmatprep.subr.mxu0 %v5689
    %5994 = vmatpush1.msra.mxu0 %v5688
    %5995 = vmatprep.subr.mxu0 %v5693
    %5996 = vmatpush1.msra.mxu0 %v5692
    %5997 = vmatprep.subr.mxu0 %v5697
    %5998 = vmatpush1.msra.mxu0 %v5696
    %5999 = vmatprep.mubr.f32.mxu0 %v5187
    %6000 = vmatmul.mubr.f32.gmra.mrb[0].mxu0 %v5186
    %v6001 = vpop.f32.mrb[0].mxu0
    %v6002 = vadd.f32 %v5931, %v6001
    %v6003 = vpop.f32.mrb[0].mxu0
    %v6004 = vadd.f32 %v5933, %v6003
    %6005 = vdwg.mxu0
    %6006 = vmatprep.subr.mxu0 %v5191
    %6007 = vmatpush1.msra.mxu0 %v5190
    %6008 = vmatprep.subr.mxu0 %v5195
    %6009 = vmatpush1.msra.mxu0 %v5194
    %6010 = vmatprep.subr.mxu0 %v5199
    %6011 = vmatpush1.msra.mxu0 %v5198
    %6012 = vmatprep.subr.mxu0 %v5203
    %6013 = vmatpush1.msra.mxu0 %v5202
    %6014 = vmatprep.subr.mxu0 %v5207
    %6015 = vmatpush1.msra.mxu0 %v5206
    %6016 = vmatprep.subr.mxu0 %v5211
    %6017 = vmatpush1.msra.mxu0 %v5210
    %6018 = vmatprep.subr.mxu0 %v5215
    %6019 = vmatpush1.msra.mxu0 %v5214
    %6020 = vmatprep.subr.mxu0 %v5219
    %6021 = vmatpush1.msra.mxu0 %v5218
    %6022 = vmatprep.subr.mxu0 %v5223
    %6023 = vmatpush1.msra.mxu0 %v5222
    %6024 = vmatprep.subr.mxu0 %v5227
    %6025 = vmatpush1.msra.mxu0 %v5226
    %6026 = vmatprep.subr.mxu0 %v5231
    %6027 = vmatpush1.msra.mxu0 %v5230
    %6028 = vmatprep.subr.mxu0 %v5235
    %6029 = vmatpush1.msra.mxu0 %v5234
    %6030 = vmatprep.subr.mxu0 %v5239
    %6031 = vmatpush1.msra.mxu0 %v5238
    %6032 = vmatprep.subr.mxu0 %v5243
    %6033 = vmatpush1.msra.mxu0 %v5242
    %6034 = vmatprep.subr.mxu0 %v5247
    %6035 = vmatpush1.msra.mxu0 %v5246
    %6036 = vmatprep.subr.mxu0 %v5251
    %6037 = vmatpush1.msra.mxu0 %v5250
    %6038 = vmatprep.subr.mxu0 %v5255
    %6039 = vmatpush1.msra.mxu0 %v5254
    %6040 = vmatprep.subr.mxu0 %v5259
    %6041 = vmatpush1.msra.mxu0 %v5258
    %6042 = vmatprep.subr.mxu0 %v5263
    %6043 = vmatpush1.msra.mxu0 %v5262
    %6044 = vmatprep.subr.mxu0 %v5267
    %6045 = vmatpush1.msra.mxu0 %v5266
    %6046 = vmatprep.subr.mxu0 %v5271
    %6047 = vmatpush1.msra.mxu0 %v5270
    %6048 = vmatprep.subr.mxu0 %v5275
    %6049 = vmatpush1.msra.mxu0 %v5274
    %6050 = vmatprep.subr.mxu0 %v5279
    %6051 = vmatpush1.msra.mxu0 %v5278
    %6052 = vmatprep.subr.mxu0 %v5283
    %6053 = vmatpush1.msra.mxu0 %v5282
    %6054 = vmatprep.subr.mxu0 %v5287
    %6055 = vmatpush1.msra.mxu0 %v5286
    %6056 = vmatprep.subr.mxu0 %v5291
    %6057 = vmatpush1.msra.mxu0 %v5290
    %6058 = vmatprep.subr.mxu0 %v5295
    %6059 = vmatpush1.msra.mxu0 %v5294
    %6060 = vmatprep.subr.mxu0 %v5299
    %6061 = vmatpush1.msra.mxu0 %v5298
    %6062 = vmatprep.subr.mxu0 %v5303
    %6063 = vmatpush1.msra.mxu0 %v5302
    %6064 = vmatprep.subr.mxu0 %v5307
    %6065 = vmatpush1.msra.mxu0 %v5306
    %6066 = vmatprep.subr.mxu0 %v5311
    %6067 = vmatpush1.msra.mxu0 %v5310
    %6068 = vmatprep.subr.mxu0 %v5315
    %6069 = vmatpush1.msra.mxu0 %v5314
    %6070 = vmatprep.mubr.f32.mxu0 %v5181
    %6071 = vmatmul.mubr.f32.gmra.mrb[0].mxu0 %v5180
    %v6072 = vpop.f32.mrb[0].mxu0
    %v6073 = vadd.f32 %v5713, %v6072
    %v6074 = vpop.f32.mrb[0].mxu0
    %v6075 = vadd.f32 %v5717, %v6074
    %6076 = vdwg.mxu0
    %6077 = vmatprep.subr.mxu0 %v5319
    %6078 = vmatpush1.msra.mxu0 %v5318
    %6079 = vmatprep.subr.mxu0 %v5323
    %6080 = vmatpush1.msra.mxu0 %v5322
    %6081 = vmatprep.subr.mxu0 %v5327
    %6082 = vmatpush1.msra.mxu0 %v5326
    %6083 = vmatprep.subr.mxu0 %v5331
    %6084 = vmatpush1.msra.mxu0 %v5330
    %6085 = vmatprep.subr.mxu0 %v5335
    %6086 = vmatpush1.msra.mxu0 %v5334
    %6087 = vmatprep.subr.mxu0 %v5339
    %6088 = vmatpush1.msra.mxu0 %v5338
    %6089 = vmatprep.subr.mxu0 %v5343
    %6090 = vmatpush1.msra.mxu0 %v5342
    %6091 = vmatprep.subr.mxu0 %v5347
    %6092 = vmatpush1.msra.mxu0 %v5346
    %6093 = vmatprep.subr.mxu0 %v5351
    %6094 = vmatpush1.msra.mxu0 %v5350
    %6095 = vmatprep.subr.mxu0 %v5355
    %6096 = vmatpush1.msra.mxu0 %v5354
    %6097 = vmatprep.subr.mxu0 %v5359
    %6098 = vmatpush1.msra.mxu0 %v5358
    %6099 = vmatprep.subr.mxu0 %v5363
    %6100 = vmatpush1.msra.mxu0 %v5362
    %6101 = vmatprep.subr.mxu0 %v5367
    %6102 = vmatpush1.msra.mxu0 %v5366
    %6103 = vmatprep.subr.mxu0 %v5371
    %6104 = vmatpush1.msra.mxu0 %v5370
    %6105 = vmatprep.subr.mxu0 %v5375
    %6106 = vmatpush1.msra.mxu0 %v5374
    %6107 = vmatprep.subr.mxu0 %v5379
    %6108 = vmatpush1.msra.mxu0 %v5378
    %6109 = vmatprep.subr.mxu0 %v5383
    %6110 = vmatpush1.msra.mxu0 %v5382
    %6111 = vmatprep.subr.mxu0 %v5387
    %6112 = vmatpush1.msra.mxu0 %v5386
    %6113 = vmatprep.subr.mxu0 %v5391
    %6114 = vmatpush1.msra.mxu0 %v5390
    %6115 = vmatprep.subr.mxu0 %v5395
    %6116 = vmatpush1.msra.mxu0 %v5394
    %6117 = vmatprep.subr.mxu0 %v5399
    %6118 = vmatpush1.msra.mxu0 %v5398
    %6119 = vmatprep.subr.mxu0 %v5403
    %6120 = vmatpush1.msra.mxu0 %v5402
    %6121 = vmatprep.subr.mxu0 %v5407
    %6122 = vmatpush1.msra.mxu0 %v5406
    %6123 = vmatprep.subr.mxu0 %v5411
    %6124 = vmatpush1.msra.mxu0 %v5410
    %6125 = vmatprep.subr.mxu0 %v5415
    %6126 = vmatpush1.msra.mxu0 %v5414
    %6127 = vmatprep.subr.mxu0 %v5419
    %6128 = vmatpush1.msra.mxu0 %v5418
    %6129 = vmatprep.subr.mxu0 %v5423
    %6130 = vmatpush1.msra.mxu0 %v5422
    %6131 = vmatprep.subr.mxu0 %v5427
    %6132 = vmatpush1.msra.mxu0 %v5426
    %6133 = vmatprep.subr.mxu0 %v5431
    %6134 = vmatpush1.msra.mxu0 %v5430
    %6135 = vmatprep.subr.mxu0 %v5435
    %6136 = vmatpush1.msra.mxu0 %v5434
    %6137 = vmatprep.subr.mxu0 %v5439
    %6138 = vmatpush1.msra.mxu0 %v5438
    %6139 = vmatprep.subr.mxu0 %v5443
    %6140 = vmatpush1.msra.mxu0 %v5442
    %6141 = vmatprep.mubr.f32.mxu0 %v5183
    %6142 = vmatmul.mubr.f32.gmra.mrb[0].mxu0 %v5182
    %v6143 = vpop.f32.mrb[0].mxu0
    %v6144 = vadd.f32 %v6073, %v6143
    %v6145 = vpop.f32.mrb[0].mxu0
    %v6146 = vadd.f32 %v6075, %v6145
    %6147 = vdwg.mxu0
    %6148 = vmatprep.subr.mxu0 %v5447
    %6149 = vmatpush1.msra.mxu0 %v5446
    %6150 = vmatprep.subr.mxu0 %v5451
    %6151 = vmatpush1.msra.mxu0 %v5450
    %6152 = vmatprep.subr.mxu0 %v5455
    %6153 = vmatpush1.msra.mxu0 %v5454
    %6154 = vmatprep.subr.mxu0 %v5459
    %6155 = vmatpush1.msra.mxu0 %v5458
    %6156 = vmatprep.subr.mxu0 %v5463
    %6157 = vmatpush1.msra.mxu0 %v5462
    %6158 = vmatprep.subr.mxu0 %v5467
    %6159 = vmatpush1.msra.mxu0 %v5466
    %6160 = vmatprep.subr.mxu0 %v5471
    %6161 = vmatpush1.msra.mxu0 %v5470
    %6162 = vmatprep.subr.mxu0 %v5475
    %6163 = vmatpush1.msra.mxu0 %v5474
    %6164 = vmatprep.subr.mxu0 %v5479
    %6165 = vmatpush1.msra.mxu0 %v5478
    %6166 = vmatprep.subr.mxu0 %v5483
    %6167 = vmatpush1.msra.mxu0 %v5482
    %6168 = vmatprep.subr.mxu0 %v5487
    %6169 = vmatpush1.msra.mxu0 %v5486
    %6170 = vmatprep.subr.mxu0 %v5491
    %6171 = vmatpush1.msra.mxu0 %v5490
    %6172 = vmatprep.subr.mxu0 %v5495
    %6173 = vmatpush1.msra.mxu0 %v5494
    %6174 = vmatprep.subr.mxu0 %v5499
    %6175 = vmatpush1.msra.mxu0 %v5498
    %6176 = vmatprep.subr.mxu0 %v5503
    %6177 = vmatpush1.msra.mxu0 %v5502
    %6178 = vmatprep.subr.mxu0 %v5507
    %6179 = vmatpush1.msra.mxu0 %v5506
    %6180 = vmatprep.subr.mxu0 %v5511
    %6181 = vmatpush1.msra.mxu0 %v5510
    %6182 = vmatprep.subr.mxu0 %v5515
    %6183 = vmatpush1.msra.mxu0 %v5514
    %6184 = vmatprep.subr.mxu0 %v5519
    %6185 = vmatpush1.msra.mxu0 %v5518
    %6186 = vmatprep.subr.mxu0 %v5523
    %6187 = vmatpush1.msra.mxu0 %v5522
    %6188 = vmatprep.subr.mxu0 %v5527
    %6189 = vmatpush1.msra.mxu0 %v5526
    %6190 = vmatprep.subr.mxu0 %v5531
    %6191 = vmatpush1.msra.mxu0 %v5530
    %6192 = vmatprep.subr.mxu0 %v5535
    %6193 = vmatpush1.msra.mxu0 %v5534
    %6194 = vmatprep.subr.mxu0 %v5539
    %6195 = vmatpush1.msra.mxu0 %v5538
    %6196 = vmatprep.subr.mxu0 %v5543
    %6197 = vmatpush1.msra.mxu0 %v5542
    %6198 = vmatprep.subr.mxu0 %v5547
    %6199 = vmatpush1.msra.mxu0 %v5546
    %6200 = vmatprep.subr.mxu0 %v5551
    %6201 = vmatpush1.msra.mxu0 %v5550
    %6202 = vmatprep.subr.mxu0 %v5555
    %6203 = vmatpush1.msra.mxu0 %v5554
    %6204 = vmatprep.subr.mxu0 %v5559
    %6205 = vmatpush1.msra.mxu0 %v5558
    %6206 = vmatprep.subr.mxu0 %v5563
    %6207 = vmatpush1.msra.mxu0 %v5562
    %6208 = vmatprep.subr.mxu0 %v5567
    %6209 = vmatpush1.msra.mxu0 %v5566
    %6210 = vmatprep.subr.mxu0 %v5571
    %6211 = vmatpush1.msra.mxu0 %v5570
    %6212 = vmatprep.mubr.f32.mxu0 %v5185
    %6213 = vmatmul.mubr.f32.gmra.mrb[0].mxu0 %v5184
    %v6214 = vpop.f32.mrb[0].mxu0
    %v6215 = vadd.f32 %v6144, %v6214
    %v6216 = vpop.f32.mrb[0].mxu0
    %v6217 = vadd.f32 %v6146, %v6216
    %6218 = vdwg.mxu0
    %6219 = vmatprep.subr.mxu0 %v5575
    %6220 = vmatpush1.msra.mxu0 %v5574
    %6221 = vmatprep.subr.mxu0 %v5579
    %6222 = vmatpush1.msra.mxu0 %v5578
    %6223 = vmatprep.subr.mxu0 %v5583
    %6224 = vmatpush1.msra.mxu0 %v5582
    %6225 = vmatprep.subr.mxu0 %v5587
    %6226 = vmatpush1.msra.mxu0 %v5586
    %6227 = vmatprep.subr.mxu0 %v5591
    %6228 = vmatpush1.msra.mxu0 %v5590
    %6229 = vmatprep.subr.mxu0 %v5595
    %6230 = vmatpush1.msra.mxu0 %v5594
    %6231 = vmatprep.subr.mxu0 %v5599
    %6232 = vmatpush1.msra.mxu0 %v5598
    %6233 = vmatprep.subr.mxu0 %v5603
    %6234 = vmatpush1.msra.mxu0 %v5602
    %6235 = vmatprep.subr.mxu0 %v5607
    %6236 = vmatpush1.msra.mxu0 %v5606
    %6237 = vmatprep.subr.mxu0 %v5611
    %6238 = vmatpush1.msra.mxu0 %v5610
    %6239 = vmatprep.subr.mxu0 %v5615
    %6240 = vmatpush1.msra.mxu0 %v5614
    %6241 = vmatprep.subr.mxu0 %v5619
    %6242 = vmatpush1.msra.mxu0 %v5618
    %6243 = vmatprep.subr.mxu0 %v5623
    %6244 = vmatpush1.msra.mxu0 %v5622
    %6245 = vmatprep.subr.mxu0 %v5627
    %6246 = vmatpush1.msra.mxu0 %v5626
    %6247 = vmatprep.subr.mxu0 %v5631
    %6248 = vmatpush1.msra.mxu0 %v5630
    %6249 = vmatprep.subr.mxu0 %v5635
    %6250 = vmatpush1.msra.mxu0 %v5634
    %6251 = vmatprep.subr.mxu0 %v5639
    %6252 = vmatpush1.msra.mxu0 %v5638
    %6253 = vmatprep.subr.mxu0 %v5643
    %6254 = vmatpush1.msra.mxu0 %v5642
    %6255 = vmatprep.subr.mxu0 %v5647
    %6256 = vmatpush1.msra.mxu0 %v5646
    %6257 = vmatprep.subr.mxu0 %v5651
    %6258 = vmatpush1.msra.mxu0 %v5650
    %6259 = vmatprep.subr.mxu0 %v5655
    %6260 = vmatpush1.msra.mxu0 %v5654
    %6261 = vmatprep.subr.mxu0 %v5659
    %6262 = vmatpush1.msra.mxu0 %v5658
    %6263 = vmatprep.subr.mxu0 %v5663
    %6264 = vmatpush1.msra.mxu0 %v5662
    %6265 = vmatprep.subr.mxu0 %v5667
    %6266 = vmatpush1.msra.mxu0 %v5666
    %6267 = vmatprep.subr.mxu0 %v5671
    %6268 = vmatpush1.msra.mxu0 %v5670
    %6269 = vmatprep.subr.mxu0 %v5675
    %6270 = vmatpush1.msra.mxu0 %v5674
    %6271 = vmatprep.subr.mxu0 %v5679
    %6272 = vmatpush1.msra.mxu0 %v5678
    %6273 = vmatprep.subr.mxu0 %v5683
    %6274 = vmatpush1.msra.mxu0 %v5682
    %6275 = vmatprep.subr.mxu0 %v5687
    %6276 = vmatpush1.msra.mxu0 %v5686
    %6277 = vmatprep.subr.mxu0 %v5691
    %6278 = vmatpush1.msra.mxu0 %v5690
    %6279 = vmatprep.subr.mxu0 %v5695
    %6280 = vmatpush1.msra.mxu0 %v5694
    %6281 = vmatprep.subr.mxu0 %v5699
    %6282 = vmatpush1.msra.mxu0 %v5698
    %6283 = vmatprep.mubr.f32.mxu0 %v5187
    %6284 = vmatmul.mubr.f32.gmra.mrb[0].mxu0 %v5186
    %v6285 = vpop.f32.mrb[0].mxu0
    %v6286 = vadd.f32 %v6215, %v6285
    %v6287 = vpop.f32.mrb[0].mxu0
    %v6288 = vadd.f32 %v6217, %v6287
    %6289 = vdwg.mxu0
    %v6290 = vmax.f32 %v6002, 0.0
    %v6291 = vmax.f32 %v6004, 0.0
    %v6292 = vmax.f32 %v6286, 0.0
    %v6293 = vmax.f32 %v6288, 0.0
    %v6294 = vld [vmem:[#allocation17] sm:$0xff]
    %v6295 = vld [vmem:[#allocation17 + $0x8] sm:$0xff]
    %v6296 = vld [vmem:[#allocation17 + $0x10] sm:$0xff]
    %v6297 = vld [vmem:[#allocation17 + $0x18] sm:$0xff]
    %v6298 = vld [vmem:[#allocation17 + $0x20] sm:$0xff]
    %v6299 = vld [vmem:[#allocation17 + $0x28] sm:$0xff]
    %v6300 = vld [vmem:[#allocation17 + $0x30] sm:$0xff]
    %v6301 = vld [vmem:[#allocation17 + $0x38] sm:$0xff]
    %v6302 = vld [vmem:[#allocation17 + $0x40] sm:$0xff]
    %v6303 = vld [vmem:[#allocation17 + $0x48] sm:$0xff]
    %v6304 = vld [vmem:[#allocation17 + $0x50] sm:$0xff]
    %v6305 = vld [vmem:[#allocation17 + $0x58] sm:$0xff]
    %v6306 = vld [vmem:[#allocation17 + $0x60] sm:$0xff]
    %v6307 = vld [vmem:[#allocation17 + $0x68] sm:$0xff]
    %v6308 = vld [vmem:[#allocation17 + $0x70] sm:$0xff]
    %v6309 = vld [vmem:[#allocation17 + $0x78] sm:$0xff]
    %v6310 = vld [vmem:[#allocation17 + $0x80] sm:$0xff]
    %v6311 = vld [vmem:[#allocation17 + $0x88] sm:$0xff]
    %v6312 = vld [vmem:[#allocation17 + $0x90] sm:$0xff]
    %v6313 = vld [vmem:[#allocation17 + $0x98] sm:$0xff]
    %v6314 = vld [vmem:[#allocation17 + $0xa0] sm:$0xff]
    %v6315 = vld [vmem:[#allocation17 + $0xa8] sm:$0xff]
    %v6316 = vld [vmem:[#allocation17 + $0xb0] sm:$0xff]
    %v6317 = vld [vmem:[#allocation17 + $0xb8] sm:$0xff]
    %v6318 = vld [vmem:[#allocation17 + $0xc0] sm:$0xff]
    %v6319 = vld [vmem:[#allocation17 + $0xc8] sm:$0xff]
    %v6320 = vld [vmem:[#allocation17 + $0xd0] sm:$0xff]
    %v6321 = vld [vmem:[#allocation17 + $0xd8] sm:$0xff]
    %v6322 = vld [vmem:[#allocation17 + $0xe0] sm:$0xff]
    %v6323 = vld [vmem:[#allocation17 + $0xe8] sm:$0xff]
    %v6324 = vld [vmem:[#allocation17 + $0xf0] sm:$0xff]
    %v6325 = vld [vmem:[#allocation17 + $0xf8] sm:$0xff]
    %v6326 = vld [vmem:[#allocation17 + $0x100] sm:$0xff]
    %v6327 = vld [vmem:[#allocation17 + $0x108] sm:$0xff]
    %v6328 = vld [vmem:[#allocation17 + $0x110] sm:$0xff]
    %v6329 = vld [vmem:[#allocation17 + $0x118] sm:$0xff]
    %v6330 = vld [vmem:[#allocation17 + $0x120] sm:$0xff]
    %v6331 = vld [vmem:[#allocation17 + $0x128] sm:$0xff]
    %v6332 = vld [vmem:[#allocation17 + $0x130] sm:$0xff]
    %v6333 = vld [vmem:[#allocation17 + $0x138] sm:$0xff]
    %v6334 = vld [vmem:[#allocation17 + $0x140] sm:$0xff]
    %v6335 = vld [vmem:[#allocation17 + $0x148] sm:$0xff]
    %v6336 = vld [vmem:[#allocation17 + $0x150] sm:$0xff]
    %v6337 = vld [vmem:[#allocation17 + $0x158] sm:$0xff]
    %v6338 = vld [vmem:[#allocation17 + $0x160] sm:$0xff]
    %v6339 = vld [vmem:[#allocation17 + $0x168] sm:$0xff]
    %v6340 = vld [vmem:[#allocation17 + $0x170] sm:$0xff]
    %v6341 = vld [vmem:[#allocation17 + $0x178] sm:$0xff]
    %v6342 = vld [vmem:[#allocation17 + $0x180] sm:$0xff]
    %v6343 = vld [vmem:[#allocation17 + $0x188] sm:$0xff]
    %v6344 = vld [vmem:[#allocation17 + $0x190] sm:$0xff]
    %v6345 = vld [vmem:[#allocation17 + $0x198] sm:$0xff]
    %v6346 = vld [vmem:[#allocation17 + $0x1a0] sm:$0xff]
    %v6347 = vld [vmem:[#allocation17 + $0x1a8] sm:$0xff]
    %v6348 = vld [vmem:[#allocation17 + $0x1b0] sm:$0xff]
    %v6349 = vld [vmem:[#allocation17 + $0x1b8] sm:$0xff]
    %v6350 = vld [vmem:[#allocation17 + $0x1c0] sm:$0xff]
    %v6351 = vld [vmem:[#allocation17 + $0x1c8] sm:$0xff]
    %v6352 = vld [vmem:[#allocation17 + $0x1d0] sm:$0xff]
    %v6353 = vld [vmem:[#allocation17 + $0x1d8] sm:$0xff]
    %v6354 = vld [vmem:[#allocation17 + $0x1e0] sm:$0xff]
    %v6355 = vld [vmem:[#allocation17 + $0x1e8] sm:$0xff]
    %v6356 = vld [vmem:[#allocation17 + $0x1f0] sm:$0xff]
    %v6357 = vld [vmem:[#allocation17 + $0x1f8] sm:$0xff]
    %v6358 = vld [vmem:[#allocation19] sm:$0x1]
    %v6360 = vlaneseq
    %v6361 = vshrl.u32 %v6360, 7
    %v6362 = vsub.s32 0, %v6361
    %v6363 = vrot.slane %v6358, %v6362
    %6365 = vmatprep.subr.mxu0 0.0
    %6366 = vmatpush1.msra.mxu0 %v6294
    %6367 = vmatprep.subr.mxu0 0.0
    %6368 = vmatpush1.msra.mxu0 %v6295
    %6369 = vmatprep.subr.mxu0 0.0
    %6370 = vmatpush1.msra.mxu0 %v6296
    %6371 = vmatprep.subr.mxu0 0.0
    %6372 = vmatpush1.msra.mxu0 %v6297
    %6373 = vmatprep.subr.mxu0 0.0
    %6374 = vmatpush1.msra.mxu0 %v6298
    %6375 = vmatprep.subr.mxu0 0.0
    %6376 = vmatpush1.msra.mxu0 %v6299
    %6377 = vmatprep.subr.mxu0 0.0
    %6378 = vmatpush1.msra.mxu0 %v6300
    %6379 = vmatprep.subr.mxu0 0.0
    %6380 = vmatpush1.msra.mxu0 %v6301
    %6381 = vmatprep.subr.mxu0 0.0
    %6382 = vmatpush1.msra.mxu0 %v6302
    %6383 = vmatprep.subr.mxu0 0.0
    %6384 = vmatpush1.msra.mxu0 %v6303
    %6385 = vmatprep.subr.mxu0 0.0
    %6386 = vmatpush1.msra.mxu0 %v6304
    %6387 = vmatprep.subr.mxu0 0.0
    %6388 = vmatpush1.msra.mxu0 %v6305
    %6389 = vmatprep.subr.mxu0 0.0
    %6390 = vmatpush1.msra.mxu0 %v6306
    %6391 = vmatprep.subr.mxu0 0.0
    %6392 = vmatpush1.msra.mxu0 %v6307
    %6393 = vmatprep.subr.mxu0 0.0
    %6394 = vmatpush1.msra.mxu0 %v6308
    %6395 = vmatprep.subr.mxu0 0.0
    %6396 = vmatpush1.msra.mxu0 %v6309
    %6397 = vmatprep.subr.mxu0 0.0
    %6398 = vmatpush1.msra.mxu0 %v6310
    %6399 = vmatprep.subr.mxu0 0.0
    %6400 = vmatpush1.msra.mxu0 %v6311
    %6401 = vmatprep.subr.mxu0 0.0
    %6402 = vmatpush1.msra.mxu0 %v6312
    %6403 = vmatprep.subr.mxu0 0.0
    %6404 = vmatpush1.msra.mxu0 %v6313
    %6405 = vmatprep.subr.mxu0 0.0
    %6406 = vmatpush1.msra.mxu0 %v6314
    %6407 = vmatprep.subr.mxu0 0.0
    %6408 = vmatpush1.msra.mxu0 %v6315
    %6409 = vmatprep.subr.mxu0 0.0
    %6410 = vmatpush1.msra.mxu0 %v6316
    %6411 = vmatprep.subr.mxu0 0.0
    %6412 = vmatpush1.msra.mxu0 %v6317
    %6413 = vmatprep.subr.mxu0 0.0
    %6414 = vmatpush1.msra.mxu0 %v6318
    %6415 = vmatprep.subr.mxu0 0.0
    %6416 = vmatpush1.msra.mxu0 %v6319
    %6417 = vmatprep.subr.mxu0 0.0
    %6418 = vmatpush1.msra.mxu0 %v6320
    %6419 = vmatprep.subr.mxu0 0.0
    %6420 = vmatpush1.msra.mxu0 %v6321
    %6421 = vmatprep.subr.mxu0 0.0
    %6422 = vmatpush1.msra.mxu0 %v6322
    %6423 = vmatprep.subr.mxu0 0.0
    %6424 = vmatpush1.msra.mxu0 %v6323
    %6425 = vmatprep.subr.mxu0 0.0
    %6426 = vmatpush1.msra.mxu0 %v6324
    %6427 = vmatprep.subr.mxu0 0.0
    %6428 = vmatpush1.msra.mxu0 %v6325
    %6429 = vmatprep.mubr.f32.mxu0 %v6291
    %6430 = vmatmul.mubr.f32.gmra.mrb[0].mxu0 %v6290
    %v6431 = vpop.f32.mrb[0].mxu0
    %v6432 = vadd.f32 %v6363, %v6431
    %v6433 = vpop.f32.mrb[0].mxu0
    %6434 = vdwg.mxu0
    %6435 = vmatprep.subr.mxu0 0.0
    %6436 = vmatpush1.msra.mxu0 %v6326
    %6437 = vmatprep.subr.mxu0 0.0
    %6438 = vmatpush1.msra.mxu0 %v6327
    %6439 = vmatprep.subr.mxu0 0.0
    %6440 = vmatpush1.msra.mxu0 %v6328
    %6441 = vmatprep.subr.mxu0 0.0
    %6442 = vmatpush1.msra.mxu0 %v6329
    %6443 = vmatprep.subr.mxu0 0.0
    %6444 = vmatpush1.msra.mxu0 %v6330
    %6445 = vmatprep.subr.mxu0 0.0
    %6446 = vmatpush1.msra.mxu0 %v6331
    %6447 = vmatprep.subr.mxu0 0.0
    %6448 = vmatpush1.msra.mxu0 %v6332
    %6449 = vmatprep.subr.mxu0 0.0
    %6450 = vmatpush1.msra.mxu0 %v6333
    %6451 = vmatprep.subr.mxu0 0.0
    %6452 = vmatpush1.msra.mxu0 %v6334
    %6453 = vmatprep.subr.mxu0 0.0
    %6454 = vmatpush1.msra.mxu0 %v6335
    %6455 = vmatprep.subr.mxu0 0.0
    %6456 = vmatpush1.msra.mxu0 %v6336
    %6457 = vmatprep.subr.mxu0 0.0
    %6458 = vmatpush1.msra.mxu0 %v6337
    %6459 = vmatprep.subr.mxu0 0.0
    %6460 = vmatpush1.msra.mxu0 %v6338
    %6461 = vmatprep.subr.mxu0 0.0
    %6462 = vmatpush1.msra.mxu0 %v6339
    %6463 = vmatprep.subr.mxu0 0.0
    %6464 = vmatpush1.msra.mxu0 %v6340
    %6465 = vmatprep.subr.mxu0 0.0
    %6466 = vmatpush1.msra.mxu0 %v6341
    %6467 = vmatprep.subr.mxu0 0.0
    %6468 = vmatpush1.msra.mxu0 %v6342
    %6469 = vmatprep.subr.mxu0 0.0
    %6470 = vmatpush1.msra.mxu0 %v6343
    %6471 = vmatprep.subr.mxu0 0.0
    %6472 = vmatpush1.msra.mxu0 %v6344
    %6473 = vmatprep.subr.mxu0 0.0
    %6474 = vmatpush1.msra.mxu0 %v6345
    %6475 = vmatprep.subr.mxu0 0.0
    %6476 = vmatpush1.msra.mxu0 %v6346
    %6477 = vmatprep.subr.mxu0 0.0
    %6478 = vmatpush1.msra.mxu0 %v6347
    %6479 = vmatprep.subr.mxu0 0.0
    %6480 = vmatpush1.msra.mxu0 %v6348
    %6481 = vmatprep.subr.mxu0 0.0
    %6482 = vmatpush1.msra.mxu0 %v6349
    %6483 = vmatprep.subr.mxu0 0.0
    %6484 = vmatpush1.msra.mxu0 %v6350
    %6485 = vmatprep.subr.mxu0 0.0
    %6486 = vmatpush1.msra.mxu0 %v6351
    %6487 = vmatprep.subr.mxu0 0.0
    %6488 = vmatpush1.msra.mxu0 %v6352
    %6489 = vmatprep.subr.mxu0 0.0
    %6490 = vmatpush1.msra.mxu0 %v6353
    %6491 = vmatprep.subr.mxu0 0.0
    %6492 = vmatpush1.msra.mxu0 %v6354
    %6493 = vmatprep.subr.mxu0 0.0
    %6494 = vmatpush1.msra.mxu0 %v6355
    %6495 = vmatprep.subr.mxu0 0.0
    %6496 = vmatpush1.msra.mxu0 %v6356
    %6497 = vmatprep.subr.mxu0 0.0
    %6498 = vmatpush1.msra.mxu0 %v6357
    %6499 = vmatprep.mubr.f32.mxu0 %v6293
    %6500 = vmatmul.mubr.f32.gmra.mrb[0].mxu0 %v6292
    %v6501 = vpop.f32.mrb[0].mxu0
    %v6502 = vadd.f32 %v6432, %v6501
    %v6503 = vpop.f32.mrb[0].mxu0
    %6504 = vdwg.mxu0
    %6505 = vmax.xlane.f32.xlu0 %v6502
    %v6506 = vpop.xlane.xlu0 %6505
    %v6507 = vsub.f32 %v6502, %v6506
    %v6508 = vmul.f32 %v6507, 1.442695
    %v6509 = vpow.pop %v6508
    %6510 = vadd.xlane.f32.xlu0 %v6509
    %v6511 = vpop.xlane.xlu0 %6510
    %v6512 = vrcp.pop %v6511
    %v6513 = vmul.f32 %v6509, %v6512
    %6514 = vst [vmem:[#allocation20] sm:$0xff] %v6513
    // Predicated region
    $region90: #{audionet_forward.1} parent=1 // pred_check
      _
    $region91: #{audionet_forward.1} parent=1 // pred_check_branch
      %6516 = sbr.rel (0) target = $region93
    $region92: #{audionet_forward.1} parent=1 // pred_region
      %s6518 = ssub.s32 128, 128
      %6519 = vsyncadd [#allocation4], %s6518
      %s6521 = sshll.u32 [#allocation20], 4
      %s6522 = int_to_ptr.vmem [resolvable:$true] %s6521
      %6524 = dma.vmem_to_hbm [thread:$0]  %s6522, 128, %s11, [#allocation4]
    $region93: #{audionet_forward.1} parent=1 // pred_fallthru
      _
    // Predicated region
    $region94: #{audionet_forward.1} parent=1 // pred_check
      _
    $region95: #{audionet_forward.1} parent=1 // pred_check_branch
      %6526 = sbr.rel (0) target = $region97
    $region96: #{audionet_forward.1} parent=1 // pred_region
      %6527 = dma.done [#allocation4], 128
    $region97: #{audionet_forward.1} parent=1 // pred_fallthru
      _
    %6528 = vsyncpa [#allocation3], 1
    %6529 = vsyncpa [#allocation6], 1
    %6530 = vsyncpa [#allocation9], 1
    %6531 = vsyncpa [#allocation12], 1
    %6532 = vsyncpa [#allocation15], 1
    %6533 = vsyncpa [#allocation18], 1
    %6534 = vsyncpa [#allocation4], 1

</llo_original>
